<compile_context>
chip_gen: v7x
topology: tpu7x:2x2x1
jax: 0.10.0
libtpu: 0.0.40
codegen_flags: <defaults>
</compile_context>

<pallas_src>
import functools

import jax
import jax.numpy as jnp
import numpy as np
from jax.experimental import pallas as pl
from jax.experimental.pallas import tpu as pltpu

D_IN = 768      # transformer hidden size / GRU input size
H = 128         # GRU hidden size per direction
NUM_LABELS = 4  # stand-in for config.NUM_LABELS
LANE = 128      # lane-dense output width


def _make_kernel(B, T, TT, n_chunks):
    TWO_B = 2 * B

    def kernel(xt_f_ref, xa_f_ref, xt_b_ref, xa_b_ref,
               wih_f_ref, whh_f_ref, bgi_f_ref, bhn_f_ref,
               wih_b_ref, whh_b_ref, bgi_b_ref, bhn_b_ref,
               w_t_ref, w_a_ref, b_out_ref,
               out_ref,
               hf_ref, hb_ref, accf_ref, accb_ref):
        step = pl.program_id(0)

        @pl.when(step == 0)
        def _init():
            hf_ref[...] = jnp.zeros_like(hf_ref)
            hb_ref[...] = jnp.zeros_like(hb_ref)
            accf_ref[...] = jnp.zeros_like(accf_ref)
            accb_ref[...] = jnp.zeros_like(accb_ref)

        # Fuse titles + abstracts along the batch dim (one recurrence over 2B rows).
        x_f = jnp.concatenate([xt_f_ref[...], xa_f_ref[...]], axis=0)   # (2B, TT, D)
        x_b = jnp.concatenate([xt_b_ref[...], xa_b_ref[...]], axis=0)   # (2B, TT, D)

        # Hoisted input->hidden projection: one dense MXU matmul per direction per chunk.
        # bgi = b_ih + [b_hr | b_hz | 0]  (b_hn is applied inside the reset gate below).
        gi_f = jnp.dot(x_f.reshape(TWO_B * TT, D_IN), wih_f_ref[...],
                       preferred_element_type=jnp.float32).reshape(TWO_B, TT, 3 * H)
        gi_f = gi_f + bgi_f_ref[...]
        gi_b = jnp.dot(x_b.reshape(TWO_B * TT, D_IN), wih_b_ref[...],
                       preferred_element_type=jnp.float32).reshape(TWO_B, TT, 3 * H)
        gi_b = gi_b + bgi_b_ref[...]

        whh_f = whh_f_ref[...]
        whh_b = whh_b_ref[...]
        # Hoisted bias broadcasts (no per-step re-broadcast).
        bhn_f = jnp.broadcast_to(bhn_f_ref[...], (TWO_B, H))
        bhn_b = jnp.broadcast_to(bhn_b_ref[...], (TWO_B, H))

        h_f = hf_ref[...]
        h_b = hb_ref[...]
        acc_f = accf_ref[...]
        acc_b = accb_ref[...]

        def gru_step(gi, h, whh, bhn):
            gh = jnp.dot(h, whh, preferred_element_type=jnp.float32)
            r = jax.nn.sigmoid(gi[:, 0:H] + gh[:, 0:H])
            z = jax.nn.sigmoid(gi[:, H:2 * H] + gh[:, H:2 * H])
            n = jnp.tanh(gi[:, 2 * H:3 * H] + r * (gh[:, 2 * H:3 * H] + bhn))
            return (1.0 - z) * n + z * h

        # Fully unrolled time tile; forward / backward streams are independent (ILP).
        for t in range(TT):
            h_f = gru_step(gi_f[:, t, :], h_f, whh_f, bhn_f)
            h_b = gru_step(gi_b[:, TT - 1 - t, :], h_b, whh_b, bhn_b)
            acc_f = acc_f + h_f
            acc_b = acc_b + h_b

        hf_ref[...] = h_f
        hb_ref[...] = h_b
        accf_ref[...] = acc_f
        accb_ref[...] = acc_b

        @pl.when(step == n_chunks - 1)
        def _finalize():
            inv_t = 1.0 / T
            mean_f = acc_f * inv_t                    # (2B, H)  rows = [titles; abstracts]
            mean_b = acc_b * inv_t
            feat = jnp.concatenate([mean_f, mean_b], axis=1)   # (2B, 2H)
            # AvgPool1d(2,2) + Linear(256, NUM_LABELS) pre-folded into w_t / w_a.
            # TODO(synk): nn.Dropout(0.3) is identity at inference; training-mode RNG dropout not reproduced.
            out = (jnp.dot(feat[:B], w_t_ref[...], preferred_element_type=jnp.float32)
                   + jnp.dot(feat[B:], w_a_ref[...], preferred_element_type=jnp.float32)
                   + b_out_ref[...])
            out_ref[...] = out.astype(out_ref.dtype)

    return kernel


def _const_spec(shape):
    zeros = (0,) * len(shape)
    return pl.BlockSpec(shape, lambda i: zeros)


@functools.partial(jax.jit, static_argnames=("t_tile",))
def siamese_forward(hidden_titles, hidden_abstracts, params, t_tile=8):
    # hidden_*: (B, T, D_IN) float32, batch-first (like the PyTorch GRU input). No host transpose.
    B, T, D = hidden_titles.shape
    assert D == D_IN and hidden_abstracts.shape == (B, T, D)
    TT = T if T <= t_tile else t_tile
    assert T % TT == 0 and (TT % 8 == 0 or TT == T), "time tile must be sublane-aligned"
    n_chunks = T // TT

    def prep_bias(bih, bhh):
        # Fold b_hr, b_hz into the hoisted projection bias; keep b_hn separate (reset gate).
        b_gi = bih + jnp.concatenate([bhh[:, :2 * H], jnp.zeros((1, H), bhh.dtype)], axis=1)
        return b_gi, bhh[:, 2 * H:]

    bgi_f, bhn_f = prep_bias(params["bih_f"], params["bhh_f"])
    bgi_b, bhn_b = prep_bias(params["bih_b"], params["bhh_b"])

    # Fold AvgPool1d(2,2) + Linear(256, NUM_LABELS) into per-branch (2H, LANE) weights.
    wout, bout = params["wout"], params["bout"]
    L = wout.shape[1]
    q = H // 2

    def fold(w_fwd_rows, w_bwd_rows):
        w = jnp.concatenate([0.5 * jnp.repeat(w_fwd_rows, 2, axis=0),
                             0.5 * jnp.repeat(w_bwd_rows, 2, axis=0)], axis=0)  # (2H, L)
        return jnp.pad(w, ((0, 0), (0, LANE - L)))

    w_t = fold(wout[0:q], wout[q:2 * q])              # titles branch
    w_a = fold(wout[2 * q:3 * q], wout[3 * q:4 * q])  # abstracts branch
    b_out = jnp.pad(bout, ((0, 0), (0, LANE - L)))

    seq_block = (B, TT, D_IN)
    fwd_spec = pl.BlockSpec(seq_block, lambda i: (0, i, 0))
    bwd_spec = pl.BlockSpec(seq_block, lambda i: (0, n_chunks - 1 - i, 0))

    args = (hidden_titles, hidden_abstracts,      # forward-order time chunks
            hidden_titles, hidden_abstracts,      # reverse-order time chunks
            params["wih_f"], params["whh_f"], bgi_f, bhn_f,
            params["wih_b"], params["whh_b"], bgi_b, bhn_b,
            w_t, w_a, b_out)
    in_specs = [fwd_spec, fwd_spec, bwd_spec, bwd_spec] + [
        _const_spec(a.shape) for a in args[4:]]

    out = pl.pallas_call(
        _make_kernel(B, T, TT, n_chunks),
        out_shape=jax.ShapeDtypeStruct((B, LANE), jnp.float32),
        grid_spec=pltpu.PrefetchScalarGridSpec(
            num_scalar_prefetch=0,
            grid=(n_chunks,),
            in_specs=in_specs,
            out_specs=pl.BlockSpec((B, LANE), lambda i: (0, 0)),
            scratch_shapes=[pltpu.VMEM((2 * B, H), jnp.float32) for _ in range(4)]),
        compiler_params=pltpu.CompilerParams(
            dimension_semantics=("arbitrary",)),
    )(*args)
    return out[:, :NUM_LABELS]


def init_params(key):
    ks = jax.random.split(key, 10)
    gb = 1.0 / np.sqrt(H)        # torch GRU default init bound
    lb = 1.0 / np.sqrt(2 * H)    # torch Linear(256, L) default init bound
    u = lambda k, shape, b: jax.random.uniform(k, shape, jnp.float32, -b, b)
    return dict(
        wih_f=u(ks[0], (D_IN, 3 * H), gb), whh_f=u(ks[1], (H, 3 * H), gb),
        bih_f=u(ks[2], (1, 3 * H), gb),    bhh_f=u(ks[3], (1, 3 * H), gb),
        wih_b=u(ks[4], (D_IN, 3 * H), gb), whh_b=u(ks[5], (H, 3 * H), gb),
        bih_b=u(ks[6], (1, 3 * H), gb),    bhh_b=u(ks[7], (1, 3 * H), gb),
        wout=u(ks[8], (2 * H, NUM_LABELS), lb),
        bout=u(ks[9], (1, NUM_LABELS), lb),
    )


def reference_forward(hidden_titles, hidden_abstracts, params):
    # Pure-JAX reference mirroring the PyTorch module (dropout = identity / eval mode).
    def bidir_gru_pooled(x):
        B, T, _ = x.shape

        def step(h, x_t, wih, whh, bih, bhh):
            gi = x_t @ wih + bih
            gh = h @ whh + bhh
            r = jax.nn.sigmoid(gi[:, :H] + gh[:, :H])
            z = jax.nn.sigmoid(gi[:, H:2 * H] + gh[:, H:2 * H])
            n = jnp.tanh(gi[:, 2 * H:] + r * gh[:, 2 * H:])
            return (1.0 - z) * n + z * h

        h_f = jnp.zeros((B, H)); h_b = jnp.zeros((B, H))
        outs_f, outs_b = [], []
        for t in range(T):
            h_f = step(h_f, x[:, t], params["wih_f"], params["whh_f"],
                       params["bih_f"], params["bhh_f"])
            outs_f.append(h_f)
        for t in range(T - 1, -1, -1):
            h_b = step(h_b, x[:, t], params["wih_b"], params["whh_b"],
                       params["bih_b"], params["bhh_b"])
            outs_b.append(h_b)
        mean_f = jnp.mean(jnp.stack(outs_f, axis=1), axis=1)
        mean_b = jnp.mean(jnp.stack(outs_b, axis=1), axis=1)
        feat = jnp.concatenate([mean_f, mean_b], axis=1)       # rnn_out.mean(dim=1), (B, 2H)
        pooled = feat.reshape(B, H, 2).mean(axis=-1)           # AvgPool1d(2, 2)
        return pooled

    pt = bidir_gru_pooled(hidden_titles)
    pa = bidir_gru_pooled(hidden_abstracts)
    combined = jnp.concatenate([pt, pa], axis=1)               # (B, 256)
    return combined @ params["wout"] + params["bout"]          # Linear(256, NUM_LABELS)


if __name__ == "__main__":
    key = jax.random.PRNGKey(0)
    B, T, VOCAB = 2, 16, 64
    k_emb, k_ids_t, k_ids_a, k_params = jax.random.split(key, 4)

    # TODO(synk): pretrained transformers.AutoModel (SciBERT) encoder has no clean Pallas
    # equivalent; replaced by a deterministic embedding-lookup stub producing hidden states.
    emb_table = jax.random.normal(k_emb, (VOCAB, D_IN), jnp.float32) * 0.1
    input_ids_titles = jax.random.randint(k_ids_t, (B, T), 0, VOCAB)
    input_ids_abstracts = jax.random.randint(k_ids_a, (B, T), 0, VOCAB)
    # attention masks would only affect the stubbed encoder; omitted.
    hidden_titles = emb_table[input_ids_titles]        # (B, T, 768)
    hidden_abstracts = emb_table[input_ids_abstracts]  # (B, T, 768)

    params = init_params(k_params)

    out = siamese_forward(hidden_titles, hidden_abstracts, params, t_tile=8)
    out = jax.block_until_ready(out)

    ref = reference_forward(hidden_titles, hidden_abstracts, params)
    np.testing.assert_allclose(np.asarray(out), np.asarray(ref), atol=2e-2, rtol=2e-2)
    assert out.shape == (B, NUM_LABELS)
    print("KERNEL_OK")
</pallas_src>

<mosaic_0001>
module attributes {stable_mosaic.version = 11 : i64} {
  func.func @kernel(%arg0: i32, %arg1: memref<2x8x768xf32, #tpu.memory_space<vmem>>, %arg2: memref<2x8x768xf32, #tpu.memory_space<vmem>>, %arg3: memref<2x8x768xf32, #tpu.memory_space<vmem>>, %arg4: memref<2x8x768xf32, #tpu.memory_space<vmem>>, %arg5: memref<768x384xf32, #tpu.memory_space<vmem>>, %arg6: memref<128x384xf32, #tpu.memory_space<vmem>>, %arg7: memref<1x384xf32, #tpu.memory_space<vmem>>, %arg8: memref<1x128xf32, #tpu.memory_space<vmem>>, %arg9: memref<768x384xf32, #tpu.memory_space<vmem>>, %arg10: memref<128x384xf32, #tpu.memory_space<vmem>>, %arg11: memref<1x384xf32, #tpu.memory_space<vmem>>, %arg12: memref<1x128xf32, #tpu.memory_space<vmem>>, %arg13: memref<256x128xf32, #tpu.memory_space<vmem>>, %arg14: memref<256x128xf32, #tpu.memory_space<vmem>>, %arg15: memref<1x128xf32, #tpu.memory_space<vmem>>, %arg16: memref<2x128xf32, #tpu.memory_space<vmem>>, %arg17: memref<4x128xf32, #tpu.memory_space<vmem>>, %arg18: memref<4x128xf32, #tpu.memory_space<vmem>>, %arg19: memref<4x128xf32, #tpu.memory_space<vmem>>, %arg20: memref<4x128xf32, #tpu.memory_space<vmem>>) attributes {dimension_semantics = [#tpu.dimension_semantics<arbitrary>], iteration_bounds = array<i64: 2>, scalar_prefetch = 0 : i64, scratch_operands = 4 : i64, tpu.core_type = #tpu.core_type<tc>, window_params = [{transform_indices = @transform_0, window_bounds = array<i64: 2, 8, 768>}, {transform_indices = @transform_1, window_bounds = array<i64: 2, 8, 768>}, {transform_indices = @transform_2, window_bounds = array<i64: 2, 8, 768>}, {transform_indices = @transform_3, window_bounds = array<i64: 2, 8, 768>}, {pipeline_mode = #tpu.pipeline_mode<synchronous>, transform_indices = @transform_4, window_bounds = array<i64: 768, 384>}, {pipeline_mode = #tpu.pipeline_mode<synchronous>, transform_indices = @transform_5, window_bounds = array<i64: 128, 384>}, {pipeline_mode = #tpu.pipeline_mode<synchronous>, transform_indices = @transform_6, window_bounds = array<i64: 1, 384>}, {pipeline_mode = #tpu.pipeline_mode<synchronous>, transform_indices = @transform_7, window_bounds = array<i64: 1, 128>}, {pipeline_mode = #tpu.pipeline_mode<synchronous>, transform_indices = @transform_8, window_bounds = array<i64: 768, 384>}, {pipeline_mode = #tpu.pipeline_mode<synchronous>, transform_indices = @transform_9, window_bounds = array<i64: 128, 384>}, {pipeline_mode = #tpu.pipeline_mode<synchronous>, transform_indices = @transform_10, window_bounds = array<i64: 1, 384>}, {pipeline_mode = #tpu.pipeline_mode<synchronous>, transform_indices = @transform_11, window_bounds = array<i64: 1, 128>}, {pipeline_mode = #tpu.pipeline_mode<synchronous>, transform_indices = @transform_12, window_bounds = array<i64: 256, 128>}, {pipeline_mode = #tpu.pipeline_mode<synchronous>, transform_indices = @transform_13, window_bounds = array<i64: 256, 128>}, {pipeline_mode = #tpu.pipeline_mode<synchronous>, transform_indices = @transform_14, window_bounds = array<i64: 1, 128>}, {pipeline_mode = #tpu.pipeline_mode<synchronous>, transform_indices = @transform_15, window_bounds = array<i64: 2, 128>}]} {
    %c0_i32 = arith.constant 0 : i32
    %0 = arith.cmpi eq, %arg0, %c0_i32 : i32
    %1 = arith.extui %0 : i1 to i32
    %c0_i32_0 = arith.constant 0 : i32
    %2 = arith.cmpi ne, %1, %c0_i32_0 : i32
    scf.if %2 {
      %cst_110 = arith.constant 0.000000e+00 : f32
      %540 = vector.broadcast %cst_110 : f32 to vector<4x128xf32>
      %c0_111 = arith.constant 0 : index
      %c0_112 = arith.constant 0 : index
      %541 = vector.load %arg17[%c0_111, %c0_112] : memref<4x128xf32, #tpu.memory_space<vmem>>, vector<4x128xf32>
      tpu.vector_store %arg17[%c0_111, %c0_112], %540 {strides = array<i32>} : memref<4x128xf32, #tpu.memory_space<vmem>>, vector<4x128xf32>,
      %cst_113 = arith.constant 0.000000e+00 : f32
      %542 = vector.broadcast %cst_113 : f32 to vector<4x128xf32>
      %c0_114 = arith.constant 0 : index
      %c0_115 = arith.constant 0 : index
      %543 = vector.load %arg18[%c0_114, %c0_115] : memref<4x128xf32, #tpu.memory_space<vmem>>, vector<4x128xf32>
      tpu.vector_store %arg18[%c0_114, %c0_115], %542 {strides = array<i32>} : memref<4x128xf32, #tpu.memory_space<vmem>>, vector<4x128xf32>,
      %cst_116 = arith.constant 0.000000e+00 : f32
      %544 = vector.broadcast %cst_116 : f32 to vector<4x128xf32>
      %c0_117 = arith.constant 0 : index
      %c0_118 = arith.constant 0 : index
      %545 = vector.load %arg19[%c0_117, %c0_118] : memref<4x128xf32, #tpu.memory_space<vmem>>, vector<4x128xf32>
      tpu.vector_store %arg19[%c0_117, %c0_118], %544 {strides = array<i32>} : memref<4x128xf32, #tpu.memory_space<vmem>>, vector<4x128xf32>,
      %cst_119 = arith.constant 0.000000e+00 : f32
      %546 = vector.broadcast %cst_119 : f32 to vector<4x128xf32>
      %c0_120 = arith.constant 0 : index
      %c0_121 = arith.constant 0 : index
      %547 = vector.load %arg20[%c0_120, %c0_121] : memref<4x128xf32, #tpu.memory_space<vmem>>, vector<4x128xf32>
      tpu.vector_store %arg20[%c0_120, %c0_121], %546 {strides = array<i32>} : memref<4x128xf32, #tpu.memory_space<vmem>>, vector<4x128xf32>,
    } else {
    }
    %c0 = arith.constant 0 : index
    %c0_1 = arith.constant 0 : index
    %c0_2 = arith.constant 0 : index
    %3 = vector.load %arg1[%c0, %c0_1, %c0_2] : memref<2x8x768xf32, #tpu.memory_space<vmem>>, vector<2x8x768xf32>
    %c0_3 = arith.constant 0 : index
    %c0_4 = arith.constant 0 : index
    %c0_5 = arith.constant 0 : index
    %4 = vector.load %arg2[%c0_3, %c0_4, %c0_5] : memref<2x8x768xf32, #tpu.memory_space<vmem>>, vector<2x8x768xf32>
    %5 = tpu.concatenate %3, %4 in 0 : vector<2x8x768xf32>, vector<2x8x768xf32> -> vector<4x8x768xf32>
    %c0_6 = arith.constant 0 : index
    %c0_7 = arith.constant 0 : index
    %c0_8 = arith.constant 0 : index
    %6 = vector.load %arg3[%c0_6, %c0_7, %c0_8] : memref<2x8x768xf32, #tpu.memory_space<vmem>>, vector<2x8x768xf32>
    %c0_9 = arith.constant 0 : index
    %c0_10 = arith.constant 0 : index
    %c0_11 = arith.constant 0 : index
    %7 = vector.load %arg4[%c0_9, %c0_10, %c0_11] : memref<2x8x768xf32, #tpu.memory_space<vmem>>, vector<2x8x768xf32>
    %8 = tpu.concatenate %6, %7 in 0 : vector<2x8x768xf32>, vector<2x8x768xf32> -> vector<4x8x768xf32>
    %9 = vector.shape_cast %5 : vector<4x8x768xf32> to vector<32x768xf32>
    %c0_12 = arith.constant 0 : index
    %c0_13 = arith.constant 0 : index
    %10 = vector.load %arg5[%c0_12, %c0_13] : memref<768x384xf32, #tpu.memory_space<vmem>>, vector<768x384xf32>
    %cst = arith.constant dense<0.000000e+00> : vector<32x384xf32>
    %11 = tpu.matmul %9, %10, %cst {dimension_numbers = #tpu.dot_dimension_numbers<[1], [0], [0], [1], [0, 0, 1, 1], [], []>} : vector<32x768xf32>, vector<768x384xf32>, vector<32x384xf32> -> vector<32x384xf32>
    %12 = vector.shape_cast %11 : vector<32x384xf32> to vector<4x8x384xf32>
    %c0_14 = arith.constant 0 : index
    %c0_15 = arith.constant 0 : index
    %13 = vector.load %arg7[%c0_14, %c0_15] : memref<1x384xf32, #tpu.memory_space<vmem>>, vector<1x384xf32>
    %14 = vector.shape_cast %13 : vector<1x384xf32> to vector<1x1x384xf32>
    %15 = vector.broadcast %14 : vector<1x1x384xf32> to vector<4x8x384xf32>
    %16 = arith.addf %12, %15 : vector<4x8x384xf32>
    %17 = vector.shape_cast %8 : vector<4x8x768xf32> to vector<32x768xf32>
    %c0_16 = arith.constant 0 : index
    %c0_17 = arith.constant 0 : index
    %18 = vector.load %arg9[%c0_16, %c0_17] : memref<768x384xf32, #tpu.memory_space<vmem>>, vector<768x384xf32>
    %cst_18 = arith.constant dense<0.000000e+00> : vector<32x384xf32>
    %19 = tpu.matmul %17, %18, %cst_18 {dimension_numbers = #tpu.dot_dimension_numbers<[1], [0], [0], [1], [0, 0, 1, 1], [], []>} : vector<32x768xf32>, vector<768x384xf32>, vector<32x384xf32> -> vector<32x384xf32>
    %20 = vector.shape_cast %19 : vector<32x384xf32> to vector<4x8x384xf32>
    %c0_19 = arith.constant 0 : index
    %c0_20 = arith.constant 0 : index
    %21 = vector.load %arg11[%c0_19, %c0_20] : memref<1x384xf32, #tpu.memory_space<vmem>>, vector<1x384xf32>
    %22 = vector.shape_cast %21 : vector<1x384xf32> to vector<1x1x384xf32>
    %23 = vector.broadcast %22 : vector<1x1x384xf32> to vector<4x8x384xf32>
    %24 = arith.addf %20, %23 : vector<4x8x384xf32>
    %c0_21 = arith.constant 0 : index
    %c0_22 = arith.constant 0 : index
    %25 = vector.load %arg6[%c0_21, %c0_22] : memref<128x384xf32, #tpu.memory_space<vmem>>, vector<128x384xf32>
    %c0_23 = arith.constant 0 : index
    %c0_24 = arith.constant 0 : index
    %26 = vector.load %arg10[%c0_23, %c0_24] : memref<128x384xf32, #tpu.memory_space<vmem>>, vector<128x384xf32>
    %c0_25 = arith.constant 0 : index
    %c0_26 = arith.constant 0 : index
    %27 = vector.load %arg8[%c0_25, %c0_26] : memref<1x128xf32, #tpu.memory_space<vmem>>, vector<1x128xf32>
    %28 = vector.shape_cast %27 : vector<1x128xf32> to vector<1x128xf32>
    %29 = vector.broadcast %28 : vector<1x128xf32> to vector<4x128xf32>
    %c0_27 = arith.constant 0 : index
    %c0_28 = arith.constant 0 : index
    %30 = vector.load %arg12[%c0_27, %c0_28] : memref<1x128xf32, #tpu.memory_space<vmem>>, vector<1x128xf32>
    %31 = vector.shape_cast %30 : vector<1x128xf32> to vector<1x128xf32>
    %32 = vector.broadcast %31 : vector<1x128xf32> to vector<4x128xf32>
    %c0_29 = arith.constant 0 : index
    %c0_30 = arith.constant 0 : index
    %33 = vector.load %arg17[%c0_29, %c0_30] : memref<4x128xf32, #tpu.memory_space<vmem>>, vector<4x128xf32>
    %c0_31 = arith.constant 0 : index
    %c0_32 = arith.constant 0 : index
    %34 = vector.load %arg18[%c0_31, %c0_32] : memref<4x128xf32, #tpu.memory_space<vmem>>, vector<4x128xf32>
    %c0_33 = arith.constant 0 : index
    %c0_34 = arith.constant 0 : index
    %35 = vector.load %arg19[%c0_33, %c0_34] : memref<4x128xf32, #tpu.memory_space<vmem>>, vector<4x128xf32>
    %c0_35 = arith.constant 0 : index
    %c0_36 = arith.constant 0 : index
    %36 = vector.load %arg20[%c0_35, %c0_36] : memref<4x128xf32, #tpu.memory_space<vmem>>, vector<4x128xf32>
    %37 = vector.extract_strided_slice %16 {offsets = [0, 0, 0], sizes = [4, 1, 384], strides = [1, 1, 1]} : vector<4x8x384xf32> to vector<4x1x384xf32>
    %38 = vector.shape_cast %37 : vector<4x1x384xf32> to vector<4x384xf32>
    %cst_37 = arith.constant dense<0.000000e+00> : vector<4x384xf32>
    %39 = tpu.matmul %33, %25, %cst_37 {dimension_numbers = #tpu.dot_dimension_numbers<[1], [0], [0], [1], [0, 0, 1, 1], [], []>} : vector<4x128xf32>, vector<128x384xf32>, vector<4x384xf32> -> vector<4x384xf32>
    %40 = vector.extract_strided_slice %38 {offsets = [0, 0], sizes = [4, 128], strides = [1, 1]} : vector<4x384xf32> to vector<4x128xf32>
    %41 = vector.extract_strided_slice %39 {offsets = [0, 0], sizes = [4, 128], strides = [1, 1]} : vector<4x384xf32> to vector<4x128xf32>
    %42 = arith.addf %40, %41 : vector<4x128xf32>
    %43 = arith.negf %42 : vector<4x128xf32>
    %44 = math.exp %43 : vector<4x128xf32>
    %cst_38 = arith.constant 1.000000e+00 : f32
    %45 = vector.broadcast %cst_38 : f32 to vector<4x128xf32>
    %46 = arith.addf %45, %44 : vector<4x128xf32>
    %47 = arith.divf %45, %46 : vector<4x128xf32>
    %48 = vector.extract_strided_slice %38 {offsets = [0, 128], sizes = [4, 128], strides = [1, 1]} : vector<4x384xf32> to vector<4x128xf32>
    %49 = vector.extract_strided_slice %39 {offsets = [0, 128], sizes = [4, 128], strides = [1, 1]} : vector<4x384xf32> to vector<4x128xf32>
    %50 = arith.addf %48, %49 : vector<4x128xf32>
    %51 = arith.negf %50 : vector<4x128xf32>
    %52 = math.exp %51 : vector<4x128xf32>
    %cst_39 = arith.constant 1.000000e+00 : f32
    %53 = vector.broadcast %cst_39 : f32 to vector<4x128xf32>
    %54 = arith.addf %53, %52 : vector<4x128xf32>
    %55 = arith.divf %53, %54 : vector<4x128xf32>
    %56 = vector.extract_strided_slice %38 {offsets = [0, 256], sizes = [4, 128], strides = [1, 1]} : vector<4x384xf32> to vector<4x128xf32>
    %57 = vector.extract_strided_slice %39 {offsets = [0, 256], sizes = [4, 128], strides = [1, 1]} : vector<4x384xf32> to vector<4x128xf32>
    %58 = arith.addf %57, %29 : vector<4x128xf32>
    %59 = arith.mulf %47, %58 : vector<4x128xf32>
    %60 = arith.addf %56, %59 : vector<4x128xf32>
    %61 = math.tanh %60 : vector<4x128xf32>
    %cst_40 = arith.constant 1.000000e+00 : f32
    %62 = vector.broadcast %cst_40 : f32 to vector<4x128xf32>
    %63 = arith.subf %62, %55 : vector<4x128xf32>
    %64 = arith.mulf %63, %61 : vector<4x128xf32>
    %65 = arith.mulf %55, %33 : vector<4x128xf32>
    %66 = arith.addf %64, %65 : vector<4x128xf32>
    %67 = vector.extract_strided_slice %24 {offsets = [0, 7, 0], sizes = [4, 1, 384], strides = [1, 1, 1]} : vector<4x8x384xf32> to vector<4x1x384xf32>
    %68 = vector.shape_cast %67 : vector<4x1x384xf32> to vector<4x384xf32>
    %cst_41 = arith.constant dense<0.000000e+00> : vector<4x384xf32>
    %69 = tpu.matmul %34, %26, %cst_41 {dimension_numbers = #tpu.dot_dimension_numbers<[1], [0], [0], [1], [0, 0, 1, 1], [], []>} : vector<4x128xf32>, vector<128x384xf32>, vector<4x384xf32> -> vector<4x384xf32>
    %70 = vector.extract_strided_slice %68 {offsets = [0, 0], sizes = [4, 128], strides = [1, 1]} : vector<4x384xf32> to vector<4x128xf32>
    %71 = vector.extract_strided_slice %69 {offsets = [0, 0], sizes = [4, 128], strides = [1, 1]} : vector<4x384xf32> to vector<4x128xf32>
    %72 = arith.addf %70, %71 : vector<4x128xf32>
    %73 = arith.negf %72 : vector<4x128xf32>
    %74 = math.exp %73 : vector<4x128xf32>
    %cst_42 = arith.constant 1.000000e+00 : f32
    %75 = vector.broadcast %cst_42 : f32 to vector<4x128xf32>
    %76 = arith.addf %75, %74 : vector<4x128xf32>
    %77 = arith.divf %75, %76 : vector<4x128xf32>
    %78 = vector.extract_strided_slice %68 {offsets = [0, 128], sizes = [4, 128], strides = [1, 1]} : vector<4x384xf32> to vector<4x128xf32>
    %79 = vector.extract_strided_slice %69 {offsets = [0, 128], sizes = [4, 128], strides = [1, 1]} : vector<4x384xf32> to vector<4x128xf32>
    %80 = arith.addf %78, %79 : vector<4x128xf32>
    %81 = arith.negf %80 : vector<4x128xf32>
    %82 = math.exp %81 : vector<4x128xf32>
    %cst_43 = arith.constant 1.000000e+00 : f32
    %83 = vector.broadcast %cst_43 : f32 to vector<4x128xf32>
    %84 = arith.addf %83, %82 : vector<4x128xf32>
    %85 = arith.divf %83, %84 : vector<4x128xf32>
    %86 = vector.extract_strided_slice %68 {offsets = [0, 256], sizes = [4, 128], strides = [1, 1]} : vector<4x384xf32> to vector<4x128xf32>
    %87 = vector.extract_strided_slice %69 {offsets = [0, 256], sizes = [4, 128], strides = [1, 1]} : vector<4x384xf32> to vector<4x128xf32>
    %88 = arith.addf %87, %32 : vector<4x128xf32>
    %89 = arith.mulf %77, %88 : vector<4x128xf32>
    %90 = arith.addf %86, %89 : vector<4x128xf32>
    %91 = math.tanh %90 : vector<4x128xf32>
    %cst_44 = arith.constant 1.000000e+00 : f32
    %92 = vector.broadcast %cst_44 : f32 to vector<4x128xf32>
    %93 = arith.subf %92, %85 : vector<4x128xf32>
    %94 = arith.mulf %93, %91 : vector<4x128xf32>
    %95 = arith.mulf %85, %34 : vector<4x128xf32>
    %96 = arith.addf %94, %95 : vector<4x128xf32>
    %97 = arith.addf %35, %66 : vector<4x128xf32>
    %98 = arith.addf %36, %96 : vector<4x128xf32>
    %99 = vector.extract_strided_slice %16 {offsets = [0, 1, 0], sizes = [4, 1, 384], strides = [1, 1, 1]} : vector<4x8x384xf32> to vector<4x1x384xf32>
    %100 = vector.shape_cast %99 : vector<4x1x384xf32> to vector<4x384xf32>
    %cst_45 = arith.constant dense<0.000000e+00> : vector<4x384xf32>
    %101 = tpu.matmul %66, %25, %cst_45 {dimension_numbers = #tpu.dot_dimension_numbers<[1], [0], [0], [1], [0, 0, 1, 1], [], []>} : vector<4x128xf32>, vector<128x384xf32>, vector<4x384xf32> -> vector<4x384xf32>
    %102 = vector.extract_strided_slice %100 {offsets = [0, 0], sizes = [4, 128], strides = [1, 1]} : vector<4x384xf32> to vector<4x128xf32>
    %103 = vector.extract_strided_slice %101 {offsets = [0, 0], sizes = [4, 128], strides = [1, 1]} : vector<4x384xf32> to vector<4x128xf32>
    %104 = arith.addf %102, %103 : vector<4x128xf32>
    %105 = arith.negf %104 : vector<4x128xf32>
    %106 = math.exp %105 : vector<4x128xf32>
    %cst_46 = arith.constant 1.000000e+00 : f32
    %107 = vector.broadcast %cst_46 : f32 to vector<4x128xf32>
    %108 = arith.addf %107, %106 : vector<4x128xf32>
    %109 = arith.divf %107, %108 : vector<4x128xf32>
    %110 = vector.extract_strided_slice %100 {offsets = [0, 128], sizes = [4, 128], strides = [1, 1]} : vector<4x384xf32> to vector<4x128xf32>
    %111 = vector.extract_strided_slice %101 {offsets = [0, 128], sizes = [4, 128], strides = [1, 1]} : vector<4x384xf32> to vector<4x128xf32>
    %112 = arith.addf %110, %111 : vector<4x128xf32>
    %113 = arith.negf %112 : vector<4x128xf32>
    %114 = math.exp %113 : vector<4x128xf32>
    %cst_47 = arith.constant 1.000000e+00 : f32
    %115 = vector.broadcast %cst_47 : f32 to vector<4x128xf32>
    %116 = arith.addf %115, %114 : vector<4x128xf32>
    %117 = arith.divf %115, %116 : vector<4x128xf32>
    %118 = vector.extract_strided_slice %100 {offsets = [0, 256], sizes = [4, 128], strides = [1, 1]} : vector<4x384xf32> to vector<4x128xf32>
    %119 = vector.extract_strided_slice %101 {offsets = [0, 256], sizes = [4, 128], strides = [1, 1]} : vector<4x384xf32> to vector<4x128xf32>
    %120 = arith.addf %119, %29 : vector<4x128xf32>
    %121 = arith.mulf %109, %120 : vector<4x128xf32>
    %122 = arith.addf %118, %121 : vector<4x128xf32>
    %123 = math.tanh %122 : vector<4x128xf32>
    %cst_48 = arith.constant 1.000000e+00 : f32
    %124 = vector.broadcast %cst_48 : f32 to vector<4x128xf32>
    %125 = arith.subf %124, %117 : vector<4x128xf32>
    %126 = arith.mulf %125, %123 : vector<4x128xf32>
    %127 = arith.mulf %117, %66 : vector<4x128xf32>
    %128 = arith.addf %126, %127 : vector<4x128xf32>
    %129 = vector.extract_strided_slice %24 {offsets = [0, 6, 0], sizes = [4, 1, 384], strides = [1, 1, 1]} : vector<4x8x384xf32> to vector<4x1x384xf32>
    %130 = vector.shape_cast %129 : vector<4x1x384xf32> to vector<4x384xf32>
    %cst_49 = arith.constant dense<0.000000e+00> : vector<4x384xf32>
    %131 = tpu.matmul %96, %26, %cst_49 {dimension_numbers = #tpu.dot_dimension_numbers<[1], [0], [0], [1], [0, 0, 1, 1], [], []>} : vector<4x128xf32>, vector<128x384xf32>, vector<4x384xf32> -> vector<4x384xf32>
    %132 = vector.extract_strided_slice %130 {offsets = [0, 0], sizes = [4, 128], strides = [1, 1]} : vector<4x384xf32> to vector<4x128xf32>
    %133 = vector.extract_strided_slice %131 {offsets = [0, 0], sizes = [4, 128], strides = [1, 1]} : vector<4x384xf32> to vector<4x128xf32>
    %134 = arith.addf %132, %133 : vector<4x128xf32>
    %135 = arith.negf %134 : vector<4x128xf32>
    %136 = math.exp %135 : vector<4x128xf32>
    %cst_50 = arith.constant 1.000000e+00 : f32
    %137 = vector.broadcast %cst_50 : f32 to vector<4x128xf32>
    %138 = arith.addf %137, %136 : vector<4x128xf32>
    %139 = arith.divf %137, %138 : vector<4x128xf32>
    %140 = vector.extract_strided_slice %130 {offsets = [0, 128], sizes = [4, 128], strides = [1, 1]} : vector<4x384xf32> to vector<4x128xf32>
    %141 = vector.extract_strided_slice %131 {offsets = [0, 128], sizes = [4, 128], strides = [1, 1]} : vector<4x384xf32> to vector<4x128xf32>
    %142 = arith.addf %140, %141 : vector<4x128xf32>
    %143 = arith.negf %142 : vector<4x128xf32>
    %144 = math.exp %143 : vector<4x128xf32>
    %cst_51 = arith.constant 1.000000e+00 : f32
    %145 = vector.broadcast %cst_51 : f32 to vector<4x128xf32>
    %146 = arith.addf %145, %144 : vector<4x128xf32>
    %147 = arith.divf %145, %146 : vector<4x128xf32>
    %148 = vector.extract_strided_slice %130 {offsets = [0, 256], sizes = [4, 128], strides = [1, 1]} : vector<4x384xf32> to vector<4x128xf32>
    %149 = vector.extract_strided_slice %131 {offsets = [0, 256], sizes = [4, 128], strides = [1, 1]} : vector<4x384xf32> to vector<4x128xf32>
    %150 = arith.addf %149, %32 : vector<4x128xf32>
    %151 = arith.mulf %139, %150 : vector<4x128xf32>
    %152 = arith.addf %148, %151 : vector<4x128xf32>
    %153 = math.tanh %152 : vector<4x128xf32>
    %cst_52 = arith.constant 1.000000e+00 : f32
    %154 = vector.broadcast %cst_52 : f32 to vector<4x128xf32>
    %155 = arith.subf %154, %147 : vector<4x128xf32>
    %156 = arith.mulf %155, %153 : vector<4x128xf32>
    %157 = arith.mulf %147, %96 : vector<4x128xf32>
    %158 = arith.addf %156, %157 : vector<4x128xf32>
    %159 = arith.addf %97, %128 : vector<4x128xf32>
    %160 = arith.addf %98, %158 : vector<4x128xf32>
    %161 = vector.extract_strided_slice %16 {offsets = [0, 2, 0], sizes = [4, 1, 384], strides = [1, 1, 1]} : vector<4x8x384xf32> to vector<4x1x384xf32>
    %162 = vector.shape_cast %161 : vector<4x1x384xf32> to vector<4x384xf32>
    %cst_53 = arith.constant dense<0.000000e+00> : vector<4x384xf32>
    %163 = tpu.matmul %128, %25, %cst_53 {dimension_numbers = #tpu.dot_dimension_numbers<[1], [0], [0], [1], [0, 0, 1, 1], [], []>} : vector<4x128xf32>, vector<128x384xf32>, vector<4x384xf32> -> vector<4x384xf32>
    %164 = vector.extract_strided_slice %162 {offsets = [0, 0], sizes = [4, 128], strides = [1, 1]} : vector<4x384xf32> to vector<4x128xf32>
    %165 = vector.extract_strided_slice %163 {offsets = [0, 0], sizes = [4, 128], strides = [1, 1]} : vector<4x384xf32> to vector<4x128xf32>
    %166 = arith.addf %164, %165 : vector<4x128xf32>
    %167 = arith.negf %166 : vector<4x128xf32>
    %168 = math.exp %167 : vector<4x128xf32>
    %cst_54 = arith.constant 1.000000e+00 : f32
    %169 = vector.broadcast %cst_54 : f32 to vector<4x128xf32>
    %170 = arith.addf %169, %168 : vector<4x128xf32>
    %171 = arith.divf %169, %170 : vector<4x128xf32>
    %172 = vector.extract_strided_slice %162 {offsets = [0, 128], sizes = [4, 128], strides = [1, 1]} : vector<4x384xf32> to vector<4x128xf32>
    %173 = vector.extract_strided_slice %163 {offsets = [0, 128], sizes = [4, 128], strides = [1, 1]} : vector<4x384xf32> to vector<4x128xf32>
    %174 = arith.addf %172, %173 : vector<4x128xf32>
    %175 = arith.negf %174 : vector<4x128xf32>
    %176 = math.exp %175 : vector<4x128xf32>
    %cst_55 = arith.constant 1.000000e+00 : f32
    %177 = vector.broadcast %cst_55 : f32 to vector<4x128xf32>
    %178 = arith.addf %177, %176 : vector<4x128xf32>
    %179 = arith.divf %177, %178 : vector<4x128xf32>
    %180 = vector.extract_strided_slice %162 {offsets = [0, 256], sizes = [4, 128], strides = [1, 1]} : vector<4x384xf32> to vector<4x128xf32>
    %181 = vector.extract_strided_slice %163 {offsets = [0, 256], sizes = [4, 128], strides = [1, 1]} : vector<4x384xf32> to vector<4x128xf32>
    %182 = arith.addf %181, %29 : vector<4x128xf32>
    %183 = arith.mulf %171, %182 : vector<4x128xf32>
    %184 = arith.addf %180, %183 : vector<4x128xf32>
    %185 = math.tanh %184 : vector<4x128xf32>
    %cst_56 = arith.constant 1.000000e+00 : f32
    %186 = vector.broadcast %cst_56 : f32 to vector<4x128xf32>
    %187 = arith.subf %186, %179 : vector<4x128xf32>
    %188 = arith.mulf %187, %185 : vector<4x128xf32>
    %189 = arith.mulf %179, %128 : vector<4x128xf32>
    %190 = arith.addf %188, %189 : vector<4x128xf32>
    %191 = vector.extract_strided_slice %24 {offsets = [0, 5, 0], sizes = [4, 1, 384], strides = [1, 1, 1]} : vector<4x8x384xf32> to vector<4x1x384xf32>
    %192 = vector.shape_cast %191 : vector<4x1x384xf32> to vector<4x384xf32>
    %cst_57 = arith.constant dense<0.000000e+00> : vector<4x384xf32>
    %193 = tpu.matmul %158, %26, %cst_57 {dimension_numbers = #tpu.dot_dimension_numbers<[1], [0], [0], [1], [0, 0, 1, 1], [], []>} : vector<4x128xf32>, vector<128x384xf32>, vector<4x384xf32> -> vector<4x384xf32>
    %194 = vector.extract_strided_slice %192 {offsets = [0, 0], sizes = [4, 128], strides = [1, 1]} : vector<4x384xf32> to vector<4x128xf32>
    %195 = vector.extract_strided_slice %193 {offsets = [0, 0], sizes = [4, 128], strides = [1, 1]} : vector<4x384xf32> to vector<4x128xf32>
    %196 = arith.addf %194, %195 : vector<4x128xf32>
    %197 = arith.negf %196 : vector<4x128xf32>
    %198 = math.exp %197 : vector<4x128xf32>
    %cst_58 = arith.constant 1.000000e+00 : f32
    %199 = vector.broadcast %cst_58 : f32 to vector<4x128xf32>
    %200 = arith.addf %199, %198 : vector<4x128xf32>
    %201 = arith.divf %199, %200 : vector<4x128xf32>
    %202 = vector.extract_strided_slice %192 {offsets = [0, 128], sizes = [4, 128], strides = [1, 1]} : vector<4x384xf32> to vector<4x128xf32>
    %203 = vector.extract_strided_slice %193 {offsets = [0, 128], sizes = [4, 128], strides = [1, 1]} : vector<4x384xf32> to vector<4x128xf32>
    %204 = arith.addf %202, %203 : vector<4x128xf32>
    %205 = arith.negf %204 : vector<4x128xf32>
    %206 = math.exp %205 : vector<4x128xf32>
    %cst_59 = arith.constant 1.000000e+00 : f32
    %207 = vector.broadcast %cst_59 : f32 to vector<4x128xf32>
    %208 = arith.addf %207, %206 : vector<4x128xf32>
    %209 = arith.divf %207, %208 : vector<4x128xf32>
    %210 = vector.extract_strided_slice %192 {offsets = [0, 256], sizes = [4, 128], strides = [1, 1]} : vector<4x384xf32> to vector<4x128xf32>
    %211 = vector.extract_strided_slice %193 {offsets = [0, 256], sizes = [4, 128], strides = [1, 1]} : vector<4x384xf32> to vector<4x128xf32>
    %212 = arith.addf %211, %32 : vector<4x128xf32>
    %213 = arith.mulf %201, %212 : vector<4x128xf32>
    %214 = arith.addf %210, %213 : vector<4x128xf32>
    %215 = math.tanh %214 : vector<4x128xf32>
    %cst_60 = arith.constant 1.000000e+00 : f32
    %216 = vector.broadcast %cst_60 : f32 to vector<4x128xf32>
    %217 = arith.subf %216, %209 : vector<4x128xf32>
    %218 = arith.mulf %217, %215 : vector<4x128xf32>
    %219 = arith.mulf %209, %158 : vector<4x128xf32>
    %220 = arith.addf %218, %219 : vector<4x128xf32>
    %221 = arith.addf %159, %190 : vector<4x128xf32>
    %222 = arith.addf %160, %220 : vector<4x128xf32>
    %223 = vector.extract_strided_slice %16 {offsets = [0, 3, 0], sizes = [4, 1, 384], strides = [1, 1, 1]} : vector<4x8x384xf32> to vector<4x1x384xf32>
    %224 = vector.shape_cast %223 : vector<4x1x384xf32> to vector<4x384xf32>
    %cst_61 = arith.constant dense<0.000000e+00> : vector<4x384xf32>
    %225 = tpu.matmul %190, %25, %cst_61 {dimension_numbers = #tpu.dot_dimension_numbers<[1], [0], [0], [1], [0, 0, 1, 1], [], []>} : vector<4x128xf32>, vector<128x384xf32>, vector<4x384xf32> -> vector<4x384xf32>
    %226 = vector.extract_strided_slice %224 {offsets = [0, 0], sizes = [4, 128], strides = [1, 1]} : vector<4x384xf32> to vector<4x128xf32>
    %227 = vector.extract_strided_slice %225 {offsets = [0, 0], sizes = [4, 128], strides = [1, 1]} : vector<4x384xf32> to vector<4x128xf32>
    %228 = arith.addf %226, %227 : vector<4x128xf32>
    %229 = arith.negf %228 : vector<4x128xf32>
    %230 = math.exp %229 : vector<4x128xf32>
    %cst_62 = arith.constant 1.000000e+00 : f32
    %231 = vector.broadcast %cst_62 : f32 to vector<4x128xf32>
    %232 = arith.addf %231, %230 : vector<4x128xf32>
    %233 = arith.divf %231, %232 : vector<4x128xf32>
    %234 = vector.extract_strided_slice %224 {offsets = [0, 128], sizes = [4, 128], strides = [1, 1]} : vector<4x384xf32> to vector<4x128xf32>
    %235 = vector.extract_strided_slice %225 {offsets = [0, 128], sizes = [4, 128], strides = [1, 1]} : vector<4x384xf32> to vector<4x128xf32>
    %236 = arith.addf %234, %235 : vector<4x128xf32>
    %237 = arith.negf %236 : vector<4x128xf32>
    %238 = math.exp %237 : vector<4x128xf32>
    %cst_63 = arith.constant 1.000000e+00 : f32
    %239 = vector.broadcast %cst_63 : f32 to vector<4x128xf32>
    %240 = arith.addf %239, %238 : vector<4x128xf32>
    %241 = arith.divf %239, %240 : vector<4x128xf32>
    %242 = vector.extract_strided_slice %224 {offsets = [0, 256], sizes = [4, 128], strides = [1, 1]} : vector<4x384xf32> to vector<4x128xf32>
    %243 = vector.extract_strided_slice %225 {offsets = [0, 256], sizes = [4, 128], strides = [1, 1]} : vector<4x384xf32> to vector<4x128xf32>
    %244 = arith.addf %243, %29 : vector<4x128xf32>
    %245 = arith.mulf %233, %244 : vector<4x128xf32>
    %246 = arith.addf %242, %245 : vector<4x128xf32>
    %247 = math.tanh %246 : vector<4x128xf32>
    %cst_64 = arith.constant 1.000000e+00 : f32
    %248 = vector.broadcast %cst_64 : f32 to vector<4x128xf32>
    %249 = arith.subf %248, %241 : vector<4x128xf32>
    %250 = arith.mulf %249, %247 : vector<4x128xf32>
    %251 = arith.mulf %241, %190 : vector<4x128xf32>
    %252 = arith.addf %250, %251 : vector<4x128xf32>
    %253 = vector.extract_strided_slice %24 {offsets = [0, 4, 0], sizes = [4, 1, 384], strides = [1, 1, 1]} : vector<4x8x384xf32> to vector<4x1x384xf32>
    %254 = vector.shape_cast %253 : vector<4x1x384xf32> to vector<4x384xf32>
    %cst_65 = arith.constant dense<0.000000e+00> : vector<4x384xf32>
    %255 = tpu.matmul %220, %26, %cst_65 {dimension_numbers = #tpu.dot_dimension_numbers<[1], [0], [0], [1], [0, 0, 1, 1], [], []>} : vector<4x128xf32>, vector<128x384xf32>, vector<4x384xf32> -> vector<4x384xf32>
    %256 = vector.extract_strided_slice %254 {offsets = [0, 0], sizes = [4, 128], strides = [1, 1]} : vector<4x384xf32> to vector<4x128xf32>
    %257 = vector.extract_strided_slice %255 {offsets = [0, 0], sizes = [4, 128], strides = [1, 1]} : vector<4x384xf32> to vector<4x128xf32>
    %258 = arith.addf %256, %257 : vector<4x128xf32>
    %259 = arith.negf %258 : vector<4x128xf32>
    %260 = math.exp %259 : vector<4x128xf32>
    %cst_66 = arith.constant 1.000000e+00 : f32
    %261 = vector.broadcast %cst_66 : f32 to vector<4x128xf32>
    %262 = arith.addf %261, %260 : vector<4x128xf32>
    %263 = arith.divf %261, %262 : vector<4x128xf32>
    %264 = vector.extract_strided_slice %254 {offsets = [0, 128], sizes = [4, 128], strides = [1, 1]} : vector<4x384xf32> to vector<4x128xf32>
    %265 = vector.extract_strided_slice %255 {offsets = [0, 128], sizes = [4, 128], strides = [1, 1]} : vector<4x384xf32> to vector<4x128xf32>
    %266 = arith.addf %264, %265 : vector<4x128xf32>
    %267 = arith.negf %266 : vector<4x128xf32>
    %268 = math.exp %267 : vector<4x128xf32>
    %cst_67 = arith.constant 1.000000e+00 : f32
    %269 = vector.broadcast %cst_67 : f32 to vector<4x128xf32>
    %270 = arith.addf %269, %268 : vector<4x128xf32>
    %271 = arith.divf %269, %270 : vector<4x128xf32>
    %272 = vector.extract_strided_slice %254 {offsets = [0, 256], sizes = [4, 128], strides = [1, 1]} : vector<4x384xf32> to vector<4x128xf32>
    %273 = vector.extract_strided_slice %255 {offsets = [0, 256], sizes = [4, 128], strides = [1, 1]} : vector<4x384xf32> to vector<4x128xf32>
    %274 = arith.addf %273, %32 : vector<4x128xf32>
    %275 = arith.mulf %263, %274 : vector<4x128xf32>
    %276 = arith.addf %272, %275 : vector<4x128xf32>
    %277 = math.tanh %276 : vector<4x128xf32>
    %cst_68 = arith.constant 1.000000e+00 : f32
    %278 = vector.broadcast %cst_68 : f32 to vector<4x128xf32>
    %279 = arith.subf %278, %271 : vector<4x128xf32>
    %280 = arith.mulf %279, %277 : vector<4x128xf32>
    %281 = arith.mulf %271, %220 : vector<4x128xf32>
    %282 = arith.addf %280, %281 : vector<4x128xf32>
    %283 = arith.addf %221, %252 : vector<4x128xf32>
    %284 = arith.addf %222, %282 : vector<4x128xf32>
    %285 = vector.extract_strided_slice %16 {offsets = [0, 4, 0], sizes = [4, 1, 384], strides = [1, 1, 1]} : vector<4x8x384xf32> to vector<4x1x384xf32>
    %286 = vector.shape_cast %285 : vector<4x1x384xf32> to vector<4x384xf32>
    %cst_69 = arith.constant dense<0.000000e+00> : vector<4x384xf32>
    %287 = tpu.matmul %252, %25, %cst_69 {dimension_numbers = #tpu.dot_dimension_numbers<[1], [0], [0], [1], [0, 0, 1, 1], [], []>} : vector<4x128xf32>, vector<128x384xf32>, vector<4x384xf32> -> vector<4x384xf32>
    %288 = vector.extract_strided_slice %286 {offsets = [0, 0], sizes = [4, 128], strides = [1, 1]} : vector<4x384xf32> to vector<4x128xf32>
    %289 = vector.extract_strided_slice %287 {offsets = [0, 0], sizes = [4, 128], strides = [1, 1]} : vector<4x384xf32> to vector<4x128xf32>
    %290 = arith.addf %288, %289 : vector<4x128xf32>
    %291 = arith.negf %290 : vector<4x128xf32>
    %292 = math.exp %291 : vector<4x128xf32>
    %cst_70 = arith.constant 1.000000e+00 : f32
    %293 = vector.broadcast %cst_70 : f32 to vector<4x128xf32>
    %294 = arith.addf %293, %292 : vector<4x128xf32>
    %295 = arith.divf %293, %294 : vector<4x128xf32>
    %296 = vector.extract_strided_slice %286 {offsets = [0, 128], sizes = [4, 128], strides = [1, 1]} : vector<4x384xf32> to vector<4x128xf32>
    %297 = vector.extract_strided_slice %287 {offsets = [0, 128], sizes = [4, 128], strides = [1, 1]} : vector<4x384xf32> to vector<4x128xf32>
    %298 = arith.addf %296, %297 : vector<4x128xf32>
    %299 = arith.negf %298 : vector<4x128xf32>
    %300 = math.exp %299 : vector<4x128xf32>
    %cst_71 = arith.constant 1.000000e+00 : f32
    %301 = vector.broadcast %cst_71 : f32 to vector<4x128xf32>
    %302 = arith.addf %301, %300 : vector<4x128xf32>
    %303 = arith.divf %301, %302 : vector<4x128xf32>
    %304 = vector.extract_strided_slice %286 {offsets = [0, 256], sizes = [4, 128], strides = [1, 1]} : vector<4x384xf32> to vector<4x128xf32>
    %305 = vector.extract_strided_slice %287 {offsets = [0, 256], sizes = [4, 128], strides = [1, 1]} : vector<4x384xf32> to vector<4x128xf32>
    %306 = arith.addf %305, %29 : vector<4x128xf32>
    %307 = arith.mulf %295, %306 : vector<4x128xf32>
    %308 = arith.addf %304, %307 : vector<4x128xf32>
    %309 = math.tanh %308 : vector<4x128xf32>
    %cst_72 = arith.constant 1.000000e+00 : f32
    %310 = vector.broadcast %cst_72 : f32 to vector<4x128xf32>
    %311 = arith.subf %310, %303 : vector<4x128xf32>
    %312 = arith.mulf %311, %309 : vector<4x128xf32>
    %313 = arith.mulf %303, %252 : vector<4x128xf32>
    %314 = arith.addf %312, %313 : vector<4x128xf32>
    %315 = vector.extract_strided_slice %24 {offsets = [0, 3, 0], sizes = [4, 1, 384], strides = [1, 1, 1]} : vector<4x8x384xf32> to vector<4x1x384xf32>
    %316 = vector.shape_cast %315 : vector<4x1x384xf32> to vector<4x384xf32>
    %cst_73 = arith.constant dense<0.000000e+00> : vector<4x384xf32>
    %317 = tpu.matmul %282, %26, %cst_73 {dimension_numbers = #tpu.dot_dimension_numbers<[1], [0], [0], [1], [0, 0, 1, 1], [], []>} : vector<4x128xf32>, vector<128x384xf32>, vector<4x384xf32> -> vector<4x384xf32>
    %318 = vector.extract_strided_slice %316 {offsets = [0, 0], sizes = [4, 128], strides = [1, 1]} : vector<4x384xf32> to vector<4x128xf32>
    %319 = vector.extract_strided_slice %317 {offsets = [0, 0], sizes = [4, 128], strides = [1, 1]} : vector<4x384xf32> to vector<4x128xf32>
    %320 = arith.addf %318, %319 : vector<4x128xf32>
    %321 = arith.negf %320 : vector<4x128xf32>
    %322 = math.exp %321 : vector<4x128xf32>
    %cst_74 = arith.constant 1.000000e+00 : f32
    %323 = vector.broadcast %cst_74 : f32 to vector<4x128xf32>
    %324 = arith.addf %323, %322 : vector<4x128xf32>
    %325 = arith.divf %323, %324 : vector<4x128xf32>
    %326 = vector.extract_strided_slice %316 {offsets = [0, 128], sizes = [4, 128], strides = [1, 1]} : vector<4x384xf32> to vector<4x128xf32>
    %327 = vector.extract_strided_slice %317 {offsets = [0, 128], sizes = [4, 128], strides = [1, 1]} : vector<4x384xf32> to vector<4x128xf32>
    %328 = arith.addf %326, %327 : vector<4x128xf32>
    %329 = arith.negf %328 : vector<4x128xf32>
    %330 = math.exp %329 : vector<4x128xf32>
    %cst_75 = arith.constant 1.000000e+00 : f32
    %331 = vector.broadcast %cst_75 : f32 to vector<4x128xf32>
    %332 = arith.addf %331, %330 : vector<4x128xf32>
    %333 = arith.divf %331, %332 : vector<4x128xf32>
    %334 = vector.extract_strided_slice %316 {offsets = [0, 256], sizes = [4, 128], strides = [1, 1]} : vector<4x384xf32> to vector<4x128xf32>
    %335 = vector.extract_strided_slice %317 {offsets = [0, 256], sizes = [4, 128], strides = [1, 1]} : vector<4x384xf32> to vector<4x128xf32>
    %336 = arith.addf %335, %32 : vector<4x128xf32>
    %337 = arith.mulf %325, %336 : vector<4x128xf32>
    %338 = arith.addf %334, %337 : vector<4x128xf32>
    %339 = math.tanh %338 : vector<4x128xf32>
    %cst_76 = arith.constant 1.000000e+00 : f32
    %340 = vector.broadcast %cst_76 : f32 to vector<4x128xf32>
    %341 = arith.subf %340, %333 : vector<4x128xf32>
    %342 = arith.mulf %341, %339 : vector<4x128xf32>
    %343 = arith.mulf %333, %282 : vector<4x128xf32>
    %344 = arith.addf %342, %343 : vector<4x128xf32>
    %345 = arith.addf %283, %314 : vector<4x128xf32>
    %346 = arith.addf %284, %344 : vector<4x128xf32>
    %347 = vector.extract_strided_slice %16 {offsets = [0, 5, 0], sizes = [4, 1, 384], strides = [1, 1, 1]} : vector<4x8x384xf32> to vector<4x1x384xf32>
    %348 = vector.shape_cast %347 : vector<4x1x384xf32> to vector<4x384xf32>
    %cst_77 = arith.constant dense<0.000000e+00> : vector<4x384xf32>
    %349 = tpu.matmul %314, %25, %cst_77 {dimension_numbers = #tpu.dot_dimension_numbers<[1], [0], [0], [1], [0, 0, 1, 1], [], []>} : vector<4x128xf32>, vector<128x384xf32>, vector<4x384xf32> -> vector<4x384xf32>
    %350 = vector.extract_strided_slice %348 {offsets = [0, 0], sizes = [4, 128], strides = [1, 1]} : vector<4x384xf32> to vector<4x128xf32>
    %351 = vector.extract_strided_slice %349 {offsets = [0, 0], sizes = [4, 128], strides = [1, 1]} : vector<4x384xf32> to vector<4x128xf32>
    %352 = arith.addf %350, %351 : vector<4x128xf32>
    %353 = arith.negf %352 : vector<4x128xf32>
    %354 = math.exp %353 : vector<4x128xf32>
    %cst_78 = arith.constant 1.000000e+00 : f32
    %355 = vector.broadcast %cst_78 : f32 to vector<4x128xf32>
    %356 = arith.addf %355, %354 : vector<4x128xf32>
    %357 = arith.divf %355, %356 : vector<4x128xf32>
    %358 = vector.extract_strided_slice %348 {offsets = [0, 128], sizes = [4, 128], strides = [1, 1]} : vector<4x384xf32> to vector<4x128xf32>
    %359 = vector.extract_strided_slice %349 {offsets = [0, 128], sizes = [4, 128], strides = [1, 1]} : vector<4x384xf32> to vector<4x128xf32>
    %360 = arith.addf %358, %359 : vector<4x128xf32>
    %361 = arith.negf %360 : vector<4x128xf32>
    %362 = math.exp %361 : vector<4x128xf32>
    %cst_79 = arith.constant 1.000000e+00 : f32
    %363 = vector.broadcast %cst_79 : f32 to vector<4x128xf32>
    %364 = arith.addf %363, %362 : vector<4x128xf32>
    %365 = arith.divf %363, %364 : vector<4x128xf32>
    %366 = vector.extract_strided_slice %348 {offsets = [0, 256], sizes = [4, 128], strides = [1, 1]} : vector<4x384xf32> to vector<4x128xf32>
    %367 = vector.extract_strided_slice %349 {offsets = [0, 256], sizes = [4, 128], strides = [1, 1]} : vector<4x384xf32> to vector<4x128xf32>
    %368 = arith.addf %367, %29 : vector<4x128xf32>
    %369 = arith.mulf %357, %368 : vector<4x128xf32>
    %370 = arith.addf %366, %369 : vector<4x128xf32>
    %371 = math.tanh %370 : vector<4x128xf32>
    %cst_80 = arith.constant 1.000000e+00 : f32
    %372 = vector.broadcast %cst_80 : f32 to vector<4x128xf32>
    %373 = arith.subf %372, %365 : vector<4x128xf32>
    %374 = arith.mulf %373, %371 : vector<4x128xf32>
    %375 = arith.mulf %365, %314 : vector<4x128xf32>
    %376 = arith.addf %374, %375 : vector<4x128xf32>
    %377 = vector.extract_strided_slice %24 {offsets = [0, 2, 0], sizes = [4, 1, 384], strides = [1, 1, 1]} : vector<4x8x384xf32> to vector<4x1x384xf32>
    %378 = vector.shape_cast %377 : vector<4x1x384xf32> to vector<4x384xf32>
    %cst_81 = arith.constant dense<0.000000e+00> : vector<4x384xf32>
    %379 = tpu.matmul %344, %26, %cst_81 {dimension_numbers = #tpu.dot_dimension_numbers<[1], [0], [0], [1], [0, 0, 1, 1], [], []>} : vector<4x128xf32>, vector<128x384xf32>, vector<4x384xf32> -> vector<4x384xf32>
    %380 = vector.extract_strided_slice %378 {offsets = [0, 0], sizes = [4, 128], strides = [1, 1]} : vector<4x384xf32> to vector<4x128xf32>
    %381 = vector.extract_strided_slice %379 {offsets = [0, 0], sizes = [4, 128], strides = [1, 1]} : vector<4x384xf32> to vector<4x128xf32>
    %382 = arith.addf %380, %381 : vector<4x128xf32>
    %383 = arith.negf %382 : vector<4x128xf32>
    %384 = math.exp %383 : vector<4x128xf32>
    %cst_82 = arith.constant 1.000000e+00 : f32
    %385 = vector.broadcast %cst_82 : f32 to vector<4x128xf32>
    %386 = arith.addf %385, %384 : vector<4x128xf32>
    %387 = arith.divf %385, %386 : vector<4x128xf32>
    %388 = vector.extract_strided_slice %378 {offsets = [0, 128], sizes = [4, 128], strides = [1, 1]} : vector<4x384xf32> to vector<4x128xf32>
    %389 = vector.extract_strided_slice %379 {offsets = [0, 128], sizes = [4, 128], strides = [1, 1]} : vector<4x384xf32> to vector<4x128xf32>
    %390 = arith.addf %388, %389 : vector<4x128xf32>
    %391 = arith.negf %390 : vector<4x128xf32>
    %392 = math.exp %391 : vector<4x128xf32>
    %cst_83 = arith.constant 1.000000e+00 : f32
    %393 = vector.broadcast %cst_83 : f32 to vector<4x128xf32>
    %394 = arith.addf %393, %392 : vector<4x128xf32>
    %395 = arith.divf %393, %394 : vector<4x128xf32>
    %396 = vector.extract_strided_slice %378 {offsets = [0, 256], sizes = [4, 128], strides = [1, 1]} : vector<4x384xf32> to vector<4x128xf32>
    %397 = vector.extract_strided_slice %379 {offsets = [0, 256], sizes = [4, 128], strides = [1, 1]} : vector<4x384xf32> to vector<4x128xf32>
    %398 = arith.addf %397, %32 : vector<4x128xf32>
    %399 = arith.mulf %387, %398 : vector<4x128xf32>
    %400 = arith.addf %396, %399 : vector<4x128xf32>
    %401 = math.tanh %400 : vector<4x128xf32>
    %cst_84 = arith.constant 1.000000e+00 : f32
    %402 = vector.broadcast %cst_84 : f32 to vector<4x128xf32>
    %403 = arith.subf %402, %395 : vector<4x128xf32>
    %404 = arith.mulf %403, %401 : vector<4x128xf32>
    %405 = arith.mulf %395, %344 : vector<4x128xf32>
    %406 = arith.addf %404, %405 : vector<4x128xf32>
    %407 = arith.addf %345, %376 : vector<4x128xf32>
    %408 = arith.addf %346, %406 : vector<4x128xf32>
    %409 = vector.extract_strided_slice %16 {offsets = [0, 6, 0], sizes = [4, 1, 384], strides = [1, 1, 1]} : vector<4x8x384xf32> to vector<4x1x384xf32>
    %410 = vector.shape_cast %409 : vector<4x1x384xf32> to vector<4x384xf32>
    %cst_85 = arith.constant dense<0.000000e+00> : vector<4x384xf32>
    %411 = tpu.matmul %376, %25, %cst_85 {dimension_numbers = #tpu.dot_dimension_numbers<[1], [0], [0], [1], [0, 0, 1, 1], [], []>} : vector<4x128xf32>, vector<128x384xf32>, vector<4x384xf32> -> vector<4x384xf32>
    %412 = vector.extract_strided_slice %410 {offsets = [0, 0], sizes = [4, 128], strides = [1, 1]} : vector<4x384xf32> to vector<4x128xf32>
    %413 = vector.extract_strided_slice %411 {offsets = [0, 0], sizes = [4, 128], strides = [1, 1]} : vector<4x384xf32> to vector<4x128xf32>
    %414 = arith.addf %412, %413 : vector<4x128xf32>
    %415 = arith.negf %414 : vector<4x128xf32>
    %416 = math.exp %415 : vector<4x128xf32>
    %cst_86 = arith.constant 1.000000e+00 : f32
    %417 = vector.broadcast %cst_86 : f32 to vector<4x128xf32>
    %418 = arith.addf %417, %416 : vector<4x128xf32>
    %419 = arith.divf %417, %418 : vector<4x128xf32>
    %420 = vector.extract_strided_slice %410 {offsets = [0, 128], sizes = [4, 128], strides = [1, 1]} : vector<4x384xf32> to vector<4x128xf32>
    %421 = vector.extract_strided_slice %411 {offsets = [0, 128], sizes = [4, 128], strides = [1, 1]} : vector<4x384xf32> to vector<4x128xf32>
    %422 = arith.addf %420, %421 : vector<4x128xf32>
    %423 = arith.negf %422 : vector<4x128xf32>
    %424 = math.exp %423 : vector<4x128xf32>
    %cst_87 = arith.constant 1.000000e+00 : f32
    %425 = vector.broadcast %cst_87 : f32 to vector<4x128xf32>
    %426 = arith.addf %425, %424 : vector<4x128xf32>
    %427 = arith.divf %425, %426 : vector<4x128xf32>
    %428 = vector.extract_strided_slice %410 {offsets = [0, 256], sizes = [4, 128], strides = [1, 1]} : vector<4x384xf32> to vector<4x128xf32>
    %429 = vector.extract_strided_slice %411 {offsets = [0, 256], sizes = [4, 128], strides = [1, 1]} : vector<4x384xf32> to vector<4x128xf32>
    %430 = arith.addf %429, %29 : vector<4x128xf32>
    %431 = arith.mulf %419, %430 : vector<4x128xf32>
    %432 = arith.addf %428, %431 : vector<4x128xf32>
    %433 = math.tanh %432 : vector<4x128xf32>
    %cst_88 = arith.constant 1.000000e+00 : f32
    %434 = vector.broadcast %cst_88 : f32 to vector<4x128xf32>
    %435 = arith.subf %434, %427 : vector<4x128xf32>
    %436 = arith.mulf %435, %433 : vector<4x128xf32>
    %437 = arith.mulf %427, %376 : vector<4x128xf32>
    %438 = arith.addf %436, %437 : vector<4x128xf32>
    %439 = vector.extract_strided_slice %24 {offsets = [0, 1, 0], sizes = [4, 1, 384], strides = [1, 1, 1]} : vector<4x8x384xf32> to vector<4x1x384xf32>
    %440 = vector.shape_cast %439 : vector<4x1x384xf32> to vector<4x384xf32>
    %cst_89 = arith.constant dense<0.000000e+00> : vector<4x384xf32>
    %441 = tpu.matmul %406, %26, %cst_89 {dimension_numbers = #tpu.dot_dimension_numbers<[1], [0], [0], [1], [0, 0, 1, 1], [], []>} : vector<4x128xf32>, vector<128x384xf32>, vector<4x384xf32> -> vector<4x384xf32>
    %442 = vector.extract_strided_slice %440 {offsets = [0, 0], sizes = [4, 128], strides = [1, 1]} : vector<4x384xf32> to vector<4x128xf32>
    %443 = vector.extract_strided_slice %441 {offsets = [0, 0], sizes = [4, 128], strides = [1, 1]} : vector<4x384xf32> to vector<4x128xf32>
    %444 = arith.addf %442, %443 : vector<4x128xf32>
    %445 = arith.negf %444 : vector<4x128xf32>
    %446 = math.exp %445 : vector<4x128xf32>
    %cst_90 = arith.constant 1.000000e+00 : f32
    %447 = vector.broadcast %cst_90 : f32 to vector<4x128xf32>
    %448 = arith.addf %447, %446 : vector<4x128xf32>
    %449 = arith.divf %447, %448 : vector<4x128xf32>
    %450 = vector.extract_strided_slice %440 {offsets = [0, 128], sizes = [4, 128], strides = [1, 1]} : vector<4x384xf32> to vector<4x128xf32>
    %451 = vector.extract_strided_slice %441 {offsets = [0, 128], sizes = [4, 128], strides = [1, 1]} : vector<4x384xf32> to vector<4x128xf32>
    %452 = arith.addf %450, %451 : vector<4x128xf32>
    %453 = arith.negf %452 : vector<4x128xf32>
    %454 = math.exp %453 : vector<4x128xf32>
    %cst_91 = arith.constant 1.000000e+00 : f32
    %455 = vector.broadcast %cst_91 : f32 to vector<4x128xf32>
    %456 = arith.addf %455, %454 : vector<4x128xf32>
    %457 = arith.divf %455, %456 : vector<4x128xf32>
    %458 = vector.extract_strided_slice %440 {offsets = [0, 256], sizes = [4, 128], strides = [1, 1]} : vector<4x384xf32> to vector<4x128xf32>
    %459 = vector.extract_strided_slice %441 {offsets = [0, 256], sizes = [4, 128], strides = [1, 1]} : vector<4x384xf32> to vector<4x128xf32>
    %460 = arith.addf %459, %32 : vector<4x128xf32>
    %461 = arith.mulf %449, %460 : vector<4x128xf32>
    %462 = arith.addf %458, %461 : vector<4x128xf32>
    %463 = math.tanh %462 : vector<4x128xf32>
    %cst_92 = arith.constant 1.000000e+00 : f32
    %464 = vector.broadcast %cst_92 : f32 to vector<4x128xf32>
    %465 = arith.subf %464, %457 : vector<4x128xf32>
    %466 = arith.mulf %465, %463 : vector<4x128xf32>
    %467 = arith.mulf %457, %406 : vector<4x128xf32>
    %468 = arith.addf %466, %467 : vector<4x128xf32>
    %469 = arith.addf %407, %438 : vector<4x128xf32>
    %470 = arith.addf %408, %468 : vector<4x128xf32>
    %471 = vector.extract_strided_slice %16 {offsets = [0, 7, 0], sizes = [4, 1, 384], strides = [1, 1, 1]} : vector<4x8x384xf32> to vector<4x1x384xf32>
    %472 = vector.shape_cast %471 : vector<4x1x384xf32> to vector<4x384xf32>
    %cst_93 = arith.constant dense<0.000000e+00> : vector<4x384xf32>
    %473 = tpu.matmul %438, %25, %cst_93 {dimension_numbers = #tpu.dot_dimension_numbers<[1], [0], [0], [1], [0, 0, 1, 1], [], []>} : vector<4x128xf32>, vector<128x384xf32>, vector<4x384xf32> -> vector<4x384xf32>
    %474 = vector.extract_strided_slice %472 {offsets = [0, 0], sizes = [4, 128], strides = [1, 1]} : vector<4x384xf32> to vector<4x128xf32>
    %475 = vector.extract_strided_slice %473 {offsets = [0, 0], sizes = [4, 128], strides = [1, 1]} : vector<4x384xf32> to vector<4x128xf32>
    %476 = arith.addf %474, %475 : vector<4x128xf32>
    %477 = arith.negf %476 : vector<4x128xf32>
    %478 = math.exp %477 : vector<4x128xf32>
    %cst_94 = arith.constant 1.000000e+00 : f32
    %479 = vector.broadcast %cst_94 : f32 to vector<4x128xf32>
    %480 = arith.addf %479, %478 : vector<4x128xf32>
    %481 = arith.divf %479, %480 : vector<4x128xf32>
    %482 = vector.extract_strided_slice %472 {offsets = [0, 128], sizes = [4, 128], strides = [1, 1]} : vector<4x384xf32> to vector<4x128xf32>
    %483 = vector.extract_strided_slice %473 {offsets = [0, 128], sizes = [4, 128], strides = [1, 1]} : vector<4x384xf32> to vector<4x128xf32>
    %484 = arith.addf %482, %483 : vector<4x128xf32>
    %485 = arith.negf %484 : vector<4x128xf32>
    %486 = math.exp %485 : vector<4x128xf32>
    %cst_95 = arith.constant 1.000000e+00 : f32
    %487 = vector.broadcast %cst_95 : f32 to vector<4x128xf32>
    %488 = arith.addf %487, %486 : vector<4x128xf32>
    %489 = arith.divf %487, %488 : vector<4x128xf32>
    %490 = vector.extract_strided_slice %472 {offsets = [0, 256], sizes = [4, 128], strides = [1, 1]} : vector<4x384xf32> to vector<4x128xf32>
    %491 = vector.extract_strided_slice %473 {offsets = [0, 256], sizes = [4, 128], strides = [1, 1]} : vector<4x384xf32> to vector<4x128xf32>
    %492 = arith.addf %491, %29 : vector<4x128xf32>
    %493 = arith.mulf %481, %492 : vector<4x128xf32>
    %494 = arith.addf %490, %493 : vector<4x128xf32>
    %495 = math.tanh %494 : vector<4x128xf32>
    %cst_96 = arith.constant 1.000000e+00 : f32
    %496 = vector.broadcast %cst_96 : f32 to vector<4x128xf32>
    %497 = arith.subf %496, %489 : vector<4x128xf32>
    %498 = arith.mulf %497, %495 : vector<4x128xf32>
    %499 = arith.mulf %489, %438 : vector<4x128xf32>
    %500 = arith.addf %498, %499 : vector<4x128xf32>
    %501 = vector.extract_strided_slice %24 {offsets = [0, 0, 0], sizes = [4, 1, 384], strides = [1, 1, 1]} : vector<4x8x384xf32> to vector<4x1x384xf32>
    %502 = vector.shape_cast %501 : vector<4x1x384xf32> to vector<4x384xf32>
    %cst_97 = arith.constant dense<0.000000e+00> : vector<4x384xf32>
    %503 = tpu.matmul %468, %26, %cst_97 {dimension_numbers = #tpu.dot_dimension_numbers<[1], [0], [0], [1], [0, 0, 1, 1], [], []>} : vector<4x128xf32>, vector<128x384xf32>, vector<4x384xf32> -> vector<4x384xf32>
    %504 = vector.extract_strided_slice %502 {offsets = [0, 0], sizes = [4, 128], strides = [1, 1]} : vector<4x384xf32> to vector<4x128xf32>
    %505 = vector.extract_strided_slice %503 {offsets = [0, 0], sizes = [4, 128], strides = [1, 1]} : vector<4x384xf32> to vector<4x128xf32>
    %506 = arith.addf %504, %505 : vector<4x128xf32>
    %507 = arith.negf %506 : vector<4x128xf32>
    %508 = math.exp %507 : vector<4x128xf32>
    %cst_98 = arith.constant 1.000000e+00 : f32
    %509 = vector.broadcast %cst_98 : f32 to vector<4x128xf32>
    %510 = arith.addf %509, %508 : vector<4x128xf32>
    %511 = arith.divf %509, %510 : vector<4x128xf32>
    %512 = vector.extract_strided_slice %502 {offsets = [0, 128], sizes = [4, 128], strides = [1, 1]} : vector<4x384xf32> to vector<4x128xf32>
    %513 = vector.extract_strided_slice %503 {offsets = [0, 128], sizes = [4, 128], strides = [1, 1]} : vector<4x384xf32> to vector<4x128xf32>
    %514 = arith.addf %512, %513 : vector<4x128xf32>
    %515 = arith.negf %514 : vector<4x128xf32>
    %516 = math.exp %515 : vector<4x128xf32>
    %cst_99 = arith.constant 1.000000e+00 : f32
    %517 = vector.broadcast %cst_99 : f32 to vector<4x128xf32>
    %518 = arith.addf %517, %516 : vector<4x128xf32>
    %519 = arith.divf %517, %518 : vector<4x128xf32>
    %520 = vector.extract_strided_slice %502 {offsets = [0, 256], sizes = [4, 128], strides = [1, 1]} : vector<4x384xf32> to vector<4x128xf32>
    %521 = vector.extract_strided_slice %503 {offsets = [0, 256], sizes = [4, 128], strides = [1, 1]} : vector<4x384xf32> to vector<4x128xf32>
    %522 = arith.addf %521, %32 : vector<4x128xf32>
    %523 = arith.mulf %511, %522 : vector<4x128xf32>
    %524 = arith.addf %520, %523 : vector<4x128xf32>
    %525 = math.tanh %524 : vector<4x128xf32>
    %cst_100 = arith.constant 1.000000e+00 : f32
    %526 = vector.broadcast %cst_100 : f32 to vector<4x128xf32>
    %527 = arith.subf %526, %519 : vector<4x128xf32>
    %528 = arith.mulf %527, %525 : vector<4x128xf32>
    %529 = arith.mulf %519, %468 : vector<4x128xf32>
    %530 = arith.addf %528, %529 : vector<4x128xf32>
    %531 = arith.addf %469, %500 : vector<4x128xf32>
    %532 = arith.addf %470, %530 : vector<4x128xf32>
    %c0_101 = arith.constant 0 : index
    %c0_102 = arith.constant 0 : index
    %533 = vector.load %arg17[%c0_101, %c0_102] : memref<4x128xf32, #tpu.memory_space<vmem>>, vector<4x128xf32>
    tpu.vector_store %arg17[%c0_101, %c0_102], %500 {strides = array<i32>} : memref<4x128xf32, #tpu.memory_space<vmem>>, vector<4x128xf32>,
    %c0_103 = arith.constant 0 : index
    %c0_104 = arith.constant 0 : index
    %534 = vector.load %arg18[%c0_103, %c0_104] : memref<4x128xf32, #tpu.memory_space<vmem>>, vector<4x128xf32>
    tpu.vector_store %arg18[%c0_103, %c0_104], %530 {strides = array<i32>} : memref<4x128xf32, #tpu.memory_space<vmem>>, vector<4x128xf32>,
    %c0_105 = arith.constant 0 : index
    %c0_106 = arith.constant 0 : index
    %535 = vector.load %arg19[%c0_105, %c0_106] : memref<4x128xf32, #tpu.memory_space<vmem>>, vector<4x128xf32>
    tpu.vector_store %arg19[%c0_105, %c0_106], %531 {strides = array<i32>} : memref<4x128xf32, #tpu.memory_space<vmem>>, vector<4x128xf32>,
    %c0_107 = arith.constant 0 : index
    %c0_108 = arith.constant 0 : index
    %536 = vector.load %arg20[%c0_107, %c0_108] : memref<4x128xf32, #tpu.memory_space<vmem>>, vector<4x128xf32>
    tpu.vector_store %arg20[%c0_107, %c0_108], %532 {strides = array<i32>} : memref<4x128xf32, #tpu.memory_space<vmem>>, vector<4x128xf32>,
    %c1_i32 = arith.constant 1 : i32
    %537 = arith.cmpi eq, %arg0, %c1_i32 : i32
    %538 = arith.extui %537 : i1 to i32
    %c0_i32_109 = arith.constant 0 : i32
    %539 = arith.cmpi ne, %538, %c0_i32_109 : i32
    scf.if %539 {
      %cst_110 = arith.constant 6.250000e-02 : f32
      %540 = vector.broadcast %cst_110 : f32 to vector<4x128xf32>
      %541 = arith.mulf %531, %540 : vector<4x128xf32>
      %cst_111 = arith.constant 6.250000e-02 : f32
      %542 = vector.broadcast %cst_111 : f32 to vector<4x128xf32>
      %543 = arith.mulf %532, %542 : vector<4x128xf32>
      %544 = tpu.concatenate %541, %543 in 1 : vector<4x128xf32>, vector<4x128xf32> -> vector<4x256xf32>
      %545 = vector.extract_strided_slice %544 {offsets = [0, 0], sizes = [2, 256], strides = [1, 1]} : vector<4x256xf32> to vector<2x256xf32>
      %c0_112 = arith.constant 0 : index
      %c0_113 = arith.constant 0 : index
      %546 = vector.load %arg13[%c0_112, %c0_113] : memref<256x128xf32, #tpu.memory_space<vmem>>, vector<256x128xf32>
      %cst_114 = arith.constant dense<0.000000e+00> : vector<2x128xf32>
      %547 = tpu.matmul %545, %546, %cst_114 {dimension_numbers = #tpu.dot_dimension_numbers<[1], [0], [0], [1], [0, 0, 1, 1], [], []>} : vector<2x256xf32>, vector<256x128xf32>, vector<2x128xf32> -> vector<2x128xf32>
      %548 = vector.extract_strided_slice %544 {offsets = [2, 0], sizes = [2, 256], strides = [1, 1]} : vector<4x256xf32> to vector<2x256xf32>
      %c0_115 = arith.constant 0 : index
      %c0_116 = arith.constant 0 : index
      %549 = vector.load %arg14[%c0_115, %c0_116] : memref<256x128xf32, #tpu.memory_space<vmem>>, vector<256x128xf32>
      %cst_117 = arith.constant dense<0.000000e+00> : vector<2x128xf32>
      %550 = tpu.matmul %548, %549, %cst_117 {dimension_numbers = #tpu.dot_dimension_numbers<[1], [0], [0], [1], [0, 0, 1, 1], [], []>} : vector<2x256xf32>, vector<256x128xf32>, vector<2x128xf32> -> vector<2x128xf32>
      %551 = arith.addf %547, %550 : vector<2x128xf32>
      %c0_118 = arith.constant 0 : index
      %c0_119 = arith.constant 0 : index
      %552 = vector.load %arg15[%c0_118, %c0_119] : memref<1x128xf32, #tpu.memory_space<vmem>>, vector<1x128xf32>
      %553 = vector.broadcast %552 : vector<1x128xf32> to vector<2x128xf32>
      %554 = arith.addf %551, %553 : vector<2x128xf32>
      %c0_120 = arith.constant 0 : index
      %c0_121 = arith.constant 0 : index
      %555 = vector.load %arg16[%c0_120, %c0_121] : memref<2x128xf32, #tpu.memory_space<vmem>>, vector<2x128xf32>
      tpu.vector_store %arg16[%c0_120, %c0_121], %554 {strides = array<i32>} : memref<2x128xf32, #tpu.memory_space<vmem>>, vector<2x128xf32>,
    } else {
    }
    return
  }
  func.func @transform_0(%arg0: i32) -> (i32, i32, i32) {
    %c0_i32 = arith.constant 0 : i32
    %c0_i32_0 = arith.constant 0 : i32
    %c0_i32_1 = arith.constant 0 : i32
    return %c0_i32, %arg0, %c0_i32_0 : i32, i32, i32
  }
  func.func @transform_1(%arg0: i32) -> (i32, i32, i32) {
    %c0_i32 = arith.constant 0 : i32
    %c0_i32_0 = arith.constant 0 : i32
    %c0_i32_1 = arith.constant 0 : i32
    return %c0_i32, %arg0, %c0_i32_0 : i32, i32, i32
  }
  func.func @transform_2(%arg0: i32) -> (i32, i32, i32) {
    %c1_i32 = arith.constant 1 : i32
    %0 = arith.subi %c1_i32, %arg0 : i32
    %c0_i32 = arith.constant 0 : i32
    %c0_i32_0 = arith.constant 0 : i32
    %c0_i32_1 = arith.constant 0 : i32
    return %c0_i32, %0, %c0_i32_0 : i32, i32, i32
  }
  func.func @transform_3(%arg0: i32) -> (i32, i32, i32) {
    %c1_i32 = arith.constant 1 : i32
    %0 = arith.subi %c1_i32, %arg0 : i32
    %c0_i32 = arith.constant 0 : i32
    %c0_i32_0 = arith.constant 0 : i32
    %c0_i32_1 = arith.constant 0 : i32
    return %c0_i32, %0, %c0_i32_0 : i32, i32, i32
  }
  func.func @transform_4(%arg0: i32) -> (i32, i32) {
    %c0_i32 = arith.constant 0 : i32
    %c0_i32_0 = arith.constant 0 : i32
    %c0_i32_1 = arith.constant 0 : i32
    return %c0_i32, %c0_i32_0 : i32, i32
  }
  func.func @transform_5(%arg0: i32) -> (i32, i32) {
    %c0_i32 = arith.constant 0 : i32
    %c0_i32_0 = arith.constant 0 : i32
    %c0_i32_1 = arith.constant 0 : i32
    return %c0_i32, %c0_i32_0 : i32, i32
  }
  func.func @transform_6(%arg0: i32) -> (i32, i32) {
    %c0_i32 = arith.constant 0 : i32
    %c0_i32_0 = arith.constant 0 : i32
    %c0_i32_1 = arith.constant 0 : i32
    return %c0_i32, %c0_i32_0 : i32, i32
  }
  func.func @transform_7(%arg0: i32) -> (i32, i32) {
    %c0_i32 = arith.constant 0 : i32
    %c0_i32_0 = arith.constant 0 : i32
    %c0_i32_1 = arith.constant 0 : i32
    return %c0_i32, %c0_i32_0 : i32, i32
  }
  func.func @transform_8(%arg0: i32) -> (i32, i32) {
    %c0_i32 = arith.constant 0 : i32
    %c0_i32_0 = arith.constant 0 : i32
    %c0_i32_1 = arith.constant 0 : i32
    return %c0_i32, %c0_i32_0 : i32, i32
  }
  func.func @transform_9(%arg0: i32) -> (i32, i32) {
    %c0_i32 = arith.constant 0 : i32
    %c0_i32_0 = arith.constant 0 : i32
    %c0_i32_1 = arith.constant 0 : i32
    return %c0_i32, %c0_i32_0 : i32, i32
  }
  func.func @transform_10(%arg0: i32) -> (i32, i32) {
    %c0_i32 = arith.constant 0 : i32
    %c0_i32_0 = arith.constant 0 : i32
    %c0_i32_1 = arith.constant 0 : i32
    return %c0_i32, %c0_i32_0 : i32, i32
  }
  func.func @transform_11(%arg0: i32) -> (i32, i32) {
    %c0_i32 = arith.constant 0 : i32
    %c0_i32_0 = arith.constant 0 : i32
    %c0_i32_1 = arith.constant 0 : i32
    return %c0_i32, %c0_i32_0 : i32, i32
  }
  func.func @transform_12(%arg0: i32) -> (i32, i32) {
    %c0_i32 = arith.constant 0 : i32
    %c0_i32_0 = arith.constant 0 : i32
    %c0_i32_1 = arith.constant 0 : i32
    return %c0_i32, %c0_i32_0 : i32, i32
  }
  func.func @transform_13(%arg0: i32) -> (i32, i32) {
    %c0_i32 = arith.constant 0 : i32
    %c0_i32_0 = arith.constant 0 : i32
    %c0_i32_1 = arith.constant 0 : i32
    return %c0_i32, %c0_i32_0 : i32, i32
  }
  func.func @transform_14(%arg0: i32) -> (i32, i32) {
    %c0_i32 = arith.constant 0 : i32
    %c0_i32_0 = arith.constant 0 : i32
    %c0_i32_1 = arith.constant 0 : i32
    return %c0_i32, %c0_i32_0 : i32, i32
  }
  func.func @transform_15(%arg0: i32) -> (i32, i32) {
    %c0_i32 = arith.constant 0 : i32
    %c0_i32_0 = arith.constant 0 : i32
    %c0_i32_1 = arith.constant 0 : i32
    return %c0_i32, %c0_i32_0 : i32, i32
  }
}

</mosaic_0001>

<llo_original>
// kernel: siamese_forward.1
$region0: #{siamese_forward.1}
  #allocation0 [shape = 'u32[]', space=smem, size = 0x4, offset = 0x4, fixed_abs, tag = 'smem constant byte address 0x4 - core index']
  #allocation1 [shape = 'u32[144,128]{1,0:T(1,128)}', space=vmem, size = 0x12000, scoped, tag = 'internal scratch']
  #allocation2 [shape = 'f32[4,128]{1,0:T(4,128)}', space=vmem, size = 0x800, scoped, tag = 'scratch operand']
  #allocation3 [shape = 'f32[4,128]{1,0:T(4,128)}', space=vmem, size = 0x800, scoped, tag = 'scratch operand']
  #allocation4 [shape = 'f32[4,128]{1,0:T(4,128)}', space=vmem, size = 0x800, scoped, tag = 'scratch operand']
  #allocation5 [shape = 'f32[4,128]{1,0:T(4,128)}', space=vmem, size = 0x800, scoped, tag = 'scratch operand']
  %s0 = inlined_call_operand.vmem [shape: f32[2,16,768], index: 0, kind: input, shape index: {}, may-alias: {0,2}]
  %s1 = inlined_call_operand.vmem [shape: f32[2,16,768], index: 1, kind: input, shape index: {}, may-alias: {1,3}]
  %s2 = inlined_call_operand.vmem [shape: f32[2,16,768], index: 2, kind: input, shape index: {}, may-alias: {0,2}]
  %s3 = inlined_call_operand.vmem [shape: f32[2,16,768], index: 3, kind: input, shape index: {}, may-alias: {1,3}]
  %s4 = inlined_call_operand.hbm [shape: f32[768,384], index: 4, kind: input, shape index: {}]
  %s5 = inlined_call_operand.vmem [shape: f32[128,384], index: 5, kind: input, shape index: {}]
  %s6 = inlined_call_operand.vmem [shape: f32[1,384], index: 6, kind: input, shape index: {}]
  %s7 = inlined_call_operand.vmem [shape: f32[1,128], index: 7, kind: input, shape index: {}]
  %s8 = inlined_call_operand.hbm [shape: f32[768,384], index: 8, kind: input, shape index: {}]
  %s9 = inlined_call_operand.vmem [shape: f32[128,384], index: 9, kind: input, shape index: {}]
  %s10 = inlined_call_operand.vmem [shape: f32[1,384], index: 10, kind: input, shape index: {}]
  %s11 = inlined_call_operand.vmem [shape: f32[1,128], index: 11, kind: input, shape index: {}]
  %s12 = inlined_call_operand.vmem [shape: f32[256,128], index: 12, kind: input, shape index: {}]
  %s13 = inlined_call_operand.vmem [shape: f32[256,128], index: 13, kind: input, shape index: {}]
  %s14 = inlined_call_operand.vmem [shape: f32[1,128], index: 14, kind: input, shape index: {}]
  %s15 = inlined_call_operand.hbm [shape: f32[2,128], index: 15, kind: output, shape index: {}]
  %s16 = sld [smem:[#allocation0]]
  $region201: #{siamese_forward.1} parent=0
    _
  %s18 = ssub.s32 1, %s16
  %s19 = scalar_select 0, %s18, %s16
  $region1: #{siamese_forward.1} parent=0
    #allocation6 [shape = 'u8[98304]{0}', space=vmem, size = 0x18000, scoped, tag = 'input window, operand 0']
    #allocation7 [shape = 'u8[98304]{0}', space=vmem, size = 0x18000, scoped, tag = 'input window, operand 1']
    #allocation8 [shape = 'u8[98304]{0}', space=vmem, size = 0x18000, scoped, tag = 'input window, operand 2']
    #allocation9 [shape = 'u8[98304]{0}', space=vmem, size = 0x18000, scoped, tag = 'input window, operand 3']
    #allocation10 [shape = 'u8[1179648]{0}', space=vmem, size = 0x120000, scoped, tag = 'input window, operand 4, single buffered']
    #allocation11 [shape = 's32[2]{0}', space=sflag, size = 0x8, scoped, tag = 'scoped memory for siamese_forward.1']
    #allocation12 [shape = 's32[2]{0}', space=sflag, size = 0x8, scoped, tag = 'scoped memory for siamese_forward.1']
    #allocation13 [shape = 'u8[1179648]{0}', space=vmem, size = 0x120000, scoped, tag = 'input window, operand 8, single buffered']
    #allocation14 [shape = 's32[1]{0}', space=sflag, size = 0x4, scoped, tag = 'scoped memory for siamese_forward.1']
    #allocation15 [shape = 'u8[1024]{0}', space=vmem, size = 0x400, scoped, tag = 'output window, operand 0, single buffered']
    %20 = vsyncpa [#allocation11], 0
    %21 = vsyncpa [#allocation14], 0
    %22 = vsyncpa [#allocation12], 0
    loop: start=0, step=1, limit=4
    $region2: #{siamese_forward.1} parent=1 // loop_pre_header
      _
    $region3: #{siamese_forward.1} parent=1 // loop_header
      %s24 = sphi 0, %s28
      %p25 = scmp.ge.s32.totalorder %s24, 4
      %s34 = sphi 0, %s36
      %s37 = sphi 0, %s34
      %s38 = sphi 0, %s37
      %s54 = sphi 0, %s38
      %s60 = sphi 0, %s62
      %s63 = sphi 0, %s60
      %s64 = sphi 0, %s63
      %s80 = sphi 0, %s64
      %s88 = sphi 0, %s90
      %s91 = sphi 0, %s88
      %s92 = sphi 0, %s91
      %s108 = sphi 0, %s92
      %s116 = sphi 0, %s118
      %s119 = sphi 0, %s116
      %s120 = sphi 0, %s119
      %s136 = sphi 0, %s120
      %s140 = sphi 0, %s140
      %s142 = sphi 0, %s140
      %s143 = sphi 0, %s142
      %s157 = sphi 0, %s143
      %s161 = sphi 0, %s161
      %s163 = sphi 0, %s161
      %s164 = sphi 0, %s163
      %s178 = sphi 0, %s164
      %s182 = sphi 0, %s182
      %s184 = sphi 0, %s182
      %s185 = sphi 0, %s184
      %s199 = sphi 0, %s185
      %s203 = sphi 0, %s203
      %s205 = sphi 0, %s203
      %s206 = sphi 0, %s205
      %s220 = sphi 0, %s206
      %s224 = sphi 0, %s224
      %s226 = sphi 0, %s224
      %s227 = sphi 0, %s226
      %s241 = sphi 0, %s227
      %s245 = sphi 0, %s245
      %s247 = sphi 0, %s245
      %s248 = sphi 0, %s247
      %s262 = sphi 0, %s248
      %s266 = sphi 0, %s266
      %s268 = sphi 0, %s266
      %s269 = sphi 0, %s268
      %s283 = sphi 0, %s269
      %s287 = sphi 0, %s287
      %s289 = sphi 0, %s287
      %s290 = sphi 0, %s289
      %s304 = sphi 0, %s290
      %s308 = sphi 0, %s308
      %s310 = sphi 0, %s308
      %s311 = sphi 0, %s310
      %s325 = sphi 0, %s311
      %s329 = sphi 0, %s329
      %s331 = sphi 0, %s329
      %s332 = sphi 0, %s331
      %s346 = sphi 0, %s332
      %s350 = sphi 0, %s350
      %s352 = sphi 0, %s350
      %s353 = sphi 0, %s352
      %s367 = sphi 0, %s353
      %s371 = sphi 0, %s371
      %s373 = sphi 0, %s371
      %s374 = sphi 0, %s373
      %s388 = sphi 0, %s374
    $region4: #{siamese_forward.1} parent=1 // loop_header_branch
      %27 = sbr.rel (%p25) target = $region8
    $region5: #{siamese_forward.1} parent=1 // loop_body
      %s29 = ssub.s32 %s24, 1
      %s30 = ssub.s32 %s24, 2
      %s31 = sadd.s32 %s24, 1
      %s32 = ssub.s32 %s24, %s31
      %p33 = scmp.eq.s32.totalorder %s32, 0
      %s35 = sadd.s32 %s34, 1
      %s36 = scalar_select %p33, %s34, %s35
      %p39 = pneg %p33
      %p40 = scmp.eq.s32.totalorder %s24, 1
      %p41 = por %p39, %p40
      %p42 = scmp.ne.s32.totalorder %s34, %s37
      %p43 = scmp.eq.s32.totalorder %s24, 0
      %p44 = por %p42, %p43
      %p45 = scmp.ne.s32.totalorder %s34, %s37
      %p46 = scmp.eq.s32.totalorder %s29, 1
      %p47 = por %p45, %p46
      %p48 = scmp.ne.s32.totalorder %s37, %s38
      %p49 = scmp.eq.s32.totalorder %s29, 0
      %p50 = por %p48, %p49
      %p51 = scmp.ne.s32.totalorder %s37, %s38
      %p52 = scmp.eq.s32.totalorder %s30, 1
      %p53 = por %p51, %p52
      %p55 = scmp.ne.s32.totalorder %s38, %s54
      %p56 = scmp.eq.s32.totalorder %s30, 0
      %p57 = por %p55, %p56
      %s58 = ssub.s32 %s24, %s31
      %p59 = scmp.eq.s32.totalorder %s58, 0
      %s61 = sadd.s32 %s60, 1
      %s62 = scalar_select %p59, %s60, %s61
      %p65 = pneg %p59
      %p66 = scmp.eq.s32.totalorder %s24, 1
      %p67 = por %p65, %p66
      %p68 = scmp.ne.s32.totalorder %s60, %s63
      %p69 = scmp.eq.s32.totalorder %s24, 0
      %p70 = por %p68, %p69
      %p71 = scmp.ne.s32.totalorder %s60, %s63
      %p72 = scmp.eq.s32.totalorder %s29, 1
      %p73 = por %p71, %p72
      %p74 = scmp.ne.s32.totalorder %s63, %s64
      %p75 = scmp.eq.s32.totalorder %s29, 0
      %p76 = por %p74, %p75
      %p77 = scmp.ne.s32.totalorder %s63, %s64
      %p78 = scmp.eq.s32.totalorder %s30, 1
      %p79 = por %p77, %p78
      %p81 = scmp.ne.s32.totalorder %s64, %s80
      %p82 = scmp.eq.s32.totalorder %s30, 0
      %p83 = por %p81, %p82
      %s84 = ssub.s32 1, %s24
      %s85 = ssub.s32 1, %s31
      %s86 = ssub.s32 %s84, %s85
      %p87 = scmp.eq.s32.totalorder %s86, 0
      %s89 = sadd.s32 %s88, 1
      %s90 = scalar_select %p87, %s88, %s89
      %p93 = pneg %p87
      %p94 = scmp.eq.s32.totalorder %s24, 1
      %p95 = por %p93, %p94
      %p96 = scmp.ne.s32.totalorder %s88, %s91
      %p97 = scmp.eq.s32.totalorder %s24, 0
      %p98 = por %p96, %p97
      %p99 = scmp.ne.s32.totalorder %s88, %s91
      %p100 = scmp.eq.s32.totalorder %s29, 1
      %p101 = por %p99, %p100
      %p102 = scmp.ne.s32.totalorder %s91, %s92
      %p103 = scmp.eq.s32.totalorder %s29, 0
      %p104 = por %p102, %p103
      %p105 = scmp.ne.s32.totalorder %s91, %s92
      %p106 = scmp.eq.s32.totalorder %s30, 1
      %p107 = por %p105, %p106
      %p109 = scmp.ne.s32.totalorder %s92, %s108
      %p110 = scmp.eq.s32.totalorder %s30, 0
      %p111 = por %p109, %p110
      %s112 = ssub.s32 1, %s24
      %s113 = ssub.s32 1, %s31
      %s114 = ssub.s32 %s112, %s113
      %p115 = scmp.eq.s32.totalorder %s114, 0
      %s117 = sadd.s32 %s116, 1
      %s118 = scalar_select %p115, %s116, %s117
      %p121 = pneg %p115
      %p122 = scmp.eq.s32.totalorder %s24, 1
      %p123 = por %p121, %p122
      %p124 = scmp.ne.s32.totalorder %s116, %s119
      %p125 = scmp.eq.s32.totalorder %s24, 0
      %p126 = por %p124, %p125
      %p127 = scmp.ne.s32.totalorder %s116, %s119
      %p128 = scmp.eq.s32.totalorder %s29, 1
      %p129 = por %p127, %p128
      %p130 = scmp.ne.s32.totalorder %s119, %s120
      %p131 = scmp.eq.s32.totalorder %s29, 0
      %p132 = por %p130, %p131
      %p133 = scmp.ne.s32.totalorder %s119, %s120
      %p134 = scmp.eq.s32.totalorder %s30, 1
      %p135 = por %p133, %p134
      %p137 = scmp.ne.s32.totalorder %s120, %s136
      %p138 = scmp.eq.s32.totalorder %s30, 0
      %p139 = por %p137, %p138
      %s141 = sadd.s32 %s140, 1
      %p144 = scmp.eq.s32.totalorder %s24, 1
      %p145 = scmp.ne.s32.totalorder %s140, %s142
      %p146 = scmp.eq.s32.totalorder %s24, 0
      %p147 = por %p145, %p146
      %p148 = scmp.ne.s32.totalorder %s140, %s142
      %p149 = scmp.eq.s32.totalorder %s29, 1
      %p150 = por %p148, %p149
      %p151 = scmp.ne.s32.totalorder %s142, %s143
      %p152 = scmp.eq.s32.totalorder %s29, 0
      %p153 = por %p151, %p152
      %p154 = scmp.ne.s32.totalorder %s142, %s143
      %p155 = scmp.eq.s32.totalorder %s30, 1
      %p156 = por %p154, %p155
      %p158 = scmp.ne.s32.totalorder %s143, %s157
      %p159 = scmp.eq.s32.totalorder %s30, 0
      %p160 = por %p158, %p159
      %s162 = sadd.s32 %s161, 1
      %p165 = scmp.eq.s32.totalorder %s24, 1
      %p166 = scmp.ne.s32.totalorder %s161, %s163
      %p167 = scmp.eq.s32.totalorder %s24, 0
      %p168 = por %p166, %p167
      %p169 = scmp.ne.s32.totalorder %s161, %s163
      %p170 = scmp.eq.s32.totalorder %s29, 1
      %p171 = por %p169, %p170
      %p172 = scmp.ne.s32.totalorder %s163, %s164
      %p173 = scmp.eq.s32.totalorder %s29, 0
      %p174 = por %p172, %p173
      %p175 = scmp.ne.s32.totalorder %s163, %s164
      %p176 = scmp.eq.s32.totalorder %s30, 1
      %p177 = por %p175, %p176
      %p179 = scmp.ne.s32.totalorder %s164, %s178
      %p180 = scmp.eq.s32.totalorder %s30, 0
      %p181 = por %p179, %p180
      %s183 = sadd.s32 %s182, 1
      %p186 = scmp.eq.s32.totalorder %s24, 1
      %p187 = scmp.ne.s32.totalorder %s182, %s184
      %p188 = scmp.eq.s32.totalorder %s24, 0
      %p189 = por %p187, %p188
      %p190 = scmp.ne.s32.totalorder %s182, %s184
      %p191 = scmp.eq.s32.totalorder %s29, 1
      %p192 = por %p190, %p191
      %p193 = scmp.ne.s32.totalorder %s184, %s185
      %p194 = scmp.eq.s32.totalorder %s29, 0
      %p195 = por %p193, %p194
      %p196 = scmp.ne.s32.totalorder %s184, %s185
      %p197 = scmp.eq.s32.totalorder %s30, 1
      %p198 = por %p196, %p197
      %p200 = scmp.ne.s32.totalorder %s185, %s199
      %p201 = scmp.eq.s32.totalorder %s30, 0
      %p202 = por %p200, %p201
      %s204 = sadd.s32 %s203, 1
      %p207 = scmp.eq.s32.totalorder %s24, 1
      %p208 = scmp.ne.s32.totalorder %s203, %s205
      %p209 = scmp.eq.s32.totalorder %s24, 0
      %p210 = por %p208, %p209
      %p211 = scmp.ne.s32.totalorder %s203, %s205
      %p212 = scmp.eq.s32.totalorder %s29, 1
      %p213 = por %p211, %p212
      %p214 = scmp.ne.s32.totalorder %s205, %s206
      %p215 = scmp.eq.s32.totalorder %s29, 0
      %p216 = por %p214, %p215
      %p217 = scmp.ne.s32.totalorder %s205, %s206
      %p218 = scmp.eq.s32.totalorder %s30, 1
      %p219 = por %p217, %p218
      %p221 = scmp.ne.s32.totalorder %s206, %s220
      %p222 = scmp.eq.s32.totalorder %s30, 0
      %p223 = por %p221, %p222
      %s225 = sadd.s32 %s224, 1
      %p228 = scmp.eq.s32.totalorder %s24, 1
      %p229 = scmp.ne.s32.totalorder %s224, %s226
      %p230 = scmp.eq.s32.totalorder %s24, 0
      %p231 = por %p229, %p230
      %p232 = scmp.ne.s32.totalorder %s224, %s226
      %p233 = scmp.eq.s32.totalorder %s29, 1
      %p234 = por %p232, %p233
      %p235 = scmp.ne.s32.totalorder %s226, %s227
      %p236 = scmp.eq.s32.totalorder %s29, 0
      %p237 = por %p235, %p236
      %p238 = scmp.ne.s32.totalorder %s226, %s227
      %p239 = scmp.eq.s32.totalorder %s30, 1
      %p240 = por %p238, %p239
      %p242 = scmp.ne.s32.totalorder %s227, %s241
      %p243 = scmp.eq.s32.totalorder %s30, 0
      %p244 = por %p242, %p243
      %s246 = sadd.s32 %s245, 1
      %p249 = scmp.eq.s32.totalorder %s24, 1
      %p250 = scmp.ne.s32.totalorder %s245, %s247
      %p251 = scmp.eq.s32.totalorder %s24, 0
      %p252 = por %p250, %p251
      %p253 = scmp.ne.s32.totalorder %s245, %s247
      %p254 = scmp.eq.s32.totalorder %s29, 1
      %p255 = por %p253, %p254
      %p256 = scmp.ne.s32.totalorder %s247, %s248
      %p257 = scmp.eq.s32.totalorder %s29, 0
      %p258 = por %p256, %p257
      %p259 = scmp.ne.s32.totalorder %s247, %s248
      %p260 = scmp.eq.s32.totalorder %s30, 1
      %p261 = por %p259, %p260
      %p263 = scmp.ne.s32.totalorder %s248, %s262
      %p264 = scmp.eq.s32.totalorder %s30, 0
      %p265 = por %p263, %p264
      %s267 = sadd.s32 %s266, 1
      %p270 = scmp.eq.s32.totalorder %s24, 1
      %p271 = scmp.ne.s32.totalorder %s266, %s268
      %p272 = scmp.eq.s32.totalorder %s24, 0
      %p273 = por %p271, %p272
      %p274 = scmp.ne.s32.totalorder %s266, %s268
      %p275 = scmp.eq.s32.totalorder %s29, 1
      %p276 = por %p274, %p275
      %p277 = scmp.ne.s32.totalorder %s268, %s269
      %p278 = scmp.eq.s32.totalorder %s29, 0
      %p279 = por %p277, %p278
      %p280 = scmp.ne.s32.totalorder %s268, %s269
      %p281 = scmp.eq.s32.totalorder %s30, 1
      %p282 = por %p280, %p281
      %p284 = scmp.ne.s32.totalorder %s269, %s283
      %p285 = scmp.eq.s32.totalorder %s30, 0
      %p286 = por %p284, %p285
      %s288 = sadd.s32 %s287, 1
      %p291 = scmp.eq.s32.totalorder %s24, 1
      %p292 = scmp.ne.s32.totalorder %s287, %s289
      %p293 = scmp.eq.s32.totalorder %s24, 0
      %p294 = por %p292, %p293
      %p295 = scmp.ne.s32.totalorder %s287, %s289
      %p296 = scmp.eq.s32.totalorder %s29, 1
      %p297 = por %p295, %p296
      %p298 = scmp.ne.s32.totalorder %s289, %s290
      %p299 = scmp.eq.s32.totalorder %s29, 0
      %p300 = por %p298, %p299
      %p301 = scmp.ne.s32.totalorder %s289, %s290
      %p302 = scmp.eq.s32.totalorder %s30, 1
      %p303 = por %p301, %p302
      %p305 = scmp.ne.s32.totalorder %s290, %s304
      %p306 = scmp.eq.s32.totalorder %s30, 0
      %p307 = por %p305, %p306
      %s309 = sadd.s32 %s308, 1
      %p312 = scmp.eq.s32.totalorder %s24, 1
      %p313 = scmp.ne.s32.totalorder %s308, %s310
      %p314 = scmp.eq.s32.totalorder %s24, 0
      %p315 = por %p313, %p314
      %p316 = scmp.ne.s32.totalorder %s308, %s310
      %p317 = scmp.eq.s32.totalorder %s29, 1
      %p318 = por %p316, %p317
      %p319 = scmp.ne.s32.totalorder %s310, %s311
      %p320 = scmp.eq.s32.totalorder %s29, 0
      %p321 = por %p319, %p320
      %p322 = scmp.ne.s32.totalorder %s310, %s311
      %p323 = scmp.eq.s32.totalorder %s30, 1
      %p324 = por %p322, %p323
      %p326 = scmp.ne.s32.totalorder %s311, %s325
      %p327 = scmp.eq.s32.totalorder %s30, 0
      %p328 = por %p326, %p327
      %s330 = sadd.s32 %s329, 1
      %p333 = scmp.eq.s32.totalorder %s24, 1
      %p334 = scmp.ne.s32.totalorder %s329, %s331
      %p335 = scmp.eq.s32.totalorder %s24, 0
      %p336 = por %p334, %p335
      %p337 = scmp.ne.s32.totalorder %s329, %s331
      %p338 = scmp.eq.s32.totalorder %s29, 1
      %p339 = por %p337, %p338
      %p340 = scmp.ne.s32.totalorder %s331, %s332
      %p341 = scmp.eq.s32.totalorder %s29, 0
      %p342 = por %p340, %p341
      %p343 = scmp.ne.s32.totalorder %s331, %s332
      %p344 = scmp.eq.s32.totalorder %s30, 1
      %p345 = por %p343, %p344
      %p347 = scmp.ne.s32.totalorder %s332, %s346
      %p348 = scmp.eq.s32.totalorder %s30, 0
      %p349 = por %p347, %p348
      %s351 = sadd.s32 %s350, 1
      %p354 = scmp.eq.s32.totalorder %s24, 1
      %p355 = scmp.ne.s32.totalorder %s350, %s352
      %p356 = scmp.eq.s32.totalorder %s24, 0
      %p357 = por %p355, %p356
      %p358 = scmp.ne.s32.totalorder %s350, %s352
      %p359 = scmp.eq.s32.totalorder %s29, 1
      %p360 = por %p358, %p359
      %p361 = scmp.ne.s32.totalorder %s352, %s353
      %p362 = scmp.eq.s32.totalorder %s29, 0
      %p363 = por %p361, %p362
      %p364 = scmp.ne.s32.totalorder %s352, %s353
      %p365 = scmp.eq.s32.totalorder %s30, 1
      %p366 = por %p364, %p365
      %p368 = scmp.ne.s32.totalorder %s353, %s367
      %p369 = scmp.eq.s32.totalorder %s30, 0
      %p370 = por %p368, %p369
      %s372 = sadd.s32 %s371, 1
      %p375 = scmp.eq.s32.totalorder %s24, 1
      %p376 = scmp.ne.s32.totalorder %s371, %s373
      %p377 = scmp.eq.s32.totalorder %s24, 0
      %p378 = por %p376, %p377
      %p379 = scmp.ne.s32.totalorder %s371, %s373
      %p380 = scmp.eq.s32.totalorder %s29, 1
      %p381 = por %p379, %p380
      %p382 = scmp.ne.s32.totalorder %s373, %s374
      %p383 = scmp.eq.s32.totalorder %s29, 0
      %p384 = por %p382, %p383
      %p385 = scmp.ne.s32.totalorder %s373, %s374
      %p386 = scmp.eq.s32.totalorder %s30, 1
      %p387 = por %p385, %p386
      %p389 = scmp.ne.s32.totalorder %s374, %s388
      %p390 = scmp.eq.s32.totalorder %s30, 0
      %p391 = por %p389, %p390
      %p392 = scmp.le.s32.totalorder 1, %s24
      %p393 = scmp.lt.s32.totalorder %s24, 3
      %p394 = pnand %p392, %p393
      %p395 = pneg %p394
      // Predicated region
      $region9: #{siamese_forward.1} parent=5 // pred_check
        _
      $region10: #{siamese_forward.1} parent=5 // pred_check_branch
        %397 = sbr.rel (%p394) target = $region12
      $region11: #{siamese_forward.1} parent=5 // pred_region
        %s398 = ssub.s32 %s24, 1
        // Predicated region
        $region13: #{siamese_forward.1} parent=11 // pred_check
          %p399 = pneg %p153
        $region14: #{siamese_forward.1} parent=11 // pred_check_branch
          %401 = sbr.rel (%p399) target = $region16
        $region15: #{siamese_forward.1} parent=11 // pred_region
          %s403 = ssub.s32 36864, 36864
          %404 = vsyncadd [#allocation11], %s403
          %s405 = sshll.u32 [#allocation10], 4
          %s406 = int_to_ptr.vmem [resolvable:$true] %s405
          %411 = dma.hbm_to_vmem [thread:$0]  %s4, 36864, %s406, [#allocation11], 384, 384, 24
        $region16: #{siamese_forward.1} parent=11 // pred_fallthru
          _
        // Predicated region
        $region17: #{siamese_forward.1} parent=11 // pred_check
          %p412 = pneg %p174
        $region18: #{siamese_forward.1} parent=11 // pred_check_branch
          %414 = sbr.rel (%p412) target = $region20
        $region19: #{siamese_forward.1} parent=11 // pred_region
          _
        $region20: #{siamese_forward.1} parent=11 // pred_fallthru
          _
        // Predicated region
        $region21: #{siamese_forward.1} parent=11 // pred_check
          %p415 = pneg %p195
        $region22: #{siamese_forward.1} parent=11 // pred_check_branch
          %417 = sbr.rel (%p415) target = $region24
        $region23: #{siamese_forward.1} parent=11 // pred_region
          _
        $region24: #{siamese_forward.1} parent=11 // pred_fallthru
          _
        // Predicated region
        $region25: #{siamese_forward.1} parent=11 // pred_check
          %p418 = pneg %p216
        $region26: #{siamese_forward.1} parent=11 // pred_check_branch
          %420 = sbr.rel (%p418) target = $region28
        $region27: #{siamese_forward.1} parent=11 // pred_region
          _
        $region28: #{siamese_forward.1} parent=11 // pred_fallthru
          _
        // Predicated region
        $region29: #{siamese_forward.1} parent=11 // pred_check
          %p421 = pneg %p237
        $region30: #{siamese_forward.1} parent=11 // pred_check_branch
          %423 = sbr.rel (%p421) target = $region32
        $region31: #{siamese_forward.1} parent=11 // pred_region
          %s425 = ssub.s32 36864, 36864
          %426 = vsyncadd [#allocation14], %s425
          %s427 = sshll.u32 [#allocation13], 4
          %s428 = int_to_ptr.vmem [resolvable:$true] %s427
          %433 = dma.hbm_to_vmem [thread:$0]  %s8, 36864, %s428, [#allocation14], 384, 384, 24
        $region32: #{siamese_forward.1} parent=11 // pred_fallthru
          _
        // Predicated region
        $region33: #{siamese_forward.1} parent=11 // pred_check
          %p434 = pneg %p258
        $region34: #{siamese_forward.1} parent=11 // pred_check_branch
          %436 = sbr.rel (%p434) target = $region36
        $region35: #{siamese_forward.1} parent=11 // pred_region
          _
        $region36: #{siamese_forward.1} parent=11 // pred_fallthru
          _
        // Predicated region
        $region37: #{siamese_forward.1} parent=11 // pred_check
          %p437 = pneg %p279
        $region38: #{siamese_forward.1} parent=11 // pred_check_branch
          %439 = sbr.rel (%p437) target = $region40
        $region39: #{siamese_forward.1} parent=11 // pred_region
          _
        $region40: #{siamese_forward.1} parent=11 // pred_fallthru
          _
        // Predicated region
        $region41: #{siamese_forward.1} parent=11 // pred_check
          %p440 = pneg %p300
        $region42: #{siamese_forward.1} parent=11 // pred_check_branch
          %442 = sbr.rel (%p440) target = $region44
        $region43: #{siamese_forward.1} parent=11 // pred_region
          _
        $region44: #{siamese_forward.1} parent=11 // pred_fallthru
          _
        // Predicated region
        $region45: #{siamese_forward.1} parent=11 // pred_check
          %p443 = pneg %p321
        $region46: #{siamese_forward.1} parent=11 // pred_check_branch
          %445 = sbr.rel (%p443) target = $region48
        $region47: #{siamese_forward.1} parent=11 // pred_region
          _
        $region48: #{siamese_forward.1} parent=11 // pred_fallthru
          _
        // Predicated region
        $region49: #{siamese_forward.1} parent=11 // pred_check
          %p446 = pneg %p342
        $region50: #{siamese_forward.1} parent=11 // pred_check_branch
          %448 = sbr.rel (%p446) target = $region52
        $region51: #{siamese_forward.1} parent=11 // pred_region
          _
        $region52: #{siamese_forward.1} parent=11 // pred_fallthru
          _
        // Predicated region
        $region53: #{siamese_forward.1} parent=11 // pred_check
          %p449 = pneg %p363
        $region54: #{siamese_forward.1} parent=11 // pred_check_branch
          %451 = sbr.rel (%p449) target = $region56
        $region55: #{siamese_forward.1} parent=11 // pred_region
          _
        $region56: #{siamese_forward.1} parent=11 // pred_fallthru
          _
      $region12: #{siamese_forward.1} parent=5 // pred_fallthru
        _
      %p452 = scmp.lt.s32.totalorder %s24, 2
      // Predicated region
      $region57: #{siamese_forward.1} parent=5 // pred_check
        %p453 = pneg %p452
      $region58: #{siamese_forward.1} parent=5 // pred_check_branch
        %455 = sbr.rel (%p453) target = $region60
      $region59: #{siamese_forward.1} parent=5 // pred_region
        // Predicated region
        $region61: #{siamese_forward.1} parent=59 // pred_check
          %p456 = pneg %p44
        $region62: #{siamese_forward.1} parent=59 // pred_check_branch
          %458 = sbr.rel (%p456) target = $region64
        $region63: #{siamese_forward.1} parent=59 // pred_region
          %s459 = sand.u32 %s34, 1
          %s460 = sand.u32 %s34, 1
          %s461 = smul.addr %s460, 96
          %s462 = scalar_lea.vmem [#allocation6], %s461
          %s463 = smul.addr %s24, 6
          %s464 = smul.addr %s463, 8
          %s465 = scalar_lea.vmem %s0, %s464
          // Predicated region
          $region65: #{siamese_forward.1} parent=63 // pred_check
            _
          $region66: #{siamese_forward.1} parent=63 // pred_check_branch
            %467 = sbr.rel (0) target = $region68
          $region67: #{siamese_forward.1} parent=63 // pred_region
            // Predicated region
            $region69: #{siamese_forward.1} parent=67 // pred_check
              _
            $region70: #{siamese_forward.1} parent=67 // pred_check_branch
              %469 = sbr.rel (0) target = $region72
            $region71: #{siamese_forward.1} parent=67 // pred_region
              loop: start=0, step=1, limit=1
              $region73: #{siamese_forward.1} parent=71 // loop_pre_header
                _
              $region74: #{siamese_forward.1} parent=71 // loop_header
                %s471 = sphi 0, %s475
                %p472 = scmp.ge.s32.totalorder %s471, 1
                %s476 = sphi %s465, %s465
                %s477 = sphi %s462, %s462
              $region75: #{siamese_forward.1} parent=71 // loop_header_branch
                %474 = sbr.rel (%p472) target = $region79
              $region76: #{siamese_forward.1} parent=71 // loop_body
                %v478 = vld [vmem:[%s476] sm:$0xff]
                %479 = vst [vmem:[%s477] sm:$0xff] %v478
                %v480 = vld [vmem:[%s476 + $0x8] sm:$0xff]
                %481 = vst [vmem:[%s477 + $0x8] sm:$0xff] %v480
                %v482 = vld [vmem:[%s476 + $0x10] sm:$0xff]
                %483 = vst [vmem:[%s477 + $0x10] sm:$0xff] %v482
                %v484 = vld [vmem:[%s476 + $0x18] sm:$0xff]
                %485 = vst [vmem:[%s477 + $0x18] sm:$0xff] %v484
                %v486 = vld [vmem:[%s476 + $0x20] sm:$0xff]
                %487 = vst [vmem:[%s477 + $0x20] sm:$0xff] %v486
                %v488 = vld [vmem:[%s476 + $0x28] sm:$0xff]
                %489 = vst [vmem:[%s477 + $0x28] sm:$0xff] %v488
                %v490 = vld [vmem:[%s476 + $0x60] sm:$0xff]
                %491 = vst [vmem:[%s477 + $0x30] sm:$0xff] %v490
                %v492 = vld [vmem:[%s476 + $0x68] sm:$0xff]
                %493 = vst [vmem:[%s477 + $0x38] sm:$0xff] %v492
                %v494 = vld [vmem:[%s476 + $0x70] sm:$0xff]
                %495 = vst [vmem:[%s477 + $0x40] sm:$0xff] %v494
                %v496 = vld [vmem:[%s476 + $0x78] sm:$0xff]
                %497 = vst [vmem:[%s477 + $0x48] sm:$0xff] %v496
                %v498 = vld [vmem:[%s476 + $0x80] sm:$0xff]
                %499 = vst [vmem:[%s477 + $0x50] sm:$0xff] %v498
                %v500 = vld [vmem:[%s476 + $0x88] sm:$0xff]
                %501 = vst [vmem:[%s477 + $0x58] sm:$0xff] %v500
              $region77: #{siamese_forward.1} parent=71 // loop_footer
                %s475 = sadd.s32 1, %s471
              $region78: #{siamese_forward.1} parent=71 // loop_footer_branch
                %470 = sbr.rel target = $region74
              $region79: #{siamese_forward.1} parent=71 // loop_exit
                _
            $region72: #{siamese_forward.1} parent=67 // pred_fallthru
              _
            // Predicated region
            $region80: #{siamese_forward.1} parent=67 // pred_check
              _
            $region81: #{siamese_forward.1} parent=67 // pred_check_branch
              %503 = sbr.rel target = $region83
            $region82: #{siamese_forward.1} parent=67 // pred_region
              _
            $region83: #{siamese_forward.1} parent=67 // pred_fallthru
              _
          $region68: #{siamese_forward.1} parent=63 // pred_fallthru
            _
          %504 = vnop
        $region64: #{siamese_forward.1} parent=59 // pred_fallthru
          _
        // Predicated region
        $region84: #{siamese_forward.1} parent=59 // pred_check
          %p505 = pneg %p70
        $region85: #{siamese_forward.1} parent=59 // pred_check_branch
          %507 = sbr.rel (%p505) target = $region87
        $region86: #{siamese_forward.1} parent=59 // pred_region
          %s508 = sand.u32 %s60, 1
          %s509 = sand.u32 %s60, 1
          %s510 = smul.addr %s509, 96
          %s511 = scalar_lea.vmem [#allocation7], %s510
          %s512 = smul.addr %s24, 6
          %s513 = smul.addr %s512, 8
          %s514 = scalar_lea.vmem %s1, %s513
          // Predicated region
          $region88: #{siamese_forward.1} parent=86 // pred_check
            _
          $region89: #{siamese_forward.1} parent=86 // pred_check_branch
            %516 = sbr.rel (0) target = $region91
          $region90: #{siamese_forward.1} parent=86 // pred_region
            // Predicated region
            $region92: #{siamese_forward.1} parent=90 // pred_check
              _
            $region93: #{siamese_forward.1} parent=90 // pred_check_branch
              %518 = sbr.rel (0) target = $region95
            $region94: #{siamese_forward.1} parent=90 // pred_region
              loop: start=0, step=1, limit=1
              $region96: #{siamese_forward.1} parent=94 // loop_pre_header
                _
              $region97: #{siamese_forward.1} parent=94 // loop_header
                %s520 = sphi 0, %s524
                %p521 = scmp.ge.s32.totalorder %s520, 1
                %s525 = sphi %s514, %s514
                %s526 = sphi %s511, %s511
              $region98: #{siamese_forward.1} parent=94 // loop_header_branch
                %523 = sbr.rel (%p521) target = $region102
              $region99: #{siamese_forward.1} parent=94 // loop_body
                %v527 = vld [vmem:[%s525] sm:$0xff]
                %528 = vst [vmem:[%s526] sm:$0xff] %v527
                %v529 = vld [vmem:[%s525 + $0x8] sm:$0xff]
                %530 = vst [vmem:[%s526 + $0x8] sm:$0xff] %v529
                %v531 = vld [vmem:[%s525 + $0x10] sm:$0xff]
                %532 = vst [vmem:[%s526 + $0x10] sm:$0xff] %v531
                %v533 = vld [vmem:[%s525 + $0x18] sm:$0xff]
                %534 = vst [vmem:[%s526 + $0x18] sm:$0xff] %v533
                %v535 = vld [vmem:[%s525 + $0x20] sm:$0xff]
                %536 = vst [vmem:[%s526 + $0x20] sm:$0xff] %v535
                %v537 = vld [vmem:[%s525 + $0x28] sm:$0xff]
                %538 = vst [vmem:[%s526 + $0x28] sm:$0xff] %v537
                %v539 = vld [vmem:[%s525 + $0x60] sm:$0xff]
                %540 = vst [vmem:[%s526 + $0x30] sm:$0xff] %v539
                %v541 = vld [vmem:[%s525 + $0x68] sm:$0xff]
                %542 = vst [vmem:[%s526 + $0x38] sm:$0xff] %v541
                %v543 = vld [vmem:[%s525 + $0x70] sm:$0xff]
                %544 = vst [vmem:[%s526 + $0x40] sm:$0xff] %v543
                %v545 = vld [vmem:[%s525 + $0x78] sm:$0xff]
                %546 = vst [vmem:[%s526 + $0x48] sm:$0xff] %v545
                %v547 = vld [vmem:[%s525 + $0x80] sm:$0xff]
                %548 = vst [vmem:[%s526 + $0x50] sm:$0xff] %v547
                %v549 = vld [vmem:[%s525 + $0x88] sm:$0xff]
                %550 = vst [vmem:[%s526 + $0x58] sm:$0xff] %v549
              $region100: #{siamese_forward.1} parent=94 // loop_footer
                %s524 = sadd.s32 1, %s520
              $region101: #{siamese_forward.1} parent=94 // loop_footer_branch
                %519 = sbr.rel target = $region97
              $region102: #{siamese_forward.1} parent=94 // loop_exit
                _
            $region95: #{siamese_forward.1} parent=90 // pred_fallthru
              _
            // Predicated region
            $region103: #{siamese_forward.1} parent=90 // pred_check
              _
            $region104: #{siamese_forward.1} parent=90 // pred_check_branch
              %552 = sbr.rel target = $region106
            $region105: #{siamese_forward.1} parent=90 // pred_region
              _
            $region106: #{siamese_forward.1} parent=90 // pred_fallthru
              _
          $region91: #{siamese_forward.1} parent=86 // pred_fallthru
            _
          %553 = vnop
        $region87: #{siamese_forward.1} parent=59 // pred_fallthru
          _
        // Predicated region
        $region107: #{siamese_forward.1} parent=59 // pred_check
          %p554 = pneg %p98
        $region108: #{siamese_forward.1} parent=59 // pred_check_branch
          %556 = sbr.rel (%p554) target = $region110
        $region109: #{siamese_forward.1} parent=59 // pred_region
          %s557 = sand.u32 %s88, 1
          %s558 = sand.u32 %s88, 1
          %s559 = smul.addr %s558, 96
          %s560 = scalar_lea.vmem [#allocation8], %s559
          %s561 = ssub.s32 1, %s24
          %s562 = smul.addr %s561, 6
          %s563 = smul.addr %s562, 8
          %s564 = scalar_lea.vmem %s2, %s563
          // Predicated region
          $region111: #{siamese_forward.1} parent=109 // pred_check
            _
          $region112: #{siamese_forward.1} parent=109 // pred_check_branch
            %566 = sbr.rel (0) target = $region114
          $region113: #{siamese_forward.1} parent=109 // pred_region
            // Predicated region
            $region115: #{siamese_forward.1} parent=113 // pred_check
              _
            $region116: #{siamese_forward.1} parent=113 // pred_check_branch
              %568 = sbr.rel (0) target = $region118
            $region117: #{siamese_forward.1} parent=113 // pred_region
              loop: start=0, step=1, limit=1
              $region119: #{siamese_forward.1} parent=117 // loop_pre_header
                _
              $region120: #{siamese_forward.1} parent=117 // loop_header
                %s570 = sphi 0, %s574
                %p571 = scmp.ge.s32.totalorder %s570, 1
                %s575 = sphi %s564, %s564
                %s576 = sphi %s560, %s560
              $region121: #{siamese_forward.1} parent=117 // loop_header_branch
                %573 = sbr.rel (%p571) target = $region125
              $region122: #{siamese_forward.1} parent=117 // loop_body
                %v577 = vld [vmem:[%s575] sm:$0xff]
                %578 = vst [vmem:[%s576] sm:$0xff] %v577
                %v579 = vld [vmem:[%s575 + $0x8] sm:$0xff]
                %580 = vst [vmem:[%s576 + $0x8] sm:$0xff] %v579
                %v581 = vld [vmem:[%s575 + $0x10] sm:$0xff]
                %582 = vst [vmem:[%s576 + $0x10] sm:$0xff] %v581
                %v583 = vld [vmem:[%s575 + $0x18] sm:$0xff]
                %584 = vst [vmem:[%s576 + $0x18] sm:$0xff] %v583
                %v585 = vld [vmem:[%s575 + $0x20] sm:$0xff]
                %586 = vst [vmem:[%s576 + $0x20] sm:$0xff] %v585
                %v587 = vld [vmem:[%s575 + $0x28] sm:$0xff]
                %588 = vst [vmem:[%s576 + $0x28] sm:$0xff] %v587
                %v589 = vld [vmem:[%s575 + $0x60] sm:$0xff]
                %590 = vst [vmem:[%s576 + $0x30] sm:$0xff] %v589
                %v591 = vld [vmem:[%s575 + $0x68] sm:$0xff]
                %592 = vst [vmem:[%s576 + $0x38] sm:$0xff] %v591
                %v593 = vld [vmem:[%s575 + $0x70] sm:$0xff]
                %594 = vst [vmem:[%s576 + $0x40] sm:$0xff] %v593
                %v595 = vld [vmem:[%s575 + $0x78] sm:$0xff]
                %596 = vst [vmem:[%s576 + $0x48] sm:$0xff] %v595
                %v597 = vld [vmem:[%s575 + $0x80] sm:$0xff]
                %598 = vst [vmem:[%s576 + $0x50] sm:$0xff] %v597
                %v599 = vld [vmem:[%s575 + $0x88] sm:$0xff]
                %600 = vst [vmem:[%s576 + $0x58] sm:$0xff] %v599
              $region123: #{siamese_forward.1} parent=117 // loop_footer
                %s574 = sadd.s32 1, %s570
              $region124: #{siamese_forward.1} parent=117 // loop_footer_branch
                %569 = sbr.rel target = $region120
              $region125: #{siamese_forward.1} parent=117 // loop_exit
                _
            $region118: #{siamese_forward.1} parent=113 // pred_fallthru
              _
            // Predicated region
            $region126: #{siamese_forward.1} parent=113 // pred_check
              _
            $region127: #{siamese_forward.1} parent=113 // pred_check_branch
              %602 = sbr.rel target = $region129
            $region128: #{siamese_forward.1} parent=113 // pred_region
              _
            $region129: #{siamese_forward.1} parent=113 // pred_fallthru
              _
          $region114: #{siamese_forward.1} parent=109 // pred_fallthru
            _
          %603 = vnop
        $region110: #{siamese_forward.1} parent=59 // pred_fallthru
          _
        // Predicated region
        $region130: #{siamese_forward.1} parent=59 // pred_check
          %p604 = pneg %p126
        $region131: #{siamese_forward.1} parent=59 // pred_check_branch
          %606 = sbr.rel (%p604) target = $region133
        $region132: #{siamese_forward.1} parent=59 // pred_region
          %s607 = sand.u32 %s116, 1
          %s608 = sand.u32 %s116, 1
          %s609 = smul.addr %s608, 96
          %s610 = scalar_lea.vmem [#allocation9], %s609
          %s611 = ssub.s32 1, %s24
          %s612 = smul.addr %s611, 6
          %s613 = smul.addr %s612, 8
          %s614 = scalar_lea.vmem %s3, %s613
          // Predicated region
          $region134: #{siamese_forward.1} parent=132 // pred_check
            _
          $region135: #{siamese_forward.1} parent=132 // pred_check_branch
            %616 = sbr.rel (0) target = $region137
          $region136: #{siamese_forward.1} parent=132 // pred_region
            // Predicated region
            $region138: #{siamese_forward.1} parent=136 // pred_check
              _
            $region139: #{siamese_forward.1} parent=136 // pred_check_branch
              %618 = sbr.rel (0) target = $region141
            $region140: #{siamese_forward.1} parent=136 // pred_region
              loop: start=0, step=1, limit=1
              $region142: #{siamese_forward.1} parent=140 // loop_pre_header
                _
              $region143: #{siamese_forward.1} parent=140 // loop_header
                %s620 = sphi 0, %s624
                %p621 = scmp.ge.s32.totalorder %s620, 1
                %s625 = sphi %s614, %s614
                %s626 = sphi %s610, %s610
              $region144: #{siamese_forward.1} parent=140 // loop_header_branch
                %623 = sbr.rel (%p621) target = $region148
              $region145: #{siamese_forward.1} parent=140 // loop_body
                %v627 = vld [vmem:[%s625] sm:$0xff]
                %628 = vst [vmem:[%s626] sm:$0xff] %v627
                %v629 = vld [vmem:[%s625 + $0x8] sm:$0xff]
                %630 = vst [vmem:[%s626 + $0x8] sm:$0xff] %v629
                %v631 = vld [vmem:[%s625 + $0x10] sm:$0xff]
                %632 = vst [vmem:[%s626 + $0x10] sm:$0xff] %v631
                %v633 = vld [vmem:[%s625 + $0x18] sm:$0xff]
                %634 = vst [vmem:[%s626 + $0x18] sm:$0xff] %v633
                %v635 = vld [vmem:[%s625 + $0x20] sm:$0xff]
                %636 = vst [vmem:[%s626 + $0x20] sm:$0xff] %v635
                %v637 = vld [vmem:[%s625 + $0x28] sm:$0xff]
                %638 = vst [vmem:[%s626 + $0x28] sm:$0xff] %v637
                %v639 = vld [vmem:[%s625 + $0x60] sm:$0xff]
                %640 = vst [vmem:[%s626 + $0x30] sm:$0xff] %v639
                %v641 = vld [vmem:[%s625 + $0x68] sm:$0xff]
                %642 = vst [vmem:[%s626 + $0x38] sm:$0xff] %v641
                %v643 = vld [vmem:[%s625 + $0x70] sm:$0xff]
                %644 = vst [vmem:[%s626 + $0x40] sm:$0xff] %v643
                %v645 = vld [vmem:[%s625 + $0x78] sm:$0xff]
                %646 = vst [vmem:[%s626 + $0x48] sm:$0xff] %v645
                %v647 = vld [vmem:[%s625 + $0x80] sm:$0xff]
                %648 = vst [vmem:[%s626 + $0x50] sm:$0xff] %v647
                %v649 = vld [vmem:[%s625 + $0x88] sm:$0xff]
                %650 = vst [vmem:[%s626 + $0x58] sm:$0xff] %v649
              $region146: #{siamese_forward.1} parent=140 // loop_footer
                %s624 = sadd.s32 1, %s620
              $region147: #{siamese_forward.1} parent=140 // loop_footer_branch
                %619 = sbr.rel target = $region143
              $region148: #{siamese_forward.1} parent=140 // loop_exit
                _
            $region141: #{siamese_forward.1} parent=136 // pred_fallthru
              _
            // Predicated region
            $region149: #{siamese_forward.1} parent=136 // pred_check
              _
            $region150: #{siamese_forward.1} parent=136 // pred_check_branch
              %652 = sbr.rel target = $region152
            $region151: #{siamese_forward.1} parent=136 // pred_region
              _
            $region152: #{siamese_forward.1} parent=136 // pred_fallthru
              _
          $region137: #{siamese_forward.1} parent=132 // pred_fallthru
            _
          %653 = vnop
        $region133: #{siamese_forward.1} parent=59 // pred_fallthru
          _
      $region60: #{siamese_forward.1} parent=5 // pred_fallthru
        _
      %p654 = scmp.le.s32.totalorder 1, %s24
      %p655 = scmp.lt.s32.totalorder %s24, 3
      %p656 = pnand %p654, %p655
      %p657 = pneg %p656
      // Predicated region
      $region153: #{siamese_forward.1} parent=5 // pred_check
        _
      $region154: #{siamese_forward.1} parent=5 // pred_check_branch
        %659 = sbr.rel (%p656) target = $region156
      $region155: #{siamese_forward.1} parent=5 // pred_region
        %s660 = ssub.s32 %s24, 1
        %s661 = sand.u32 %s37, 1
        %s662 = sand.u32 %s37, 1
        %s663 = smul.addr %s662, 96
        %s664 = scalar_lea.vmem [#allocation6], %s663
        // Predicated region
        $region157: #{siamese_forward.1} parent=155 // pred_check
          %p665 = pneg %p50
        $region158: #{siamese_forward.1} parent=155 // pred_check_branch
          %667 = sbr.rel (%p665) target = $region160
        $region159: #{siamese_forward.1} parent=155 // pred_region
          _
        $region160: #{siamese_forward.1} parent=155 // pred_fallthru
          _
        %s668 = sand.u32 %s63, 1
        %s669 = sand.u32 %s63, 1
        %s670 = smul.addr %s669, 96
        %s671 = scalar_lea.vmem [#allocation7], %s670
        // Predicated region
        $region161: #{siamese_forward.1} parent=155 // pred_check
          %p672 = pneg %p76
        $region162: #{siamese_forward.1} parent=155 // pred_check_branch
          %674 = sbr.rel (%p672) target = $region164
        $region163: #{siamese_forward.1} parent=155 // pred_region
          _
        $region164: #{siamese_forward.1} parent=155 // pred_fallthru
          _
        %s675 = sand.u32 %s91, 1
        %s676 = sand.u32 %s91, 1
        %s677 = smul.addr %s676, 96
        %s678 = scalar_lea.vmem [#allocation8], %s677
        // Predicated region
        $region165: #{siamese_forward.1} parent=155 // pred_check
          %p679 = pneg %p104
        $region166: #{siamese_forward.1} parent=155 // pred_check_branch
          %681 = sbr.rel (%p679) target = $region168
        $region167: #{siamese_forward.1} parent=155 // pred_region
          _
        $region168: #{siamese_forward.1} parent=155 // pred_fallthru
          _
        %s682 = sand.u32 %s119, 1
        %s683 = sand.u32 %s119, 1
        %s684 = smul.addr %s683, 96
        %s685 = scalar_lea.vmem [#allocation9], %s684
        // Predicated region
        $region169: #{siamese_forward.1} parent=155 // pred_check
          %p686 = pneg %p132
        $region170: #{siamese_forward.1} parent=155 // pred_check_branch
          %688 = sbr.rel (%p686) target = $region172
        $region171: #{siamese_forward.1} parent=155 // pred_region
          _
        $region172: #{siamese_forward.1} parent=155 // pred_fallthru
          _
        // Predicated region
        $region173: #{siamese_forward.1} parent=155 // pred_check
          %p689 = pneg %p153
        $region174: #{siamese_forward.1} parent=155 // pred_check_branch
          %691 = sbr.rel (%p689) target = $region176
        $region175: #{siamese_forward.1} parent=155 // pred_region
          %692 = dma.done [#allocation11], 36864
        $region176: #{siamese_forward.1} parent=155 // pred_fallthru
          _
        // Predicated region
        $region177: #{siamese_forward.1} parent=155 // pred_check
          %p693 = pneg %p237
        $region178: #{siamese_forward.1} parent=155 // pred_check_branch
          %695 = sbr.rel (%p693) target = $region180
        $region179: #{siamese_forward.1} parent=155 // pred_region
          %696 = dma.done [#allocation14], 36864
        $region180: #{siamese_forward.1} parent=155 // pred_fallthru
          _
        %s697 = sand.u32 %s37, 1
        %s698 = sand.u32 %s37, 1
        %s699 = smul.addr %s698, 96
        %s700 = scalar_lea.vmem [#allocation6], %s699
        %p701 = pneg %p50
        %p702 = pneg %p47
        %s703 = sand.u32 %s63, 1
        %s704 = sand.u32 %s63, 1
        %s705 = smul.addr %s704, 96
        %s706 = scalar_lea.vmem [#allocation7], %s705
        %p707 = pneg %p76
        %p708 = pneg %p73
        %s709 = sand.u32 %s91, 1
        %s710 = sand.u32 %s91, 1
        %s711 = smul.addr %s710, 96
        %s712 = scalar_lea.vmem [#allocation8], %s711
        %p713 = pneg %p104
        %p714 = pneg %p101
        %s715 = sand.u32 %s119, 1
        %s716 = sand.u32 %s119, 1
        %s717 = smul.addr %s716, 96
        %s718 = scalar_lea.vmem [#allocation9], %s717
        %p719 = pneg %p132
        %p720 = pneg %p129
        %p721 = pneg %p153
        %p722 = pneg %p150
        %p723 = pneg %p174
        %p724 = pneg %p171
        %p725 = pneg %p195
        %p726 = pneg %p192
        %p727 = pneg %p216
        %p728 = pneg %p213
        %p729 = pneg %p237
        %p730 = pneg %p234
        %p731 = pneg %p258
        %p732 = pneg %p255
        %p733 = pneg %p279
        %p734 = pneg %p276
        %p735 = pneg %p300
        %p736 = pneg %p297
        %p737 = pneg %p321
        %p738 = pneg %p318
        %p739 = pneg %p342
        %p740 = pneg %p339
        %p741 = pneg %p363
        %p742 = pneg %p360
        %p743 = pneg %p384
        %p744 = pneg %p381
        %s745 = ssub.s32 1, %s29
        %s746 = ssub.s32 1, %s29
        %p747 = scmp.eq.s32.totalorder %s29, 0
        // Predicated region
        $region181: #{siamese_forward.1} parent=155 // pred_check
          %p748 = pneg %p747
        $region182: #{siamese_forward.1} parent=155 // pred_check_branch
          %750 = sbr.rel (%p748) target = $region184
        $region183: #{siamese_forward.1} parent=155 // pred_region
          %751 = vst [vmem:[#allocation2] sm:$0xf] 0.0
          %752 = vst [vmem:[#allocation3] sm:$0xf] 0.0
          %753 = vst [vmem:[#allocation4] sm:$0xf] 0.0
          %754 = vst [vmem:[#allocation5] sm:$0xf] 0.0
        $region184: #{siamese_forward.1} parent=155 // pred_fallthru
          _
        %v755 = vld [vmem:[%s664] sm:$0xff]
        %v756 = vld [vmem:[%s664 + $0x8] sm:$0xff]
        %v757 = vld [vmem:[%s664 + $0x10] sm:$0xff]
        %v758 = vld [vmem:[%s664 + $0x18] sm:$0xff]
        %v759 = vld [vmem:[%s664 + $0x20] sm:$0xff]
        %v760 = vld [vmem:[%s664 + $0x28] sm:$0xff]
        %v761 = vld [vmem:[%s664 + $0x30] sm:$0xff]
        %v762 = vld [vmem:[%s664 + $0x38] sm:$0xff]
        %v763 = vld [vmem:[%s664 + $0x40] sm:$0xff]
        %v764 = vld [vmem:[%s664 + $0x48] sm:$0xff]
        %v765 = vld [vmem:[%s664 + $0x50] sm:$0xff]
        %v766 = vld [vmem:[%s664 + $0x58] sm:$0xff]
        %v767 = vld [vmem:[%s671] sm:$0xff]
        %v768 = vld [vmem:[%s671 + $0x8] sm:$0xff]
        %v769 = vld [vmem:[%s671 + $0x10] sm:$0xff]
        %v770 = vld [vmem:[%s671 + $0x18] sm:$0xff]
        %v771 = vld [vmem:[%s671 + $0x20] sm:$0xff]
        %v772 = vld [vmem:[%s671 + $0x28] sm:$0xff]
        %v773 = vld [vmem:[%s671 + $0x30] sm:$0xff]
        %v774 = vld [vmem:[%s671 + $0x38] sm:$0xff]
        %v775 = vld [vmem:[%s671 + $0x40] sm:$0xff]
        %v776 = vld [vmem:[%s671 + $0x48] sm:$0xff]
        %v777 = vld [vmem:[%s671 + $0x50] sm:$0xff]
        %v778 = vld [vmem:[%s671 + $0x58] sm:$0xff]
        %v779 = vld [vmem:[%s678] sm:$0xff]
        %v780 = vld [vmem:[%s678 + $0x8] sm:$0xff]
        %v781 = vld [vmem:[%s678 + $0x10] sm:$0xff]
        %v782 = vld [vmem:[%s678 + $0x18] sm:$0xff]
        %v783 = vld [vmem:[%s678 + $0x20] sm:$0xff]
        %v784 = vld [vmem:[%s678 + $0x28] sm:$0xff]
        %v785 = vld [vmem:[%s678 + $0x30] sm:$0xff]
        %v786 = vld [vmem:[%s678 + $0x38] sm:$0xff]
        %v787 = vld [vmem:[%s678 + $0x40] sm:$0xff]
        %v788 = vld [vmem:[%s678 + $0x48] sm:$0xff]
        %v789 = vld [vmem:[%s678 + $0x50] sm:$0xff]
        %v790 = vld [vmem:[%s678 + $0x58] sm:$0xff]
        %v791 = vld [vmem:[%s685] sm:$0xff]
        %v792 = vld [vmem:[%s685 + $0x8] sm:$0xff]
        %v793 = vld [vmem:[%s685 + $0x10] sm:$0xff]
        %v794 = vld [vmem:[%s685 + $0x18] sm:$0xff]
        %v795 = vld [vmem:[%s685 + $0x20] sm:$0xff]
        %v796 = vld [vmem:[%s685 + $0x28] sm:$0xff]
        %v797 = vld [vmem:[%s685 + $0x30] sm:$0xff]
        %v798 = vld [vmem:[%s685 + $0x38] sm:$0xff]
        %v799 = vld [vmem:[%s685 + $0x40] sm:$0xff]
        %v800 = vld [vmem:[%s685 + $0x48] sm:$0xff]
        %v801 = vld [vmem:[%s685 + $0x50] sm:$0xff]
        %v802 = vld [vmem:[%s685 + $0x58] sm:$0xff]
        %v803 = vld [vmem:[#allocation10] sm:$0xff]
        %v804 = vld [vmem:[#allocation10 + $0x8] sm:$0xff]
        %v805 = vld [vmem:[#allocation10 + $0x10] sm:$0xff]
        %v806 = vld [vmem:[#allocation10 + $0x18] sm:$0xff]
        %v807 = vld [vmem:[#allocation10 + $0x20] sm:$0xff]
        %v808 = vld [vmem:[#allocation10 + $0x28] sm:$0xff]
        %v809 = vld [vmem:[#allocation10 + $0x30] sm:$0xff]
        %v810 = vld [vmem:[#allocation10 + $0x38] sm:$0xff]
        %v811 = vld [vmem:[#allocation10 + $0x40] sm:$0xff]
        %v812 = vld [vmem:[#allocation10 + $0x48] sm:$0xff]
        %v813 = vld [vmem:[#allocation10 + $0x50] sm:$0xff]
        %v814 = vld [vmem:[#allocation10 + $0x58] sm:$0xff]
        %v815 = vld [vmem:[#allocation10 + $0x60] sm:$0xff]
        %v816 = vld [vmem:[#allocation10 + $0x68] sm:$0xff]
        %v817 = vld [vmem:[#allocation10 + $0x70] sm:$0xff]
        %v818 = vld [vmem:[#allocation10 + $0x78] sm:$0xff]
        %v819 = vld [vmem:[#allocation10 + $0x80] sm:$0xff]
        %v820 = vld [vmem:[#allocation10 + $0x88] sm:$0xff]
        %v821 = vld [vmem:[#allocation10 + $0x90] sm:$0xff]
        %v822 = vld [vmem:[#allocation10 + $0x98] sm:$0xff]
        %v823 = vld [vmem:[#allocation10 + $0xa0] sm:$0xff]
        %v824 = vld [vmem:[#allocation10 + $0xa8] sm:$0xff]
        %v825 = vld [vmem:[#allocation10 + $0xb0] sm:$0xff]
        %v826 = vld [vmem:[#allocation10 + $0xb8] sm:$0xff]
        %v827 = vld [vmem:[#allocation10 + $0xc0] sm:$0xff]
        %v828 = vld [vmem:[#allocation10 + $0xc8] sm:$0xff]
        %v829 = vld [vmem:[#allocation10 + $0xd0] sm:$0xff]
        %v830 = vld [vmem:[#allocation10 + $0xd8] sm:$0xff]
        %v831 = vld [vmem:[#allocation10 + $0xe0] sm:$0xff]
        %v832 = vld [vmem:[#allocation10 + $0xe8] sm:$0xff]
        %v833 = vld [vmem:[#allocation10 + $0xf0] sm:$0xff]
        %v834 = vld [vmem:[#allocation10 + $0xf8] sm:$0xff]
        %v835 = vld [vmem:[#allocation10 + $0x100] sm:$0xff]
        %v836 = vld [vmem:[#allocation10 + $0x108] sm:$0xff]
        %v837 = vld [vmem:[#allocation10 + $0x110] sm:$0xff]
        %v838 = vld [vmem:[#allocation10 + $0x118] sm:$0xff]
        %v839 = vld [vmem:[#allocation10 + $0x120] sm:$0xff]
        %v840 = vld [vmem:[#allocation10 + $0x128] sm:$0xff]
        %v841 = vld [vmem:[#allocation10 + $0x130] sm:$0xff]
        %v842 = vld [vmem:[#allocation10 + $0x138] sm:$0xff]
        %v843 = vld [vmem:[#allocation10 + $0x140] sm:$0xff]
        %v844 = vld [vmem:[#allocation10 + $0x148] sm:$0xff]
        %v845 = vld [vmem:[#allocation10 + $0x150] sm:$0xff]
        %v846 = vld [vmem:[#allocation10 + $0x158] sm:$0xff]
        %v847 = vld [vmem:[#allocation10 + $0x160] sm:$0xff]
        %v848 = vld [vmem:[#allocation10 + $0x168] sm:$0xff]
        %v849 = vld [vmem:[#allocation10 + $0x170] sm:$0xff]
        %v850 = vld [vmem:[#allocation10 + $0x178] sm:$0xff]
        %v851 = vld [vmem:[#allocation10 + $0x180] sm:$0xff]
        %v852 = vld [vmem:[#allocation10 + $0x188] sm:$0xff]
        %v853 = vld [vmem:[#allocation10 + $0x190] sm:$0xff]
        %v854 = vld [vmem:[#allocation10 + $0x198] sm:$0xff]
        %v855 = vld [vmem:[#allocation10 + $0x1a0] sm:$0xff]
        %v856 = vld [vmem:[#allocation10 + $0x1a8] sm:$0xff]
        %v857 = vld [vmem:[#allocation10 + $0x1b0] sm:$0xff]
        %v858 = vld [vmem:[#allocation10 + $0x1b8] sm:$0xff]
        %v859 = vld [vmem:[#allocation10 + $0x1c0] sm:$0xff]
        %v860 = vld [vmem:[#allocation10 + $0x1c8] sm:$0xff]
        %v861 = vld [vmem:[#allocation10 + $0x1d0] sm:$0xff]
        %v862 = vld [vmem:[#allocation10 + $0x1d8] sm:$0xff]
        %v863 = vld [vmem:[#allocation10 + $0x1e0] sm:$0xff]
        %v864 = vld [vmem:[#allocation10 + $0x1e8] sm:$0xff]
        %v865 = vld [vmem:[#allocation10 + $0x1f0] sm:$0xff]
        %v866 = vld [vmem:[#allocation10 + $0x1f8] sm:$0xff]
        %v867 = vld [vmem:[#allocation10 + $0x200] sm:$0xff]
        %v868 = vld [vmem:[#allocation10 + $0x208] sm:$0xff]
        %v869 = vld [vmem:[#allocation10 + $0x210] sm:$0xff]
        %v870 = vld [vmem:[#allocation10 + $0x218] sm:$0xff]
        %v871 = vld [vmem:[#allocation10 + $0x220] sm:$0xff]
        %v872 = vld [vmem:[#allocation10 + $0x228] sm:$0xff]
        %v873 = vld [vmem:[#allocation10 + $0x230] sm:$0xff]
        %v874 = vld [vmem:[#allocation10 + $0x238] sm:$0xff]
        %v875 = vld [vmem:[#allocation10 + $0x240] sm:$0xff]
        %v876 = vld [vmem:[#allocation10 + $0x248] sm:$0xff]
        %v877 = vld [vmem:[#allocation10 + $0x250] sm:$0xff]
        %v878 = vld [vmem:[#allocation10 + $0x258] sm:$0xff]
        %v879 = vld [vmem:[#allocation10 + $0x260] sm:$0xff]
        %v880 = vld [vmem:[#allocation10 + $0x268] sm:$0xff]
        %v881 = vld [vmem:[#allocation10 + $0x270] sm:$0xff]
        %v882 = vld [vmem:[#allocation10 + $0x278] sm:$0xff]
        %v883 = vld [vmem:[#allocation10 + $0x280] sm:$0xff]
        %v884 = vld [vmem:[#allocation10 + $0x288] sm:$0xff]
        %v885 = vld [vmem:[#allocation10 + $0x290] sm:$0xff]
        %v886 = vld [vmem:[#allocation10 + $0x298] sm:$0xff]
        %v887 = vld [vmem:[#allocation10 + $0x2a0] sm:$0xff]
        %v888 = vld [vmem:[#allocation10 + $0x2a8] sm:$0xff]
        %v889 = vld [vmem:[#allocation10 + $0x2b0] sm:$0xff]
        %v890 = vld [vmem:[#allocation10 + $0x2b8] sm:$0xff]
        %v891 = vld [vmem:[#allocation10 + $0x2c0] sm:$0xff]
        %v892 = vld [vmem:[#allocation10 + $0x2c8] sm:$0xff]
        %v893 = vld [vmem:[#allocation10 + $0x2d0] sm:$0xff]
        %v894 = vld [vmem:[#allocation10 + $0x2d8] sm:$0xff]
        %v895 = vld [vmem:[#allocation10 + $0x2e0] sm:$0xff]
        %v896 = vld [vmem:[#allocation10 + $0x2e8] sm:$0xff]
        %v897 = vld [vmem:[#allocation10 + $0x2f0] sm:$0xff]
        %v898 = vld [vmem:[#allocation10 + $0x2f8] sm:$0xff]
        %v899 = vld [vmem:[#allocation10 + $0x300] sm:$0xff]
        %v900 = vld [vmem:[#allocation10 + $0x308] sm:$0xff]
        %v901 = vld [vmem:[#allocation10 + $0x310] sm:$0xff]
        %v902 = vld [vmem:[#allocation10 + $0x318] sm:$0xff]
        %v903 = vld [vmem:[#allocation10 + $0x320] sm:$0xff]
        %v904 = vld [vmem:[#allocation10 + $0x328] sm:$0xff]
        %v905 = vld [vmem:[#allocation10 + $0x330] sm:$0xff]
        %v906 = vld [vmem:[#allocation10 + $0x338] sm:$0xff]
        %v907 = vld [vmem:[#allocation10 + $0x340] sm:$0xff]
        %v908 = vld [vmem:[#allocation10 + $0x348] sm:$0xff]
        %v909 = vld [vmem:[#allocation10 + $0x350] sm:$0xff]
        %v910 = vld [vmem:[#allocation10 + $0x358] sm:$0xff]
        %v911 = vld [vmem:[#allocation10 + $0x360] sm:$0xff]
        %v912 = vld [vmem:[#allocation10 + $0x368] sm:$0xff]
        %v913 = vld [vmem:[#allocation10 + $0x370] sm:$0xff]
        %v914 = vld [vmem:[#allocation10 + $0x378] sm:$0xff]
        %v915 = vld [vmem:[#allocation10 + $0x380] sm:$0xff]
        %v916 = vld [vmem:[#allocation10 + $0x388] sm:$0xff]
        %v917 = vld [vmem:[#allocation10 + $0x390] sm:$0xff]
        %v918 = vld [vmem:[#allocation10 + $0x398] sm:$0xff]
        %v919 = vld [vmem:[#allocation10 + $0x3a0] sm:$0xff]
        %v920 = vld [vmem:[#allocation10 + $0x3a8] sm:$0xff]
        %v921 = vld [vmem:[#allocation10 + $0x3b0] sm:$0xff]
        %v922 = vld [vmem:[#allocation10 + $0x3b8] sm:$0xff]
        %v923 = vld [vmem:[#allocation10 + $0x3c0] sm:$0xff]
        %v924 = vld [vmem:[#allocation10 + $0x3c8] sm:$0xff]
        %v925 = vld [vmem:[#allocation10 + $0x3d0] sm:$0xff]
        %v926 = vld [vmem:[#allocation10 + $0x3d8] sm:$0xff]
        %v927 = vld [vmem:[#allocation10 + $0x3e0] sm:$0xff]
        %v928 = vld [vmem:[#allocation10 + $0x3e8] sm:$0xff]
        %v929 = vld [vmem:[#allocation10 + $0x3f0] sm:$0xff]
        %v930 = vld [vmem:[#allocation10 + $0x3f8] sm:$0xff]
        %v931 = vld [vmem:[#allocation10 + $0x400] sm:$0xff]
        %v932 = vld [vmem:[#allocation10 + $0x408] sm:$0xff]
        %v933 = vld [vmem:[#allocation10 + $0x410] sm:$0xff]
        %v934 = vld [vmem:[#allocation10 + $0x418] sm:$0xff]
        %v935 = vld [vmem:[#allocation10 + $0x420] sm:$0xff]
        %v936 = vld [vmem:[#allocation10 + $0x428] sm:$0xff]
        %v937 = vld [vmem:[#allocation10 + $0x430] sm:$0xff]
        %v938 = vld [vmem:[#allocation10 + $0x438] sm:$0xff]
        %v939 = vld [vmem:[#allocation10 + $0x440] sm:$0xff]
        %v940 = vld [vmem:[#allocation10 + $0x448] sm:$0xff]
        %v941 = vld [vmem:[#allocation10 + $0x450] sm:$0xff]
        %v942 = vld [vmem:[#allocation10 + $0x458] sm:$0xff]
        %v943 = vld [vmem:[#allocation10 + $0x460] sm:$0xff]
        %v944 = vld [vmem:[#allocation10 + $0x468] sm:$0xff]
        %v945 = vld [vmem:[#allocation10 + $0x470] sm:$0xff]
        %v946 = vld [vmem:[#allocation10 + $0x478] sm:$0xff]
        %v947 = vld [vmem:[#allocation10 + $0x480] sm:$0xff]
        %v948 = vld [vmem:[#allocation10 + $0x488] sm:$0xff]
        %v949 = vld [vmem:[#allocation10 + $0x490] sm:$0xff]
        %v950 = vld [vmem:[#allocation10 + $0x498] sm:$0xff]
        %v951 = vld [vmem:[#allocation10 + $0x4a0] sm:$0xff]
        %v952 = vld [vmem:[#allocation10 + $0x4a8] sm:$0xff]
        %v953 = vld [vmem:[#allocation10 + $0x4b0] sm:$0xff]
        %v954 = vld [vmem:[#allocation10 + $0x4b8] sm:$0xff]
        %v955 = vld [vmem:[#allocation10 + $0x4c0] sm:$0xff]
        %v956 = vld [vmem:[#allocation10 + $0x4c8] sm:$0xff]
        %v957 = vld [vmem:[#allocation10 + $0x4d0] sm:$0xff]
        %v958 = vld [vmem:[#allocation10 + $0x4d8] sm:$0xff]
        %v959 = vld [vmem:[#allocation10 + $0x4e0] sm:$0xff]
        %v960 = vld [vmem:[#allocation10 + $0x4e8] sm:$0xff]
        %v961 = vld [vmem:[#allocation10 + $0x4f0] sm:$0xff]
        %v962 = vld [vmem:[#allocation10 + $0x4f8] sm:$0xff]
        %v963 = vld [vmem:[#allocation10 + $0x500] sm:$0xff]
        %v964 = vld [vmem:[#allocation10 + $0x508] sm:$0xff]
        %v965 = vld [vmem:[#allocation10 + $0x510] sm:$0xff]
        %v966 = vld [vmem:[#allocation10 + $0x518] sm:$0xff]
        %v967 = vld [vmem:[#allocation10 + $0x520] sm:$0xff]
        %v968 = vld [vmem:[#allocation10 + $0x528] sm:$0xff]
        %v969 = vld [vmem:[#allocation10 + $0x530] sm:$0xff]
        %v970 = vld [vmem:[#allocation10 + $0x538] sm:$0xff]
        %v971 = vld [vmem:[#allocation10 + $0x540] sm:$0xff]
        %v972 = vld [vmem:[#allocation10 + $0x548] sm:$0xff]
        %v973 = vld [vmem:[#allocation10 + $0x550] sm:$0xff]
        %v974 = vld [vmem:[#allocation10 + $0x558] sm:$0xff]
        %v975 = vld [vmem:[#allocation10 + $0x560] sm:$0xff]
        %v976 = vld [vmem:[#allocation10 + $0x568] sm:$0xff]
        %v977 = vld [vmem:[#allocation10 + $0x570] sm:$0xff]
        %v978 = vld [vmem:[#allocation10 + $0x578] sm:$0xff]
        %v979 = vld [vmem:[#allocation10 + $0x580] sm:$0xff]
        %v980 = vld [vmem:[#allocation10 + $0x588] sm:$0xff]
        %v981 = vld [vmem:[#allocation10 + $0x590] sm:$0xff]
        %v982 = vld [vmem:[#allocation10 + $0x598] sm:$0xff]
        %v983 = vld [vmem:[#allocation10 + $0x5a0] sm:$0xff]
        %v984 = vld [vmem:[#allocation10 + $0x5a8] sm:$0xff]
        %v985 = vld [vmem:[#allocation10 + $0x5b0] sm:$0xff]
        %v986 = vld [vmem:[#allocation10 + $0x5b8] sm:$0xff]
        %v987 = vld [vmem:[#allocation10 + $0x5c0] sm:$0xff]
        %v988 = vld [vmem:[#allocation10 + $0x5c8] sm:$0xff]
        %v989 = vld [vmem:[#allocation10 + $0x5d0] sm:$0xff]
        %v990 = vld [vmem:[#allocation10 + $0x5d8] sm:$0xff]
        %v991 = vld [vmem:[#allocation10 + $0x5e0] sm:$0xff]
        %v992 = vld [vmem:[#allocation10 + $0x5e8] sm:$0xff]
        %v993 = vld [vmem:[#allocation10 + $0x5f0] sm:$0xff]
        %v994 = vld [vmem:[#allocation10 + $0x5f8] sm:$0xff]
        %v995 = vld [vmem:[#allocation10 + $0x600] sm:$0xff]
        %v996 = vld [vmem:[#allocation10 + $0x608] sm:$0xff]
        %v997 = vld [vmem:[#allocation10 + $0x610] sm:$0xff]
        %v998 = vld [vmem:[#allocation10 + $0x618] sm:$0xff]
        %v999 = vld [vmem:[#allocation10 + $0x620] sm:$0xff]
        %v1000 = vld [vmem:[#allocation10 + $0x628] sm:$0xff]
        %v1001 = vld [vmem:[#allocation10 + $0x630] sm:$0xff]
        %v1002 = vld [vmem:[#allocation10 + $0x638] sm:$0xff]
        %v1003 = vld [vmem:[#allocation10 + $0x640] sm:$0xff]
        %v1004 = vld [vmem:[#allocation10 + $0x648] sm:$0xff]
        %v1005 = vld [vmem:[#allocation10 + $0x650] sm:$0xff]
        %v1006 = vld [vmem:[#allocation10 + $0x658] sm:$0xff]
        %v1007 = vld [vmem:[#allocation10 + $0x660] sm:$0xff]
        %v1008 = vld [vmem:[#allocation10 + $0x668] sm:$0xff]
        %v1009 = vld [vmem:[#allocation10 + $0x670] sm:$0xff]
        %v1010 = vld [vmem:[#allocation10 + $0x678] sm:$0xff]
        %v1011 = vld [vmem:[#allocation10 + $0x680] sm:$0xff]
        %v1012 = vld [vmem:[#allocation10 + $0x688] sm:$0xff]
        %v1013 = vld [vmem:[#allocation10 + $0x690] sm:$0xff]
        %v1014 = vld [vmem:[#allocation10 + $0x698] sm:$0xff]
        %v1015 = vld [vmem:[#allocation10 + $0x6a0] sm:$0xff]
        %v1016 = vld [vmem:[#allocation10 + $0x6a8] sm:$0xff]
        %v1017 = vld [vmem:[#allocation10 + $0x6b0] sm:$0xff]
        %v1018 = vld [vmem:[#allocation10 + $0x6b8] sm:$0xff]
        %v1019 = vld [vmem:[#allocation10 + $0x6c0] sm:$0xff]
        %v1020 = vld [vmem:[#allocation10 + $0x6c8] sm:$0xff]
        %v1021 = vld [vmem:[#allocation10 + $0x6d0] sm:$0xff]
        %v1022 = vld [vmem:[#allocation10 + $0x6d8] sm:$0xff]
        %v1023 = vld [vmem:[#allocation10 + $0x6e0] sm:$0xff]
        %v1024 = vld [vmem:[#allocation10 + $0x6e8] sm:$0xff]
        %v1025 = vld [vmem:[#allocation10 + $0x6f0] sm:$0xff]
        %v1026 = vld [vmem:[#allocation10 + $0x6f8] sm:$0xff]
        %v1027 = vld [vmem:[#allocation10 + $0x700] sm:$0xff]
        %v1028 = vld [vmem:[#allocation10 + $0x708] sm:$0xff]
        %v1029 = vld [vmem:[#allocation10 + $0x710] sm:$0xff]
        %v1030 = vld [vmem:[#allocation10 + $0x718] sm:$0xff]
        %v1031 = vld [vmem:[#allocation10 + $0x720] sm:$0xff]
        %v1032 = vld [vmem:[#allocation10 + $0x728] sm:$0xff]
        %v1033 = vld [vmem:[#allocation10 + $0x730] sm:$0xff]
        %v1034 = vld [vmem:[#allocation10 + $0x738] sm:$0xff]
        %v1035 = vld [vmem:[#allocation10 + $0x740] sm:$0xff]
        %v1036 = vld [vmem:[#allocation10 + $0x748] sm:$0xff]
        %v1037 = vld [vmem:[#allocation10 + $0x750] sm:$0xff]
        %v1038 = vld [vmem:[#allocation10 + $0x758] sm:$0xff]
        %v1039 = vld [vmem:[#allocation10 + $0x760] sm:$0xff]
        %v1040 = vld [vmem:[#allocation10 + $0x768] sm:$0xff]
        %v1041 = vld [vmem:[#allocation10 + $0x770] sm:$0xff]
        %v1042 = vld [vmem:[#allocation10 + $0x778] sm:$0xff]
        %v1043 = vld [vmem:[#allocation10 + $0x780] sm:$0xff]
        %v1044 = vld [vmem:[#allocation10 + $0x788] sm:$0xff]
        %v1045 = vld [vmem:[#allocation10 + $0x790] sm:$0xff]
        %v1046 = vld [vmem:[#allocation10 + $0x798] sm:$0xff]
        %v1047 = vld [vmem:[#allocation10 + $0x7a0] sm:$0xff]
        %v1048 = vld [vmem:[#allocation10 + $0x7a8] sm:$0xff]
        %v1049 = vld [vmem:[#allocation10 + $0x7b0] sm:$0xff]
        %v1050 = vld [vmem:[#allocation10 + $0x7b8] sm:$0xff]
        %v1051 = vld [vmem:[#allocation10 + $0x7c0] sm:$0xff]
        %v1052 = vld [vmem:[#allocation10 + $0x7c8] sm:$0xff]
        %v1053 = vld [vmem:[#allocation10 + $0x7d0] sm:$0xff]
        %v1054 = vld [vmem:[#allocation10 + $0x7d8] sm:$0xff]
        %v1055 = vld [vmem:[#allocation10 + $0x7e0] sm:$0xff]
        %v1056 = vld [vmem:[#allocation10 + $0x7e8] sm:$0xff]
        %v1057 = vld [vmem:[#allocation10 + $0x7f0] sm:$0xff]
        %v1058 = vld [vmem:[#allocation10 + $0x7f8] sm:$0xff]
        %v1059 = vld [vmem:[#allocation10 + $0x800] sm:$0xff]
        %v1060 = vld [vmem:[#allocation10 + $0x808] sm:$0xff]
        %v1061 = vld [vmem:[#allocation10 + $0x810] sm:$0xff]
        %v1062 = vld [vmem:[#allocation10 + $0x818] sm:$0xff]
        %v1063 = vld [vmem:[#allocation10 + $0x820] sm:$0xff]
        %v1064 = vld [vmem:[#allocation10 + $0x828] sm:$0xff]
        %v1065 = vld [vmem:[#allocation10 + $0x830] sm:$0xff]
        %v1066 = vld [vmem:[#allocation10 + $0x838] sm:$0xff]
        %v1067 = vld [vmem:[#allocation10 + $0x840] sm:$0xff]
        %v1068 = vld [vmem:[#allocation10 + $0x848] sm:$0xff]
        %v1069 = vld [vmem:[#allocation10 + $0x850] sm:$0xff]
        %v1070 = vld [vmem:[#allocation10 + $0x858] sm:$0xff]
        %v1071 = vld [vmem:[#allocation10 + $0x860] sm:$0xff]
        %v1072 = vld [vmem:[#allocation10 + $0x868] sm:$0xff]
        %v1073 = vld [vmem:[#allocation10 + $0x870] sm:$0xff]
        %v1074 = vld [vmem:[#allocation10 + $0x878] sm:$0xff]
        %v1075 = vld [vmem:[#allocation10 + $0x880] sm:$0xff]
        %v1076 = vld [vmem:[#allocation10 + $0x888] sm:$0xff]
        %v1077 = vld [vmem:[#allocation10 + $0x890] sm:$0xff]
        %v1078 = vld [vmem:[#allocation10 + $0x898] sm:$0xff]
        %v1079 = vld [vmem:[#allocation10 + $0x8a0] sm:$0xff]
        %v1080 = vld [vmem:[#allocation10 + $0x8a8] sm:$0xff]
        %v1081 = vld [vmem:[#allocation10 + $0x8b0] sm:$0xff]
        %v1082 = vld [vmem:[#allocation10 + $0x8b8] sm:$0xff]
        %v1083 = vld [vmem:[#allocation10 + $0x8c0] sm:$0xff]
        %v1084 = vld [vmem:[#allocation10 + $0x8c8] sm:$0xff]
        %v1085 = vld [vmem:[#allocation10 + $0x8d0] sm:$0xff]
        %v1086 = vld [vmem:[#allocation10 + $0x8d8] sm:$0xff]
        %v1087 = vld [vmem:[#allocation10 + $0x8e0] sm:$0xff]
        %v1088 = vld [vmem:[#allocation10 + $0x8e8] sm:$0xff]
        %v1089 = vld [vmem:[#allocation10 + $0x8f0] sm:$0xff]
        %v1090 = vld [vmem:[#allocation10 + $0x8f8] sm:$0xff]
        %1091 = vmatprep.subr.mxu0 %v804
        %1092 = vmatpush1.msra.mxu0 %v803
        %1093 = vmatprep.subr.mxu0 %v807
        %1094 = vmatpush1.msra.mxu0 %v806
        %1095 = vmatprep.subr.mxu0 %v810
        %1096 = vmatpush1.msra.mxu0 %v809
        %1097 = vmatprep.subr.mxu0 %v813
        %1098 = vmatpush1.msra.mxu0 %v812
        %1099 = vmatprep.subr.mxu0 %v816
        %1100 = vmatpush1.msra.mxu0 %v815
        %1101 = vmatprep.subr.mxu0 %v819
        %1102 = vmatpush1.msra.mxu0 %v818
        %1103 = vmatprep.subr.mxu0 %v822
        %1104 = vmatpush1.msra.mxu0 %v821
        %1105 = vmatprep.subr.mxu0 %v825
        %1106 = vmatpush1.msra.mxu0 %v824
        %1107 = vmatprep.subr.mxu0 %v828
        %1108 = vmatpush1.msra.mxu0 %v827
        %1109 = vmatprep.subr.mxu0 %v831
        %1110 = vmatpush1.msra.mxu0 %v830
        %1111 = vmatprep.subr.mxu0 %v834
        %1112 = vmatpush1.msra.mxu0 %v833
        %1113 = vmatprep.subr.mxu0 %v837
        %1114 = vmatpush1.msra.mxu0 %v836
        %1115 = vmatprep.subr.mxu0 %v840
        %1116 = vmatpush1.msra.mxu0 %v839
        %1117 = vmatprep.subr.mxu0 %v843
        %1118 = vmatpush1.msra.mxu0 %v842
        %1119 = vmatprep.subr.mxu0 %v846
        %1120 = vmatpush1.msra.mxu0 %v845
        %1121 = vmatprep.subr.mxu0 %v849
        %1122 = vmatpush1.msra.mxu0 %v848
        %1123 = vmatprep.subr.mxu0 %v852
        %1124 = vmatpush1.msra.mxu0 %v851
        %1125 = vmatprep.subr.mxu0 %v855
        %1126 = vmatpush1.msra.mxu0 %v854
        %1127 = vmatprep.subr.mxu0 %v858
        %1128 = vmatpush1.msra.mxu0 %v857
        %1129 = vmatprep.subr.mxu0 %v861
        %1130 = vmatpush1.msra.mxu0 %v860
        %1131 = vmatprep.subr.mxu0 %v864
        %1132 = vmatpush1.msra.mxu0 %v863
        %1133 = vmatprep.subr.mxu0 %v867
        %1134 = vmatpush1.msra.mxu0 %v866
        %1135 = vmatprep.subr.mxu0 %v870
        %1136 = vmatpush1.msra.mxu0 %v869
        %1137 = vmatprep.subr.mxu0 %v873
        %1138 = vmatpush1.msra.mxu0 %v872
        %1139 = vmatprep.subr.mxu0 %v876
        %1140 = vmatpush1.msra.mxu0 %v875
        %1141 = vmatprep.subr.mxu0 %v879
        %1142 = vmatpush1.msra.mxu0 %v878
        %1143 = vmatprep.subr.mxu0 %v882
        %1144 = vmatpush1.msra.mxu0 %v881
        %1145 = vmatprep.subr.mxu0 %v885
        %1146 = vmatpush1.msra.mxu0 %v884
        %1147 = vmatprep.subr.mxu0 %v888
        %1148 = vmatpush1.msra.mxu0 %v887
        %1149 = vmatprep.subr.mxu0 %v891
        %1150 = vmatpush1.msra.mxu0 %v890
        %1151 = vmatprep.subr.mxu0 %v894
        %1152 = vmatpush1.msra.mxu0 %v893
        %1153 = vmatprep.subr.mxu0 %v897
        %1154 = vmatpush1.msra.mxu0 %v896
        %1155 = vmatprep.mubr.f32.mxu0 %v756
        %1156 = vmatmul.mubr.f32.gmra.mrb[0].mxu0 %v755
        %v1157 = vpop.f32.mrb[0].mxu0
        %v1158 = vadd.f32 0.0, %v1157
        %v1159 = vpop.f32.mrb[0].mxu0
        %v1160 = vadd.f32 0.0, %v1159
        %1161 = vmatprep.mubr.f32.mxu0 %v762
        %1162 = vmatmul.mubr.f32.gmra.mrb[0].mxu0 %v761
        %v1163 = vpop.f32.mrb[0].mxu0
        %v1164 = vadd.f32 0.0, %v1163
        %v1165 = vpop.f32.mrb[0].mxu0
        %v1166 = vadd.f32 0.0, %v1165
        %1167 = vmatprep.mubr.f32.mxu0 %v768
        %1168 = vmatmul.mubr.f32.gmra.mrb[0].mxu0 %v767
        %v1169 = vpop.f32.mrb[0].mxu0
        %v1170 = vadd.f32 0.0, %v1169
        %v1171 = vpop.f32.mrb[0].mxu0
        %v1172 = vadd.f32 0.0, %v1171
        %1173 = vmatprep.mubr.f32.mxu0 %v774
        %1174 = vmatmul.mubr.f32.gmra.mrb[0].mxu0 %v773
        %v1175 = vpop.f32.mrb[0].mxu0
        %v1176 = vadd.f32 0.0, %v1175
        %v1177 = vpop.f32.mrb[0].mxu0
        %v1178 = vadd.f32 0.0, %v1177
        %1179 = vdwg.mxu0
        %1180 = vmatprep.subr.mxu0 %v900
        %1181 = vmatpush1.msra.mxu0 %v899
        %1182 = vmatprep.subr.mxu0 %v903
        %1183 = vmatpush1.msra.mxu0 %v902
        %1184 = vmatprep.subr.mxu0 %v906
        %1185 = vmatpush1.msra.mxu0 %v905
        %1186 = vmatprep.subr.mxu0 %v909
        %1187 = vmatpush1.msra.mxu0 %v908
        %1188 = vmatprep.subr.mxu0 %v912
        %1189 = vmatpush1.msra.mxu0 %v911
        %1190 = vmatprep.subr.mxu0 %v915
        %1191 = vmatpush1.msra.mxu0 %v914
        %1192 = vmatprep.subr.mxu0 %v918
        %1193 = vmatpush1.msra.mxu0 %v917
        %1194 = vmatprep.subr.mxu0 %v921
        %1195 = vmatpush1.msra.mxu0 %v920
        %1196 = vmatprep.subr.mxu0 %v924
        %1197 = vmatpush1.msra.mxu0 %v923
        %1198 = vmatprep.subr.mxu0 %v927
        %1199 = vmatpush1.msra.mxu0 %v926
        %1200 = vmatprep.subr.mxu0 %v930
        %1201 = vmatpush1.msra.mxu0 %v929
        %1202 = vmatprep.subr.mxu0 %v933
        %1203 = vmatpush1.msra.mxu0 %v932
        %1204 = vmatprep.subr.mxu0 %v936
        %1205 = vmatpush1.msra.mxu0 %v935
        %1206 = vmatprep.subr.mxu0 %v939
        %1207 = vmatpush1.msra.mxu0 %v938
        %1208 = vmatprep.subr.mxu0 %v942
        %1209 = vmatpush1.msra.mxu0 %v941
        %1210 = vmatprep.subr.mxu0 %v945
        %1211 = vmatpush1.msra.mxu0 %v944
        %1212 = vmatprep.subr.mxu0 %v948
        %1213 = vmatpush1.msra.mxu0 %v947
        %1214 = vmatprep.subr.mxu0 %v951
        %1215 = vmatpush1.msra.mxu0 %v950
        %1216 = vmatprep.subr.mxu0 %v954
        %1217 = vmatpush1.msra.mxu0 %v953
        %1218 = vmatprep.subr.mxu0 %v957
        %1219 = vmatpush1.msra.mxu0 %v956
        %1220 = vmatprep.subr.mxu0 %v960
        %1221 = vmatpush1.msra.mxu0 %v959
        %1222 = vmatprep.subr.mxu0 %v963
        %1223 = vmatpush1.msra.mxu0 %v962
        %1224 = vmatprep.subr.mxu0 %v966
        %1225 = vmatpush1.msra.mxu0 %v965
        %1226 = vmatprep.subr.mxu0 %v969
        %1227 = vmatpush1.msra.mxu0 %v968
        %1228 = vmatprep.subr.mxu0 %v972
        %1229 = vmatpush1.msra.mxu0 %v971
        %1230 = vmatprep.subr.mxu0 %v975
        %1231 = vmatpush1.msra.mxu0 %v974
        %1232 = vmatprep.subr.mxu0 %v978
        %1233 = vmatpush1.msra.mxu0 %v977
        %1234 = vmatprep.subr.mxu0 %v981
        %1235 = vmatpush1.msra.mxu0 %v980
        %1236 = vmatprep.subr.mxu0 %v984
        %1237 = vmatpush1.msra.mxu0 %v983
        %1238 = vmatprep.subr.mxu0 %v987
        %1239 = vmatpush1.msra.mxu0 %v986
        %1240 = vmatprep.subr.mxu0 %v990
        %1241 = vmatpush1.msra.mxu0 %v989
        %1242 = vmatprep.subr.mxu0 %v993
        %1243 = vmatpush1.msra.mxu0 %v992
        %1244 = vmatprep.mubr.f32.mxu0 %v758
        %1245 = vmatmul.mubr.f32.gmra.mrb[0].mxu0 %v757
        %v1246 = vpop.f32.mrb[0].mxu0
        %v1247 = vadd.f32 %v1158, %v1246
        %v1248 = vpop.f32.mrb[0].mxu0
        %v1249 = vadd.f32 %v1160, %v1248
        %1250 = vmatprep.mubr.f32.mxu0 %v764
        %1251 = vmatmul.mubr.f32.gmra.mrb[0].mxu0 %v763
        %v1252 = vpop.f32.mrb[0].mxu0
        %v1253 = vadd.f32 %v1164, %v1252
        %v1254 = vpop.f32.mrb[0].mxu0
        %v1255 = vadd.f32 %v1166, %v1254
        %1256 = vmatprep.mubr.f32.mxu0 %v770
        %1257 = vmatmul.mubr.f32.gmra.mrb[0].mxu0 %v769
        %v1258 = vpop.f32.mrb[0].mxu0
        %v1259 = vadd.f32 %v1170, %v1258
        %v1260 = vpop.f32.mrb[0].mxu0
        %v1261 = vadd.f32 %v1172, %v1260
        %1262 = vmatprep.mubr.f32.mxu0 %v776
        %1263 = vmatmul.mubr.f32.gmra.mrb[0].mxu0 %v775
        %v1264 = vpop.f32.mrb[0].mxu0
        %v1265 = vadd.f32 %v1176, %v1264
        %v1266 = vpop.f32.mrb[0].mxu0
        %v1267 = vadd.f32 %v1178, %v1266
        %1268 = vdwg.mxu0
        %1269 = vmatprep.subr.mxu0 %v996
        %1270 = vmatpush1.msra.mxu0 %v995
        %1271 = vmatprep.subr.mxu0 %v999
        %1272 = vmatpush1.msra.mxu0 %v998
        %1273 = vmatprep.subr.mxu0 %v1002
        %1274 = vmatpush1.msra.mxu0 %v1001
        %1275 = vmatprep.subr.mxu0 %v1005
        %1276 = vmatpush1.msra.mxu0 %v1004
        %1277 = vmatprep.subr.mxu0 %v1008
        %1278 = vmatpush1.msra.mxu0 %v1007
        %1279 = vmatprep.subr.mxu0 %v1011
        %1280 = vmatpush1.msra.mxu0 %v1010
        %1281 = vmatprep.subr.mxu0 %v1014
        %1282 = vmatpush1.msra.mxu0 %v1013
        %1283 = vmatprep.subr.mxu0 %v1017
        %1284 = vmatpush1.msra.mxu0 %v1016
        %1285 = vmatprep.subr.mxu0 %v1020
        %1286 = vmatpush1.msra.mxu0 %v1019
        %1287 = vmatprep.subr.mxu0 %v1023
        %1288 = vmatpush1.msra.mxu0 %v1022
        %1289 = vmatprep.subr.mxu0 %v1026
        %1290 = vmatpush1.msra.mxu0 %v1025
        %1291 = vmatprep.subr.mxu0 %v1029
        %1292 = vmatpush1.msra.mxu0 %v1028
        %1293 = vmatprep.subr.mxu0 %v1032
        %1294 = vmatpush1.msra.mxu0 %v1031
        %1295 = vmatprep.subr.mxu0 %v1035
        %1296 = vmatpush1.msra.mxu0 %v1034
        %1297 = vmatprep.subr.mxu0 %v1038
        %1298 = vmatpush1.msra.mxu0 %v1037
        %1299 = vmatprep.subr.mxu0 %v1041
        %1300 = vmatpush1.msra.mxu0 %v1040
        %1301 = vmatprep.subr.mxu0 %v1044
        %1302 = vmatpush1.msra.mxu0 %v1043
        %1303 = vmatprep.subr.mxu0 %v1047
        %1304 = vmatpush1.msra.mxu0 %v1046
        %1305 = vmatprep.subr.mxu0 %v1050
        %1306 = vmatpush1.msra.mxu0 %v1049
        %1307 = vmatprep.subr.mxu0 %v1053
        %1308 = vmatpush1.msra.mxu0 %v1052
        %1309 = vmatprep.subr.mxu0 %v1056
        %1310 = vmatpush1.msra.mxu0 %v1055
        %1311 = vmatprep.subr.mxu0 %v1059
        %1312 = vmatpush1.msra.mxu0 %v1058
        %1313 = vmatprep.subr.mxu0 %v1062
        %1314 = vmatpush1.msra.mxu0 %v1061
        %1315 = vmatprep.subr.mxu0 %v1065
        %1316 = vmatpush1.msra.mxu0 %v1064
        %1317 = vmatprep.subr.mxu0 %v1068
        %1318 = vmatpush1.msra.mxu0 %v1067
        %1319 = vmatprep.subr.mxu0 %v1071
        %1320 = vmatpush1.msra.mxu0 %v1070
        %1321 = vmatprep.subr.mxu0 %v1074
        %1322 = vmatpush1.msra.mxu0 %v1073
        %1323 = vmatprep.subr.mxu0 %v1077
        %1324 = vmatpush1.msra.mxu0 %v1076
        %1325 = vmatprep.subr.mxu0 %v1080
        %1326 = vmatpush1.msra.mxu0 %v1079
        %1327 = vmatprep.subr.mxu0 %v1083
        %1328 = vmatpush1.msra.mxu0 %v1082
        %1329 = vmatprep.subr.mxu0 %v1086
        %1330 = vmatpush1.msra.mxu0 %v1085
        %1331 = vmatprep.subr.mxu0 %v1089
        %1332 = vmatpush1.msra.mxu0 %v1088
        %1333 = vmatprep.mubr.f32.mxu0 %v760
        %1334 = vmatmul.mubr.f32.gmra.mrb[0].mxu0 %v759
        %v1335 = vpop.f32.mrb[0].mxu0
        %v1336 = vadd.f32 %v1247, %v1335
        %v1337 = vpop.f32.mrb[0].mxu0
        %v1338 = vadd.f32 %v1249, %v1337
        %1339 = vmatprep.mubr.f32.mxu0 %v766
        %1340 = vmatmul.mubr.f32.gmra.mrb[0].mxu0 %v765
        %v1341 = vpop.f32.mrb[0].mxu0
        %v1342 = vadd.f32 %v1253, %v1341
        %v1343 = vpop.f32.mrb[0].mxu0
        %v1344 = vadd.f32 %v1255, %v1343
        %1345 = vmatprep.mubr.f32.mxu0 %v772
        %1346 = vmatmul.mubr.f32.gmra.mrb[0].mxu0 %v771
        %v1347 = vpop.f32.mrb[0].mxu0
        %v1348 = vadd.f32 %v1259, %v1347
        %v1349 = vpop.f32.mrb[0].mxu0
        %v1350 = vadd.f32 %v1261, %v1349
        %1351 = vmatprep.mubr.f32.mxu0 %v778
        %1352 = vmatmul.mubr.f32.gmra.mrb[0].mxu0 %v777
        %v1353 = vpop.f32.mrb[0].mxu0
        %v1354 = vadd.f32 %v1265, %v1353
        %v1355 = vpop.f32.mrb[0].mxu0
        %v1356 = vadd.f32 %v1267, %v1355
        %1357 = vdwg.mxu0
        %1358 = vmatprep.subr.mxu0 0.0
        %1359 = vmatpush1.msra.mxu0 %v805
        %1360 = vmatprep.subr.mxu0 0.0
        %1361 = vmatpush1.msra.mxu0 %v808
        %1362 = vmatprep.subr.mxu0 0.0
        %1363 = vmatpush1.msra.mxu0 %v811
        %1364 = vmatprep.subr.mxu0 0.0
        %1365 = vmatpush1.msra.mxu0 %v814
        %1366 = vmatprep.subr.mxu0 0.0
        %1367 = vmatpush1.msra.mxu0 %v817
        %1368 = vmatprep.subr.mxu0 0.0
        %1369 = vmatpush1.msra.mxu0 %v820
        %1370 = vmatprep.subr.mxu0 0.0
        %1371 = vmatpush1.msra.mxu0 %v823
        %1372 = vmatprep.subr.mxu0 0.0
        %1373 = vmatpush1.msra.mxu0 %v826
        %1374 = vmatprep.subr.mxu0 0.0
        %1375 = vmatpush1.msra.mxu0 %v829
        %1376 = vmatprep.subr.mxu0 0.0
        %1377 = vmatpush1.msra.mxu0 %v832
        %1378 = vmatprep.subr.mxu0 0.0
        %1379 = vmatpush1.msra.mxu0 %v835
        %1380 = vmatprep.subr.mxu0 0.0
        %1381 = vmatpush1.msra.mxu0 %v838
        %1382 = vmatprep.subr.mxu0 0.0
        %1383 = vmatpush1.msra.mxu0 %v841
        %1384 = vmatprep.subr.mxu0 0.0
        %1385 = vmatpush1.msra.mxu0 %v844
        %1386 = vmatprep.subr.mxu0 0.0
        %1387 = vmatpush1.msra.mxu0 %v847
        %1388 = vmatprep.subr.mxu0 0.0
        %1389 = vmatpush1.msra.mxu0 %v850
        %1390 = vmatprep.subr.mxu0 0.0
        %1391 = vmatpush1.msra.mxu0 %v853
        %1392 = vmatprep.subr.mxu0 0.0
        %1393 = vmatpush1.msra.mxu0 %v856
        %1394 = vmatprep.subr.mxu0 0.0
        %1395 = vmatpush1.msra.mxu0 %v859
        %1396 = vmatprep.subr.mxu0 0.0
        %1397 = vmatpush1.msra.mxu0 %v862
        %1398 = vmatprep.subr.mxu0 0.0
        %1399 = vmatpush1.msra.mxu0 %v865
        %1400 = vmatprep.subr.mxu0 0.0
        %1401 = vmatpush1.msra.mxu0 %v868
        %1402 = vmatprep.subr.mxu0 0.0
        %1403 = vmatpush1.msra.mxu0 %v871
        %1404 = vmatprep.subr.mxu0 0.0
        %1405 = vmatpush1.msra.mxu0 %v874
        %1406 = vmatprep.subr.mxu0 0.0
        %1407 = vmatpush1.msra.mxu0 %v877
        %1408 = vmatprep.subr.mxu0 0.0
        %1409 = vmatpush1.msra.mxu0 %v880
        %1410 = vmatprep.subr.mxu0 0.0
        %1411 = vmatpush1.msra.mxu0 %v883
        %1412 = vmatprep.subr.mxu0 0.0
        %1413 = vmatpush1.msra.mxu0 %v886
        %1414 = vmatprep.subr.mxu0 0.0
        %1415 = vmatpush1.msra.mxu0 %v889
        %1416 = vmatprep.subr.mxu0 0.0
        %1417 = vmatpush1.msra.mxu0 %v892
        %1418 = vmatprep.subr.mxu0 0.0
        %1419 = vmatpush1.msra.mxu0 %v895
        %1420 = vmatprep.subr.mxu0 0.0
        %1421 = vmatpush1.msra.mxu0 %v898
        %1422 = vmatprep.mubr.f32.mxu0 %v756
        %1423 = vmatmul.mubr.f32.gmra.mrb[0].mxu0 %v755
        %v1424 = vpop.f32.mrb[0].mxu0
        %v1425 = vadd.f32 0.0, %v1424
        %v1426 = vpop.f32.mrb[0].mxu0
        %1427 = vmatprep.mubr.f32.mxu0 %v762
        %1428 = vmatmul.mubr.f32.gmra.mrb[0].mxu0 %v761
        %v1429 = vpop.f32.mrb[0].mxu0
        %v1430 = vadd.f32 0.0, %v1429
        %v1431 = vpop.f32.mrb[0].mxu0
        %1432 = vmatprep.mubr.f32.mxu0 %v768
        %1433 = vmatmul.mubr.f32.gmra.mrb[0].mxu0 %v767
        %v1434 = vpop.f32.mrb[0].mxu0
        %v1435 = vadd.f32 0.0, %v1434
        %v1436 = vpop.f32.mrb[0].mxu0
        %1437 = vmatprep.mubr.f32.mxu0 %v774
        %1438 = vmatmul.mubr.f32.gmra.mrb[0].mxu0 %v773
        %v1439 = vpop.f32.mrb[0].mxu0
        %v1440 = vadd.f32 0.0, %v1439
        %v1441 = vpop.f32.mrb[0].mxu0
        %1442 = vdwg.mxu0
        %1443 = vmatprep.subr.mxu0 0.0
        %1444 = vmatpush1.msra.mxu0 %v901
        %1445 = vmatprep.subr.mxu0 0.0
        %1446 = vmatpush1.msra.mxu0 %v904
        %1447 = vmatprep.subr.mxu0 0.0
        %1448 = vmatpush1.msra.mxu0 %v907
        %1449 = vmatprep.subr.mxu0 0.0
        %1450 = vmatpush1.msra.mxu0 %v910
        %1451 = vmatprep.subr.mxu0 0.0
        %1452 = vmatpush1.msra.mxu0 %v913
        %1453 = vmatprep.subr.mxu0 0.0
        %1454 = vmatpush1.msra.mxu0 %v916
        %1455 = vmatprep.subr.mxu0 0.0
        %1456 = vmatpush1.msra.mxu0 %v919
        %1457 = vmatprep.subr.mxu0 0.0
        %1458 = vmatpush1.msra.mxu0 %v922
        %1459 = vmatprep.subr.mxu0 0.0
        %1460 = vmatpush1.msra.mxu0 %v925
        %1461 = vmatprep.subr.mxu0 0.0
        %1462 = vmatpush1.msra.mxu0 %v928
        %1463 = vmatprep.subr.mxu0 0.0
        %1464 = vmatpush1.msra.mxu0 %v931
        %1465 = vmatprep.subr.mxu0 0.0
        %1466 = vmatpush1.msra.mxu0 %v934
        %1467 = vmatprep.subr.mxu0 0.0
        %1468 = vmatpush1.msra.mxu0 %v937
        %1469 = vmatprep.subr.mxu0 0.0
        %1470 = vmatpush1.msra.mxu0 %v940
        %1471 = vmatprep.subr.mxu0 0.0
        %1472 = vmatpush1.msra.mxu0 %v943
        %1473 = vmatprep.subr.mxu0 0.0
        %1474 = vmatpush1.msra.mxu0 %v946
        %1475 = vmatprep.subr.mxu0 0.0
        %1476 = vmatpush1.msra.mxu0 %v949
        %1477 = vmatprep.subr.mxu0 0.0
        %1478 = vmatpush1.msra.mxu0 %v952
        %1479 = vmatprep.subr.mxu0 0.0
        %1480 = vmatpush1.msra.mxu0 %v955
        %1481 = vmatprep.subr.mxu0 0.0
        %1482 = vmatpush1.msra.mxu0 %v958
        %1483 = vmatprep.subr.mxu0 0.0
        %1484 = vmatpush1.msra.mxu0 %v961
        %1485 = vmatprep.subr.mxu0 0.0
        %1486 = vmatpush1.msra.mxu0 %v964
        %1487 = vmatprep.subr.mxu0 0.0
        %1488 = vmatpush1.msra.mxu0 %v967
        %1489 = vmatprep.subr.mxu0 0.0
        %1490 = vmatpush1.msra.mxu0 %v970
        %1491 = vmatprep.subr.mxu0 0.0
        %1492 = vmatpush1.msra.mxu0 %v973
        %1493 = vmatprep.subr.mxu0 0.0
        %1494 = vmatpush1.msra.mxu0 %v976
        %1495 = vmatprep.subr.mxu0 0.0
        %1496 = vmatpush1.msra.mxu0 %v979
        %1497 = vmatprep.subr.mxu0 0.0
        %1498 = vmatpush1.msra.mxu0 %v982
        %1499 = vmatprep.subr.mxu0 0.0
        %1500 = vmatpush1.msra.mxu0 %v985
        %1501 = vmatprep.subr.mxu0 0.0
        %1502 = vmatpush1.msra.mxu0 %v988
        %1503 = vmatprep.subr.mxu0 0.0
        %1504 = vmatpush1.msra.mxu0 %v991
        %1505 = vmatprep.subr.mxu0 0.0
        %1506 = vmatpush1.msra.mxu0 %v994
        %1507 = vmatprep.mubr.f32.mxu0 %v758
        %1508 = vmatmul.mubr.f32.gmra.mrb[0].mxu0 %v757
        %v1509 = vpop.f32.mrb[0].mxu0
        %v1510 = vadd.f32 %v1425, %v1509
        %v1511 = vpop.f32.mrb[0].mxu0
        %1512 = vmatprep.mubr.f32.mxu0 %v764
        %1513 = vmatmul.mubr.f32.gmra.mrb[0].mxu0 %v763
        %v1514 = vpop.f32.mrb[0].mxu0
        %v1515 = vadd.f32 %v1430, %v1514
        %v1516 = vpop.f32.mrb[0].mxu0
        %1517 = vmatprep.mubr.f32.mxu0 %v770
        %1518 = vmatmul.mubr.f32.gmra.mrb[0].mxu0 %v769
        %v1519 = vpop.f32.mrb[0].mxu0
        %v1520 = vadd.f32 %v1435, %v1519
        %v1521 = vpop.f32.mrb[0].mxu0
        %1522 = vmatprep.mubr.f32.mxu0 %v776
        %1523 = vmatmul.mubr.f32.gmra.mrb[0].mxu0 %v775
        %v1524 = vpop.f32.mrb[0].mxu0
        %v1525 = vadd.f32 %v1440, %v1524
        %v1526 = vpop.f32.mrb[0].mxu0
        %1527 = vdwg.mxu0
        %1528 = vmatprep.subr.mxu0 0.0
        %1529 = vmatpush1.msra.mxu0 %v997
        %1530 = vmatprep.subr.mxu0 0.0
        %1531 = vmatpush1.msra.mxu0 %v1000
        %1532 = vmatprep.subr.mxu0 0.0
        %1533 = vmatpush1.msra.mxu0 %v1003
        %1534 = vmatprep.subr.mxu0 0.0
        %1535 = vmatpush1.msra.mxu0 %v1006
        %1536 = vmatprep.subr.mxu0 0.0
        %1537 = vmatpush1.msra.mxu0 %v1009
        %1538 = vmatprep.subr.mxu0 0.0
        %1539 = vmatpush1.msra.mxu0 %v1012
        %1540 = vmatprep.subr.mxu0 0.0
        %1541 = vmatpush1.msra.mxu0 %v1015
        %1542 = vmatprep.subr.mxu0 0.0
        %1543 = vmatpush1.msra.mxu0 %v1018
        %1544 = vmatprep.subr.mxu0 0.0
        %1545 = vmatpush1.msra.mxu0 %v1021
        %1546 = vmatprep.subr.mxu0 0.0
        %1547 = vmatpush1.msra.mxu0 %v1024
        %1548 = vmatprep.subr.mxu0 0.0
        %1549 = vmatpush1.msra.mxu0 %v1027
        %1550 = vmatprep.subr.mxu0 0.0
        %1551 = vmatpush1.msra.mxu0 %v1030
        %1552 = vmatprep.subr.mxu0 0.0
        %1553 = vmatpush1.msra.mxu0 %v1033
        %1554 = vmatprep.subr.mxu0 0.0
        %1555 = vmatpush1.msra.mxu0 %v1036
        %1556 = vmatprep.subr.mxu0 0.0
        %1557 = vmatpush1.msra.mxu0 %v1039
        %1558 = vmatprep.subr.mxu0 0.0
        %1559 = vmatpush1.msra.mxu0 %v1042
        %1560 = vmatprep.subr.mxu0 0.0
        %1561 = vmatpush1.msra.mxu0 %v1045
        %1562 = vmatprep.subr.mxu0 0.0
        %1563 = vmatpush1.msra.mxu0 %v1048
        %1564 = vmatprep.subr.mxu0 0.0
        %1565 = vmatpush1.msra.mxu0 %v1051
        %1566 = vmatprep.subr.mxu0 0.0
        %1567 = vmatpush1.msra.mxu0 %v1054
        %1568 = vmatprep.subr.mxu0 0.0
        %1569 = vmatpush1.msra.mxu0 %v1057
        %1570 = vmatprep.subr.mxu0 0.0
        %1571 = vmatpush1.msra.mxu0 %v1060
        %1572 = vmatprep.subr.mxu0 0.0
        %1573 = vmatpush1.msra.mxu0 %v1063
        %1574 = vmatprep.subr.mxu0 0.0
        %1575 = vmatpush1.msra.mxu0 %v1066
        %1576 = vmatprep.subr.mxu0 0.0
        %1577 = vmatpush1.msra.mxu0 %v1069
        %1578 = vmatprep.subr.mxu0 0.0
        %1579 = vmatpush1.msra.mxu0 %v1072
        %1580 = vmatprep.subr.mxu0 0.0
        %1581 = vmatpush1.msra.mxu0 %v1075
        %1582 = vmatprep.subr.mxu0 0.0
        %1583 = vmatpush1.msra.mxu0 %v1078
        %1584 = vmatprep.subr.mxu0 0.0
        %1585 = vmatpush1.msra.mxu0 %v1081
        %1586 = vmatprep.subr.mxu0 0.0
        %1587 = vmatpush1.msra.mxu0 %v1084
        %1588 = vmatprep.subr.mxu0 0.0
        %1589 = vmatpush1.msra.mxu0 %v1087
        %1590 = vmatprep.subr.mxu0 0.0
        %1591 = vmatpush1.msra.mxu0 %v1090
        %1592 = vmatprep.mubr.f32.mxu0 %v760
        %1593 = vmatmul.mubr.f32.gmra.mrb[0].mxu0 %v759
        %v1594 = vpop.f32.mrb[0].mxu0
        %v1595 = vadd.f32 %v1510, %v1594
        %v1596 = vpop.f32.mrb[0].mxu0
        %1597 = vmatprep.mubr.f32.mxu0 %v766
        %1598 = vmatmul.mubr.f32.gmra.mrb[0].mxu0 %v765
        %v1599 = vpop.f32.mrb[0].mxu0
        %v1600 = vadd.f32 %v1515, %v1599
        %v1601 = vpop.f32.mrb[0].mxu0
        %1602 = vmatprep.mubr.f32.mxu0 %v772
        %1603 = vmatmul.mubr.f32.gmra.mrb[0].mxu0 %v771
        %v1604 = vpop.f32.mrb[0].mxu0
        %v1605 = vadd.f32 %v1520, %v1604
        %v1606 = vpop.f32.mrb[0].mxu0
        %1607 = vmatprep.mubr.f32.mxu0 %v778
        %1608 = vmatmul.mubr.f32.gmra.mrb[0].mxu0 %v777
        %v1609 = vpop.f32.mrb[0].mxu0
        %v1610 = vadd.f32 %v1525, %v1609
        %v1611 = vpop.f32.mrb[0].mxu0
        %1612 = vdwg.mxu0
        %v1613 = vld [vmem:[%s6] sm:$0x7]
        %v1615 = vlaneseq
        %v1616 = vshrl.u32 %v1615, 7
        %v1617 = vsub.s32 0, %v1616
        %v1618 = vrot.slane %v1613, %v1617
        %v1619 = vlaneseq
        %v1620 = vshrl.u32 %v1619, 7
        %v1621 = vsub.s32 1, %v1620
        %v1622 = vrot.slane %v1613, %v1621
        %v1623 = vlaneseq
        %v1624 = vshrl.u32 %v1623, 7
        %v1625 = vsub.s32 2, %v1624
        %v1626 = vrot.slane %v1613, %v1625
        %v1630 = vadd.f32 %v1336, %v1618
        %v1631 = vadd.f32 %v1338, %v1622
        %v1632 = vadd.f32 %v1595, %v1626
        %v1633 = vadd.f32 %v1342, %v1618
        %v1634 = vadd.f32 %v1344, %v1622
        %v1635 = vadd.f32 %v1600, %v1626
        %v1636 = vadd.f32 %v1348, %v1618
        %v1637 = vadd.f32 %v1350, %v1622
        %v1638 = vadd.f32 %v1605, %v1626
        %v1639 = vadd.f32 %v1354, %v1618
        %v1640 = vadd.f32 %v1356, %v1622
        %v1641 = vadd.f32 %v1610, %v1626
        %v1642 = vld [vmem:[#allocation13] sm:$0xff]
        %v1643 = vld [vmem:[#allocation13 + $0x8] sm:$0xff]
        %v1644 = vld [vmem:[#allocation13 + $0x10] sm:$0xff]
        %v1645 = vld [vmem:[#allocation13 + $0x18] sm:$0xff]
        %v1646 = vld [vmem:[#allocation13 + $0x20] sm:$0xff]
        %v1647 = vld [vmem:[#allocation13 + $0x28] sm:$0xff]
        %v1648 = vld [vmem:[#allocation13 + $0x30] sm:$0xff]
        %v1649 = vld [vmem:[#allocation13 + $0x38] sm:$0xff]
        %v1650 = vld [vmem:[#allocation13 + $0x40] sm:$0xff]
        %v1651 = vld [vmem:[#allocation13 + $0x48] sm:$0xff]
        %v1652 = vld [vmem:[#allocation13 + $0x50] sm:$0xff]
        %v1653 = vld [vmem:[#allocation13 + $0x58] sm:$0xff]
        %v1654 = vld [vmem:[#allocation13 + $0x60] sm:$0xff]
        %v1655 = vld [vmem:[#allocation13 + $0x68] sm:$0xff]
        %v1656 = vld [vmem:[#allocation13 + $0x70] sm:$0xff]
        %v1657 = vld [vmem:[#allocation13 + $0x78] sm:$0xff]
        %v1658 = vld [vmem:[#allocation13 + $0x80] sm:$0xff]
        %v1659 = vld [vmem:[#allocation13 + $0x88] sm:$0xff]
        %v1660 = vld [vmem:[#allocation13 + $0x90] sm:$0xff]
        %v1661 = vld [vmem:[#allocation13 + $0x98] sm:$0xff]
        %v1662 = vld [vmem:[#allocation13 + $0xa0] sm:$0xff]
        %v1663 = vld [vmem:[#allocation13 + $0xa8] sm:$0xff]
        %v1664 = vld [vmem:[#allocation13 + $0xb0] sm:$0xff]
        %v1665 = vld [vmem:[#allocation13 + $0xb8] sm:$0xff]
        %v1666 = vld [vmem:[#allocation13 + $0xc0] sm:$0xff]
        %v1667 = vld [vmem:[#allocation13 + $0xc8] sm:$0xff]
        %v1668 = vld [vmem:[#allocation13 + $0xd0] sm:$0xff]
        %v1669 = vld [vmem:[#allocation13 + $0xd8] sm:$0xff]
        %v1670 = vld [vmem:[#allocation13 + $0xe0] sm:$0xff]
        %v1671 = vld [vmem:[#allocation13 + $0xe8] sm:$0xff]
        %v1672 = vld [vmem:[#allocation13 + $0xf0] sm:$0xff]
        %v1673 = vld [vmem:[#allocation13 + $0xf8] sm:$0xff]
        %v1674 = vld [vmem:[#allocation13 + $0x100] sm:$0xff]
        %v1675 = vld [vmem:[#allocation13 + $0x108] sm:$0xff]
        %v1676 = vld [vmem:[#allocation13 + $0x110] sm:$0xff]
        %v1677 = vld [vmem:[#allocation13 + $0x118] sm:$0xff]
        %v1678 = vld [vmem:[#allocation13 + $0x120] sm:$0xff]
        %v1679 = vld [vmem:[#allocation13 + $0x128] sm:$0xff]
        %v1680 = vld [vmem:[#allocation13 + $0x130] sm:$0xff]
        %v1681 = vld [vmem:[#allocation13 + $0x138] sm:$0xff]
        %v1682 = vld [vmem:[#allocation13 + $0x140] sm:$0xff]
        %v1683 = vld [vmem:[#allocation13 + $0x148] sm:$0xff]
        %v1684 = vld [vmem:[#allocation13 + $0x150] sm:$0xff]
        %v1685 = vld [vmem:[#allocation13 + $0x158] sm:$0xff]
        %v1686 = vld [vmem:[#allocation13 + $0x160] sm:$0xff]
        %v1687 = vld [vmem:[#allocation13 + $0x168] sm:$0xff]
        %v1688 = vld [vmem:[#allocation13 + $0x170] sm:$0xff]
        %v1689 = vld [vmem:[#allocation13 + $0x178] sm:$0xff]
        %v1690 = vld [vmem:[#allocation13 + $0x180] sm:$0xff]
        %v1691 = vld [vmem:[#allocation13 + $0x188] sm:$0xff]
        %v1692 = vld [vmem:[#allocation13 + $0x190] sm:$0xff]
        %v1693 = vld [vmem:[#allocation13 + $0x198] sm:$0xff]
        %v1694 = vld [vmem:[#allocation13 + $0x1a0] sm:$0xff]
        %v1695 = vld [vmem:[#allocation13 + $0x1a8] sm:$0xff]
        %v1696 = vld [vmem:[#allocation13 + $0x1b0] sm:$0xff]
        %v1697 = vld [vmem:[#allocation13 + $0x1b8] sm:$0xff]
        %v1698 = vld [vmem:[#allocation13 + $0x1c0] sm:$0xff]
        %v1699 = vld [vmem:[#allocation13 + $0x1c8] sm:$0xff]
        %v1700 = vld [vmem:[#allocation13 + $0x1d0] sm:$0xff]
        %v1701 = vld [vmem:[#allocation13 + $0x1d8] sm:$0xff]
        %v1702 = vld [vmem:[#allocation13 + $0x1e0] sm:$0xff]
        %v1703 = vld [vmem:[#allocation13 + $0x1e8] sm:$0xff]
        %v1704 = vld [vmem:[#allocation13 + $0x1f0] sm:$0xff]
        %v1705 = vld [vmem:[#allocation13 + $0x1f8] sm:$0xff]
        %v1706 = vld [vmem:[#allocation13 + $0x200] sm:$0xff]
        %v1707 = vld [vmem:[#allocation13 + $0x208] sm:$0xff]
        %v1708 = vld [vmem:[#allocation13 + $0x210] sm:$0xff]
        %v1709 = vld [vmem:[#allocation13 + $0x218] sm:$0xff]
        %v1710 = vld [vmem:[#allocation13 + $0x220] sm:$0xff]
        %v1711 = vld [vmem:[#allocation13 + $0x228] sm:$0xff]
        %v1712 = vld [vmem:[#allocation13 + $0x230] sm:$0xff]
        %v1713 = vld [vmem:[#allocation13 + $0x238] sm:$0xff]
        %v1714 = vld [vmem:[#allocation13 + $0x240] sm:$0xff]
        %v1715 = vld [vmem:[#allocation13 + $0x248] sm:$0xff]
        %v1716 = vld [vmem:[#allocation13 + $0x250] sm:$0xff]
        %v1717 = vld [vmem:[#allocation13 + $0x258] sm:$0xff]
        %v1718 = vld [vmem:[#allocation13 + $0x260] sm:$0xff]
        %v1719 = vld [vmem:[#allocation13 + $0x268] sm:$0xff]
        %v1720 = vld [vmem:[#allocation13 + $0x270] sm:$0xff]
        %v1721 = vld [vmem:[#allocation13 + $0x278] sm:$0xff]
        %v1722 = vld [vmem:[#allocation13 + $0x280] sm:$0xff]
        %v1723 = vld [vmem:[#allocation13 + $0x288] sm:$0xff]
        %v1724 = vld [vmem:[#allocation13 + $0x290] sm:$0xff]
        %v1725 = vld [vmem:[#allocation13 + $0x298] sm:$0xff]
        %v1726 = vld [vmem:[#allocation13 + $0x2a0] sm:$0xff]
        %v1727 = vld [vmem:[#allocation13 + $0x2a8] sm:$0xff]
        %v1728 = vld [vmem:[#allocation13 + $0x2b0] sm:$0xff]
        %v1729 = vld [vmem:[#allocation13 + $0x2b8] sm:$0xff]
        %v1730 = vld [vmem:[#allocation13 + $0x2c0] sm:$0xff]
        %v1731 = vld [vmem:[#allocation13 + $0x2c8] sm:$0xff]
        %v1732 = vld [vmem:[#allocation13 + $0x2d0] sm:$0xff]
        %v1733 = vld [vmem:[#allocation13 + $0x2d8] sm:$0xff]
        %v1734 = vld [vmem:[#allocation13 + $0x2e0] sm:$0xff]
        %v1735 = vld [vmem:[#allocation13 + $0x2e8] sm:$0xff]
        %v1736 = vld [vmem:[#allocation13 + $0x2f0] sm:$0xff]
        %v1737 = vld [vmem:[#allocation13 + $0x2f8] sm:$0xff]
        %v1738 = vld [vmem:[#allocation13 + $0x300] sm:$0xff]
        %v1739 = vld [vmem:[#allocation13 + $0x308] sm:$0xff]
        %v1740 = vld [vmem:[#allocation13 + $0x310] sm:$0xff]
        %v1741 = vld [vmem:[#allocation13 + $0x318] sm:$0xff]
        %v1742 = vld [vmem:[#allocation13 + $0x320] sm:$0xff]
        %v1743 = vld [vmem:[#allocation13 + $0x328] sm:$0xff]
        %v1744 = vld [vmem:[#allocation13 + $0x330] sm:$0xff]
        %v1745 = vld [vmem:[#allocation13 + $0x338] sm:$0xff]
        %v1746 = vld [vmem:[#allocation13 + $0x340] sm:$0xff]
        %v1747 = vld [vmem:[#allocation13 + $0x348] sm:$0xff]
        %v1748 = vld [vmem:[#allocation13 + $0x350] sm:$0xff]
        %v1749 = vld [vmem:[#allocation13 + $0x358] sm:$0xff]
        %v1750 = vld [vmem:[#allocation13 + $0x360] sm:$0xff]
        %v1751 = vld [vmem:[#allocation13 + $0x368] sm:$0xff]
        %v1752 = vld [vmem:[#allocation13 + $0x370] sm:$0xff]
        %v1753 = vld [vmem:[#allocation13 + $0x378] sm:$0xff]
        %v1754 = vld [vmem:[#allocation13 + $0x380] sm:$0xff]
        %v1755 = vld [vmem:[#allocation13 + $0x388] sm:$0xff]
        %v1756 = vld [vmem:[#allocation13 + $0x390] sm:$0xff]
        %v1757 = vld [vmem:[#allocation13 + $0x398] sm:$0xff]
        %v1758 = vld [vmem:[#allocation13 + $0x3a0] sm:$0xff]
        %v1759 = vld [vmem:[#allocation13 + $0x3a8] sm:$0xff]
        %v1760 = vld [vmem:[#allocation13 + $0x3b0] sm:$0xff]
        %v1761 = vld [vmem:[#allocation13 + $0x3b8] sm:$0xff]
        %v1762 = vld [vmem:[#allocation13 + $0x3c0] sm:$0xff]
        %v1763 = vld [vmem:[#allocation13 + $0x3c8] sm:$0xff]
        %v1764 = vld [vmem:[#allocation13 + $0x3d0] sm:$0xff]
        %v1765 = vld [vmem:[#allocation13 + $0x3d8] sm:$0xff]
        %v1766 = vld [vmem:[#allocation13 + $0x3e0] sm:$0xff]
        %v1767 = vld [vmem:[#allocation13 + $0x3e8] sm:$0xff]
        %v1768 = vld [vmem:[#allocation13 + $0x3f0] sm:$0xff]
        %v1769 = vld [vmem:[#allocation13 + $0x3f8] sm:$0xff]
        %v1770 = vld [vmem:[#allocation13 + $0x400] sm:$0xff]
        %v1771 = vld [vmem:[#allocation13 + $0x408] sm:$0xff]
        %v1772 = vld [vmem:[#allocation13 + $0x410] sm:$0xff]
        %v1773 = vld [vmem:[#allocation13 + $0x418] sm:$0xff]
        %v1774 = vld [vmem:[#allocation13 + $0x420] sm:$0xff]
        %v1775 = vld [vmem:[#allocation13 + $0x428] sm:$0xff]
        %v1776 = vld [vmem:[#allocation13 + $0x430] sm:$0xff]
        %v1777 = vld [vmem:[#allocation13 + $0x438] sm:$0xff]
        %v1778 = vld [vmem:[#allocation13 + $0x440] sm:$0xff]
        %v1779 = vld [vmem:[#allocation13 + $0x448] sm:$0xff]
        %v1780 = vld [vmem:[#allocation13 + $0x450] sm:$0xff]
        %v1781 = vld [vmem:[#allocation13 + $0x458] sm:$0xff]
        %v1782 = vld [vmem:[#allocation13 + $0x460] sm:$0xff]
        %v1783 = vld [vmem:[#allocation13 + $0x468] sm:$0xff]
        %v1784 = vld [vmem:[#allocation13 + $0x470] sm:$0xff]
        %v1785 = vld [vmem:[#allocation13 + $0x478] sm:$0xff]
        %v1786 = vld [vmem:[#allocation13 + $0x480] sm:$0xff]
        %v1787 = vld [vmem:[#allocation13 + $0x488] sm:$0xff]
        %v1788 = vld [vmem:[#allocation13 + $0x490] sm:$0xff]
        %v1789 = vld [vmem:[#allocation13 + $0x498] sm:$0xff]
        %v1790 = vld [vmem:[#allocation13 + $0x4a0] sm:$0xff]
        %v1791 = vld [vmem:[#allocation13 + $0x4a8] sm:$0xff]
        %v1792 = vld [vmem:[#allocation13 + $0x4b0] sm:$0xff]
        %v1793 = vld [vmem:[#allocation13 + $0x4b8] sm:$0xff]
        %v1794 = vld [vmem:[#allocation13 + $0x4c0] sm:$0xff]
        %v1795 = vld [vmem:[#allocation13 + $0x4c8] sm:$0xff]
        %v1796 = vld [vmem:[#allocation13 + $0x4d0] sm:$0xff]
        %v1797 = vld [vmem:[#allocation13 + $0x4d8] sm:$0xff]
        %v1798 = vld [vmem:[#allocation13 + $0x4e0] sm:$0xff]
        %v1799 = vld [vmem:[#allocation13 + $0x4e8] sm:$0xff]
        %v1800 = vld [vmem:[#allocation13 + $0x4f0] sm:$0xff]
        %v1801 = vld [vmem:[#allocation13 + $0x4f8] sm:$0xff]
        %v1802 = vld [vmem:[#allocation13 + $0x500] sm:$0xff]
        %v1803 = vld [vmem:[#allocation13 + $0x508] sm:$0xff]
        %v1804 = vld [vmem:[#allocation13 + $0x510] sm:$0xff]
        %v1805 = vld [vmem:[#allocation13 + $0x518] sm:$0xff]
        %v1806 = vld [vmem:[#allocation13 + $0x520] sm:$0xff]
        %v1807 = vld [vmem:[#allocation13 + $0x528] sm:$0xff]
        %v1808 = vld [vmem:[#allocation13 + $0x530] sm:$0xff]
        %v1809 = vld [vmem:[#allocation13 + $0x538] sm:$0xff]
        %v1810 = vld [vmem:[#allocation13 + $0x540] sm:$0xff]
        %v1811 = vld [vmem:[#allocation13 + $0x548] sm:$0xff]
        %v1812 = vld [vmem:[#allocation13 + $0x550] sm:$0xff]
        %v1813 = vld [vmem:[#allocation13 + $0x558] sm:$0xff]
        %v1814 = vld [vmem:[#allocation13 + $0x560] sm:$0xff]
        %v1815 = vld [vmem:[#allocation13 + $0x568] sm:$0xff]
        %v1816 = vld [vmem:[#allocation13 + $0x570] sm:$0xff]
        %v1817 = vld [vmem:[#allocation13 + $0x578] sm:$0xff]
        %v1818 = vld [vmem:[#allocation13 + $0x580] sm:$0xff]
        %v1819 = vld [vmem:[#allocation13 + $0x588] sm:$0xff]
        %v1820 = vld [vmem:[#allocation13 + $0x590] sm:$0xff]
        %v1821 = vld [vmem:[#allocation13 + $0x598] sm:$0xff]
        %v1822 = vld [vmem:[#allocation13 + $0x5a0] sm:$0xff]
        %v1823 = vld [vmem:[#allocation13 + $0x5a8] sm:$0xff]
        %v1824 = vld [vmem:[#allocation13 + $0x5b0] sm:$0xff]
        %v1825 = vld [vmem:[#allocation13 + $0x5b8] sm:$0xff]
        %v1826 = vld [vmem:[#allocation13 + $0x5c0] sm:$0xff]
        %v1827 = vld [vmem:[#allocation13 + $0x5c8] sm:$0xff]
        %v1828 = vld [vmem:[#allocation13 + $0x5d0] sm:$0xff]
        %v1829 = vld [vmem:[#allocation13 + $0x5d8] sm:$0xff]
        %v1830 = vld [vmem:[#allocation13 + $0x5e0] sm:$0xff]
        %v1831 = vld [vmem:[#allocation13 + $0x5e8] sm:$0xff]
        %v1832 = vld [vmem:[#allocation13 + $0x5f0] sm:$0xff]
        %v1833 = vld [vmem:[#allocation13 + $0x5f8] sm:$0xff]
        %v1834 = vld [vmem:[#allocation13 + $0x600] sm:$0xff]
        %v1835 = vld [vmem:[#allocation13 + $0x608] sm:$0xff]
        %v1836 = vld [vmem:[#allocation13 + $0x610] sm:$0xff]
        %v1837 = vld [vmem:[#allocation13 + $0x618] sm:$0xff]
        %v1838 = vld [vmem:[#allocation13 + $0x620] sm:$0xff]
        %v1839 = vld [vmem:[#allocation13 + $0x628] sm:$0xff]
        %v1840 = vld [vmem:[#allocation13 + $0x630] sm:$0xff]
        %v1841 = vld [vmem:[#allocation13 + $0x638] sm:$0xff]
        %v1842 = vld [vmem:[#allocation13 + $0x640] sm:$0xff]
        %v1843 = vld [vmem:[#allocation13 + $0x648] sm:$0xff]
        %v1844 = vld [vmem:[#allocation13 + $0x650] sm:$0xff]
        %v1845 = vld [vmem:[#allocation13 + $0x658] sm:$0xff]
        %v1846 = vld [vmem:[#allocation13 + $0x660] sm:$0xff]
        %v1847 = vld [vmem:[#allocation13 + $0x668] sm:$0xff]
        %v1848 = vld [vmem:[#allocation13 + $0x670] sm:$0xff]
        %v1849 = vld [vmem:[#allocation13 + $0x678] sm:$0xff]
        %v1850 = vld [vmem:[#allocation13 + $0x680] sm:$0xff]
        %v1851 = vld [vmem:[#allocation13 + $0x688] sm:$0xff]
        %v1852 = vld [vmem:[#allocation13 + $0x690] sm:$0xff]
        %v1853 = vld [vmem:[#allocation13 + $0x698] sm:$0xff]
        %v1854 = vld [vmem:[#allocation13 + $0x6a0] sm:$0xff]
        %v1855 = vld [vmem:[#allocation13 + $0x6a8] sm:$0xff]
        %v1856 = vld [vmem:[#allocation13 + $0x6b0] sm:$0xff]
        %v1857 = vld [vmem:[#allocation13 + $0x6b8] sm:$0xff]
        %v1858 = vld [vmem:[#allocation13 + $0x6c0] sm:$0xff]
        %v1859 = vld [vmem:[#allocation13 + $0x6c8] sm:$0xff]
        %v1860 = vld [vmem:[#allocation13 + $0x6d0] sm:$0xff]
        %v1861 = vld [vmem:[#allocation13 + $0x6d8] sm:$0xff]
        %v1862 = vld [vmem:[#allocation13 + $0x6e0] sm:$0xff]
        %v1863 = vld [vmem:[#allocation13 + $0x6e8] sm:$0xff]
        %v1864 = vld [vmem:[#allocation13 + $0x6f0] sm:$0xff]
        %v1865 = vld [vmem:[#allocation13 + $0x6f8] sm:$0xff]
        %v1866 = vld [vmem:[#allocation13 + $0x700] sm:$0xff]
        %v1867 = vld [vmem:[#allocation13 + $0x708] sm:$0xff]
        %v1868 = vld [vmem:[#allocation13 + $0x710] sm:$0xff]
        %v1869 = vld [vmem:[#allocation13 + $0x718] sm:$0xff]
        %v1870 = vld [vmem:[#allocation13 + $0x720] sm:$0xff]
        %v1871 = vld [vmem:[#allocation13 + $0x728] sm:$0xff]
        %v1872 = vld [vmem:[#allocation13 + $0x730] sm:$0xff]
        %v1873 = vld [vmem:[#allocation13 + $0x738] sm:$0xff]
        %v1874 = vld [vmem:[#allocation13 + $0x740] sm:$0xff]
        %v1875 = vld [vmem:[#allocation13 + $0x748] sm:$0xff]
        %v1876 = vld [vmem:[#allocation13 + $0x750] sm:$0xff]
        %v1877 = vld [vmem:[#allocation13 + $0x758] sm:$0xff]
        %v1878 = vld [vmem:[#allocation13 + $0x760] sm:$0xff]
        %v1879 = vld [vmem:[#allocation13 + $0x768] sm:$0xff]
        %v1880 = vld [vmem:[#allocation13 + $0x770] sm:$0xff]
        %v1881 = vld [vmem:[#allocation13 + $0x778] sm:$0xff]
        %v1882 = vld [vmem:[#allocation13 + $0x780] sm:$0xff]
        %v1883 = vld [vmem:[#allocation13 + $0x788] sm:$0xff]
        %v1884 = vld [vmem:[#allocation13 + $0x790] sm:$0xff]
        %v1885 = vld [vmem:[#allocation13 + $0x798] sm:$0xff]
        %v1886 = vld [vmem:[#allocation13 + $0x7a0] sm:$0xff]
        %v1887 = vld [vmem:[#allocation13 + $0x7a8] sm:$0xff]
        %v1888 = vld [vmem:[#allocation13 + $0x7b0] sm:$0xff]
        %v1889 = vld [vmem:[#allocation13 + $0x7b8] sm:$0xff]
        %v1890 = vld [vmem:[#allocation13 + $0x7c0] sm:$0xff]
        %v1891 = vld [vmem:[#allocation13 + $0x7c8] sm:$0xff]
        %v1892 = vld [vmem:[#allocation13 + $0x7d0] sm:$0xff]
        %v1893 = vld [vmem:[#allocation13 + $0x7d8] sm:$0xff]
        %v1894 = vld [vmem:[#allocation13 + $0x7e0] sm:$0xff]
        %v1895 = vld [vmem:[#allocation13 + $0x7e8] sm:$0xff]
        %v1896 = vld [vmem:[#allocation13 + $0x7f0] sm:$0xff]
        %v1897 = vld [vmem:[#allocation13 + $0x7f8] sm:$0xff]
        %v1898 = vld [vmem:[#allocation13 + $0x800] sm:$0xff]
        %v1899 = vld [vmem:[#allocation13 + $0x808] sm:$0xff]
        %v1900 = vld [vmem:[#allocation13 + $0x810] sm:$0xff]
        %v1901 = vld [vmem:[#allocation13 + $0x818] sm:$0xff]
        %v1902 = vld [vmem:[#allocation13 + $0x820] sm:$0xff]
        %v1903 = vld [vmem:[#allocation13 + $0x828] sm:$0xff]
        %v1904 = vld [vmem:[#allocation13 + $0x830] sm:$0xff]
        %v1905 = vld [vmem:[#allocation13 + $0x838] sm:$0xff]
        %v1906 = vld [vmem:[#allocation13 + $0x840] sm:$0xff]
        %v1907 = vld [vmem:[#allocation13 + $0x848] sm:$0xff]
        %v1908 = vld [vmem:[#allocation13 + $0x850] sm:$0xff]
        %v1909 = vld [vmem:[#allocation13 + $0x858] sm:$0xff]
        %v1910 = vld [vmem:[#allocation13 + $0x860] sm:$0xff]
        %v1911 = vld [vmem:[#allocation13 + $0x868] sm:$0xff]
        %v1912 = vld [vmem:[#allocation13 + $0x870] sm:$0xff]
        %v1913 = vld [vmem:[#allocation13 + $0x878] sm:$0xff]
        %v1914 = vld [vmem:[#allocation13 + $0x880] sm:$0xff]
        %v1915 = vld [vmem:[#allocation13 + $0x888] sm:$0xff]
        %v1916 = vld [vmem:[#allocation13 + $0x890] sm:$0xff]
        %v1917 = vld [vmem:[#allocation13 + $0x898] sm:$0xff]
        %v1918 = vld [vmem:[#allocation13 + $0x8a0] sm:$0xff]
        %v1919 = vld [vmem:[#allocation13 + $0x8a8] sm:$0xff]
        %v1920 = vld [vmem:[#allocation13 + $0x8b0] sm:$0xff]
        %v1921 = vld [vmem:[#allocation13 + $0x8b8] sm:$0xff]
        %v1922 = vld [vmem:[#allocation13 + $0x8c0] sm:$0xff]
        %v1923 = vld [vmem:[#allocation13 + $0x8c8] sm:$0xff]
        %v1924 = vld [vmem:[#allocation13 + $0x8d0] sm:$0xff]
        %v1925 = vld [vmem:[#allocation13 + $0x8d8] sm:$0xff]
        %v1926 = vld [vmem:[#allocation13 + $0x8e0] sm:$0xff]
        %v1927 = vld [vmem:[#allocation13 + $0x8e8] sm:$0xff]
        %v1928 = vld [vmem:[#allocation13 + $0x8f0] sm:$0xff]
        %v1929 = vld [vmem:[#allocation13 + $0x8f8] sm:$0xff]
        %1930 = vmatprep.subr.mxu0 %v1643
        %1931 = vmatpush1.msra.mxu0 %v1642
        %1932 = vmatprep.subr.mxu0 %v1646
        %1933 = vmatpush1.msra.mxu0 %v1645
        %1934 = vmatprep.subr.mxu0 %v1649
        %1935 = vmatpush1.msra.mxu0 %v1648
        %1936 = vmatprep.subr.mxu0 %v1652
        %1937 = vmatpush1.msra.mxu0 %v1651
        %1938 = vmatprep.subr.mxu0 %v1655
        %1939 = vmatpush1.msra.mxu0 %v1654
        %1940 = vmatprep.subr.mxu0 %v1658
        %1941 = vmatpush1.msra.mxu0 %v1657
        %1942 = vmatprep.subr.mxu0 %v1661
        %1943 = vmatpush1.msra.mxu0 %v1660
        %1944 = vmatprep.subr.mxu0 %v1664
        %1945 = vmatpush1.msra.mxu0 %v1663
        %1946 = vmatprep.subr.mxu0 %v1667
        %1947 = vmatpush1.msra.mxu0 %v1666
        %1948 = vmatprep.subr.mxu0 %v1670
        %1949 = vmatpush1.msra.mxu0 %v1669
        %1950 = vmatprep.subr.mxu0 %v1673
        %1951 = vmatpush1.msra.mxu0 %v1672
        %1952 = vmatprep.subr.mxu0 %v1676
        %1953 = vmatpush1.msra.mxu0 %v1675
        %1954 = vmatprep.subr.mxu0 %v1679
        %1955 = vmatpush1.msra.mxu0 %v1678
        %1956 = vmatprep.subr.mxu0 %v1682
        %1957 = vmatpush1.msra.mxu0 %v1681
        %1958 = vmatprep.subr.mxu0 %v1685
        %1959 = vmatpush1.msra.mxu0 %v1684
        %1960 = vmatprep.subr.mxu0 %v1688
        %1961 = vmatpush1.msra.mxu0 %v1687
        %1962 = vmatprep.subr.mxu0 %v1691
        %1963 = vmatpush1.msra.mxu0 %v1690
        %1964 = vmatprep.subr.mxu0 %v1694
        %1965 = vmatpush1.msra.mxu0 %v1693
        %1966 = vmatprep.subr.mxu0 %v1697
        %1967 = vmatpush1.msra.mxu0 %v1696
        %1968 = vmatprep.subr.mxu0 %v1700
        %1969 = vmatpush1.msra.mxu0 %v1699
        %1970 = vmatprep.subr.mxu0 %v1703
        %1971 = vmatpush1.msra.mxu0 %v1702
        %1972 = vmatprep.subr.mxu0 %v1706
        %1973 = vmatpush1.msra.mxu0 %v1705
        %1974 = vmatprep.subr.mxu0 %v1709
        %1975 = vmatpush1.msra.mxu0 %v1708
        %1976 = vmatprep.subr.mxu0 %v1712
        %1977 = vmatpush1.msra.mxu0 %v1711
        %1978 = vmatprep.subr.mxu0 %v1715
        %1979 = vmatpush1.msra.mxu0 %v1714
        %1980 = vmatprep.subr.mxu0 %v1718
        %1981 = vmatpush1.msra.mxu0 %v1717
        %1982 = vmatprep.subr.mxu0 %v1721
        %1983 = vmatpush1.msra.mxu0 %v1720
        %1984 = vmatprep.subr.mxu0 %v1724
        %1985 = vmatpush1.msra.mxu0 %v1723
        %1986 = vmatprep.subr.mxu0 %v1727
        %1987 = vmatpush1.msra.mxu0 %v1726
        %1988 = vmatprep.subr.mxu0 %v1730
        %1989 = vmatpush1.msra.mxu0 %v1729
        %1990 = vmatprep.subr.mxu0 %v1733
        %1991 = vmatpush1.msra.mxu0 %v1732
        %1992 = vmatprep.subr.mxu0 %v1736
        %1993 = vmatpush1.msra.mxu0 %v1735
        %1994 = vmatprep.mubr.f32.mxu0 %v780
        %1995 = vmatmul.mubr.f32.gmra.mrb[0].mxu0 %v779
        %v1996 = vpop.f32.mrb[0].mxu0
        %v1997 = vadd.f32 0.0, %v1996
        %v1998 = vpop.f32.mrb[0].mxu0
        %v1999 = vadd.f32 0.0, %v1998
        %2000 = vmatprep.mubr.f32.mxu0 %v786
        %2001 = vmatmul.mubr.f32.gmra.mrb[0].mxu0 %v785
        %v2002 = vpop.f32.mrb[0].mxu0
        %v2003 = vadd.f32 0.0, %v2002
        %v2004 = vpop.f32.mrb[0].mxu0
        %v2005 = vadd.f32 0.0, %v2004
        %2006 = vmatprep.mubr.f32.mxu0 %v792
        %2007 = vmatmul.mubr.f32.gmra.mrb[0].mxu0 %v791
        %v2008 = vpop.f32.mrb[0].mxu0
        %v2009 = vadd.f32 0.0, %v2008
        %v2010 = vpop.f32.mrb[0].mxu0
        %v2011 = vadd.f32 0.0, %v2010
        %2012 = vmatprep.mubr.f32.mxu0 %v798
        %2013 = vmatmul.mubr.f32.gmra.mrb[0].mxu0 %v797
        %v2014 = vpop.f32.mrb[0].mxu0
        %v2015 = vadd.f32 0.0, %v2014
        %v2016 = vpop.f32.mrb[0].mxu0
        %v2017 = vadd.f32 0.0, %v2016
        %2018 = vdwg.mxu0
        %2019 = vmatprep.subr.mxu0 %v1739
        %2020 = vmatpush1.msra.mxu0 %v1738
        %2021 = vmatprep.subr.mxu0 %v1742
        %2022 = vmatpush1.msra.mxu0 %v1741
        %2023 = vmatprep.subr.mxu0 %v1745
        %2024 = vmatpush1.msra.mxu0 %v1744
        %2025 = vmatprep.subr.mxu0 %v1748
        %2026 = vmatpush1.msra.mxu0 %v1747
        %2027 = vmatprep.subr.mxu0 %v1751
        %2028 = vmatpush1.msra.mxu0 %v1750
        %2029 = vmatprep.subr.mxu0 %v1754
        %2030 = vmatpush1.msra.mxu0 %v1753
        %2031 = vmatprep.subr.mxu0 %v1757
        %2032 = vmatpush1.msra.mxu0 %v1756
        %2033 = vmatprep.subr.mxu0 %v1760
        %2034 = vmatpush1.msra.mxu0 %v1759
        %2035 = vmatprep.subr.mxu0 %v1763
        %2036 = vmatpush1.msra.mxu0 %v1762
        %2037 = vmatprep.subr.mxu0 %v1766
        %2038 = vmatpush1.msra.mxu0 %v1765
        %2039 = vmatprep.subr.mxu0 %v1769
        %2040 = vmatpush1.msra.mxu0 %v1768
        %2041 = vmatprep.subr.mxu0 %v1772
        %2042 = vmatpush1.msra.mxu0 %v1771
        %2043 = vmatprep.subr.mxu0 %v1775
        %2044 = vmatpush1.msra.mxu0 %v1774
        %2045 = vmatprep.subr.mxu0 %v1778
        %2046 = vmatpush1.msra.mxu0 %v1777
        %2047 = vmatprep.subr.mxu0 %v1781
        %2048 = vmatpush1.msra.mxu0 %v1780
        %2049 = vmatprep.subr.mxu0 %v1784
        %2050 = vmatpush1.msra.mxu0 %v1783
        %2051 = vmatprep.subr.mxu0 %v1787
        %2052 = vmatpush1.msra.mxu0 %v1786
        %2053 = vmatprep.subr.mxu0 %v1790
        %2054 = vmatpush1.msra.mxu0 %v1789
        %2055 = vmatprep.subr.mxu0 %v1793
        %2056 = vmatpush1.msra.mxu0 %v1792
        %2057 = vmatprep.subr.mxu0 %v1796
        %2058 = vmatpush1.msra.mxu0 %v1795
        %2059 = vmatprep.subr.mxu0 %v1799
        %2060 = vmatpush1.msra.mxu0 %v1798
        %2061 = vmatprep.subr.mxu0 %v1802
        %2062 = vmatpush1.msra.mxu0 %v1801
        %2063 = vmatprep.subr.mxu0 %v1805
        %2064 = vmatpush1.msra.mxu0 %v1804
        %2065 = vmatprep.subr.mxu0 %v1808
        %2066 = vmatpush1.msra.mxu0 %v1807
        %2067 = vmatprep.subr.mxu0 %v1811
        %2068 = vmatpush1.msra.mxu0 %v1810
        %2069 = vmatprep.subr.mxu0 %v1814
        %2070 = vmatpush1.msra.mxu0 %v1813
        %2071 = vmatprep.subr.mxu0 %v1817
        %2072 = vmatpush1.msra.mxu0 %v1816
        %2073 = vmatprep.subr.mxu0 %v1820
        %2074 = vmatpush1.msra.mxu0 %v1819
        %2075 = vmatprep.subr.mxu0 %v1823
        %2076 = vmatpush1.msra.mxu0 %v1822
        %2077 = vmatprep.subr.mxu0 %v1826
        %2078 = vmatpush1.msra.mxu0 %v1825
        %2079 = vmatprep.subr.mxu0 %v1829
        %2080 = vmatpush1.msra.mxu0 %v1828
        %2081 = vmatprep.subr.mxu0 %v1832
        %2082 = vmatpush1.msra.mxu0 %v1831
        %2083 = vmatprep.mubr.f32.mxu0 %v782
        %2084 = vmatmul.mubr.f32.gmra.mrb[0].mxu0 %v781
        %v2085 = vpop.f32.mrb[0].mxu0
        %v2086 = vadd.f32 %v1997, %v2085
        %v2087 = vpop.f32.mrb[0].mxu0
        %v2088 = vadd.f32 %v1999, %v2087
        %2089 = vmatprep.mubr.f32.mxu0 %v788
        %2090 = vmatmul.mubr.f32.gmra.mrb[0].mxu0 %v787
        %v2091 = vpop.f32.mrb[0].mxu0
        %v2092 = vadd.f32 %v2003, %v2091
        %v2093 = vpop.f32.mrb[0].mxu0
        %v2094 = vadd.f32 %v2005, %v2093
        %2095 = vmatprep.mubr.f32.mxu0 %v794
        %2096 = vmatmul.mubr.f32.gmra.mrb[0].mxu0 %v793
        %v2097 = vpop.f32.mrb[0].mxu0
        %v2098 = vadd.f32 %v2009, %v2097
        %v2099 = vpop.f32.mrb[0].mxu0
        %v2100 = vadd.f32 %v2011, %v2099
        %2101 = vmatprep.mubr.f32.mxu0 %v800
        %2102 = vmatmul.mubr.f32.gmra.mrb[0].mxu0 %v799
        %v2103 = vpop.f32.mrb[0].mxu0
        %v2104 = vadd.f32 %v2015, %v2103
        %v2105 = vpop.f32.mrb[0].mxu0
        %v2106 = vadd.f32 %v2017, %v2105
        %2107 = vdwg.mxu0
        %2108 = vmatprep.subr.mxu0 %v1835
        %2109 = vmatpush1.msra.mxu0 %v1834
        %2110 = vmatprep.subr.mxu0 %v1838
        %2111 = vmatpush1.msra.mxu0 %v1837
        %2112 = vmatprep.subr.mxu0 %v1841
        %2113 = vmatpush1.msra.mxu0 %v1840
        %2114 = vmatprep.subr.mxu0 %v1844
        %2115 = vmatpush1.msra.mxu0 %v1843
        %2116 = vmatprep.subr.mxu0 %v1847
        %2117 = vmatpush1.msra.mxu0 %v1846
        %2118 = vmatprep.subr.mxu0 %v1850
        %2119 = vmatpush1.msra.mxu0 %v1849
        %2120 = vmatprep.subr.mxu0 %v1853
        %2121 = vmatpush1.msra.mxu0 %v1852
        %2122 = vmatprep.subr.mxu0 %v1856
        %2123 = vmatpush1.msra.mxu0 %v1855
        %2124 = vmatprep.subr.mxu0 %v1859
        %2125 = vmatpush1.msra.mxu0 %v1858
        %2126 = vmatprep.subr.mxu0 %v1862
        %2127 = vmatpush1.msra.mxu0 %v1861
        %2128 = vmatprep.subr.mxu0 %v1865
        %2129 = vmatpush1.msra.mxu0 %v1864
        %2130 = vmatprep.subr.mxu0 %v1868
        %2131 = vmatpush1.msra.mxu0 %v1867
        %2132 = vmatprep.subr.mxu0 %v1871
        %2133 = vmatpush1.msra.mxu0 %v1870
        %2134 = vmatprep.subr.mxu0 %v1874
        %2135 = vmatpush1.msra.mxu0 %v1873
        %2136 = vmatprep.subr.mxu0 %v1877
        %2137 = vmatpush1.msra.mxu0 %v1876
        %2138 = vmatprep.subr.mxu0 %v1880
        %2139 = vmatpush1.msra.mxu0 %v1879
        %2140 = vmatprep.subr.mxu0 %v1883
        %2141 = vmatpush1.msra.mxu0 %v1882
        %2142 = vmatprep.subr.mxu0 %v1886
        %2143 = vmatpush1.msra.mxu0 %v1885
        %2144 = vmatprep.subr.mxu0 %v1889
        %2145 = vmatpush1.msra.mxu0 %v1888
        %2146 = vmatprep.subr.mxu0 %v1892
        %2147 = vmatpush1.msra.mxu0 %v1891
        %2148 = vmatprep.subr.mxu0 %v1895
        %2149 = vmatpush1.msra.mxu0 %v1894
        %2150 = vmatprep.subr.mxu0 %v1898
        %2151 = vmatpush1.msra.mxu0 %v1897
        %2152 = vmatprep.subr.mxu0 %v1901
        %2153 = vmatpush1.msra.mxu0 %v1900
        %2154 = vmatprep.subr.mxu0 %v1904
        %2155 = vmatpush1.msra.mxu0 %v1903
        %2156 = vmatprep.subr.mxu0 %v1907
        %2157 = vmatpush1.msra.mxu0 %v1906
        %2158 = vmatprep.subr.mxu0 %v1910
        %2159 = vmatpush1.msra.mxu0 %v1909
        %2160 = vmatprep.subr.mxu0 %v1913
        %2161 = vmatpush1.msra.mxu0 %v1912
        %2162 = vmatprep.subr.mxu0 %v1916
        %2163 = vmatpush1.msra.mxu0 %v1915
        %2164 = vmatprep.subr.mxu0 %v1919
        %2165 = vmatpush1.msra.mxu0 %v1918
        %2166 = vmatprep.subr.mxu0 %v1922
        %2167 = vmatpush1.msra.mxu0 %v1921
        %2168 = vmatprep.subr.mxu0 %v1925
        %2169 = vmatpush1.msra.mxu0 %v1924
        %2170 = vmatprep.subr.mxu0 %v1928
        %2171 = vmatpush1.msra.mxu0 %v1927
        %2172 = vmatprep.mubr.f32.mxu0 %v784
        %2173 = vmatmul.mubr.f32.gmra.mrb[0].mxu0 %v783
        %v2174 = vpop.f32.mrb[0].mxu0
        %v2175 = vadd.f32 %v2086, %v2174
        %v2176 = vpop.f32.mrb[0].mxu0
        %v2177 = vadd.f32 %v2088, %v2176
        %2178 = vmatprep.mubr.f32.mxu0 %v790
        %2179 = vmatmul.mubr.f32.gmra.mrb[0].mxu0 %v789
        %v2180 = vpop.f32.mrb[0].mxu0
        %v2181 = vadd.f32 %v2092, %v2180
        %v2182 = vpop.f32.mrb[0].mxu0
        %v2183 = vadd.f32 %v2094, %v2182
        %2184 = vmatprep.mubr.f32.mxu0 %v796
        %2185 = vmatmul.mubr.f32.gmra.mrb[0].mxu0 %v795
        %v2186 = vpop.f32.mrb[0].mxu0
        %v2187 = vadd.f32 %v2098, %v2186
        %v2188 = vpop.f32.mrb[0].mxu0
        %v2189 = vadd.f32 %v2100, %v2188
        %2190 = vmatprep.mubr.f32.mxu0 %v802
        %2191 = vmatmul.mubr.f32.gmra.mrb[0].mxu0 %v801
        %v2192 = vpop.f32.mrb[0].mxu0
        %v2193 = vadd.f32 %v2104, %v2192
        %v2194 = vpop.f32.mrb[0].mxu0
        %v2195 = vadd.f32 %v2106, %v2194
        %2196 = vdwg.mxu0
        %2197 = vmatprep.subr.mxu0 0.0
        %2198 = vmatpush1.msra.mxu0 %v1644
        %2199 = vmatprep.subr.mxu0 0.0
        %2200 = vmatpush1.msra.mxu0 %v1647
        %2201 = vmatprep.subr.mxu0 0.0
        %2202 = vmatpush1.msra.mxu0 %v1650
        %2203 = vmatprep.subr.mxu0 0.0
        %2204 = vmatpush1.msra.mxu0 %v1653
        %2205 = vmatprep.subr.mxu0 0.0
        %2206 = vmatpush1.msra.mxu0 %v1656
        %2207 = vmatprep.subr.mxu0 0.0
        %2208 = vmatpush1.msra.mxu0 %v1659
        %2209 = vmatprep.subr.mxu0 0.0
        %2210 = vmatpush1.msra.mxu0 %v1662
        %2211 = vmatprep.subr.mxu0 0.0
        %2212 = vmatpush1.msra.mxu0 %v1665
        %2213 = vmatprep.subr.mxu0 0.0
        %2214 = vmatpush1.msra.mxu0 %v1668
        %2215 = vmatprep.subr.mxu0 0.0
        %2216 = vmatpush1.msra.mxu0 %v1671
        %2217 = vmatprep.subr.mxu0 0.0
        %2218 = vmatpush1.msra.mxu0 %v1674
        %2219 = vmatprep.subr.mxu0 0.0
        %2220 = vmatpush1.msra.mxu0 %v1677
        %2221 = vmatprep.subr.mxu0 0.0
        %2222 = vmatpush1.msra.mxu0 %v1680
        %2223 = vmatprep.subr.mxu0 0.0
        %2224 = vmatpush1.msra.mxu0 %v1683
        %2225 = vmatprep.subr.mxu0 0.0
        %2226 = vmatpush1.msra.mxu0 %v1686
        %2227 = vmatprep.subr.mxu0 0.0
        %2228 = vmatpush1.msra.mxu0 %v1689
        %2229 = vmatprep.subr.mxu0 0.0
        %2230 = vmatpush1.msra.mxu0 %v1692
        %2231 = vmatprep.subr.mxu0 0.0
        %2232 = vmatpush1.msra.mxu0 %v1695
        %2233 = vmatprep.subr.mxu0 0.0
        %2234 = vmatpush1.msra.mxu0 %v1698
        %2235 = vmatprep.subr.mxu0 0.0
        %2236 = vmatpush1.msra.mxu0 %v1701
        %2237 = vmatprep.subr.mxu0 0.0
        %2238 = vmatpush1.msra.mxu0 %v1704
        %2239 = vmatprep.subr.mxu0 0.0
        %2240 = vmatpush1.msra.mxu0 %v1707
        %2241 = vmatprep.subr.mxu0 0.0
        %2242 = vmatpush1.msra.mxu0 %v1710
        %2243 = vmatprep.subr.mxu0 0.0
        %2244 = vmatpush1.msra.mxu0 %v1713
        %2245 = vmatprep.subr.mxu0 0.0
        %2246 = vmatpush1.msra.mxu0 %v1716
        %2247 = vmatprep.subr.mxu0 0.0
        %2248 = vmatpush1.msra.mxu0 %v1719
        %2249 = vmatprep.subr.mxu0 0.0
        %2250 = vmatpush1.msra.mxu0 %v1722
        %2251 = vmatprep.subr.mxu0 0.0
        %2252 = vmatpush1.msra.mxu0 %v1725
        %2253 = vmatprep.subr.mxu0 0.0
        %2254 = vmatpush1.msra.mxu0 %v1728
        %2255 = vmatprep.subr.mxu0 0.0
        %2256 = vmatpush1.msra.mxu0 %v1731
        %2257 = vmatprep.subr.mxu0 0.0
        %2258 = vmatpush1.msra.mxu0 %v1734
        %2259 = vmatprep.subr.mxu0 0.0
        %2260 = vmatpush1.msra.mxu0 %v1737
        %2261 = vmatprep.mubr.f32.mxu0 %v780
        %2262 = vmatmul.mubr.f32.gmra.mrb[0].mxu0 %v779
        %v2263 = vpop.f32.mrb[0].mxu0
        %v2264 = vadd.f32 0.0, %v2263
        %v2265 = vpop.f32.mrb[0].mxu0
        %2266 = vmatprep.mubr.f32.mxu0 %v786
        %2267 = vmatmul.mubr.f32.gmra.mrb[0].mxu0 %v785
        %v2268 = vpop.f32.mrb[0].mxu0
        %v2269 = vadd.f32 0.0, %v2268
        %v2270 = vpop.f32.mrb[0].mxu0
        %2271 = vmatprep.mubr.f32.mxu0 %v792
        %2272 = vmatmul.mubr.f32.gmra.mrb[0].mxu0 %v791
        %v2273 = vpop.f32.mrb[0].mxu0
        %v2274 = vadd.f32 0.0, %v2273
        %v2275 = vpop.f32.mrb[0].mxu0
        %2276 = vmatprep.mubr.f32.mxu0 %v798
        %2277 = vmatmul.mubr.f32.gmra.mrb[0].mxu0 %v797
        %v2278 = vpop.f32.mrb[0].mxu0
        %v2279 = vadd.f32 0.0, %v2278
        %v2280 = vpop.f32.mrb[0].mxu0
        %2281 = vdwg.mxu0
        %2282 = vmatprep.subr.mxu0 0.0
        %2283 = vmatpush1.msra.mxu0 %v1740
        %2284 = vmatprep.subr.mxu0 0.0
        %2285 = vmatpush1.msra.mxu0 %v1743
        %2286 = vmatprep.subr.mxu0 0.0
        %2287 = vmatpush1.msra.mxu0 %v1746
        %2288 = vmatprep.subr.mxu0 0.0
        %2289 = vmatpush1.msra.mxu0 %v1749
        %2290 = vmatprep.subr.mxu0 0.0
        %2291 = vmatpush1.msra.mxu0 %v1752
        %2292 = vmatprep.subr.mxu0 0.0
        %2293 = vmatpush1.msra.mxu0 %v1755
        %2294 = vmatprep.subr.mxu0 0.0
        %2295 = vmatpush1.msra.mxu0 %v1758
        %2296 = vmatprep.subr.mxu0 0.0
        %2297 = vmatpush1.msra.mxu0 %v1761
        %2298 = vmatprep.subr.mxu0 0.0
        %2299 = vmatpush1.msra.mxu0 %v1764
        %2300 = vmatprep.subr.mxu0 0.0
        %2301 = vmatpush1.msra.mxu0 %v1767
        %2302 = vmatprep.subr.mxu0 0.0
        %2303 = vmatpush1.msra.mxu0 %v1770
        %2304 = vmatprep.subr.mxu0 0.0
        %2305 = vmatpush1.msra.mxu0 %v1773
        %2306 = vmatprep.subr.mxu0 0.0
        %2307 = vmatpush1.msra.mxu0 %v1776
        %2308 = vmatprep.subr.mxu0 0.0
        %2309 = vmatpush1.msra.mxu0 %v1779
        %2310 = vmatprep.subr.mxu0 0.0
        %2311 = vmatpush1.msra.mxu0 %v1782
        %2312 = vmatprep.subr.mxu0 0.0
        %2313 = vmatpush1.msra.mxu0 %v1785
        %2314 = vmatprep.subr.mxu0 0.0
        %2315 = vmatpush1.msra.mxu0 %v1788
        %2316 = vmatprep.subr.mxu0 0.0
        %2317 = vmatpush1.msra.mxu0 %v1791
        %2318 = vmatprep.subr.mxu0 0.0
        %2319 = vmatpush1.msra.mxu0 %v1794
        %2320 = vmatprep.subr.mxu0 0.0
        %2321 = vmatpush1.msra.mxu0 %v1797
        %2322 = vmatprep.subr.mxu0 0.0
        %2323 = vmatpush1.msra.mxu0 %v1800
        %2324 = vmatprep.subr.mxu0 0.0
        %2325 = vmatpush1.msra.mxu0 %v1803
        %2326 = vmatprep.subr.mxu0 0.0
        %2327 = vmatpush1.msra.mxu0 %v1806
        %2328 = vmatprep.subr.mxu0 0.0
        %2329 = vmatpush1.msra.mxu0 %v1809
        %2330 = vmatprep.subr.mxu0 0.0
        %2331 = vmatpush1.msra.mxu0 %v1812
        %2332 = vmatprep.subr.mxu0 0.0
        %2333 = vmatpush1.msra.mxu0 %v1815
        %2334 = vmatprep.subr.mxu0 0.0
        %2335 = vmatpush1.msra.mxu0 %v1818
        %2336 = vmatprep.subr.mxu0 0.0
        %2337 = vmatpush1.msra.mxu0 %v1821
        %2338 = vmatprep.subr.mxu0 0.0
        %2339 = vmatpush1.msra.mxu0 %v1824
        %2340 = vmatprep.subr.mxu0 0.0
        %2341 = vmatpush1.msra.mxu0 %v1827
        %2342 = vmatprep.subr.mxu0 0.0
        %2343 = vmatpush1.msra.mxu0 %v1830
        %2344 = vmatprep.subr.mxu0 0.0
        %2345 = vmatpush1.msra.mxu0 %v1833
        %2346 = vmatprep.mubr.f32.mxu0 %v782
        %2347 = vmatmul.mubr.f32.gmra.mrb[0].mxu0 %v781
        %v2348 = vpop.f32.mrb[0].mxu0
        %v2349 = vadd.f32 %v2264, %v2348
        %v2350 = vpop.f32.mrb[0].mxu0
        %2351 = vmatprep.mubr.f32.mxu0 %v788
        %2352 = vmatmul.mubr.f32.gmra.mrb[0].mxu0 %v787
        %v2353 = vpop.f32.mrb[0].mxu0
        %v2354 = vadd.f32 %v2269, %v2353
        %v2355 = vpop.f32.mrb[0].mxu0
        %2356 = vmatprep.mubr.f32.mxu0 %v794
        %2357 = vmatmul.mubr.f32.gmra.mrb[0].mxu0 %v793
        %v2358 = vpop.f32.mrb[0].mxu0
        %v2359 = vadd.f32 %v2274, %v2358
        %v2360 = vpop.f32.mrb[0].mxu0
        %2361 = vmatprep.mubr.f32.mxu0 %v800
        %2362 = vmatmul.mubr.f32.gmra.mrb[0].mxu0 %v799
        %v2363 = vpop.f32.mrb[0].mxu0
        %v2364 = vadd.f32 %v2279, %v2363
        %v2365 = vpop.f32.mrb[0].mxu0
        %2366 = vdwg.mxu0
        %2367 = vmatprep.subr.mxu0 0.0
        %2368 = vmatpush1.msra.mxu0 %v1836
        %2369 = vmatprep.subr.mxu0 0.0
        %2370 = vmatpush1.msra.mxu0 %v1839
        %2371 = vmatprep.subr.mxu0 0.0
        %2372 = vmatpush1.msra.mxu0 %v1842
        %2373 = vmatprep.subr.mxu0 0.0
        %2374 = vmatpush1.msra.mxu0 %v1845
        %2375 = vmatprep.subr.mxu0 0.0
        %2376 = vmatpush1.msra.mxu0 %v1848
        %2377 = vmatprep.subr.mxu0 0.0
        %2378 = vmatpush1.msra.mxu0 %v1851
        %2379 = vmatprep.subr.mxu0 0.0
        %2380 = vmatpush1.msra.mxu0 %v1854
        %2381 = vmatprep.subr.mxu0 0.0
        %2382 = vmatpush1.msra.mxu0 %v1857
        %2383 = vmatprep.subr.mxu0 0.0
        %2384 = vmatpush1.msra.mxu0 %v1860
        %2385 = vmatprep.subr.mxu0 0.0
        %2386 = vmatpush1.msra.mxu0 %v1863
        %2387 = vmatprep.subr.mxu0 0.0
        %2388 = vmatpush1.msra.mxu0 %v1866
        %2389 = vmatprep.subr.mxu0 0.0
        %2390 = vmatpush1.msra.mxu0 %v1869
        %2391 = vmatprep.subr.mxu0 0.0
        %2392 = vmatpush1.msra.mxu0 %v1872
        %2393 = vmatprep.subr.mxu0 0.0
        %2394 = vmatpush1.msra.mxu0 %v1875
        %2395 = vmatprep.subr.mxu0 0.0
        %2396 = vmatpush1.msra.mxu0 %v1878
        %2397 = vmatprep.subr.mxu0 0.0
        %2398 = vmatpush1.msra.mxu0 %v1881
        %2399 = vmatprep.subr.mxu0 0.0
        %2400 = vmatpush1.msra.mxu0 %v1884
        %2401 = vmatprep.subr.mxu0 0.0
        %2402 = vmatpush1.msra.mxu0 %v1887
        %2403 = vmatprep.subr.mxu0 0.0
        %2404 = vmatpush1.msra.mxu0 %v1890
        %2405 = vmatprep.subr.mxu0 0.0
        %2406 = vmatpush1.msra.mxu0 %v1893
        %2407 = vmatprep.subr.mxu0 0.0
        %2408 = vmatpush1.msra.mxu0 %v1896
        %2409 = vmatprep.subr.mxu0 0.0
        %2410 = vmatpush1.msra.mxu0 %v1899
        %2411 = vmatprep.subr.mxu0 0.0
        %2412 = vmatpush1.msra.mxu0 %v1902
        %2413 = vmatprep.subr.mxu0 0.0
        %2414 = vmatpush1.msra.mxu0 %v1905
        %2415 = vmatprep.subr.mxu0 0.0
        %2416 = vmatpush1.msra.mxu0 %v1908
        %2417 = vmatprep.subr.mxu0 0.0
        %2418 = vmatpush1.msra.mxu0 %v1911
        %2419 = vmatprep.subr.mxu0 0.0
        %2420 = vmatpush1.msra.mxu0 %v1914
        %2421 = vmatprep.subr.mxu0 0.0
        %2422 = vmatpush1.msra.mxu0 %v1917
        %2423 = vmatprep.subr.mxu0 0.0
        %2424 = vmatpush1.msra.mxu0 %v1920
        %2425 = vmatprep.subr.mxu0 0.0
        %2426 = vmatpush1.msra.mxu0 %v1923
        %2427 = vmatprep.subr.mxu0 0.0
        %2428 = vmatpush1.msra.mxu0 %v1926
        %2429 = vmatprep.subr.mxu0 0.0
        %2430 = vmatpush1.msra.mxu0 %v1929
        %2431 = vmatprep.mubr.f32.mxu0 %v784
        %2432 = vmatmul.mubr.f32.gmra.mrb[0].mxu0 %v783
        %v2433 = vpop.f32.mrb[0].mxu0
        %v2434 = vadd.f32 %v2349, %v2433
        %v2435 = vpop.f32.mrb[0].mxu0
        %2436 = vmatprep.mubr.f32.mxu0 %v790
        %2437 = vmatmul.mubr.f32.gmra.mrb[0].mxu0 %v789
        %v2438 = vpop.f32.mrb[0].mxu0
        %v2439 = vadd.f32 %v2354, %v2438
        %v2440 = vpop.f32.mrb[0].mxu0
        %2441 = vmatprep.mubr.f32.mxu0 %v796
        %2442 = vmatmul.mubr.f32.gmra.mrb[0].mxu0 %v795
        %v2443 = vpop.f32.mrb[0].mxu0
        %v2444 = vadd.f32 %v2359, %v2443
        %v2445 = vpop.f32.mrb[0].mxu0
        %2446 = vmatprep.mubr.f32.mxu0 %v802
        %2447 = vmatmul.mubr.f32.gmra.mrb[0].mxu0 %v801
        %v2448 = vpop.f32.mrb[0].mxu0
        %v2449 = vadd.f32 %v2364, %v2448
        %v2450 = vpop.f32.mrb[0].mxu0
        %2451 = vdwg.mxu0
        %v2452 = vld [vmem:[%s10] sm:$0x7]
        %v2454 = vlaneseq
        %v2455 = vshrl.u32 %v2454, 7
        %v2456 = vsub.s32 0, %v2455
        %v2457 = vrot.slane %v2452, %v2456
        %v2458 = vlaneseq
        %v2459 = vshrl.u32 %v2458, 7
        %v2460 = vsub.s32 1, %v2459
        %v2461 = vrot.slane %v2452, %v2460
        %v2462 = vlaneseq
        %v2463 = vshrl.u32 %v2462, 7
        %v2464 = vsub.s32 2, %v2463
        %v2465 = vrot.slane %v2452, %v2464
        %v2469 = vadd.f32 %v2175, %v2457
        %v2470 = vadd.f32 %v2177, %v2461
        %v2471 = vadd.f32 %v2434, %v2465
        %v2472 = vadd.f32 %v2181, %v2457
        %v2473 = vadd.f32 %v2183, %v2461
        %v2474 = vadd.f32 %v2439, %v2465
        %v2475 = vadd.f32 %v2187, %v2457
        %v2476 = vadd.f32 %v2189, %v2461
        %v2477 = vadd.f32 %v2444, %v2465
        %v2478 = vadd.f32 %v2193, %v2457
        %v2479 = vadd.f32 %v2195, %v2461
        %v2480 = vadd.f32 %v2449, %v2465
        %v2481 = vld [vmem:[%s5] sm:$0xff]
        %v2482 = vld [vmem:[%s5 + $0x8] sm:$0xff]
        %v2483 = vld [vmem:[%s5 + $0x10] sm:$0xff]
        %v2484 = vld [vmem:[%s5 + $0x18] sm:$0xff]
        %v2485 = vld [vmem:[%s5 + $0x20] sm:$0xff]
        %v2486 = vld [vmem:[%s5 + $0x28] sm:$0xff]
        %v2487 = vld [vmem:[%s5 + $0x30] sm:$0xff]
        %v2488 = vld [vmem:[%s5 + $0x38] sm:$0xff]
        %v2489 = vld [vmem:[%s5 + $0x40] sm:$0xff]
        %v2490 = vld [vmem:[%s5 + $0x48] sm:$0xff]
        %v2491 = vld [vmem:[%s5 + $0x50] sm:$0xff]
        %v2492 = vld [vmem:[%s5 + $0x58] sm:$0xff]
        %v2493 = vld [vmem:[%s5 + $0x60] sm:$0xff]
        %v2494 = vld [vmem:[%s5 + $0x68] sm:$0xff]
        %v2495 = vld [vmem:[%s5 + $0x70] sm:$0xff]
        %v2496 = vld [vmem:[%s5 + $0x78] sm:$0xff]
        %v2497 = vld [vmem:[%s5 + $0x80] sm:$0xff]
        %v2498 = vld [vmem:[%s5 + $0x88] sm:$0xff]
        %v2499 = vld [vmem:[%s5 + $0x90] sm:$0xff]
        %v2500 = vld [vmem:[%s5 + $0x98] sm:$0xff]
        %v2501 = vld [vmem:[%s5 + $0xa0] sm:$0xff]
        %v2502 = vld [vmem:[%s5 + $0xa8] sm:$0xff]
        %v2503 = vld [vmem:[%s5 + $0xb0] sm:$0xff]
        %v2504 = vld [vmem:[%s5 + $0xb8] sm:$0xff]
        %v2505 = vld [vmem:[%s5 + $0xc0] sm:$0xff]
        %v2506 = vld [vmem:[%s5 + $0xc8] sm:$0xff]
        %v2507 = vld [vmem:[%s5 + $0xd0] sm:$0xff]
        %v2508 = vld [vmem:[%s5 + $0xd8] sm:$0xff]
        %v2509 = vld [vmem:[%s5 + $0xe0] sm:$0xff]
        %v2510 = vld [vmem:[%s5 + $0xe8] sm:$0xff]
        %v2511 = vld [vmem:[%s5 + $0xf0] sm:$0xff]
        %v2512 = vld [vmem:[%s5 + $0xf8] sm:$0xff]
        %v2513 = vld [vmem:[%s5 + $0x100] sm:$0xff]
        %v2514 = vld [vmem:[%s5 + $0x108] sm:$0xff]
        %v2515 = vld [vmem:[%s5 + $0x110] sm:$0xff]
        %v2516 = vld [vmem:[%s5 + $0x118] sm:$0xff]
        %v2517 = vld [vmem:[%s5 + $0x120] sm:$0xff]
        %v2518 = vld [vmem:[%s5 + $0x128] sm:$0xff]
        %v2519 = vld [vmem:[%s5 + $0x130] sm:$0xff]
        %v2520 = vld [vmem:[%s5 + $0x138] sm:$0xff]
        %v2521 = vld [vmem:[%s5 + $0x140] sm:$0xff]
        %v2522 = vld [vmem:[%s5 + $0x148] sm:$0xff]
        %v2523 = vld [vmem:[%s5 + $0x150] sm:$0xff]
        %v2524 = vld [vmem:[%s5 + $0x158] sm:$0xff]
        %v2525 = vld [vmem:[%s5 + $0x160] sm:$0xff]
        %v2526 = vld [vmem:[%s5 + $0x168] sm:$0xff]
        %v2527 = vld [vmem:[%s5 + $0x170] sm:$0xff]
        %v2528 = vld [vmem:[%s5 + $0x178] sm:$0xff]
        %v2529 = vld [vmem:[%s9] sm:$0xff]
        %v2530 = vld [vmem:[%s9 + $0x8] sm:$0xff]
        %v2531 = vld [vmem:[%s9 + $0x10] sm:$0xff]
        %v2532 = vld [vmem:[%s9 + $0x18] sm:$0xff]
        %v2533 = vld [vmem:[%s9 + $0x20] sm:$0xff]
        %v2534 = vld [vmem:[%s9 + $0x28] sm:$0xff]
        %v2535 = vld [vmem:[%s9 + $0x30] sm:$0xff]
        %v2536 = vld [vmem:[%s9 + $0x38] sm:$0xff]
        %v2537 = vld [vmem:[%s9 + $0x40] sm:$0xff]
        %v2538 = vld [vmem:[%s9 + $0x48] sm:$0xff]
        %v2539 = vld [vmem:[%s9 + $0x50] sm:$0xff]
        %v2540 = vld [vmem:[%s9 + $0x58] sm:$0xff]
        %v2541 = vld [vmem:[%s9 + $0x60] sm:$0xff]
        %v2542 = vld [vmem:[%s9 + $0x68] sm:$0xff]
        %v2543 = vld [vmem:[%s9 + $0x70] sm:$0xff]
        %v2544 = vld [vmem:[%s9 + $0x78] sm:$0xff]
        %v2545 = vld [vmem:[%s9 + $0x80] sm:$0xff]
        %v2546 = vld [vmem:[%s9 + $0x88] sm:$0xff]
        %v2547 = vld [vmem:[%s9 + $0x90] sm:$0xff]
        %v2548 = vld [vmem:[%s9 + $0x98] sm:$0xff]
        %v2549 = vld [vmem:[%s9 + $0xa0] sm:$0xff]
        %v2550 = vld [vmem:[%s9 + $0xa8] sm:$0xff]
        %v2551 = vld [vmem:[%s9 + $0xb0] sm:$0xff]
        %v2552 = vld [vmem:[%s9 + $0xb8] sm:$0xff]
        %v2553 = vld [vmem:[%s9 + $0xc0] sm:$0xff]
        %v2554 = vld [vmem:[%s9 + $0xc8] sm:$0xff]
        %v2555 = vld [vmem:[%s9 + $0xd0] sm:$0xff]
        %v2556 = vld [vmem:[%s9 + $0xd8] sm:$0xff]
        %v2557 = vld [vmem:[%s9 + $0xe0] sm:$0xff]
        %v2558 = vld [vmem:[%s9 + $0xe8] sm:$0xff]
        %v2559 = vld [vmem:[%s9 + $0xf0] sm:$0xff]
        %v2560 = vld [vmem:[%s9 + $0xf8] sm:$0xff]
        %v2561 = vld [vmem:[%s9 + $0x100] sm:$0xff]
        %v2562 = vld [vmem:[%s9 + $0x108] sm:$0xff]
        %v2563 = vld [vmem:[%s9 + $0x110] sm:$0xff]
        %v2564 = vld [vmem:[%s9 + $0x118] sm:$0xff]
        %v2565 = vld [vmem:[%s9 + $0x120] sm:$0xff]
        %v2566 = vld [vmem:[%s9 + $0x128] sm:$0xff]
        %v2567 = vld [vmem:[%s9 + $0x130] sm:$0xff]
        %v2568 = vld [vmem:[%s9 + $0x138] sm:$0xff]
        %v2569 = vld [vmem:[%s9 + $0x140] sm:$0xff]
        %v2570 = vld [vmem:[%s9 + $0x148] sm:$0xff]
        %v2571 = vld [vmem:[%s9 + $0x150] sm:$0xff]
        %v2572 = vld [vmem:[%s9 + $0x158] sm:$0xff]
        %v2573 = vld [vmem:[%s9 + $0x160] sm:$0xff]
        %v2574 = vld [vmem:[%s9 + $0x168] sm:$0xff]
        %v2575 = vld [vmem:[%s9 + $0x170] sm:$0xff]
        %v2576 = vld [vmem:[%s9 + $0x178] sm:$0xff]
        %v2577 = vld [vmem:[%s7] sm:$0x1]
        %v2579 = vlaneseq
        %v2580 = vshrl.u32 %v2579, 7
        %v2581 = vsub.s32 0, %v2580
        %v2582 = vrot.slane %v2577, %v2581
        %v2584 = vld [vmem:[%s11] sm:$0x1]
        %v2586 = vlaneseq
        %v2587 = vshrl.u32 %v2586, 7
        %v2588 = vsub.s32 0, %v2587
        %v2589 = vrot.slane %v2584, %v2588
        %v2591 = vld [vmem:[#allocation2] sm:$0xf]
        %v2592 = vld [vmem:[#allocation3] sm:$0xf]
        %v2593 = vld [vmem:[#allocation4] sm:$0xf]
        %v2594 = vld [vmem:[#allocation5] sm:$0xf]
        %2595 = vmatprep.subr.mxu0 %v2482
        %2596 = vmatpush1.msra.mxu0 %v2481
        %2597 = vmatprep.subr.mxu0 %v2485
        %2598 = vmatpush1.msra.mxu0 %v2484
        %2599 = vmatprep.subr.mxu0 %v2488
        %2600 = vmatpush1.msra.mxu0 %v2487
        %2601 = vmatprep.subr.mxu0 %v2491
        %2602 = vmatpush1.msra.mxu0 %v2490
        %2603 = vmatprep.subr.mxu0 %v2494
        %2604 = vmatpush1.msra.mxu0 %v2493
        %2605 = vmatprep.subr.mxu0 %v2497
        %2606 = vmatpush1.msra.mxu0 %v2496
        %2607 = vmatprep.subr.mxu0 %v2500
        %2608 = vmatpush1.msra.mxu0 %v2499
        %2609 = vmatprep.subr.mxu0 %v2503
        %2610 = vmatpush1.msra.mxu0 %v2502
        %2611 = vmatprep.subr.mxu0 %v2506
        %2612 = vmatpush1.msra.mxu0 %v2505
        %2613 = vmatprep.subr.mxu0 %v2509
        %2614 = vmatpush1.msra.mxu0 %v2508
        %2615 = vmatprep.subr.mxu0 %v2512
        %2616 = vmatpush1.msra.mxu0 %v2511
        %2617 = vmatprep.subr.mxu0 %v2515
        %2618 = vmatpush1.msra.mxu0 %v2514
        %2619 = vmatprep.subr.mxu0 %v2518
        %2620 = vmatpush1.msra.mxu0 %v2517
        %2621 = vmatprep.subr.mxu0 %v2521
        %2622 = vmatpush1.msra.mxu0 %v2520
        %2623 = vmatprep.subr.mxu0 %v2524
        %2624 = vmatpush1.msra.mxu0 %v2523
        %2625 = vmatprep.subr.mxu0 %v2527
        %2626 = vmatpush1.msra.mxu0 %v2526
        %2627 = vmatprep.subr.mxu0 0.0
        %2628 = vmatpush1.msra.mxu0 0.0
        %2629 = vmatprep.subr.mxu0 0.0
        %2630 = vmatpush1.msra.mxu0 0.0
        %2631 = vmatprep.subr.mxu0 0.0
        %2632 = vmatpush1.msra.mxu0 0.0
        %2633 = vmatprep.subr.mxu0 0.0
        %2634 = vmatpush1.msra.mxu0 0.0
        %2635 = vmatprep.subr.mxu0 0.0
        %2636 = vmatpush1.msra.mxu0 0.0
        %2637 = vmatprep.subr.mxu0 0.0
        %2638 = vmatpush1.msra.mxu0 0.0
        %2639 = vmatprep.subr.mxu0 0.0
        %2640 = vmatpush1.msra.mxu0 0.0
        %2641 = vmatprep.subr.mxu0 0.0
        %2642 = vmatpush1.msra.mxu0 0.0
        %2643 = vmatprep.subr.mxu0 0.0
        %2644 = vmatpush1.msra.mxu0 0.0
        %2645 = vmatprep.subr.mxu0 0.0
        %2646 = vmatpush1.msra.mxu0 0.0
        %2647 = vmatprep.subr.mxu0 0.0
        %2648 = vmatpush1.msra.mxu0 0.0
        %2649 = vmatprep.subr.mxu0 0.0
        %2650 = vmatpush1.msra.mxu0 0.0
        %2651 = vmatprep.subr.mxu0 0.0
        %2652 = vmatpush1.msra.mxu0 0.0
        %2653 = vmatprep.subr.mxu0 0.0
        %2654 = vmatpush1.msra.mxu0 0.0
        %2655 = vmatprep.subr.mxu0 0.0
        %2656 = vmatpush1.msra.mxu0 0.0
        %2657 = vmatprep.subr.mxu0 0.0
        %2658 = vmatpush1.msra.mxu0 0.0
        %2659 = vmatprep.mubr.f32.mxu0 0.0
        %2660 = vmatmul.mubr.f32.gmra.mrb[0].mxu0 %v2591
        %v2661 = vpop.f32.mrb[0].mxu0
        %v2662 = vadd.f32 0.0, %v2661
        %v2663 = vpop.f32.mrb[0].mxu0
        %v2664 = vadd.f32 0.0, %v2663
        %2665 = vdwg.mxu0
        %2666 = vmatprep.subr.mxu0 0.0
        %2667 = vmatpush1.msra.mxu0 %v2483
        %2668 = vmatprep.subr.mxu0 0.0
        %2669 = vmatpush1.msra.mxu0 %v2486
        %2670 = vmatprep.subr.mxu0 0.0
        %2671 = vmatpush1.msra.mxu0 %v2489
        %2672 = vmatprep.subr.mxu0 0.0
        %2673 = vmatpush1.msra.mxu0 %v2492
        %2674 = vmatprep.subr.mxu0 0.0
        %2675 = vmatpush1.msra.mxu0 %v2495
        %2676 = vmatprep.subr.mxu0 0.0
        %2677 = vmatpush1.msra.mxu0 %v2498
        %2678 = vmatprep.subr.mxu0 0.0
        %2679 = vmatpush1.msra.mxu0 %v2501
        %2680 = vmatprep.subr.mxu0 0.0
        %2681 = vmatpush1.msra.mxu0 %v2504
        %2682 = vmatprep.subr.mxu0 0.0
        %2683 = vmatpush1.msra.mxu0 %v2507
        %2684 = vmatprep.subr.mxu0 0.0
        %2685 = vmatpush1.msra.mxu0 %v2510
        %2686 = vmatprep.subr.mxu0 0.0
        %2687 = vmatpush1.msra.mxu0 %v2513
        %2688 = vmatprep.subr.mxu0 0.0
        %2689 = vmatpush1.msra.mxu0 %v2516
        %2690 = vmatprep.subr.mxu0 0.0
        %2691 = vmatpush1.msra.mxu0 %v2519
        %2692 = vmatprep.subr.mxu0 0.0
        %2693 = vmatpush1.msra.mxu0 %v2522
        %2694 = vmatprep.subr.mxu0 0.0
        %2695 = vmatpush1.msra.mxu0 %v2525
        %2696 = vmatprep.subr.mxu0 0.0
        %2697 = vmatpush1.msra.mxu0 %v2528
        %2698 = vmatprep.subr.mxu0 0.0
        %2699 = vmatpush1.msra.mxu0 0.0
        %2700 = vmatprep.subr.mxu0 0.0
        %2701 = vmatpush1.msra.mxu0 0.0
        %2702 = vmatprep.subr.mxu0 0.0
        %2703 = vmatpush1.msra.mxu0 0.0
        %2704 = vmatprep.subr.mxu0 0.0
        %2705 = vmatpush1.msra.mxu0 0.0
        %2706 = vmatprep.subr.mxu0 0.0
        %2707 = vmatpush1.msra.mxu0 0.0
        %2708 = vmatprep.subr.mxu0 0.0
        %2709 = vmatpush1.msra.mxu0 0.0
        %2710 = vmatprep.subr.mxu0 0.0
        %2711 = vmatpush1.msra.mxu0 0.0
        %2712 = vmatprep.subr.mxu0 0.0
        %2713 = vmatpush1.msra.mxu0 0.0
        %2714 = vmatprep.subr.mxu0 0.0
        %2715 = vmatpush1.msra.mxu0 0.0
        %2716 = vmatprep.subr.mxu0 0.0
        %2717 = vmatpush1.msra.mxu0 0.0
        %2718 = vmatprep.subr.mxu0 0.0
        %2719 = vmatpush1.msra.mxu0 0.0
        %2720 = vmatprep.subr.mxu0 0.0
        %2721 = vmatpush1.msra.mxu0 0.0
        %2722 = vmatprep.subr.mxu0 0.0
        %2723 = vmatpush1.msra.mxu0 0.0
        %2724 = vmatprep.subr.mxu0 0.0
        %2725 = vmatpush1.msra.mxu0 0.0
        %2726 = vmatprep.subr.mxu0 0.0
        %2727 = vmatpush1.msra.mxu0 0.0
        %2728 = vmatprep.subr.mxu0 0.0
        %2729 = vmatpush1.msra.mxu0 0.0
        %2730 = vmatprep.mubr.f32.mxu0 0.0
        %2731 = vmatmul.mubr.f32.gmra.mrb[0].mxu0 %v2591
        %v2732 = vpop.f32.mrb[0].mxu0
        %v2733 = vadd.f32 0.0, %v2732
        %v2734 = vpop.f32.mrb[0].mxu0
        %2735 = vdwg.mxu0
        %v2737 = vrot.slane %v2662, 1
        %v2738 = vrot.slane %v2662, 2
        %v2739 = vrot.slane %v2662, 3
        %v2744 = vadd.f32 %v1630, %v2662
        %v2745 = vadd.f32 %v1633, %v2737
        %v2746 = vadd.f32 %v1636, %v2738
        %v2747 = vadd.f32 %v1639, %v2739
        %v2748 = vxor.u32 %v2744, 2147483648
        %v2749 = vxor.u32 %v2745, 2147483648
        %v2750 = vxor.u32 %v2746, 2147483648
        %v2751 = vxor.u32 %v2747, 2147483648
        %v2752 = vmul.f32 %v2748, 1.442695
        %v2753 = vpow.pop %v2752
        %v2754 = vmul.f32 %v2749, 1.442695
        %v2755 = vpow.pop %v2754
        %v2756 = vmul.f32 %v2750, 1.442695
        %v2757 = vpow.pop %v2756
        %v2758 = vmul.f32 %v2751, 1.442695
        %v2759 = vpow.pop %v2758
        %v2760 = vadd.f32 %v2753, 1.0
        %v2761 = vadd.f32 %v2755, 1.0
        %v2762 = vadd.f32 %v2757, 1.0
        %v2763 = vadd.f32 %v2759, 1.0
        %v2764 = vrcp.pop %v2760
        %v2765 = vmul.f32 1.0, %v2764
        %v2766 = vrcp.pop %v2761
        %v2767 = vmul.f32 1.0, %v2766
        %v2768 = vrcp.pop %v2762
        %v2769 = vmul.f32 1.0, %v2768
        %v2770 = vrcp.pop %v2763
        %v2771 = vmul.f32 1.0, %v2770
        %v2773 = vrot.slane %v2664, 1
        %v2774 = vrot.slane %v2664, 2
        %v2775 = vrot.slane %v2664, 3
        %v2780 = vadd.f32 %v1631, %v2664
        %v2781 = vadd.f32 %v1634, %v2773
        %v2782 = vadd.f32 %v1637, %v2774
        %v2783 = vadd.f32 %v1640, %v2775
        %v2784 = vxor.u32 %v2780, 2147483648
        %v2785 = vxor.u32 %v2781, 2147483648
        %v2786 = vxor.u32 %v2782, 2147483648
        %v2787 = vxor.u32 %v2783, 2147483648
        %v2788 = vmul.f32 %v2784, 1.442695
        %v2789 = vpow.pop %v2788
        %v2790 = vmul.f32 %v2785, 1.442695
        %v2791 = vpow.pop %v2790
        %v2792 = vmul.f32 %v2786, 1.442695
        %v2793 = vpow.pop %v2792
        %v2794 = vmul.f32 %v2787, 1.442695
        %v2795 = vpow.pop %v2794
        %v2796 = vadd.f32 %v2789, 1.0
        %v2797 = vadd.f32 %v2791, 1.0
        %v2798 = vadd.f32 %v2793, 1.0
        %v2799 = vadd.f32 %v2795, 1.0
        %v2800 = vrcp.pop %v2796
        %v2801 = vmul.f32 1.0, %v2800
        %v2802 = vrcp.pop %v2797
        %v2803 = vmul.f32 1.0, %v2802
        %v2804 = vrcp.pop %v2798
        %v2805 = vmul.f32 1.0, %v2804
        %v2806 = vrcp.pop %v2799
        %v2807 = vmul.f32 1.0, %v2806
        %v2808 = vadd.f32 %v2733, %v2582
        %v2810 = vrot.slane %v2808, 1
        %v2811 = vrot.slane %v2808, 2
        %v2812 = vrot.slane %v2808, 3
        %v2817 = vmul.f32 %v2765, %v2808
        %v2818 = vmul.f32 %v2767, %v2810
        %v2819 = vmul.f32 %v2769, %v2811
        %v2820 = vmul.f32 %v2771, %v2812
        %v2821 = vadd.f32 %v1632, %v2817
        %v2822 = vadd.f32 %v1635, %v2818
        %v2823 = vadd.f32 %v1638, %v2819
        %v2824 = vadd.f32 %v1641, %v2820
        %v2825 = vtanh.pop %v2821
        %v2826 = vtanh.pop %v2822
        %v2827 = vtanh.pop %v2823
        %v2828 = vtanh.pop %v2824
        %v2829 = vsub.f32 1.0, %v2801
        %v2830 = vsub.f32 1.0, %v2803
        %v2831 = vsub.f32 1.0, %v2805
        %v2832 = vsub.f32 1.0, %v2807
        %v2833 = vmul.f32 %v2829, %v2825
        %v2834 = vmul.f32 %v2830, %v2826
        %v2835 = vmul.f32 %v2831, %v2827
        %v2836 = vmul.f32 %v2832, %v2828
        %v2838 = vrot.slane %v2591, 1
        %v2839 = vrot.slane %v2591, 2
        %v2840 = vrot.slane %v2591, 3
        %v2845 = vmul.f32 %v2801, %v2591
        %v2846 = vmul.f32 %v2803, %v2838
        %v2847 = vmul.f32 %v2805, %v2839
        %v2848 = vmul.f32 %v2807, %v2840
        %v2849 = vadd.f32 %v2833, %v2845
        %v2850 = vadd.f32 %v2834, %v2846
        %v2851 = vadd.f32 %v2835, %v2847
        %v2852 = vadd.f32 %v2836, %v2848
        %2853 = vmatprep.subr.mxu0 %v2530
        %2854 = vmatpush1.msra.mxu0 %v2529
        %2855 = vmatprep.subr.mxu0 %v2533
        %2856 = vmatpush1.msra.mxu0 %v2532
        %2857 = vmatprep.subr.mxu0 %v2536
        %2858 = vmatpush1.msra.mxu0 %v2535
        %2859 = vmatprep.subr.mxu0 %v2539
        %2860 = vmatpush1.msra.mxu0 %v2538
        %2861 = vmatprep.subr.mxu0 %v2542
        %2862 = vmatpush1.msra.mxu0 %v2541
        %2863 = vmatprep.subr.mxu0 %v2545
        %2864 = vmatpush1.msra.mxu0 %v2544
        %2865 = vmatprep.subr.mxu0 %v2548
        %2866 = vmatpush1.msra.mxu0 %v2547
        %2867 = vmatprep.subr.mxu0 %v2551
        %2868 = vmatpush1.msra.mxu0 %v2550
        %2869 = vmatprep.subr.mxu0 %v2554
        %2870 = vmatpush1.msra.mxu0 %v2553
        %2871 = vmatprep.subr.mxu0 %v2557
        %2872 = vmatpush1.msra.mxu0 %v2556
        %2873 = vmatprep.subr.mxu0 %v2560
        %2874 = vmatpush1.msra.mxu0 %v2559
        %2875 = vmatprep.subr.mxu0 %v2563
        %2876 = vmatpush1.msra.mxu0 %v2562
        %2877 = vmatprep.subr.mxu0 %v2566
        %2878 = vmatpush1.msra.mxu0 %v2565
        %2879 = vmatprep.subr.mxu0 %v2569
        %2880 = vmatpush1.msra.mxu0 %v2568
        %2881 = vmatprep.subr.mxu0 %v2572
        %2882 = vmatpush1.msra.mxu0 %v2571
        %2883 = vmatprep.subr.mxu0 %v2575
        %2884 = vmatpush1.msra.mxu0 %v2574
        %2885 = vmatprep.subr.mxu0 0.0
        %2886 = vmatpush1.msra.mxu0 0.0
        %2887 = vmatprep.subr.mxu0 0.0
        %2888 = vmatpush1.msra.mxu0 0.0
        %2889 = vmatprep.subr.mxu0 0.0
        %2890 = vmatpush1.msra.mxu0 0.0
        %2891 = vmatprep.subr.mxu0 0.0
        %2892 = vmatpush1.msra.mxu0 0.0
        %2893 = vmatprep.subr.mxu0 0.0
        %2894 = vmatpush1.msra.mxu0 0.0
        %2895 = vmatprep.subr.mxu0 0.0
        %2896 = vmatpush1.msra.mxu0 0.0
        %2897 = vmatprep.subr.mxu0 0.0
        %2898 = vmatpush1.msra.mxu0 0.0
        %2899 = vmatprep.subr.mxu0 0.0
        %2900 = vmatpush1.msra.mxu0 0.0
        %2901 = vmatprep.subr.mxu0 0.0
        %2902 = vmatpush1.msra.mxu0 0.0
        %2903 = vmatprep.subr.mxu0 0.0
        %2904 = vmatpush1.msra.mxu0 0.0
        %2905 = vmatprep.subr.mxu0 0.0
        %2906 = vmatpush1.msra.mxu0 0.0
        %2907 = vmatprep.subr.mxu0 0.0
        %2908 = vmatpush1.msra.mxu0 0.0
        %2909 = vmatprep.subr.mxu0 0.0
        %2910 = vmatpush1.msra.mxu0 0.0
        %2911 = vmatprep.subr.mxu0 0.0
        %2912 = vmatpush1.msra.mxu0 0.0
        %2913 = vmatprep.subr.mxu0 0.0
        %2914 = vmatpush1.msra.mxu0 0.0
        %2915 = vmatprep.subr.mxu0 0.0
        %2916 = vmatpush1.msra.mxu0 0.0
        %2917 = vmatprep.mubr.f32.mxu0 0.0
        %2918 = vmatmul.mubr.f32.gmra.mrb[0].mxu0 %v2592
        %v2919 = vpop.f32.mrb[0].mxu0
        %v2920 = vadd.f32 0.0, %v2919
        %v2921 = vpop.f32.mrb[0].mxu0
        %v2922 = vadd.f32 0.0, %v2921
        %2923 = vdwg.mxu0
        %2924 = vmatprep.subr.mxu0 0.0
        %2925 = vmatpush1.msra.mxu0 %v2531
        %2926 = vmatprep.subr.mxu0 0.0
        %2927 = vmatpush1.msra.mxu0 %v2534
        %2928 = vmatprep.subr.mxu0 0.0
        %2929 = vmatpush1.msra.mxu0 %v2537
        %2930 = vmatprep.subr.mxu0 0.0
        %2931 = vmatpush1.msra.mxu0 %v2540
        %2932 = vmatprep.subr.mxu0 0.0
        %2933 = vmatpush1.msra.mxu0 %v2543
        %2934 = vmatprep.subr.mxu0 0.0
        %2935 = vmatpush1.msra.mxu0 %v2546
        %2936 = vmatprep.subr.mxu0 0.0
        %2937 = vmatpush1.msra.mxu0 %v2549
        %2938 = vmatprep.subr.mxu0 0.0
        %2939 = vmatpush1.msra.mxu0 %v2552
        %2940 = vmatprep.subr.mxu0 0.0
        %2941 = vmatpush1.msra.mxu0 %v2555
        %2942 = vmatprep.subr.mxu0 0.0
        %2943 = vmatpush1.msra.mxu0 %v2558
        %2944 = vmatprep.subr.mxu0 0.0
        %2945 = vmatpush1.msra.mxu0 %v2561
        %2946 = vmatprep.subr.mxu0 0.0
        %2947 = vmatpush1.msra.mxu0 %v2564
        %2948 = vmatprep.subr.mxu0 0.0
        %2949 = vmatpush1.msra.mxu0 %v2567
        %2950 = vmatprep.subr.mxu0 0.0
        %2951 = vmatpush1.msra.mxu0 %v2570
        %2952 = vmatprep.subr.mxu0 0.0
        %2953 = vmatpush1.msra.mxu0 %v2573
        %2954 = vmatprep.subr.mxu0 0.0
        %2955 = vmatpush1.msra.mxu0 %v2576
        %2956 = vmatprep.subr.mxu0 0.0
        %2957 = vmatpush1.msra.mxu0 0.0
        %2958 = vmatprep.subr.mxu0 0.0
        %2959 = vmatpush1.msra.mxu0 0.0
        %2960 = vmatprep.subr.mxu0 0.0
        %2961 = vmatpush1.msra.mxu0 0.0
        %2962 = vmatprep.subr.mxu0 0.0
        %2963 = vmatpush1.msra.mxu0 0.0
        %2964 = vmatprep.subr.mxu0 0.0
        %2965 = vmatpush1.msra.mxu0 0.0
        %2966 = vmatprep.subr.mxu0 0.0
        %2967 = vmatpush1.msra.mxu0 0.0
        %2968 = vmatprep.subr.mxu0 0.0
        %2969 = vmatpush1.msra.mxu0 0.0
        %2970 = vmatprep.subr.mxu0 0.0
        %2971 = vmatpush1.msra.mxu0 0.0
        %2972 = vmatprep.subr.mxu0 0.0
        %2973 = vmatpush1.msra.mxu0 0.0
        %2974 = vmatprep.subr.mxu0 0.0
        %2975 = vmatpush1.msra.mxu0 0.0
        %2976 = vmatprep.subr.mxu0 0.0
        %2977 = vmatpush1.msra.mxu0 0.0
        %2978 = vmatprep.subr.mxu0 0.0
        %2979 = vmatpush1.msra.mxu0 0.0
        %2980 = vmatprep.subr.mxu0 0.0
        %2981 = vmatpush1.msra.mxu0 0.0
        %2982 = vmatprep.subr.mxu0 0.0
        %2983 = vmatpush1.msra.mxu0 0.0
        %2984 = vmatprep.subr.mxu0 0.0
        %2985 = vmatpush1.msra.mxu0 0.0
        %2986 = vmatprep.subr.mxu0 0.0
        %2987 = vmatpush1.msra.mxu0 0.0
        %2988 = vmatprep.mubr.f32.mxu0 0.0
        %2989 = vmatmul.mubr.f32.gmra.mrb[0].mxu0 %v2592
        %v2990 = vpop.f32.mrb[0].mxu0
        %v2991 = vadd.f32 0.0, %v2990
        %v2992 = vpop.f32.mrb[0].mxu0
        %2993 = vdwg.mxu0
        %v2995 = vrot.slane %v2920, 1
        %v2996 = vrot.slane %v2920, 2
        %v2997 = vrot.slane %v2920, 3
        %v2998 = vrot.slane %v2920, 4
        %v3003 = vadd.f32 %v2469, %v2995
        %v3004 = vadd.f32 %v2472, %v2996
        %v3005 = vadd.f32 %v2475, %v2997
        %v3006 = vadd.f32 %v2478, %v2998
        %v3007 = vxor.u32 %v3003, 2147483648
        %v3008 = vxor.u32 %v3004, 2147483648
        %v3009 = vxor.u32 %v3005, 2147483648
        %v3010 = vxor.u32 %v3006, 2147483648
        %v3011 = vmul.f32 %v3007, 1.442695
        %v3012 = vpow.pop %v3011
        %v3013 = vmul.f32 %v3008, 1.442695
        %v3014 = vpow.pop %v3013
        %v3015 = vmul.f32 %v3009, 1.442695
        %v3016 = vpow.pop %v3015
        %v3017 = vmul.f32 %v3010, 1.442695
        %v3018 = vpow.pop %v3017
        %v3019 = vadd.f32 %v3012, 1.0
        %v3020 = vadd.f32 %v3014, 1.0
        %v3021 = vadd.f32 %v3016, 1.0
        %v3022 = vadd.f32 %v3018, 1.0
        %v3023 = vrcp.pop %v3019
        %v3024 = vmul.f32 1.0, %v3023
        %v3025 = vrcp.pop %v3020
        %v3026 = vmul.f32 1.0, %v3025
        %v3027 = vrcp.pop %v3021
        %v3028 = vmul.f32 1.0, %v3027
        %v3029 = vrcp.pop %v3022
        %v3030 = vmul.f32 1.0, %v3029
        %v3032 = vrot.slane %v2922, 1
        %v3033 = vrot.slane %v2922, 2
        %v3034 = vrot.slane %v2922, 3
        %v3035 = vrot.slane %v2922, 4
        %v3040 = vadd.f32 %v2470, %v3032
        %v3041 = vadd.f32 %v2473, %v3033
        %v3042 = vadd.f32 %v2476, %v3034
        %v3043 = vadd.f32 %v2479, %v3035
        %v3044 = vxor.u32 %v3040, 2147483648
        %v3045 = vxor.u32 %v3041, 2147483648
        %v3046 = vxor.u32 %v3042, 2147483648
        %v3047 = vxor.u32 %v3043, 2147483648
        %v3048 = vmul.f32 %v3044, 1.442695
        %v3049 = vpow.pop %v3048
        %v3050 = vmul.f32 %v3045, 1.442695
        %v3051 = vpow.pop %v3050
        %v3052 = vmul.f32 %v3046, 1.442695
        %v3053 = vpow.pop %v3052
        %v3054 = vmul.f32 %v3047, 1.442695
        %v3055 = vpow.pop %v3054
        %v3056 = vadd.f32 %v3049, 1.0
        %v3057 = vadd.f32 %v3051, 1.0
        %v3058 = vadd.f32 %v3053, 1.0
        %v3059 = vadd.f32 %v3055, 1.0
        %v3060 = vrcp.pop %v3056
        %v3061 = vmul.f32 1.0, %v3060
        %v3062 = vrcp.pop %v3057
        %v3063 = vmul.f32 1.0, %v3062
        %v3064 = vrcp.pop %v3058
        %v3065 = vmul.f32 1.0, %v3064
        %v3066 = vrcp.pop %v3059
        %v3067 = vmul.f32 1.0, %v3066
        %v3068 = vadd.f32 %v2991, %v2589
        %v3070 = vrot.slane %v3068, 1
        %v3071 = vrot.slane %v3068, 2
        %v3072 = vrot.slane %v3068, 3
        %v3073 = vrot.slane %v3068, 4
        %v3078 = vmul.f32 %v3024, %v3070
        %v3079 = vmul.f32 %v3026, %v3071
        %v3080 = vmul.f32 %v3028, %v3072
        %v3081 = vmul.f32 %v3030, %v3073
        %v3082 = vadd.f32 %v2471, %v3078
        %v3083 = vadd.f32 %v2474, %v3079
        %v3084 = vadd.f32 %v2477, %v3080
        %v3085 = vadd.f32 %v2480, %v3081
        %v3086 = vtanh.pop %v3082
        %v3087 = vtanh.pop %v3083
        %v3088 = vtanh.pop %v3084
        %v3089 = vtanh.pop %v3085
        %v3090 = vsub.f32 1.0, %v3061
        %v3091 = vsub.f32 1.0, %v3063
        %v3092 = vsub.f32 1.0, %v3065
        %v3093 = vsub.f32 1.0, %v3067
        %v3094 = vmul.f32 %v3090, %v3086
        %v3095 = vmul.f32 %v3091, %v3087
        %v3096 = vmul.f32 %v3092, %v3088
        %v3097 = vmul.f32 %v3093, %v3089
        %v3099 = vrot.slane %v2592, 1
        %v3100 = vrot.slane %v2592, 2
        %v3101 = vrot.slane %v2592, 3
        %v3102 = vrot.slane %v2592, 4
        %v3107 = vmul.f32 %v3061, %v3099
        %v3108 = vmul.f32 %v3063, %v3100
        %v3109 = vmul.f32 %v3065, %v3101
        %v3110 = vmul.f32 %v3067, %v3102
        %v3111 = vadd.f32 %v3094, %v3107
        %v3112 = vadd.f32 %v3095, %v3108
        %v3113 = vadd.f32 %v3096, %v3109
        %v3114 = vadd.f32 %v3097, %v3110
        %v3119 = vrot.slane %v2850, 7
        %vm3120 = vcmask 1041409
        %v3121 = vsel %vm3120, %v3119, %v2849
        %v3122 = vrot.slane %v2851, 6
        %vm3123 = vcmask 1042434
        %v3124 = vsel %vm3123, %v3122, %v3121
        %v3125 = vrot.slane %v2852, 5
        %vm3126 = vcmask 1043459
        %v3127 = vsel %vm3126, %v3125, %v3124
        %v3129 = vadd.f32 %v2593, %v3127
        %v3134 = vrot.slane %v3111, 7
        %v3135 = vrot.slane %v3112, 6
        %v3136 = vsel %vm3120, %v3135, %v3134
        %v3137 = vrot.slane %v3113, 5
        %v3138 = vsel %vm3123, %v3137, %v3136
        %v3139 = vrot.slane %v3114, 4
        %v3140 = vsel %vm3126, %v3139, %v3138
        %v3142 = vadd.f32 %v2594, %v3140
        %3143 = vmatprep.subr.mxu0 %v2482
        %3144 = vmatpush1.msra.mxu0 %v2481
        %3145 = vmatprep.subr.mxu0 %v2485
        %3146 = vmatpush1.msra.mxu0 %v2484
        %3147 = vmatprep.subr.mxu0 %v2488
        %3148 = vmatpush1.msra.mxu0 %v2487
        %3149 = vmatprep.subr.mxu0 %v2491
        %3150 = vmatpush1.msra.mxu0 %v2490
        %3151 = vmatprep.subr.mxu0 %v2494
        %3152 = vmatpush1.msra.mxu0 %v2493
        %3153 = vmatprep.subr.mxu0 %v2497
        %3154 = vmatpush1.msra.mxu0 %v2496
        %3155 = vmatprep.subr.mxu0 %v2500
        %3156 = vmatpush1.msra.mxu0 %v2499
        %3157 = vmatprep.subr.mxu0 %v2503
        %3158 = vmatpush1.msra.mxu0 %v2502
        %3159 = vmatprep.subr.mxu0 %v2506
        %3160 = vmatpush1.msra.mxu0 %v2505
        %3161 = vmatprep.subr.mxu0 %v2509
        %3162 = vmatpush1.msra.mxu0 %v2508
        %3163 = vmatprep.subr.mxu0 %v2512
        %3164 = vmatpush1.msra.mxu0 %v2511
        %3165 = vmatprep.subr.mxu0 %v2515
        %3166 = vmatpush1.msra.mxu0 %v2514
        %3167 = vmatprep.subr.mxu0 %v2518
        %3168 = vmatpush1.msra.mxu0 %v2517
        %3169 = vmatprep.subr.mxu0 %v2521
        %3170 = vmatpush1.msra.mxu0 %v2520
        %3171 = vmatprep.subr.mxu0 %v2524
        %3172 = vmatpush1.msra.mxu0 %v2523
        %3173 = vmatprep.subr.mxu0 %v2527
        %3174 = vmatpush1.msra.mxu0 %v2526
        %3175 = vmatprep.subr.mxu0 0.0
        %3176 = vmatpush1.msra.mxu0 0.0
        %3177 = vmatprep.subr.mxu0 0.0
        %3178 = vmatpush1.msra.mxu0 0.0
        %3179 = vmatprep.subr.mxu0 0.0
        %3180 = vmatpush1.msra.mxu0 0.0
        %3181 = vmatprep.subr.mxu0 0.0
        %3182 = vmatpush1.msra.mxu0 0.0
        %3183 = vmatprep.subr.mxu0 0.0
        %3184 = vmatpush1.msra.mxu0 0.0
        %3185 = vmatprep.subr.mxu0 0.0
        %3186 = vmatpush1.msra.mxu0 0.0
        %3187 = vmatprep.subr.mxu0 0.0
        %3188 = vmatpush1.msra.mxu0 0.0
        %3189 = vmatprep.subr.mxu0 0.0
        %3190 = vmatpush1.msra.mxu0 0.0
        %3191 = vmatprep.subr.mxu0 0.0
        %3192 = vmatpush1.msra.mxu0 0.0
        %3193 = vmatprep.subr.mxu0 0.0
        %3194 = vmatpush1.msra.mxu0 0.0
        %3195 = vmatprep.subr.mxu0 0.0
        %3196 = vmatpush1.msra.mxu0 0.0
        %3197 = vmatprep.subr.mxu0 0.0
        %3198 = vmatpush1.msra.mxu0 0.0
        %3199 = vmatprep.subr.mxu0 0.0
        %3200 = vmatpush1.msra.mxu0 0.0
        %3201 = vmatprep.subr.mxu0 0.0
        %3202 = vmatpush1.msra.mxu0 0.0
        %3203 = vmatprep.subr.mxu0 0.0
        %3204 = vmatpush1.msra.mxu0 0.0
        %3205 = vmatprep.subr.mxu0 0.0
        %3206 = vmatpush1.msra.mxu0 0.0
        %3207 = vmatprep.mubr.f32.mxu0 0.0
        %3208 = vmatmul.mubr.f32.gmra.mrb[0].mxu0 %v3127
        %v3209 = vpop.f32.mrb[0].mxu0
        %v3210 = vadd.f32 0.0, %v3209
        %v3211 = vpop.f32.mrb[0].mxu0
        %v3212 = vadd.f32 0.0, %v3211
        %3213 = vdwg.mxu0
        %3214 = vmatprep.subr.mxu0 0.0
        %3215 = vmatpush1.msra.mxu0 %v2483
        %3216 = vmatprep.subr.mxu0 0.0
        %3217 = vmatpush1.msra.mxu0 %v2486
        %3218 = vmatprep.subr.mxu0 0.0
        %3219 = vmatpush1.msra.mxu0 %v2489
        %3220 = vmatprep.subr.mxu0 0.0
        %3221 = vmatpush1.msra.mxu0 %v2492
        %3222 = vmatprep.subr.mxu0 0.0
        %3223 = vmatpush1.msra.mxu0 %v2495
        %3224 = vmatprep.subr.mxu0 0.0
        %3225 = vmatpush1.msra.mxu0 %v2498
        %3226 = vmatprep.subr.mxu0 0.0
        %3227 = vmatpush1.msra.mxu0 %v2501
        %3228 = vmatprep.subr.mxu0 0.0
        %3229 = vmatpush1.msra.mxu0 %v2504
        %3230 = vmatprep.subr.mxu0 0.0
        %3231 = vmatpush1.msra.mxu0 %v2507
        %3232 = vmatprep.subr.mxu0 0.0
        %3233 = vmatpush1.msra.mxu0 %v2510
        %3234 = vmatprep.subr.mxu0 0.0
        %3235 = vmatpush1.msra.mxu0 %v2513
        %3236 = vmatprep.subr.mxu0 0.0
        %3237 = vmatpush1.msra.mxu0 %v2516
        %3238 = vmatprep.subr.mxu0 0.0
        %3239 = vmatpush1.msra.mxu0 %v2519
        %3240 = vmatprep.subr.mxu0 0.0
        %3241 = vmatpush1.msra.mxu0 %v2522
        %3242 = vmatprep.subr.mxu0 0.0
        %3243 = vmatpush1.msra.mxu0 %v2525
        %3244 = vmatprep.subr.mxu0 0.0
        %3245 = vmatpush1.msra.mxu0 %v2528
        %3246 = vmatprep.subr.mxu0 0.0
        %3247 = vmatpush1.msra.mxu0 0.0
        %3248 = vmatprep.subr.mxu0 0.0
        %3249 = vmatpush1.msra.mxu0 0.0
        %3250 = vmatprep.subr.mxu0 0.0
        %3251 = vmatpush1.msra.mxu0 0.0
        %3252 = vmatprep.subr.mxu0 0.0
        %3253 = vmatpush1.msra.mxu0 0.0
        %3254 = vmatprep.subr.mxu0 0.0
        %3255 = vmatpush1.msra.mxu0 0.0
        %3256 = vmatprep.subr.mxu0 0.0
        %3257 = vmatpush1.msra.mxu0 0.0
        %3258 = vmatprep.subr.mxu0 0.0
        %3259 = vmatpush1.msra.mxu0 0.0
        %3260 = vmatprep.subr.mxu0 0.0
        %3261 = vmatpush1.msra.mxu0 0.0
        %3262 = vmatprep.subr.mxu0 0.0
        %3263 = vmatpush1.msra.mxu0 0.0
        %3264 = vmatprep.subr.mxu0 0.0
        %3265 = vmatpush1.msra.mxu0 0.0
        %3266 = vmatprep.subr.mxu0 0.0
        %3267 = vmatpush1.msra.mxu0 0.0
        %3268 = vmatprep.subr.mxu0 0.0
        %3269 = vmatpush1.msra.mxu0 0.0
        %3270 = vmatprep.subr.mxu0 0.0
        %3271 = vmatpush1.msra.mxu0 0.0
        %3272 = vmatprep.subr.mxu0 0.0
        %3273 = vmatpush1.msra.mxu0 0.0
        %3274 = vmatprep.subr.mxu0 0.0
        %3275 = vmatpush1.msra.mxu0 0.0
        %3276 = vmatprep.subr.mxu0 0.0
        %3277 = vmatpush1.msra.mxu0 0.0
        %3278 = vmatprep.mubr.f32.mxu0 0.0
        %3279 = vmatmul.mubr.f32.gmra.mrb[0].mxu0 %v3127
        %v3280 = vpop.f32.mrb[0].mxu0
        %v3281 = vadd.f32 0.0, %v3280
        %v3282 = vpop.f32.mrb[0].mxu0
        %3283 = vdwg.mxu0
        %v3285 = vrot.slane %v3210, 7
        %v3286 = vrot.slane %v3210, 1
        %v3287 = vrot.slane %v3210, 2
        %v3292 = vadd.f32 %v1630, %v3285
        %v3293 = vadd.f32 %v1633, %v3210
        %v3294 = vadd.f32 %v1636, %v3286
        %v3295 = vadd.f32 %v1639, %v3287
        %v3296 = vxor.u32 %v3292, 2147483648
        %v3297 = vxor.u32 %v3293, 2147483648
        %v3298 = vxor.u32 %v3294, 2147483648
        %v3299 = vxor.u32 %v3295, 2147483648
        %v3300 = vmul.f32 %v3296, 1.442695
        %v3301 = vpow.pop %v3300
        %v3302 = vmul.f32 %v3297, 1.442695
        %v3303 = vpow.pop %v3302
        %v3304 = vmul.f32 %v3298, 1.442695
        %v3305 = vpow.pop %v3304
        %v3306 = vmul.f32 %v3299, 1.442695
        %v3307 = vpow.pop %v3306
        %v3308 = vadd.f32 %v3301, 1.0
        %v3309 = vadd.f32 %v3303, 1.0
        %v3310 = vadd.f32 %v3305, 1.0
        %v3311 = vadd.f32 %v3307, 1.0
        %v3312 = vrcp.pop %v3308
        %v3313 = vmul.f32 1.0, %v3312
        %v3314 = vrcp.pop %v3309
        %v3315 = vmul.f32 1.0, %v3314
        %v3316 = vrcp.pop %v3310
        %v3317 = vmul.f32 1.0, %v3316
        %v3318 = vrcp.pop %v3311
        %v3319 = vmul.f32 1.0, %v3318
        %v3321 = vrot.slane %v3212, 7
        %v3322 = vrot.slane %v3212, 1
        %v3323 = vrot.slane %v3212, 2
        %v3328 = vadd.f32 %v1631, %v3321
        %v3329 = vadd.f32 %v1634, %v3212
        %v3330 = vadd.f32 %v1637, %v3322
        %v3331 = vadd.f32 %v1640, %v3323
        %v3332 = vxor.u32 %v3328, 2147483648
        %v3333 = vxor.u32 %v3329, 2147483648
        %v3334 = vxor.u32 %v3330, 2147483648
        %v3335 = vxor.u32 %v3331, 2147483648
        %v3336 = vmul.f32 %v3332, 1.442695
        %v3337 = vpow.pop %v3336
        %v3338 = vmul.f32 %v3333, 1.442695
        %v3339 = vpow.pop %v3338
        %v3340 = vmul.f32 %v3334, 1.442695
        %v3341 = vpow.pop %v3340
        %v3342 = vmul.f32 %v3335, 1.442695
        %v3343 = vpow.pop %v3342
        %v3344 = vadd.f32 %v3337, 1.0
        %v3345 = vadd.f32 %v3339, 1.0
        %v3346 = vadd.f32 %v3341, 1.0
        %v3347 = vadd.f32 %v3343, 1.0
        %v3348 = vrcp.pop %v3344
        %v3349 = vmul.f32 1.0, %v3348
        %v3350 = vrcp.pop %v3345
        %v3351 = vmul.f32 1.0, %v3350
        %v3352 = vrcp.pop %v3346
        %v3353 = vmul.f32 1.0, %v3352
        %v3354 = vrcp.pop %v3347
        %v3355 = vmul.f32 1.0, %v3354
        %v3356 = vadd.f32 %v3281, %v2582
        %v3358 = vrot.slane %v3356, 7
        %v3359 = vrot.slane %v3356, 1
        %v3360 = vrot.slane %v3356, 2
        %v3365 = vmul.f32 %v3313, %v3358
        %v3366 = vmul.f32 %v3315, %v3356
        %v3367 = vmul.f32 %v3317, %v3359
        %v3368 = vmul.f32 %v3319, %v3360
        %v3369 = vadd.f32 %v1632, %v3365
        %v3370 = vadd.f32 %v1635, %v3366
        %v3371 = vadd.f32 %v1638, %v3367
        %v3372 = vadd.f32 %v1641, %v3368
        %v3373 = vtanh.pop %v3369
        %v3374 = vtanh.pop %v3370
        %v3375 = vtanh.pop %v3371
        %v3376 = vtanh.pop %v3372
        %v3377 = vsub.f32 1.0, %v3349
        %v3378 = vsub.f32 1.0, %v3351
        %v3379 = vsub.f32 1.0, %v3353
        %v3380 = vsub.f32 1.0, %v3355
        %v3381 = vmul.f32 %v3377, %v3373
        %v3382 = vmul.f32 %v3378, %v3374
        %v3383 = vmul.f32 %v3379, %v3375
        %v3384 = vmul.f32 %v3380, %v3376
        %v3385 = vrot.slane %v2849, 7
        %v3386 = vrot.slane %v2851, 7
        %v3387 = vrot.slane %v2852, 7
        %v3392 = vmul.f32 %v3349, %v3385
        %v3393 = vmul.f32 %v3351, %v3119
        %v3394 = vmul.f32 %v3353, %v3386
        %v3395 = vmul.f32 %v3355, %v3387
        %v3396 = vadd.f32 %v3381, %v3392
        %v3397 = vadd.f32 %v3382, %v3393
        %v3398 = vadd.f32 %v3383, %v3394
        %v3399 = vadd.f32 %v3384, %v3395
        %3400 = vmatprep.subr.mxu0 %v2530
        %3401 = vmatpush1.msra.mxu0 %v2529
        %3402 = vmatprep.subr.mxu0 %v2533
        %3403 = vmatpush1.msra.mxu0 %v2532
        %3404 = vmatprep.subr.mxu0 %v2536
        %3405 = vmatpush1.msra.mxu0 %v2535
        %3406 = vmatprep.subr.mxu0 %v2539
        %3407 = vmatpush1.msra.mxu0 %v2538
        %3408 = vmatprep.subr.mxu0 %v2542
        %3409 = vmatpush1.msra.mxu0 %v2541
        %3410 = vmatprep.subr.mxu0 %v2545
        %3411 = vmatpush1.msra.mxu0 %v2544
        %3412 = vmatprep.subr.mxu0 %v2548
        %3413 = vmatpush1.msra.mxu0 %v2547
        %3414 = vmatprep.subr.mxu0 %v2551
        %3415 = vmatpush1.msra.mxu0 %v2550
        %3416 = vmatprep.subr.mxu0 %v2554
        %3417 = vmatpush1.msra.mxu0 %v2553
        %3418 = vmatprep.subr.mxu0 %v2557
        %3419 = vmatpush1.msra.mxu0 %v2556
        %3420 = vmatprep.subr.mxu0 %v2560
        %3421 = vmatpush1.msra.mxu0 %v2559
        %3422 = vmatprep.subr.mxu0 %v2563
        %3423 = vmatpush1.msra.mxu0 %v2562
        %3424 = vmatprep.subr.mxu0 %v2566
        %3425 = vmatpush1.msra.mxu0 %v2565
        %3426 = vmatprep.subr.mxu0 %v2569
        %3427 = vmatpush1.msra.mxu0 %v2568
        %3428 = vmatprep.subr.mxu0 %v2572
        %3429 = vmatpush1.msra.mxu0 %v2571
        %3430 = vmatprep.subr.mxu0 %v2575
        %3431 = vmatpush1.msra.mxu0 %v2574
        %3432 = vmatprep.subr.mxu0 0.0
        %3433 = vmatpush1.msra.mxu0 0.0
        %3434 = vmatprep.subr.mxu0 0.0
        %3435 = vmatpush1.msra.mxu0 0.0
        %3436 = vmatprep.subr.mxu0 0.0
        %3437 = vmatpush1.msra.mxu0 0.0
        %3438 = vmatprep.subr.mxu0 0.0
        %3439 = vmatpush1.msra.mxu0 0.0
        %3440 = vmatprep.subr.mxu0 0.0
        %3441 = vmatpush1.msra.mxu0 0.0
        %3442 = vmatprep.subr.mxu0 0.0
        %3443 = vmatpush1.msra.mxu0 0.0
        %3444 = vmatprep.subr.mxu0 0.0
        %3445 = vmatpush1.msra.mxu0 0.0
        %3446 = vmatprep.subr.mxu0 0.0
        %3447 = vmatpush1.msra.mxu0 0.0
        %3448 = vmatprep.subr.mxu0 0.0
        %3449 = vmatpush1.msra.mxu0 0.0
        %3450 = vmatprep.subr.mxu0 0.0
        %3451 = vmatpush1.msra.mxu0 0.0
        %3452 = vmatprep.subr.mxu0 0.0
        %3453 = vmatpush1.msra.mxu0 0.0
        %3454 = vmatprep.subr.mxu0 0.0
        %3455 = vmatpush1.msra.mxu0 0.0
        %3456 = vmatprep.subr.mxu0 0.0
        %3457 = vmatpush1.msra.mxu0 0.0
        %3458 = vmatprep.subr.mxu0 0.0
        %3459 = vmatpush1.msra.mxu0 0.0
        %3460 = vmatprep.subr.mxu0 0.0
        %3461 = vmatpush1.msra.mxu0 0.0
        %3462 = vmatprep.subr.mxu0 0.0
        %3463 = vmatpush1.msra.mxu0 0.0
        %3464 = vmatprep.mubr.f32.mxu0 0.0
        %3465 = vmatmul.mubr.f32.gmra.mrb[0].mxu0 %v3140
        %v3466 = vpop.f32.mrb[0].mxu0
        %v3467 = vadd.f32 0.0, %v3466
        %v3468 = vpop.f32.mrb[0].mxu0
        %v3469 = vadd.f32 0.0, %v3468
        %3470 = vdwg.mxu0
        %3471 = vmatprep.subr.mxu0 0.0
        %3472 = vmatpush1.msra.mxu0 %v2531
        %3473 = vmatprep.subr.mxu0 0.0
        %3474 = vmatpush1.msra.mxu0 %v2534
        %3475 = vmatprep.subr.mxu0 0.0
        %3476 = vmatpush1.msra.mxu0 %v2537
        %3477 = vmatprep.subr.mxu0 0.0
        %3478 = vmatpush1.msra.mxu0 %v2540
        %3479 = vmatprep.subr.mxu0 0.0
        %3480 = vmatpush1.msra.mxu0 %v2543
        %3481 = vmatprep.subr.mxu0 0.0
        %3482 = vmatpush1.msra.mxu0 %v2546
        %3483 = vmatprep.subr.mxu0 0.0
        %3484 = vmatpush1.msra.mxu0 %v2549
        %3485 = vmatprep.subr.mxu0 0.0
        %3486 = vmatpush1.msra.mxu0 %v2552
        %3487 = vmatprep.subr.mxu0 0.0
        %3488 = vmatpush1.msra.mxu0 %v2555
        %3489 = vmatprep.subr.mxu0 0.0
        %3490 = vmatpush1.msra.mxu0 %v2558
        %3491 = vmatprep.subr.mxu0 0.0
        %3492 = vmatpush1.msra.mxu0 %v2561
        %3493 = vmatprep.subr.mxu0 0.0
        %3494 = vmatpush1.msra.mxu0 %v2564
        %3495 = vmatprep.subr.mxu0 0.0
        %3496 = vmatpush1.msra.mxu0 %v2567
        %3497 = vmatprep.subr.mxu0 0.0
        %3498 = vmatpush1.msra.mxu0 %v2570
        %3499 = vmatprep.subr.mxu0 0.0
        %3500 = vmatpush1.msra.mxu0 %v2573
        %3501 = vmatprep.subr.mxu0 0.0
        %3502 = vmatpush1.msra.mxu0 %v2576
        %3503 = vmatprep.subr.mxu0 0.0
        %3504 = vmatpush1.msra.mxu0 0.0
        %3505 = vmatprep.subr.mxu0 0.0
        %3506 = vmatpush1.msra.mxu0 0.0
        %3507 = vmatprep.subr.mxu0 0.0
        %3508 = vmatpush1.msra.mxu0 0.0
        %3509 = vmatprep.subr.mxu0 0.0
        %3510 = vmatpush1.msra.mxu0 0.0
        %3511 = vmatprep.subr.mxu0 0.0
        %3512 = vmatpush1.msra.mxu0 0.0
        %3513 = vmatprep.subr.mxu0 0.0
        %3514 = vmatpush1.msra.mxu0 0.0
        %3515 = vmatprep.subr.mxu0 0.0
        %3516 = vmatpush1.msra.mxu0 0.0
        %3517 = vmatprep.subr.mxu0 0.0
        %3518 = vmatpush1.msra.mxu0 0.0
        %3519 = vmatprep.subr.mxu0 0.0
        %3520 = vmatpush1.msra.mxu0 0.0
        %3521 = vmatprep.subr.mxu0 0.0
        %3522 = vmatpush1.msra.mxu0 0.0
        %3523 = vmatprep.subr.mxu0 0.0
        %3524 = vmatpush1.msra.mxu0 0.0
        %3525 = vmatprep.subr.mxu0 0.0
        %3526 = vmatpush1.msra.mxu0 0.0
        %3527 = vmatprep.subr.mxu0 0.0
        %3528 = vmatpush1.msra.mxu0 0.0
        %3529 = vmatprep.subr.mxu0 0.0
        %3530 = vmatpush1.msra.mxu0 0.0
        %3531 = vmatprep.subr.mxu0 0.0
        %3532 = vmatpush1.msra.mxu0 0.0
        %3533 = vmatprep.subr.mxu0 0.0
        %3534 = vmatpush1.msra.mxu0 0.0
        %3535 = vmatprep.mubr.f32.mxu0 0.0
        %3536 = vmatmul.mubr.f32.gmra.mrb[0].mxu0 %v3140
        %v3537 = vpop.f32.mrb[0].mxu0
        %v3538 = vadd.f32 0.0, %v3537
        %v3539 = vpop.f32.mrb[0].mxu0
        %3540 = vdwg.mxu0
        %v3542 = vrot.slane %v3467, 2
        %v3543 = vrot.slane %v3467, 3
        %v3544 = vrot.slane %v3467, 4
        %v3545 = vrot.slane %v3467, 5
        %v3550 = vadd.f32 %v2469, %v3542
        %v3551 = vadd.f32 %v2472, %v3543
        %v3552 = vadd.f32 %v2475, %v3544
        %v3553 = vadd.f32 %v2478, %v3545
        %v3554 = vxor.u32 %v3550, 2147483648
        %v3555 = vxor.u32 %v3551, 2147483648
        %v3556 = vxor.u32 %v3552, 2147483648
        %v3557 = vxor.u32 %v3553, 2147483648
        %v3558 = vmul.f32 %v3554, 1.442695
        %v3559 = vpow.pop %v3558
        %v3560 = vmul.f32 %v3555, 1.442695
        %v3561 = vpow.pop %v3560
        %v3562 = vmul.f32 %v3556, 1.442695
        %v3563 = vpow.pop %v3562
        %v3564 = vmul.f32 %v3557, 1.442695
        %v3565 = vpow.pop %v3564
        %v3566 = vadd.f32 %v3559, 1.0
        %v3567 = vadd.f32 %v3561, 1.0
        %v3568 = vadd.f32 %v3563, 1.0
        %v3569 = vadd.f32 %v3565, 1.0
        %v3570 = vrcp.pop %v3566
        %v3571 = vmul.f32 1.0, %v3570
        %v3572 = vrcp.pop %v3567
        %v3573 = vmul.f32 1.0, %v3572
        %v3574 = vrcp.pop %v3568
        %v3575 = vmul.f32 1.0, %v3574
        %v3576 = vrcp.pop %v3569
        %v3577 = vmul.f32 1.0, %v3576
        %v3579 = vrot.slane %v3469, 2
        %v3580 = vrot.slane %v3469, 3
        %v3581 = vrot.slane %v3469, 4
        %v3582 = vrot.slane %v3469, 5
        %v3587 = vadd.f32 %v2470, %v3579
        %v3588 = vadd.f32 %v2473, %v3580
        %v3589 = vadd.f32 %v2476, %v3581
        %v3590 = vadd.f32 %v2479, %v3582
        %v3591 = vxor.u32 %v3587, 2147483648
        %v3592 = vxor.u32 %v3588, 2147483648
        %v3593 = vxor.u32 %v3589, 2147483648
        %v3594 = vxor.u32 %v3590, 2147483648
        %v3595 = vmul.f32 %v3591, 1.442695
        %v3596 = vpow.pop %v3595
        %v3597 = vmul.f32 %v3592, 1.442695
        %v3598 = vpow.pop %v3597
        %v3599 = vmul.f32 %v3593, 1.442695
        %v3600 = vpow.pop %v3599
        %v3601 = vmul.f32 %v3594, 1.442695
        %v3602 = vpow.pop %v3601
        %v3603 = vadd.f32 %v3596, 1.0
        %v3604 = vadd.f32 %v3598, 1.0
        %v3605 = vadd.f32 %v3600, 1.0
        %v3606 = vadd.f32 %v3602, 1.0
        %v3607 = vrcp.pop %v3603
        %v3608 = vmul.f32 1.0, %v3607
        %v3609 = vrcp.pop %v3604
        %v3610 = vmul.f32 1.0, %v3609
        %v3611 = vrcp.pop %v3605
        %v3612 = vmul.f32 1.0, %v3611
        %v3613 = vrcp.pop %v3606
        %v3614 = vmul.f32 1.0, %v3613
        %v3615 = vadd.f32 %v3538, %v2589
        %v3617 = vrot.slane %v3615, 2
        %v3618 = vrot.slane %v3615, 3
        %v3619 = vrot.slane %v3615, 4
        %v3620 = vrot.slane %v3615, 5
        %v3625 = vmul.f32 %v3571, %v3617
        %v3626 = vmul.f32 %v3573, %v3618
        %v3627 = vmul.f32 %v3575, %v3619
        %v3628 = vmul.f32 %v3577, %v3620
        %v3629 = vadd.f32 %v2471, %v3625
        %v3630 = vadd.f32 %v2474, %v3626
        %v3631 = vadd.f32 %v2477, %v3627
        %v3632 = vadd.f32 %v2480, %v3628
        %v3633 = vtanh.pop %v3629
        %v3634 = vtanh.pop %v3630
        %v3635 = vtanh.pop %v3631
        %v3636 = vtanh.pop %v3632
        %v3637 = vsub.f32 1.0, %v3608
        %v3638 = vsub.f32 1.0, %v3610
        %v3639 = vsub.f32 1.0, %v3612
        %v3640 = vsub.f32 1.0, %v3614
        %v3641 = vmul.f32 %v3637, %v3633
        %v3642 = vmul.f32 %v3638, %v3634
        %v3643 = vmul.f32 %v3639, %v3635
        %v3644 = vmul.f32 %v3640, %v3636
        %v3645 = vrot.slane %v3111, 1
        %v3646 = vrot.slane %v3112, 1
        %v3647 = vrot.slane %v3113, 1
        %v3648 = vrot.slane %v3114, 1
        %v3653 = vmul.f32 %v3608, %v3645
        %v3654 = vmul.f32 %v3610, %v3646
        %v3655 = vmul.f32 %v3612, %v3647
        %v3656 = vmul.f32 %v3614, %v3648
        %v3657 = vadd.f32 %v3641, %v3653
        %v3658 = vadd.f32 %v3642, %v3654
        %v3659 = vadd.f32 %v3643, %v3655
        %v3660 = vadd.f32 %v3644, %v3656
        %v3665 = vrot.slane %v3396, 1
        %v3666 = vsel %vm3120, %v3397, %v3665
        %v3667 = vrot.slane %v3398, 7
        %v3668 = vsel %vm3123, %v3667, %v3666
        %v3669 = vrot.slane %v3399, 6
        %v3670 = vsel %vm3126, %v3669, %v3668
        %v3672 = vadd.f32 %v3129, %v3670
        %v3677 = vrot.slane %v3657, 6
        %v3678 = vrot.slane %v3658, 5
        %v3679 = vsel %vm3120, %v3678, %v3677
        %v3680 = vrot.slane %v3659, 4
        %v3681 = vsel %vm3123, %v3680, %v3679
        %v3682 = vrot.slane %v3660, 3
        %v3683 = vsel %vm3126, %v3682, %v3681
        %v3685 = vadd.f32 %v3142, %v3683
        %3686 = vmatprep.subr.mxu0 %v2482
        %3687 = vmatpush1.msra.mxu0 %v2481
        %3688 = vmatprep.subr.mxu0 %v2485
        %3689 = vmatpush1.msra.mxu0 %v2484
        %3690 = vmatprep.subr.mxu0 %v2488
        %3691 = vmatpush1.msra.mxu0 %v2487
        %3692 = vmatprep.subr.mxu0 %v2491
        %3693 = vmatpush1.msra.mxu0 %v2490
        %3694 = vmatprep.subr.mxu0 %v2494
        %3695 = vmatpush1.msra.mxu0 %v2493
        %3696 = vmatprep.subr.mxu0 %v2497
        %3697 = vmatpush1.msra.mxu0 %v2496
        %3698 = vmatprep.subr.mxu0 %v2500
        %3699 = vmatpush1.msra.mxu0 %v2499
        %3700 = vmatprep.subr.mxu0 %v2503
        %3701 = vmatpush1.msra.mxu0 %v2502
        %3702 = vmatprep.subr.mxu0 %v2506
        %3703 = vmatpush1.msra.mxu0 %v2505
        %3704 = vmatprep.subr.mxu0 %v2509
        %3705 = vmatpush1.msra.mxu0 %v2508
        %3706 = vmatprep.subr.mxu0 %v2512
        %3707 = vmatpush1.msra.mxu0 %v2511
        %3708 = vmatprep.subr.mxu0 %v2515
        %3709 = vmatpush1.msra.mxu0 %v2514
        %3710 = vmatprep.subr.mxu0 %v2518
        %3711 = vmatpush1.msra.mxu0 %v2517
        %3712 = vmatprep.subr.mxu0 %v2521
        %3713 = vmatpush1.msra.mxu0 %v2520
        %3714 = vmatprep.subr.mxu0 %v2524
        %3715 = vmatpush1.msra.mxu0 %v2523
        %3716 = vmatprep.subr.mxu0 %v2527
        %3717 = vmatpush1.msra.mxu0 %v2526
        %3718 = vmatprep.subr.mxu0 0.0
        %3719 = vmatpush1.msra.mxu0 0.0
        %3720 = vmatprep.subr.mxu0 0.0
        %3721 = vmatpush1.msra.mxu0 0.0
        %3722 = vmatprep.subr.mxu0 0.0
        %3723 = vmatpush1.msra.mxu0 0.0
        %3724 = vmatprep.subr.mxu0 0.0
        %3725 = vmatpush1.msra.mxu0 0.0
        %3726 = vmatprep.subr.mxu0 0.0
        %3727 = vmatpush1.msra.mxu0 0.0
        %3728 = vmatprep.subr.mxu0 0.0
        %3729 = vmatpush1.msra.mxu0 0.0
        %3730 = vmatprep.subr.mxu0 0.0
        %3731 = vmatpush1.msra.mxu0 0.0
        %3732 = vmatprep.subr.mxu0 0.0
        %3733 = vmatpush1.msra.mxu0 0.0
        %3734 = vmatprep.subr.mxu0 0.0
        %3735 = vmatpush1.msra.mxu0 0.0
        %3736 = vmatprep.subr.mxu0 0.0
        %3737 = vmatpush1.msra.mxu0 0.0
        %3738 = vmatprep.subr.mxu0 0.0
        %3739 = vmatpush1.msra.mxu0 0.0
        %3740 = vmatprep.subr.mxu0 0.0
        %3741 = vmatpush1.msra.mxu0 0.0
        %3742 = vmatprep.subr.mxu0 0.0
        %3743 = vmatpush1.msra.mxu0 0.0
        %3744 = vmatprep.subr.mxu0 0.0
        %3745 = vmatpush1.msra.mxu0 0.0
        %3746 = vmatprep.subr.mxu0 0.0
        %3747 = vmatpush1.msra.mxu0 0.0
        %3748 = vmatprep.subr.mxu0 0.0
        %3749 = vmatpush1.msra.mxu0 0.0
        %3750 = vmatprep.mubr.f32.mxu0 0.0
        %3751 = vmatmul.mubr.f32.gmra.mrb[0].mxu0 %v3670
        %v3752 = vpop.f32.mrb[0].mxu0
        %v3753 = vadd.f32 0.0, %v3752
        %v3754 = vpop.f32.mrb[0].mxu0
        %v3755 = vadd.f32 0.0, %v3754
        %3756 = vdwg.mxu0
        %3757 = vmatprep.subr.mxu0 0.0
        %3758 = vmatpush1.msra.mxu0 %v2483
        %3759 = vmatprep.subr.mxu0 0.0
        %3760 = vmatpush1.msra.mxu0 %v2486
        %3761 = vmatprep.subr.mxu0 0.0
        %3762 = vmatpush1.msra.mxu0 %v2489
        %3763 = vmatprep.subr.mxu0 0.0
        %3764 = vmatpush1.msra.mxu0 %v2492
        %3765 = vmatprep.subr.mxu0 0.0
        %3766 = vmatpush1.msra.mxu0 %v2495
        %3767 = vmatprep.subr.mxu0 0.0
        %3768 = vmatpush1.msra.mxu0 %v2498
        %3769 = vmatprep.subr.mxu0 0.0
        %3770 = vmatpush1.msra.mxu0 %v2501
        %3771 = vmatprep.subr.mxu0 0.0
        %3772 = vmatpush1.msra.mxu0 %v2504
        %3773 = vmatprep.subr.mxu0 0.0
        %3774 = vmatpush1.msra.mxu0 %v2507
        %3775 = vmatprep.subr.mxu0 0.0
        %3776 = vmatpush1.msra.mxu0 %v2510
        %3777 = vmatprep.subr.mxu0 0.0
        %3778 = vmatpush1.msra.mxu0 %v2513
        %3779 = vmatprep.subr.mxu0 0.0
        %3780 = vmatpush1.msra.mxu0 %v2516
        %3781 = vmatprep.subr.mxu0 0.0
        %3782 = vmatpush1.msra.mxu0 %v2519
        %3783 = vmatprep.subr.mxu0 0.0
        %3784 = vmatpush1.msra.mxu0 %v2522
        %3785 = vmatprep.subr.mxu0 0.0
        %3786 = vmatpush1.msra.mxu0 %v2525
        %3787 = vmatprep.subr.mxu0 0.0
        %3788 = vmatpush1.msra.mxu0 %v2528
        %3789 = vmatprep.subr.mxu0 0.0
        %3790 = vmatpush1.msra.mxu0 0.0
        %3791 = vmatprep.subr.mxu0 0.0
        %3792 = vmatpush1.msra.mxu0 0.0
        %3793 = vmatprep.subr.mxu0 0.0
        %3794 = vmatpush1.msra.mxu0 0.0
        %3795 = vmatprep.subr.mxu0 0.0
        %3796 = vmatpush1.msra.mxu0 0.0
        %3797 = vmatprep.subr.mxu0 0.0
        %3798 = vmatpush1.msra.mxu0 0.0
        %3799 = vmatprep.subr.mxu0 0.0
        %3800 = vmatpush1.msra.mxu0 0.0
        %3801 = vmatprep.subr.mxu0 0.0
        %3802 = vmatpush1.msra.mxu0 0.0
        %3803 = vmatprep.subr.mxu0 0.0
        %3804 = vmatpush1.msra.mxu0 0.0
        %3805 = vmatprep.subr.mxu0 0.0
        %3806 = vmatpush1.msra.mxu0 0.0
        %3807 = vmatprep.subr.mxu0 0.0
        %3808 = vmatpush1.msra.mxu0 0.0
        %3809 = vmatprep.subr.mxu0 0.0
        %3810 = vmatpush1.msra.mxu0 0.0
        %3811 = vmatprep.subr.mxu0 0.0
        %3812 = vmatpush1.msra.mxu0 0.0
        %3813 = vmatprep.subr.mxu0 0.0
        %3814 = vmatpush1.msra.mxu0 0.0
        %3815 = vmatprep.subr.mxu0 0.0
        %3816 = vmatpush1.msra.mxu0 0.0
        %3817 = vmatprep.subr.mxu0 0.0
        %3818 = vmatpush1.msra.mxu0 0.0
        %3819 = vmatprep.subr.mxu0 0.0
        %3820 = vmatpush1.msra.mxu0 0.0
        %3821 = vmatprep.mubr.f32.mxu0 0.0
        %3822 = vmatmul.mubr.f32.gmra.mrb[0].mxu0 %v3670
        %v3823 = vpop.f32.mrb[0].mxu0
        %v3824 = vadd.f32 0.0, %v3823
        %v3825 = vpop.f32.mrb[0].mxu0
        %3826 = vdwg.mxu0
        %v3828 = vrot.slane %v3753, 6
        %v3829 = vrot.slane %v3753, 7
        %v3830 = vrot.slane %v3753, 1
        %v3835 = vadd.f32 %v1630, %v3828
        %v3836 = vadd.f32 %v1633, %v3829
        %v3837 = vadd.f32 %v1636, %v3753
        %v3838 = vadd.f32 %v1639, %v3830
        %v3839 = vxor.u32 %v3835, 2147483648
        %v3840 = vxor.u32 %v3836, 2147483648
        %v3841 = vxor.u32 %v3837, 2147483648
        %v3842 = vxor.u32 %v3838, 2147483648
        %v3843 = vmul.f32 %v3839, 1.442695
        %v3844 = vpow.pop %v3843
        %v3845 = vmul.f32 %v3840, 1.442695
        %v3846 = vpow.pop %v3845
        %v3847 = vmul.f32 %v3841, 1.442695
        %v3848 = vpow.pop %v3847
        %v3849 = vmul.f32 %v3842, 1.442695
        %v3850 = vpow.pop %v3849
        %v3851 = vadd.f32 %v3844, 1.0
        %v3852 = vadd.f32 %v3846, 1.0
        %v3853 = vadd.f32 %v3848, 1.0
        %v3854 = vadd.f32 %v3850, 1.0
        %v3855 = vrcp.pop %v3851
        %v3856 = vmul.f32 1.0, %v3855
        %v3857 = vrcp.pop %v3852
        %v3858 = vmul.f32 1.0, %v3857
        %v3859 = vrcp.pop %v3853
        %v3860 = vmul.f32 1.0, %v3859
        %v3861 = vrcp.pop %v3854
        %v3862 = vmul.f32 1.0, %v3861
        %v3864 = vrot.slane %v3755, 6
        %v3865 = vrot.slane %v3755, 7
        %v3866 = vrot.slane %v3755, 1
        %v3871 = vadd.f32 %v1631, %v3864
        %v3872 = vadd.f32 %v1634, %v3865
        %v3873 = vadd.f32 %v1637, %v3755
        %v3874 = vadd.f32 %v1640, %v3866
        %v3875 = vxor.u32 %v3871, 2147483648
        %v3876 = vxor.u32 %v3872, 2147483648
        %v3877 = vxor.u32 %v3873, 2147483648
        %v3878 = vxor.u32 %v3874, 2147483648
        %v3879 = vmul.f32 %v3875, 1.442695
        %v3880 = vpow.pop %v3879
        %v3881 = vmul.f32 %v3876, 1.442695
        %v3882 = vpow.pop %v3881
        %v3883 = vmul.f32 %v3877, 1.442695
        %v3884 = vpow.pop %v3883
        %v3885 = vmul.f32 %v3878, 1.442695
        %v3886 = vpow.pop %v3885
        %v3887 = vadd.f32 %v3880, 1.0
        %v3888 = vadd.f32 %v3882, 1.0
        %v3889 = vadd.f32 %v3884, 1.0
        %v3890 = vadd.f32 %v3886, 1.0
        %v3891 = vrcp.pop %v3887
        %v3892 = vmul.f32 1.0, %v3891
        %v3893 = vrcp.pop %v3888
        %v3894 = vmul.f32 1.0, %v3893
        %v3895 = vrcp.pop %v3889
        %v3896 = vmul.f32 1.0, %v3895
        %v3897 = vrcp.pop %v3890
        %v3898 = vmul.f32 1.0, %v3897
        %v3899 = vadd.f32 %v3824, %v2582
        %v3901 = vrot.slane %v3899, 6
        %v3902 = vrot.slane %v3899, 7
        %v3903 = vrot.slane %v3899, 1
        %v3908 = vmul.f32 %v3856, %v3901
        %v3909 = vmul.f32 %v3858, %v3902
        %v3910 = vmul.f32 %v3860, %v3899
        %v3911 = vmul.f32 %v3862, %v3903
        %v3912 = vadd.f32 %v1632, %v3908
        %v3913 = vadd.f32 %v1635, %v3909
        %v3914 = vadd.f32 %v1638, %v3910
        %v3915 = vadd.f32 %v1641, %v3911
        %v3916 = vtanh.pop %v3912
        %v3917 = vtanh.pop %v3913
        %v3918 = vtanh.pop %v3914
        %v3919 = vtanh.pop %v3915
        %v3920 = vsub.f32 1.0, %v3892
        %v3921 = vsub.f32 1.0, %v3894
        %v3922 = vsub.f32 1.0, %v3896
        %v3923 = vsub.f32 1.0, %v3898
        %v3924 = vmul.f32 %v3920, %v3916
        %v3925 = vmul.f32 %v3921, %v3917
        %v3926 = vmul.f32 %v3922, %v3918
        %v3927 = vmul.f32 %v3923, %v3919
        %v3928 = vrot.slane %v3396, 7
        %v3929 = vrot.slane %v3397, 7
        %v3930 = vrot.slane %v3399, 7
        %v3935 = vmul.f32 %v3892, %v3928
        %v3936 = vmul.f32 %v3894, %v3929
        %v3937 = vmul.f32 %v3896, %v3667
        %v3938 = vmul.f32 %v3898, %v3930
        %v3939 = vadd.f32 %v3924, %v3935
        %v3940 = vadd.f32 %v3925, %v3936
        %v3941 = vadd.f32 %v3926, %v3937
        %v3942 = vadd.f32 %v3927, %v3938
        %3943 = vmatprep.subr.mxu0 %v2530
        %3944 = vmatpush1.msra.mxu0 %v2529
        %3945 = vmatprep.subr.mxu0 %v2533
        %3946 = vmatpush1.msra.mxu0 %v2532
        %3947 = vmatprep.subr.mxu0 %v2536
        %3948 = vmatpush1.msra.mxu0 %v2535
        %3949 = vmatprep.subr.mxu0 %v2539
        %3950 = vmatpush1.msra.mxu0 %v2538
        %3951 = vmatprep.subr.mxu0 %v2542
        %3952 = vmatpush1.msra.mxu0 %v2541
        %3953 = vmatprep.subr.mxu0 %v2545
        %3954 = vmatpush1.msra.mxu0 %v2544
        %3955 = vmatprep.subr.mxu0 %v2548
        %3956 = vmatpush1.msra.mxu0 %v2547
        %3957 = vmatprep.subr.mxu0 %v2551
        %3958 = vmatpush1.msra.mxu0 %v2550
        %3959 = vmatprep.subr.mxu0 %v2554
        %3960 = vmatpush1.msra.mxu0 %v2553
        %3961 = vmatprep.subr.mxu0 %v2557
        %3962 = vmatpush1.msra.mxu0 %v2556
        %3963 = vmatprep.subr.mxu0 %v2560
        %3964 = vmatpush1.msra.mxu0 %v2559
        %3965 = vmatprep.subr.mxu0 %v2563
        %3966 = vmatpush1.msra.mxu0 %v2562
        %3967 = vmatprep.subr.mxu0 %v2566
        %3968 = vmatpush1.msra.mxu0 %v2565
        %3969 = vmatprep.subr.mxu0 %v2569
        %3970 = vmatpush1.msra.mxu0 %v2568
        %3971 = vmatprep.subr.mxu0 %v2572
        %3972 = vmatpush1.msra.mxu0 %v2571
        %3973 = vmatprep.subr.mxu0 %v2575
        %3974 = vmatpush1.msra.mxu0 %v2574
        %3975 = vmatprep.subr.mxu0 0.0
        %3976 = vmatpush1.msra.mxu0 0.0
        %3977 = vmatprep.subr.mxu0 0.0
        %3978 = vmatpush1.msra.mxu0 0.0
        %3979 = vmatprep.subr.mxu0 0.0
        %3980 = vmatpush1.msra.mxu0 0.0
        %3981 = vmatprep.subr.mxu0 0.0
        %3982 = vmatpush1.msra.mxu0 0.0
        %3983 = vmatprep.subr.mxu0 0.0
        %3984 = vmatpush1.msra.mxu0 0.0
        %3985 = vmatprep.subr.mxu0 0.0
        %3986 = vmatpush1.msra.mxu0 0.0
        %3987 = vmatprep.subr.mxu0 0.0
        %3988 = vmatpush1.msra.mxu0 0.0
        %3989 = vmatprep.subr.mxu0 0.0
        %3990 = vmatpush1.msra.mxu0 0.0
        %3991 = vmatprep.subr.mxu0 0.0
        %3992 = vmatpush1.msra.mxu0 0.0
        %3993 = vmatprep.subr.mxu0 0.0
        %3994 = vmatpush1.msra.mxu0 0.0
        %3995 = vmatprep.subr.mxu0 0.0
        %3996 = vmatpush1.msra.mxu0 0.0
        %3997 = vmatprep.subr.mxu0 0.0
        %3998 = vmatpush1.msra.mxu0 0.0
        %3999 = vmatprep.subr.mxu0 0.0
        %4000 = vmatpush1.msra.mxu0 0.0
        %4001 = vmatprep.subr.mxu0 0.0
        %4002 = vmatpush1.msra.mxu0 0.0
        %4003 = vmatprep.subr.mxu0 0.0
        %4004 = vmatpush1.msra.mxu0 0.0
        %4005 = vmatprep.subr.mxu0 0.0
        %4006 = vmatpush1.msra.mxu0 0.0
        %4007 = vmatprep.mubr.f32.mxu0 0.0
        %4008 = vmatmul.mubr.f32.gmra.mrb[0].mxu0 %v3683
        %v4009 = vpop.f32.mrb[0].mxu0
        %v4010 = vadd.f32 0.0, %v4009
        %v4011 = vpop.f32.mrb[0].mxu0
        %v4012 = vadd.f32 0.0, %v4011
        %4013 = vdwg.mxu0
        %4014 = vmatprep.subr.mxu0 0.0
        %4015 = vmatpush1.msra.mxu0 %v2531
        %4016 = vmatprep.subr.mxu0 0.0
        %4017 = vmatpush1.msra.mxu0 %v2534
        %4018 = vmatprep.subr.mxu0 0.0
        %4019 = vmatpush1.msra.mxu0 %v2537
        %4020 = vmatprep.subr.mxu0 0.0
        %4021 = vmatpush1.msra.mxu0 %v2540
        %4022 = vmatprep.subr.mxu0 0.0
        %4023 = vmatpush1.msra.mxu0 %v2543
        %4024 = vmatprep.subr.mxu0 0.0
        %4025 = vmatpush1.msra.mxu0 %v2546
        %4026 = vmatprep.subr.mxu0 0.0
        %4027 = vmatpush1.msra.mxu0 %v2549
        %4028 = vmatprep.subr.mxu0 0.0
        %4029 = vmatpush1.msra.mxu0 %v2552
        %4030 = vmatprep.subr.mxu0 0.0
        %4031 = vmatpush1.msra.mxu0 %v2555
        %4032 = vmatprep.subr.mxu0 0.0
        %4033 = vmatpush1.msra.mxu0 %v2558
        %4034 = vmatprep.subr.mxu0 0.0
        %4035 = vmatpush1.msra.mxu0 %v2561
        %4036 = vmatprep.subr.mxu0 0.0
        %4037 = vmatpush1.msra.mxu0 %v2564
        %4038 = vmatprep.subr.mxu0 0.0
        %4039 = vmatpush1.msra.mxu0 %v2567
        %4040 = vmatprep.subr.mxu0 0.0
        %4041 = vmatpush1.msra.mxu0 %v2570
        %4042 = vmatprep.subr.mxu0 0.0
        %4043 = vmatpush1.msra.mxu0 %v2573
        %4044 = vmatprep.subr.mxu0 0.0
        %4045 = vmatpush1.msra.mxu0 %v2576
        %4046 = vmatprep.subr.mxu0 0.0
        %4047 = vmatpush1.msra.mxu0 0.0
        %4048 = vmatprep.subr.mxu0 0.0
        %4049 = vmatpush1.msra.mxu0 0.0
        %4050 = vmatprep.subr.mxu0 0.0
        %4051 = vmatpush1.msra.mxu0 0.0
        %4052 = vmatprep.subr.mxu0 0.0
        %4053 = vmatpush1.msra.mxu0 0.0
        %4054 = vmatprep.subr.mxu0 0.0
        %4055 = vmatpush1.msra.mxu0 0.0
        %4056 = vmatprep.subr.mxu0 0.0
        %4057 = vmatpush1.msra.mxu0 0.0
        %4058 = vmatprep.subr.mxu0 0.0
        %4059 = vmatpush1.msra.mxu0 0.0
        %4060 = vmatprep.subr.mxu0 0.0
        %4061 = vmatpush1.msra.mxu0 0.0
        %4062 = vmatprep.subr.mxu0 0.0
        %4063 = vmatpush1.msra.mxu0 0.0
        %4064 = vmatprep.subr.mxu0 0.0
        %4065 = vmatpush1.msra.mxu0 0.0
        %4066 = vmatprep.subr.mxu0 0.0
        %4067 = vmatpush1.msra.mxu0 0.0
        %4068 = vmatprep.subr.mxu0 0.0
        %4069 = vmatpush1.msra.mxu0 0.0
        %4070 = vmatprep.subr.mxu0 0.0
        %4071 = vmatpush1.msra.mxu0 0.0
        %4072 = vmatprep.subr.mxu0 0.0
        %4073 = vmatpush1.msra.mxu0 0.0
        %4074 = vmatprep.subr.mxu0 0.0
        %4075 = vmatpush1.msra.mxu0 0.0
        %4076 = vmatprep.subr.mxu0 0.0
        %4077 = vmatpush1.msra.mxu0 0.0
        %4078 = vmatprep.mubr.f32.mxu0 0.0
        %4079 = vmatmul.mubr.f32.gmra.mrb[0].mxu0 %v3683
        %v4080 = vpop.f32.mrb[0].mxu0
        %v4081 = vadd.f32 0.0, %v4080
        %v4082 = vpop.f32.mrb[0].mxu0
        %4083 = vdwg.mxu0
        %v4085 = vrot.slane %v4010, 3
        %v4086 = vrot.slane %v4010, 4
        %v4087 = vrot.slane %v4010, 5
        %v4088 = vrot.slane %v4010, 6
        %v4093 = vadd.f32 %v2469, %v4085
        %v4094 = vadd.f32 %v2472, %v4086
        %v4095 = vadd.f32 %v2475, %v4087
        %v4096 = vadd.f32 %v2478, %v4088
        %v4097 = vxor.u32 %v4093, 2147483648
        %v4098 = vxor.u32 %v4094, 2147483648
        %v4099 = vxor.u32 %v4095, 2147483648
        %v4100 = vxor.u32 %v4096, 2147483648
        %v4101 = vmul.f32 %v4097, 1.442695
        %v4102 = vpow.pop %v4101
        %v4103 = vmul.f32 %v4098, 1.442695
        %v4104 = vpow.pop %v4103
        %v4105 = vmul.f32 %v4099, 1.442695
        %v4106 = vpow.pop %v4105
        %v4107 = vmul.f32 %v4100, 1.442695
        %v4108 = vpow.pop %v4107
        %v4109 = vadd.f32 %v4102, 1.0
        %v4110 = vadd.f32 %v4104, 1.0
        %v4111 = vadd.f32 %v4106, 1.0
        %v4112 = vadd.f32 %v4108, 1.0
        %v4113 = vrcp.pop %v4109
        %v4114 = vmul.f32 1.0, %v4113
        %v4115 = vrcp.pop %v4110
        %v4116 = vmul.f32 1.0, %v4115
        %v4117 = vrcp.pop %v4111
        %v4118 = vmul.f32 1.0, %v4117
        %v4119 = vrcp.pop %v4112
        %v4120 = vmul.f32 1.0, %v4119
        %v4122 = vrot.slane %v4012, 3
        %v4123 = vrot.slane %v4012, 4
        %v4124 = vrot.slane %v4012, 5
        %v4125 = vrot.slane %v4012, 6
        %v4130 = vadd.f32 %v2470, %v4122
        %v4131 = vadd.f32 %v2473, %v4123
        %v4132 = vadd.f32 %v2476, %v4124
        %v4133 = vadd.f32 %v2479, %v4125
        %v4134 = vxor.u32 %v4130, 2147483648
        %v4135 = vxor.u32 %v4131, 2147483648
        %v4136 = vxor.u32 %v4132, 2147483648
        %v4137 = vxor.u32 %v4133, 2147483648
        %v4138 = vmul.f32 %v4134, 1.442695
        %v4139 = vpow.pop %v4138
        %v4140 = vmul.f32 %v4135, 1.442695
        %v4141 = vpow.pop %v4140
        %v4142 = vmul.f32 %v4136, 1.442695
        %v4143 = vpow.pop %v4142
        %v4144 = vmul.f32 %v4137, 1.442695
        %v4145 = vpow.pop %v4144
        %v4146 = vadd.f32 %v4139, 1.0
        %v4147 = vadd.f32 %v4141, 1.0
        %v4148 = vadd.f32 %v4143, 1.0
        %v4149 = vadd.f32 %v4145, 1.0
        %v4150 = vrcp.pop %v4146
        %v4151 = vmul.f32 1.0, %v4150
        %v4152 = vrcp.pop %v4147
        %v4153 = vmul.f32 1.0, %v4152
        %v4154 = vrcp.pop %v4148
        %v4155 = vmul.f32 1.0, %v4154
        %v4156 = vrcp.pop %v4149
        %v4157 = vmul.f32 1.0, %v4156
        %v4158 = vadd.f32 %v4081, %v2589
        %v4160 = vrot.slane %v4158, 3
        %v4161 = vrot.slane %v4158, 4
        %v4162 = vrot.slane %v4158, 5
        %v4163 = vrot.slane %v4158, 6
        %v4168 = vmul.f32 %v4114, %v4160
        %v4169 = vmul.f32 %v4116, %v4161
        %v4170 = vmul.f32 %v4118, %v4162
        %v4171 = vmul.f32 %v4120, %v4163
        %v4172 = vadd.f32 %v2471, %v4168
        %v4173 = vadd.f32 %v2474, %v4169
        %v4174 = vadd.f32 %v2477, %v4170
        %v4175 = vadd.f32 %v2480, %v4171
        %v4176 = vtanh.pop %v4172
        %v4177 = vtanh.pop %v4173
        %v4178 = vtanh.pop %v4174
        %v4179 = vtanh.pop %v4175
        %v4180 = vsub.f32 1.0, %v4151
        %v4181 = vsub.f32 1.0, %v4153
        %v4182 = vsub.f32 1.0, %v4155
        %v4183 = vsub.f32 1.0, %v4157
        %v4184 = vmul.f32 %v4180, %v4176
        %v4185 = vmul.f32 %v4181, %v4177
        %v4186 = vmul.f32 %v4182, %v4178
        %v4187 = vmul.f32 %v4183, %v4179
        %v4188 = vrot.slane %v3657, 1
        %v4189 = vrot.slane %v3658, 1
        %v4190 = vrot.slane %v3659, 1
        %v4191 = vrot.slane %v3660, 1
        %v4196 = vmul.f32 %v4151, %v4188
        %v4197 = vmul.f32 %v4153, %v4189
        %v4198 = vmul.f32 %v4155, %v4190
        %v4199 = vmul.f32 %v4157, %v4191
        %v4200 = vadd.f32 %v4184, %v4196
        %v4201 = vadd.f32 %v4185, %v4197
        %v4202 = vadd.f32 %v4186, %v4198
        %v4203 = vadd.f32 %v4187, %v4199
        %v4208 = vrot.slane %v3939, 2
        %v4209 = vrot.slane %v3940, 1
        %v4210 = vsel %vm3120, %v4209, %v4208
        %v4211 = vsel %vm3123, %v3941, %v4210
        %v4212 = vrot.slane %v3942, 7
        %v4213 = vsel %vm3126, %v4212, %v4211
        %v4215 = vadd.f32 %v3672, %v4213
        %v4220 = vrot.slane %v4200, 5
        %v4221 = vrot.slane %v4201, 4
        %v4222 = vsel %vm3120, %v4221, %v4220
        %v4223 = vrot.slane %v4202, 3
        %v4224 = vsel %vm3123, %v4223, %v4222
        %v4225 = vrot.slane %v4203, 2
        %v4226 = vsel %vm3126, %v4225, %v4224
        %v4228 = vadd.f32 %v3685, %v4226
        %4229 = vmatprep.subr.mxu0 %v2482
        %4230 = vmatpush1.msra.mxu0 %v2481
        %4231 = vmatprep.subr.mxu0 %v2485
        %4232 = vmatpush1.msra.mxu0 %v2484
        %4233 = vmatprep.subr.mxu0 %v2488
        %4234 = vmatpush1.msra.mxu0 %v2487
        %4235 = vmatprep.subr.mxu0 %v2491
        %4236 = vmatpush1.msra.mxu0 %v2490
        %4237 = vmatprep.subr.mxu0 %v2494
        %4238 = vmatpush1.msra.mxu0 %v2493
        %4239 = vmatprep.subr.mxu0 %v2497
        %4240 = vmatpush1.msra.mxu0 %v2496
        %4241 = vmatprep.subr.mxu0 %v2500
        %4242 = vmatpush1.msra.mxu0 %v2499
        %4243 = vmatprep.subr.mxu0 %v2503
        %4244 = vmatpush1.msra.mxu0 %v2502
        %4245 = vmatprep.subr.mxu0 %v2506
        %4246 = vmatpush1.msra.mxu0 %v2505
        %4247 = vmatprep.subr.mxu0 %v2509
        %4248 = vmatpush1.msra.mxu0 %v2508
        %4249 = vmatprep.subr.mxu0 %v2512
        %4250 = vmatpush1.msra.mxu0 %v2511
        %4251 = vmatprep.subr.mxu0 %v2515
        %4252 = vmatpush1.msra.mxu0 %v2514
        %4253 = vmatprep.subr.mxu0 %v2518
        %4254 = vmatpush1.msra.mxu0 %v2517
        %4255 = vmatprep.subr.mxu0 %v2521
        %4256 = vmatpush1.msra.mxu0 %v2520
        %4257 = vmatprep.subr.mxu0 %v2524
        %4258 = vmatpush1.msra.mxu0 %v2523
        %4259 = vmatprep.subr.mxu0 %v2527
        %4260 = vmatpush1.msra.mxu0 %v2526
        %4261 = vmatprep.subr.mxu0 0.0
        %4262 = vmatpush1.msra.mxu0 0.0
        %4263 = vmatprep.subr.mxu0 0.0
        %4264 = vmatpush1.msra.mxu0 0.0
        %4265 = vmatprep.subr.mxu0 0.0
        %4266 = vmatpush1.msra.mxu0 0.0
        %4267 = vmatprep.subr.mxu0 0.0
        %4268 = vmatpush1.msra.mxu0 0.0
        %4269 = vmatprep.subr.mxu0 0.0
        %4270 = vmatpush1.msra.mxu0 0.0
        %4271 = vmatprep.subr.mxu0 0.0
        %4272 = vmatpush1.msra.mxu0 0.0
        %4273 = vmatprep.subr.mxu0 0.0
        %4274 = vmatpush1.msra.mxu0 0.0
        %4275 = vmatprep.subr.mxu0 0.0
        %4276 = vmatpush1.msra.mxu0 0.0
        %4277 = vmatprep.subr.mxu0 0.0
        %4278 = vmatpush1.msra.mxu0 0.0
        %4279 = vmatprep.subr.mxu0 0.0
        %4280 = vmatpush1.msra.mxu0 0.0
        %4281 = vmatprep.subr.mxu0 0.0
        %4282 = vmatpush1.msra.mxu0 0.0
        %4283 = vmatprep.subr.mxu0 0.0
        %4284 = vmatpush1.msra.mxu0 0.0
        %4285 = vmatprep.subr.mxu0 0.0
        %4286 = vmatpush1.msra.mxu0 0.0
        %4287 = vmatprep.subr.mxu0 0.0
        %4288 = vmatpush1.msra.mxu0 0.0
        %4289 = vmatprep.subr.mxu0 0.0
        %4290 = vmatpush1.msra.mxu0 0.0
        %4291 = vmatprep.subr.mxu0 0.0
        %4292 = vmatpush1.msra.mxu0 0.0
        %4293 = vmatprep.mubr.f32.mxu0 0.0
        %4294 = vmatmul.mubr.f32.gmra.mrb[0].mxu0 %v4213
        %v4295 = vpop.f32.mrb[0].mxu0
        %v4296 = vadd.f32 0.0, %v4295
        %v4297 = vpop.f32.mrb[0].mxu0
        %v4298 = vadd.f32 0.0, %v4297
        %4299 = vdwg.mxu0
        %4300 = vmatprep.subr.mxu0 0.0
        %4301 = vmatpush1.msra.mxu0 %v2483
        %4302 = vmatprep.subr.mxu0 0.0
        %4303 = vmatpush1.msra.mxu0 %v2486
        %4304 = vmatprep.subr.mxu0 0.0
        %4305 = vmatpush1.msra.mxu0 %v2489
        %4306 = vmatprep.subr.mxu0 0.0
        %4307 = vmatpush1.msra.mxu0 %v2492
        %4308 = vmatprep.subr.mxu0 0.0
        %4309 = vmatpush1.msra.mxu0 %v2495
        %4310 = vmatprep.subr.mxu0 0.0
        %4311 = vmatpush1.msra.mxu0 %v2498
        %4312 = vmatprep.subr.mxu0 0.0
        %4313 = vmatpush1.msra.mxu0 %v2501
        %4314 = vmatprep.subr.mxu0 0.0
        %4315 = vmatpush1.msra.mxu0 %v2504
        %4316 = vmatprep.subr.mxu0 0.0
        %4317 = vmatpush1.msra.mxu0 %v2507
        %4318 = vmatprep.subr.mxu0 0.0
        %4319 = vmatpush1.msra.mxu0 %v2510
        %4320 = vmatprep.subr.mxu0 0.0
        %4321 = vmatpush1.msra.mxu0 %v2513
        %4322 = vmatprep.subr.mxu0 0.0
        %4323 = vmatpush1.msra.mxu0 %v2516
        %4324 = vmatprep.subr.mxu0 0.0
        %4325 = vmatpush1.msra.mxu0 %v2519
        %4326 = vmatprep.subr.mxu0 0.0
        %4327 = vmatpush1.msra.mxu0 %v2522
        %4328 = vmatprep.subr.mxu0 0.0
        %4329 = vmatpush1.msra.mxu0 %v2525
        %4330 = vmatprep.subr.mxu0 0.0
        %4331 = vmatpush1.msra.mxu0 %v2528
        %4332 = vmatprep.subr.mxu0 0.0
        %4333 = vmatpush1.msra.mxu0 0.0
        %4334 = vmatprep.subr.mxu0 0.0
        %4335 = vmatpush1.msra.mxu0 0.0
        %4336 = vmatprep.subr.mxu0 0.0
        %4337 = vmatpush1.msra.mxu0 0.0
        %4338 = vmatprep.subr.mxu0 0.0
        %4339 = vmatpush1.msra.mxu0 0.0
        %4340 = vmatprep.subr.mxu0 0.0
        %4341 = vmatpush1.msra.mxu0 0.0
        %4342 = vmatprep.subr.mxu0 0.0
        %4343 = vmatpush1.msra.mxu0 0.0
        %4344 = vmatprep.subr.mxu0 0.0
        %4345 = vmatpush1.msra.mxu0 0.0
        %4346 = vmatprep.subr.mxu0 0.0
        %4347 = vmatpush1.msra.mxu0 0.0
        %4348 = vmatprep.subr.mxu0 0.0
        %4349 = vmatpush1.msra.mxu0 0.0
        %4350 = vmatprep.subr.mxu0 0.0
        %4351 = vmatpush1.msra.mxu0 0.0
        %4352 = vmatprep.subr.mxu0 0.0
        %4353 = vmatpush1.msra.mxu0 0.0
        %4354 = vmatprep.subr.mxu0 0.0
        %4355 = vmatpush1.msra.mxu0 0.0
        %4356 = vmatprep.subr.mxu0 0.0
        %4357 = vmatpush1.msra.mxu0 0.0
        %4358 = vmatprep.subr.mxu0 0.0
        %4359 = vmatpush1.msra.mxu0 0.0
        %4360 = vmatprep.subr.mxu0 0.0
        %4361 = vmatpush1.msra.mxu0 0.0
        %4362 = vmatprep.subr.mxu0 0.0
        %4363 = vmatpush1.msra.mxu0 0.0
        %4364 = vmatprep.mubr.f32.mxu0 0.0
        %4365 = vmatmul.mubr.f32.gmra.mrb[0].mxu0 %v4213
        %v4366 = vpop.f32.mrb[0].mxu0
        %v4367 = vadd.f32 0.0, %v4366
        %v4368 = vpop.f32.mrb[0].mxu0
        %4369 = vdwg.mxu0
        %v4371 = vrot.slane %v4296, 5
        %v4372 = vrot.slane %v4296, 6
        %v4373 = vrot.slane %v4296, 7
        %v4378 = vadd.f32 %v1630, %v4371
        %v4379 = vadd.f32 %v1633, %v4372
        %v4380 = vadd.f32 %v1636, %v4373
        %v4381 = vadd.f32 %v1639, %v4296
        %v4382 = vxor.u32 %v4378, 2147483648
        %v4383 = vxor.u32 %v4379, 2147483648
        %v4384 = vxor.u32 %v4380, 2147483648
        %v4385 = vxor.u32 %v4381, 2147483648
        %v4386 = vmul.f32 %v4382, 1.442695
        %v4387 = vpow.pop %v4386
        %v4388 = vmul.f32 %v4383, 1.442695
        %v4389 = vpow.pop %v4388
        %v4390 = vmul.f32 %v4384, 1.442695
        %v4391 = vpow.pop %v4390
        %v4392 = vmul.f32 %v4385, 1.442695
        %v4393 = vpow.pop %v4392
        %v4394 = vadd.f32 %v4387, 1.0
        %v4395 = vadd.f32 %v4389, 1.0
        %v4396 = vadd.f32 %v4391, 1.0
        %v4397 = vadd.f32 %v4393, 1.0
        %v4398 = vrcp.pop %v4394
        %v4399 = vmul.f32 1.0, %v4398
        %v4400 = vrcp.pop %v4395
        %v4401 = vmul.f32 1.0, %v4400
        %v4402 = vrcp.pop %v4396
        %v4403 = vmul.f32 1.0, %v4402
        %v4404 = vrcp.pop %v4397
        %v4405 = vmul.f32 1.0, %v4404
        %v4407 = vrot.slane %v4298, 5
        %v4408 = vrot.slane %v4298, 6
        %v4409 = vrot.slane %v4298, 7
        %v4414 = vadd.f32 %v1631, %v4407
        %v4415 = vadd.f32 %v1634, %v4408
        %v4416 = vadd.f32 %v1637, %v4409
        %v4417 = vadd.f32 %v1640, %v4298
        %v4418 = vxor.u32 %v4414, 2147483648
        %v4419 = vxor.u32 %v4415, 2147483648
        %v4420 = vxor.u32 %v4416, 2147483648
        %v4421 = vxor.u32 %v4417, 2147483648
        %v4422 = vmul.f32 %v4418, 1.442695
        %v4423 = vpow.pop %v4422
        %v4424 = vmul.f32 %v4419, 1.442695
        %v4425 = vpow.pop %v4424
        %v4426 = vmul.f32 %v4420, 1.442695
        %v4427 = vpow.pop %v4426
        %v4428 = vmul.f32 %v4421, 1.442695
        %v4429 = vpow.pop %v4428
        %v4430 = vadd.f32 %v4423, 1.0
        %v4431 = vadd.f32 %v4425, 1.0
        %v4432 = vadd.f32 %v4427, 1.0
        %v4433 = vadd.f32 %v4429, 1.0
        %v4434 = vrcp.pop %v4430
        %v4435 = vmul.f32 1.0, %v4434
        %v4436 = vrcp.pop %v4431
        %v4437 = vmul.f32 1.0, %v4436
        %v4438 = vrcp.pop %v4432
        %v4439 = vmul.f32 1.0, %v4438
        %v4440 = vrcp.pop %v4433
        %v4441 = vmul.f32 1.0, %v4440
        %v4442 = vadd.f32 %v4367, %v2582
        %v4444 = vrot.slane %v4442, 5
        %v4445 = vrot.slane %v4442, 6
        %v4446 = vrot.slane %v4442, 7
        %v4451 = vmul.f32 %v4399, %v4444
        %v4452 = vmul.f32 %v4401, %v4445
        %v4453 = vmul.f32 %v4403, %v4446
        %v4454 = vmul.f32 %v4405, %v4442
        %v4455 = vadd.f32 %v1632, %v4451
        %v4456 = vadd.f32 %v1635, %v4452
        %v4457 = vadd.f32 %v1638, %v4453
        %v4458 = vadd.f32 %v1641, %v4454
        %v4459 = vtanh.pop %v4455
        %v4460 = vtanh.pop %v4456
        %v4461 = vtanh.pop %v4457
        %v4462 = vtanh.pop %v4458
        %v4463 = vsub.f32 1.0, %v4435
        %v4464 = vsub.f32 1.0, %v4437
        %v4465 = vsub.f32 1.0, %v4439
        %v4466 = vsub.f32 1.0, %v4441
        %v4467 = vmul.f32 %v4463, %v4459
        %v4468 = vmul.f32 %v4464, %v4460
        %v4469 = vmul.f32 %v4465, %v4461
        %v4470 = vmul.f32 %v4466, %v4462
        %v4471 = vrot.slane %v3939, 7
        %v4472 = vrot.slane %v3940, 7
        %v4473 = vrot.slane %v3941, 7
        %v4478 = vmul.f32 %v4435, %v4471
        %v4479 = vmul.f32 %v4437, %v4472
        %v4480 = vmul.f32 %v4439, %v4473
        %v4481 = vmul.f32 %v4441, %v4212
        %v4482 = vadd.f32 %v4467, %v4478
        %v4483 = vadd.f32 %v4468, %v4479
        %v4484 = vadd.f32 %v4469, %v4480
        %v4485 = vadd.f32 %v4470, %v4481
        %4486 = vmatprep.subr.mxu0 %v2530
        %4487 = vmatpush1.msra.mxu0 %v2529
        %4488 = vmatprep.subr.mxu0 %v2533
        %4489 = vmatpush1.msra.mxu0 %v2532
        %4490 = vmatprep.subr.mxu0 %v2536
        %4491 = vmatpush1.msra.mxu0 %v2535
        %4492 = vmatprep.subr.mxu0 %v2539
        %4493 = vmatpush1.msra.mxu0 %v2538
        %4494 = vmatprep.subr.mxu0 %v2542
        %4495 = vmatpush1.msra.mxu0 %v2541
        %4496 = vmatprep.subr.mxu0 %v2545
        %4497 = vmatpush1.msra.mxu0 %v2544
        %4498 = vmatprep.subr.mxu0 %v2548
        %4499 = vmatpush1.msra.mxu0 %v2547
        %4500 = vmatprep.subr.mxu0 %v2551
        %4501 = vmatpush1.msra.mxu0 %v2550
        %4502 = vmatprep.subr.mxu0 %v2554
        %4503 = vmatpush1.msra.mxu0 %v2553
        %4504 = vmatprep.subr.mxu0 %v2557
        %4505 = vmatpush1.msra.mxu0 %v2556
        %4506 = vmatprep.subr.mxu0 %v2560
        %4507 = vmatpush1.msra.mxu0 %v2559
        %4508 = vmatprep.subr.mxu0 %v2563
        %4509 = vmatpush1.msra.mxu0 %v2562
        %4510 = vmatprep.subr.mxu0 %v2566
        %4511 = vmatpush1.msra.mxu0 %v2565
        %4512 = vmatprep.subr.mxu0 %v2569
        %4513 = vmatpush1.msra.mxu0 %v2568
        %4514 = vmatprep.subr.mxu0 %v2572
        %4515 = vmatpush1.msra.mxu0 %v2571
        %4516 = vmatprep.subr.mxu0 %v2575
        %4517 = vmatpush1.msra.mxu0 %v2574
        %4518 = vmatprep.subr.mxu0 0.0
        %4519 = vmatpush1.msra.mxu0 0.0
        %4520 = vmatprep.subr.mxu0 0.0
        %4521 = vmatpush1.msra.mxu0 0.0
        %4522 = vmatprep.subr.mxu0 0.0
        %4523 = vmatpush1.msra.mxu0 0.0
        %4524 = vmatprep.subr.mxu0 0.0
        %4525 = vmatpush1.msra.mxu0 0.0
        %4526 = vmatprep.subr.mxu0 0.0
        %4527 = vmatpush1.msra.mxu0 0.0
        %4528 = vmatprep.subr.mxu0 0.0
        %4529 = vmatpush1.msra.mxu0 0.0
        %4530 = vmatprep.subr.mxu0 0.0
        %4531 = vmatpush1.msra.mxu0 0.0
        %4532 = vmatprep.subr.mxu0 0.0
        %4533 = vmatpush1.msra.mxu0 0.0
        %4534 = vmatprep.subr.mxu0 0.0
        %4535 = vmatpush1.msra.mxu0 0.0
        %4536 = vmatprep.subr.mxu0 0.0
        %4537 = vmatpush1.msra.mxu0 0.0
        %4538 = vmatprep.subr.mxu0 0.0
        %4539 = vmatpush1.msra.mxu0 0.0
        %4540 = vmatprep.subr.mxu0 0.0
        %4541 = vmatpush1.msra.mxu0 0.0
        %4542 = vmatprep.subr.mxu0 0.0
        %4543 = vmatpush1.msra.mxu0 0.0
        %4544 = vmatprep.subr.mxu0 0.0
        %4545 = vmatpush1.msra.mxu0 0.0
        %4546 = vmatprep.subr.mxu0 0.0
        %4547 = vmatpush1.msra.mxu0 0.0
        %4548 = vmatprep.subr.mxu0 0.0
        %4549 = vmatpush1.msra.mxu0 0.0
        %4550 = vmatprep.mubr.f32.mxu0 0.0
        %4551 = vmatmul.mubr.f32.gmra.mrb[0].mxu0 %v4226
        %v4552 = vpop.f32.mrb[0].mxu0
        %v4553 = vadd.f32 0.0, %v4552
        %v4554 = vpop.f32.mrb[0].mxu0
        %v4555 = vadd.f32 0.0, %v4554
        %4556 = vdwg.mxu0
        %4557 = vmatprep.subr.mxu0 0.0
        %4558 = vmatpush1.msra.mxu0 %v2531
        %4559 = vmatprep.subr.mxu0 0.0
        %4560 = vmatpush1.msra.mxu0 %v2534
        %4561 = vmatprep.subr.mxu0 0.0
        %4562 = vmatpush1.msra.mxu0 %v2537
        %4563 = vmatprep.subr.mxu0 0.0
        %4564 = vmatpush1.msra.mxu0 %v2540
        %4565 = vmatprep.subr.mxu0 0.0
        %4566 = vmatpush1.msra.mxu0 %v2543
        %4567 = vmatprep.subr.mxu0 0.0
        %4568 = vmatpush1.msra.mxu0 %v2546
        %4569 = vmatprep.subr.mxu0 0.0
        %4570 = vmatpush1.msra.mxu0 %v2549
        %4571 = vmatprep.subr.mxu0 0.0
        %4572 = vmatpush1.msra.mxu0 %v2552
        %4573 = vmatprep.subr.mxu0 0.0
        %4574 = vmatpush1.msra.mxu0 %v2555
        %4575 = vmatprep.subr.mxu0 0.0
        %4576 = vmatpush1.msra.mxu0 %v2558
        %4577 = vmatprep.subr.mxu0 0.0
        %4578 = vmatpush1.msra.mxu0 %v2561
        %4579 = vmatprep.subr.mxu0 0.0
        %4580 = vmatpush1.msra.mxu0 %v2564
        %4581 = vmatprep.subr.mxu0 0.0
        %4582 = vmatpush1.msra.mxu0 %v2567
        %4583 = vmatprep.subr.mxu0 0.0
        %4584 = vmatpush1.msra.mxu0 %v2570
        %4585 = vmatprep.subr.mxu0 0.0
        %4586 = vmatpush1.msra.mxu0 %v2573
        %4587 = vmatprep.subr.mxu0 0.0
        %4588 = vmatpush1.msra.mxu0 %v2576
        %4589 = vmatprep.subr.mxu0 0.0
        %4590 = vmatpush1.msra.mxu0 0.0
        %4591 = vmatprep.subr.mxu0 0.0
        %4592 = vmatpush1.msra.mxu0 0.0
        %4593 = vmatprep.subr.mxu0 0.0
        %4594 = vmatpush1.msra.mxu0 0.0
        %4595 = vmatprep.subr.mxu0 0.0
        %4596 = vmatpush1.msra.mxu0 0.0
        %4597 = vmatprep.subr.mxu0 0.0
        %4598 = vmatpush1.msra.mxu0 0.0
        %4599 = vmatprep.subr.mxu0 0.0
        %4600 = vmatpush1.msra.mxu0 0.0
        %4601 = vmatprep.subr.mxu0 0.0
        %4602 = vmatpush1.msra.mxu0 0.0
        %4603 = vmatprep.subr.mxu0 0.0
        %4604 = vmatpush1.msra.mxu0 0.0
        %4605 = vmatprep.subr.mxu0 0.0
        %4606 = vmatpush1.msra.mxu0 0.0
        %4607 = vmatprep.subr.mxu0 0.0
        %4608 = vmatpush1.msra.mxu0 0.0
        %4609 = vmatprep.subr.mxu0 0.0
        %4610 = vmatpush1.msra.mxu0 0.0
        %4611 = vmatprep.subr.mxu0 0.0
        %4612 = vmatpush1.msra.mxu0 0.0
        %4613 = vmatprep.subr.mxu0 0.0
        %4614 = vmatpush1.msra.mxu0 0.0
        %4615 = vmatprep.subr.mxu0 0.0
        %4616 = vmatpush1.msra.mxu0 0.0
        %4617 = vmatprep.subr.mxu0 0.0
        %4618 = vmatpush1.msra.mxu0 0.0
        %4619 = vmatprep.subr.mxu0 0.0
        %4620 = vmatpush1.msra.mxu0 0.0
        %4621 = vmatprep.mubr.f32.mxu0 0.0
        %4622 = vmatmul.mubr.f32.gmra.mrb[0].mxu0 %v4226
        %v4623 = vpop.f32.mrb[0].mxu0
        %v4624 = vadd.f32 0.0, %v4623
        %v4625 = vpop.f32.mrb[0].mxu0
        %4626 = vdwg.mxu0
        %v4628 = vrot.slane %v4553, 4
        %v4629 = vrot.slane %v4553, 5
        %v4630 = vrot.slane %v4553, 6
        %v4631 = vrot.slane %v4553, 7
        %v4636 = vadd.f32 %v2469, %v4628
        %v4637 = vadd.f32 %v2472, %v4629
        %v4638 = vadd.f32 %v2475, %v4630
        %v4639 = vadd.f32 %v2478, %v4631
        %v4640 = vxor.u32 %v4636, 2147483648
        %v4641 = vxor.u32 %v4637, 2147483648
        %v4642 = vxor.u32 %v4638, 2147483648
        %v4643 = vxor.u32 %v4639, 2147483648
        %v4644 = vmul.f32 %v4640, 1.442695
        %v4645 = vpow.pop %v4644
        %v4646 = vmul.f32 %v4641, 1.442695
        %v4647 = vpow.pop %v4646
        %v4648 = vmul.f32 %v4642, 1.442695
        %v4649 = vpow.pop %v4648
        %v4650 = vmul.f32 %v4643, 1.442695
        %v4651 = vpow.pop %v4650
        %v4652 = vadd.f32 %v4645, 1.0
        %v4653 = vadd.f32 %v4647, 1.0
        %v4654 = vadd.f32 %v4649, 1.0
        %v4655 = vadd.f32 %v4651, 1.0
        %v4656 = vrcp.pop %v4652
        %v4657 = vmul.f32 1.0, %v4656
        %v4658 = vrcp.pop %v4653
        %v4659 = vmul.f32 1.0, %v4658
        %v4660 = vrcp.pop %v4654
        %v4661 = vmul.f32 1.0, %v4660
        %v4662 = vrcp.pop %v4655
        %v4663 = vmul.f32 1.0, %v4662
        %v4665 = vrot.slane %v4555, 4
        %v4666 = vrot.slane %v4555, 5
        %v4667 = vrot.slane %v4555, 6
        %v4668 = vrot.slane %v4555, 7
        %v4673 = vadd.f32 %v2470, %v4665
        %v4674 = vadd.f32 %v2473, %v4666
        %v4675 = vadd.f32 %v2476, %v4667
        %v4676 = vadd.f32 %v2479, %v4668
        %v4677 = vxor.u32 %v4673, 2147483648
        %v4678 = vxor.u32 %v4674, 2147483648
        %v4679 = vxor.u32 %v4675, 2147483648
        %v4680 = vxor.u32 %v4676, 2147483648
        %v4681 = vmul.f32 %v4677, 1.442695
        %v4682 = vpow.pop %v4681
        %v4683 = vmul.f32 %v4678, 1.442695
        %v4684 = vpow.pop %v4683
        %v4685 = vmul.f32 %v4679, 1.442695
        %v4686 = vpow.pop %v4685
        %v4687 = vmul.f32 %v4680, 1.442695
        %v4688 = vpow.pop %v4687
        %v4689 = vadd.f32 %v4682, 1.0
        %v4690 = vadd.f32 %v4684, 1.0
        %v4691 = vadd.f32 %v4686, 1.0
        %v4692 = vadd.f32 %v4688, 1.0
        %v4693 = vrcp.pop %v4689
        %v4694 = vmul.f32 1.0, %v4693
        %v4695 = vrcp.pop %v4690
        %v4696 = vmul.f32 1.0, %v4695
        %v4697 = vrcp.pop %v4691
        %v4698 = vmul.f32 1.0, %v4697
        %v4699 = vrcp.pop %v4692
        %v4700 = vmul.f32 1.0, %v4699
        %v4701 = vadd.f32 %v4624, %v2589
        %v4703 = vrot.slane %v4701, 4
        %v4704 = vrot.slane %v4701, 5
        %v4705 = vrot.slane %v4701, 6
        %v4706 = vrot.slane %v4701, 7
        %v4711 = vmul.f32 %v4657, %v4703
        %v4712 = vmul.f32 %v4659, %v4704
        %v4713 = vmul.f32 %v4661, %v4705
        %v4714 = vmul.f32 %v4663, %v4706
        %v4715 = vadd.f32 %v2471, %v4711
        %v4716 = vadd.f32 %v2474, %v4712
        %v4717 = vadd.f32 %v2477, %v4713
        %v4718 = vadd.f32 %v2480, %v4714
        %v4719 = vtanh.pop %v4715
        %v4720 = vtanh.pop %v4716
        %v4721 = vtanh.pop %v4717
        %v4722 = vtanh.pop %v4718
        %v4723 = vsub.f32 1.0, %v4694
        %v4724 = vsub.f32 1.0, %v4696
        %v4725 = vsub.f32 1.0, %v4698
        %v4726 = vsub.f32 1.0, %v4700
        %v4727 = vmul.f32 %v4723, %v4719
        %v4728 = vmul.f32 %v4724, %v4720
        %v4729 = vmul.f32 %v4725, %v4721
        %v4730 = vmul.f32 %v4726, %v4722
        %v4731 = vrot.slane %v4200, 1
        %v4732 = vrot.slane %v4201, 1
        %v4733 = vrot.slane %v4202, 1
        %v4734 = vrot.slane %v4203, 1
        %v4739 = vmul.f32 %v4694, %v4731
        %v4740 = vmul.f32 %v4696, %v4732
        %v4741 = vmul.f32 %v4698, %v4733
        %v4742 = vmul.f32 %v4700, %v4734
        %v4743 = vadd.f32 %v4727, %v4739
        %v4744 = vadd.f32 %v4728, %v4740
        %v4745 = vadd.f32 %v4729, %v4741
        %v4746 = vadd.f32 %v4730, %v4742
        %v4751 = vrot.slane %v4482, 3
        %v4752 = vrot.slane %v4483, 2
        %v4753 = vsel %vm3120, %v4752, %v4751
        %v4754 = vrot.slane %v4484, 1
        %v4755 = vsel %vm3123, %v4754, %v4753
        %v4756 = vsel %vm3126, %v4485, %v4755
        %v4758 = vadd.f32 %v4215, %v4756
        %v4763 = vrot.slane %v4743, 4
        %v4764 = vrot.slane %v4744, 3
        %v4765 = vsel %vm3120, %v4764, %v4763
        %v4766 = vrot.slane %v4745, 2
        %v4767 = vsel %vm3123, %v4766, %v4765
        %v4768 = vrot.slane %v4746, 1
        %v4769 = vsel %vm3126, %v4768, %v4767
        %v4771 = vadd.f32 %v4228, %v4769
        %4772 = vmatprep.subr.mxu0 %v2482
        %4773 = vmatpush1.msra.mxu0 %v2481
        %4774 = vmatprep.subr.mxu0 %v2485
        %4775 = vmatpush1.msra.mxu0 %v2484
        %4776 = vmatprep.subr.mxu0 %v2488
        %4777 = vmatpush1.msra.mxu0 %v2487
        %4778 = vmatprep.subr.mxu0 %v2491
        %4779 = vmatpush1.msra.mxu0 %v2490
        %4780 = vmatprep.subr.mxu0 %v2494
        %4781 = vmatpush1.msra.mxu0 %v2493
        %4782 = vmatprep.subr.mxu0 %v2497
        %4783 = vmatpush1.msra.mxu0 %v2496
        %4784 = vmatprep.subr.mxu0 %v2500
        %4785 = vmatpush1.msra.mxu0 %v2499
        %4786 = vmatprep.subr.mxu0 %v2503
        %4787 = vmatpush1.msra.mxu0 %v2502
        %4788 = vmatprep.subr.mxu0 %v2506
        %4789 = vmatpush1.msra.mxu0 %v2505
        %4790 = vmatprep.subr.mxu0 %v2509
        %4791 = vmatpush1.msra.mxu0 %v2508
        %4792 = vmatprep.subr.mxu0 %v2512
        %4793 = vmatpush1.msra.mxu0 %v2511
        %4794 = vmatprep.subr.mxu0 %v2515
        %4795 = vmatpush1.msra.mxu0 %v2514
        %4796 = vmatprep.subr.mxu0 %v2518
        %4797 = vmatpush1.msra.mxu0 %v2517
        %4798 = vmatprep.subr.mxu0 %v2521
        %4799 = vmatpush1.msra.mxu0 %v2520
        %4800 = vmatprep.subr.mxu0 %v2524
        %4801 = vmatpush1.msra.mxu0 %v2523
        %4802 = vmatprep.subr.mxu0 %v2527
        %4803 = vmatpush1.msra.mxu0 %v2526
        %4804 = vmatprep.subr.mxu0 0.0
        %4805 = vmatpush1.msra.mxu0 0.0
        %4806 = vmatprep.subr.mxu0 0.0
        %4807 = vmatpush1.msra.mxu0 0.0
        %4808 = vmatprep.subr.mxu0 0.0
        %4809 = vmatpush1.msra.mxu0 0.0
        %4810 = vmatprep.subr.mxu0 0.0
        %4811 = vmatpush1.msra.mxu0 0.0
        %4812 = vmatprep.subr.mxu0 0.0
        %4813 = vmatpush1.msra.mxu0 0.0
        %4814 = vmatprep.subr.mxu0 0.0
        %4815 = vmatpush1.msra.mxu0 0.0
        %4816 = vmatprep.subr.mxu0 0.0
        %4817 = vmatpush1.msra.mxu0 0.0
        %4818 = vmatprep.subr.mxu0 0.0
        %4819 = vmatpush1.msra.mxu0 0.0
        %4820 = vmatprep.subr.mxu0 0.0
        %4821 = vmatpush1.msra.mxu0 0.0
        %4822 = vmatprep.subr.mxu0 0.0
        %4823 = vmatpush1.msra.mxu0 0.0
        %4824 = vmatprep.subr.mxu0 0.0
        %4825 = vmatpush1.msra.mxu0 0.0
        %4826 = vmatprep.subr.mxu0 0.0
        %4827 = vmatpush1.msra.mxu0 0.0
        %4828 = vmatprep.subr.mxu0 0.0
        %4829 = vmatpush1.msra.mxu0 0.0
        %4830 = vmatprep.subr.mxu0 0.0
        %4831 = vmatpush1.msra.mxu0 0.0
        %4832 = vmatprep.subr.mxu0 0.0
        %4833 = vmatpush1.msra.mxu0 0.0
        %4834 = vmatprep.subr.mxu0 0.0
        %4835 = vmatpush1.msra.mxu0 0.0
        %4836 = vmatprep.mubr.f32.mxu0 0.0
        %4837 = vmatmul.mubr.f32.gmra.mrb[0].mxu0 %v4756
        %v4838 = vpop.f32.mrb[0].mxu0
        %v4839 = vadd.f32 0.0, %v4838
        %v4840 = vpop.f32.mrb[0].mxu0
        %v4841 = vadd.f32 0.0, %v4840
        %4842 = vdwg.mxu0
        %4843 = vmatprep.subr.mxu0 0.0
        %4844 = vmatpush1.msra.mxu0 %v2483
        %4845 = vmatprep.subr.mxu0 0.0
        %4846 = vmatpush1.msra.mxu0 %v2486
        %4847 = vmatprep.subr.mxu0 0.0
        %4848 = vmatpush1.msra.mxu0 %v2489
        %4849 = vmatprep.subr.mxu0 0.0
        %4850 = vmatpush1.msra.mxu0 %v2492
        %4851 = vmatprep.subr.mxu0 0.0
        %4852 = vmatpush1.msra.mxu0 %v2495
        %4853 = vmatprep.subr.mxu0 0.0
        %4854 = vmatpush1.msra.mxu0 %v2498
        %4855 = vmatprep.subr.mxu0 0.0
        %4856 = vmatpush1.msra.mxu0 %v2501
        %4857 = vmatprep.subr.mxu0 0.0
        %4858 = vmatpush1.msra.mxu0 %v2504
        %4859 = vmatprep.subr.mxu0 0.0
        %4860 = vmatpush1.msra.mxu0 %v2507
        %4861 = vmatprep.subr.mxu0 0.0
        %4862 = vmatpush1.msra.mxu0 %v2510
        %4863 = vmatprep.subr.mxu0 0.0
        %4864 = vmatpush1.msra.mxu0 %v2513
        %4865 = vmatprep.subr.mxu0 0.0
        %4866 = vmatpush1.msra.mxu0 %v2516
        %4867 = vmatprep.subr.mxu0 0.0
        %4868 = vmatpush1.msra.mxu0 %v2519
        %4869 = vmatprep.subr.mxu0 0.0
        %4870 = vmatpush1.msra.mxu0 %v2522
        %4871 = vmatprep.subr.mxu0 0.0
        %4872 = vmatpush1.msra.mxu0 %v2525
        %4873 = vmatprep.subr.mxu0 0.0
        %4874 = vmatpush1.msra.mxu0 %v2528
        %4875 = vmatprep.subr.mxu0 0.0
        %4876 = vmatpush1.msra.mxu0 0.0
        %4877 = vmatprep.subr.mxu0 0.0
        %4878 = vmatpush1.msra.mxu0 0.0
        %4879 = vmatprep.subr.mxu0 0.0
        %4880 = vmatpush1.msra.mxu0 0.0
        %4881 = vmatprep.subr.mxu0 0.0
        %4882 = vmatpush1.msra.mxu0 0.0
        %4883 = vmatprep.subr.mxu0 0.0
        %4884 = vmatpush1.msra.mxu0 0.0
        %4885 = vmatprep.subr.mxu0 0.0
        %4886 = vmatpush1.msra.mxu0 0.0
        %4887 = vmatprep.subr.mxu0 0.0
        %4888 = vmatpush1.msra.mxu0 0.0
        %4889 = vmatprep.subr.mxu0 0.0
        %4890 = vmatpush1.msra.mxu0 0.0
        %4891 = vmatprep.subr.mxu0 0.0
        %4892 = vmatpush1.msra.mxu0 0.0
        %4893 = vmatprep.subr.mxu0 0.0
        %4894 = vmatpush1.msra.mxu0 0.0
        %4895 = vmatprep.subr.mxu0 0.0
        %4896 = vmatpush1.msra.mxu0 0.0
        %4897 = vmatprep.subr.mxu0 0.0
        %4898 = vmatpush1.msra.mxu0 0.0
        %4899 = vmatprep.subr.mxu0 0.0
        %4900 = vmatpush1.msra.mxu0 0.0
        %4901 = vmatprep.subr.mxu0 0.0
        %4902 = vmatpush1.msra.mxu0 0.0
        %4903 = vmatprep.subr.mxu0 0.0
        %4904 = vmatpush1.msra.mxu0 0.0
        %4905 = vmatprep.subr.mxu0 0.0
        %4906 = vmatpush1.msra.mxu0 0.0
        %4907 = vmatprep.mubr.f32.mxu0 0.0
        %4908 = vmatmul.mubr.f32.gmra.mrb[0].mxu0 %v4756
        %v4909 = vpop.f32.mrb[0].mxu0
        %v4910 = vadd.f32 0.0, %v4909
        %v4911 = vpop.f32.mrb[0].mxu0
        %4912 = vdwg.mxu0
        %v4914 = vrot.slane %v4839, 4
        %v4915 = vrot.slane %v4839, 5
        %v4916 = vrot.slane %v4839, 6
        %v4917 = vrot.slane %v4839, 7
        %v4922 = vadd.f32 %v1630, %v4914
        %v4923 = vadd.f32 %v1633, %v4915
        %v4924 = vadd.f32 %v1636, %v4916
        %v4925 = vadd.f32 %v1639, %v4917
        %v4926 = vxor.u32 %v4922, 2147483648
        %v4927 = vxor.u32 %v4923, 2147483648
        %v4928 = vxor.u32 %v4924, 2147483648
        %v4929 = vxor.u32 %v4925, 2147483648
        %v4930 = vmul.f32 %v4926, 1.442695
        %v4931 = vpow.pop %v4930
        %v4932 = vmul.f32 %v4927, 1.442695
        %v4933 = vpow.pop %v4932
        %v4934 = vmul.f32 %v4928, 1.442695
        %v4935 = vpow.pop %v4934
        %v4936 = vmul.f32 %v4929, 1.442695
        %v4937 = vpow.pop %v4936
        %v4938 = vadd.f32 %v4931, 1.0
        %v4939 = vadd.f32 %v4933, 1.0
        %v4940 = vadd.f32 %v4935, 1.0
        %v4941 = vadd.f32 %v4937, 1.0
        %v4942 = vrcp.pop %v4938
        %v4943 = vmul.f32 1.0, %v4942
        %v4944 = vrcp.pop %v4939
        %v4945 = vmul.f32 1.0, %v4944
        %v4946 = vrcp.pop %v4940
        %v4947 = vmul.f32 1.0, %v4946
        %v4948 = vrcp.pop %v4941
        %v4949 = vmul.f32 1.0, %v4948
        %v4951 = vrot.slane %v4841, 4
        %v4952 = vrot.slane %v4841, 5
        %v4953 = vrot.slane %v4841, 6
        %v4954 = vrot.slane %v4841, 7
        %v4959 = vadd.f32 %v1631, %v4951
        %v4960 = vadd.f32 %v1634, %v4952
        %v4961 = vadd.f32 %v1637, %v4953
        %v4962 = vadd.f32 %v1640, %v4954
        %v4963 = vxor.u32 %v4959, 2147483648
        %v4964 = vxor.u32 %v4960, 2147483648
        %v4965 = vxor.u32 %v4961, 2147483648
        %v4966 = vxor.u32 %v4962, 2147483648
        %v4967 = vmul.f32 %v4963, 1.442695
        %v4968 = vpow.pop %v4967
        %v4969 = vmul.f32 %v4964, 1.442695
        %v4970 = vpow.pop %v4969
        %v4971 = vmul.f32 %v4965, 1.442695
        %v4972 = vpow.pop %v4971
        %v4973 = vmul.f32 %v4966, 1.442695
        %v4974 = vpow.pop %v4973
        %v4975 = vadd.f32 %v4968, 1.0
        %v4976 = vadd.f32 %v4970, 1.0
        %v4977 = vadd.f32 %v4972, 1.0
        %v4978 = vadd.f32 %v4974, 1.0
        %v4979 = vrcp.pop %v4975
        %v4980 = vmul.f32 1.0, %v4979
        %v4981 = vrcp.pop %v4976
        %v4982 = vmul.f32 1.0, %v4981
        %v4983 = vrcp.pop %v4977
        %v4984 = vmul.f32 1.0, %v4983
        %v4985 = vrcp.pop %v4978
        %v4986 = vmul.f32 1.0, %v4985
        %v4987 = vadd.f32 %v4910, %v2582
        %v4989 = vrot.slane %v4987, 4
        %v4990 = vrot.slane %v4987, 5
        %v4991 = vrot.slane %v4987, 6
        %v4992 = vrot.slane %v4987, 7
        %v4997 = vmul.f32 %v4943, %v4989
        %v4998 = vmul.f32 %v4945, %v4990
        %v4999 = vmul.f32 %v4947, %v4991
        %v5000 = vmul.f32 %v4949, %v4992
        %v5001 = vadd.f32 %v1632, %v4997
        %v5002 = vadd.f32 %v1635, %v4998
        %v5003 = vadd.f32 %v1638, %v4999
        %v5004 = vadd.f32 %v1641, %v5000
        %v5005 = vtanh.pop %v5001
        %v5006 = vtanh.pop %v5002
        %v5007 = vtanh.pop %v5003
        %v5008 = vtanh.pop %v5004
        %v5009 = vsub.f32 1.0, %v4980
        %v5010 = vsub.f32 1.0, %v4982
        %v5011 = vsub.f32 1.0, %v4984
        %v5012 = vsub.f32 1.0, %v4986
        %v5013 = vmul.f32 %v5009, %v5005
        %v5014 = vmul.f32 %v5010, %v5006
        %v5015 = vmul.f32 %v5011, %v5007
        %v5016 = vmul.f32 %v5012, %v5008
        %v5017 = vrot.slane %v4482, 7
        %v5018 = vrot.slane %v4483, 7
        %v5019 = vrot.slane %v4484, 7
        %v5020 = vrot.slane %v4485, 7
        %v5025 = vmul.f32 %v4980, %v5017
        %v5026 = vmul.f32 %v4982, %v5018
        %v5027 = vmul.f32 %v4984, %v5019
        %v5028 = vmul.f32 %v4986, %v5020
        %v5029 = vadd.f32 %v5013, %v5025
        %v5030 = vadd.f32 %v5014, %v5026
        %v5031 = vadd.f32 %v5015, %v5027
        %v5032 = vadd.f32 %v5016, %v5028
        %5033 = vmatprep.subr.mxu0 %v2530
        %5034 = vmatpush1.msra.mxu0 %v2529
        %5035 = vmatprep.subr.mxu0 %v2533
        %5036 = vmatpush1.msra.mxu0 %v2532
        %5037 = vmatprep.subr.mxu0 %v2536
        %5038 = vmatpush1.msra.mxu0 %v2535
        %5039 = vmatprep.subr.mxu0 %v2539
        %5040 = vmatpush1.msra.mxu0 %v2538
        %5041 = vmatprep.subr.mxu0 %v2542
        %5042 = vmatpush1.msra.mxu0 %v2541
        %5043 = vmatprep.subr.mxu0 %v2545
        %5044 = vmatpush1.msra.mxu0 %v2544
        %5045 = vmatprep.subr.mxu0 %v2548
        %5046 = vmatpush1.msra.mxu0 %v2547
        %5047 = vmatprep.subr.mxu0 %v2551
        %5048 = vmatpush1.msra.mxu0 %v2550
        %5049 = vmatprep.subr.mxu0 %v2554
        %5050 = vmatpush1.msra.mxu0 %v2553
        %5051 = vmatprep.subr.mxu0 %v2557
        %5052 = vmatpush1.msra.mxu0 %v2556
        %5053 = vmatprep.subr.mxu0 %v2560
        %5054 = vmatpush1.msra.mxu0 %v2559
        %5055 = vmatprep.subr.mxu0 %v2563
        %5056 = vmatpush1.msra.mxu0 %v2562
        %5057 = vmatprep.subr.mxu0 %v2566
        %5058 = vmatpush1.msra.mxu0 %v2565
        %5059 = vmatprep.subr.mxu0 %v2569
        %5060 = vmatpush1.msra.mxu0 %v2568
        %5061 = vmatprep.subr.mxu0 %v2572
        %5062 = vmatpush1.msra.mxu0 %v2571
        %5063 = vmatprep.subr.mxu0 %v2575
        %5064 = vmatpush1.msra.mxu0 %v2574
        %5065 = vmatprep.subr.mxu0 0.0
        %5066 = vmatpush1.msra.mxu0 0.0
        %5067 = vmatprep.subr.mxu0 0.0
        %5068 = vmatpush1.msra.mxu0 0.0
        %5069 = vmatprep.subr.mxu0 0.0
        %5070 = vmatpush1.msra.mxu0 0.0
        %5071 = vmatprep.subr.mxu0 0.0
        %5072 = vmatpush1.msra.mxu0 0.0
        %5073 = vmatprep.subr.mxu0 0.0
        %5074 = vmatpush1.msra.mxu0 0.0
        %5075 = vmatprep.subr.mxu0 0.0
        %5076 = vmatpush1.msra.mxu0 0.0
        %5077 = vmatprep.subr.mxu0 0.0
        %5078 = vmatpush1.msra.mxu0 0.0
        %5079 = vmatprep.subr.mxu0 0.0
        %5080 = vmatpush1.msra.mxu0 0.0
        %5081 = vmatprep.subr.mxu0 0.0
        %5082 = vmatpush1.msra.mxu0 0.0
        %5083 = vmatprep.subr.mxu0 0.0
        %5084 = vmatpush1.msra.mxu0 0.0
        %5085 = vmatprep.subr.mxu0 0.0
        %5086 = vmatpush1.msra.mxu0 0.0
        %5087 = vmatprep.subr.mxu0 0.0
        %5088 = vmatpush1.msra.mxu0 0.0
        %5089 = vmatprep.subr.mxu0 0.0
        %5090 = vmatpush1.msra.mxu0 0.0
        %5091 = vmatprep.subr.mxu0 0.0
        %5092 = vmatpush1.msra.mxu0 0.0
        %5093 = vmatprep.subr.mxu0 0.0
        %5094 = vmatpush1.msra.mxu0 0.0
        %5095 = vmatprep.subr.mxu0 0.0
        %5096 = vmatpush1.msra.mxu0 0.0
        %5097 = vmatprep.mubr.f32.mxu0 0.0
        %5098 = vmatmul.mubr.f32.gmra.mrb[0].mxu0 %v4769
        %v5099 = vpop.f32.mrb[0].mxu0
        %v5100 = vadd.f32 0.0, %v5099
        %v5101 = vpop.f32.mrb[0].mxu0
        %v5102 = vadd.f32 0.0, %v5101
        %5103 = vdwg.mxu0
        %5104 = vmatprep.subr.mxu0 0.0
        %5105 = vmatpush1.msra.mxu0 %v2531
        %5106 = vmatprep.subr.mxu0 0.0
        %5107 = vmatpush1.msra.mxu0 %v2534
        %5108 = vmatprep.subr.mxu0 0.0
        %5109 = vmatpush1.msra.mxu0 %v2537
        %5110 = vmatprep.subr.mxu0 0.0
        %5111 = vmatpush1.msra.mxu0 %v2540
        %5112 = vmatprep.subr.mxu0 0.0
        %5113 = vmatpush1.msra.mxu0 %v2543
        %5114 = vmatprep.subr.mxu0 0.0
        %5115 = vmatpush1.msra.mxu0 %v2546
        %5116 = vmatprep.subr.mxu0 0.0
        %5117 = vmatpush1.msra.mxu0 %v2549
        %5118 = vmatprep.subr.mxu0 0.0
        %5119 = vmatpush1.msra.mxu0 %v2552
        %5120 = vmatprep.subr.mxu0 0.0
        %5121 = vmatpush1.msra.mxu0 %v2555
        %5122 = vmatprep.subr.mxu0 0.0
        %5123 = vmatpush1.msra.mxu0 %v2558
        %5124 = vmatprep.subr.mxu0 0.0
        %5125 = vmatpush1.msra.mxu0 %v2561
        %5126 = vmatprep.subr.mxu0 0.0
        %5127 = vmatpush1.msra.mxu0 %v2564
        %5128 = vmatprep.subr.mxu0 0.0
        %5129 = vmatpush1.msra.mxu0 %v2567
        %5130 = vmatprep.subr.mxu0 0.0
        %5131 = vmatpush1.msra.mxu0 %v2570
        %5132 = vmatprep.subr.mxu0 0.0
        %5133 = vmatpush1.msra.mxu0 %v2573
        %5134 = vmatprep.subr.mxu0 0.0
        %5135 = vmatpush1.msra.mxu0 %v2576
        %5136 = vmatprep.subr.mxu0 0.0
        %5137 = vmatpush1.msra.mxu0 0.0
        %5138 = vmatprep.subr.mxu0 0.0
        %5139 = vmatpush1.msra.mxu0 0.0
        %5140 = vmatprep.subr.mxu0 0.0
        %5141 = vmatpush1.msra.mxu0 0.0
        %5142 = vmatprep.subr.mxu0 0.0
        %5143 = vmatpush1.msra.mxu0 0.0
        %5144 = vmatprep.subr.mxu0 0.0
        %5145 = vmatpush1.msra.mxu0 0.0
        %5146 = vmatprep.subr.mxu0 0.0
        %5147 = vmatpush1.msra.mxu0 0.0
        %5148 = vmatprep.subr.mxu0 0.0
        %5149 = vmatpush1.msra.mxu0 0.0
        %5150 = vmatprep.subr.mxu0 0.0
        %5151 = vmatpush1.msra.mxu0 0.0
        %5152 = vmatprep.subr.mxu0 0.0
        %5153 = vmatpush1.msra.mxu0 0.0
        %5154 = vmatprep.subr.mxu0 0.0
        %5155 = vmatpush1.msra.mxu0 0.0
        %5156 = vmatprep.subr.mxu0 0.0
        %5157 = vmatpush1.msra.mxu0 0.0
        %5158 = vmatprep.subr.mxu0 0.0
        %5159 = vmatpush1.msra.mxu0 0.0
        %5160 = vmatprep.subr.mxu0 0.0
        %5161 = vmatpush1.msra.mxu0 0.0
        %5162 = vmatprep.subr.mxu0 0.0
        %5163 = vmatpush1.msra.mxu0 0.0
        %5164 = vmatprep.subr.mxu0 0.0
        %5165 = vmatpush1.msra.mxu0 0.0
        %5166 = vmatprep.subr.mxu0 0.0
        %5167 = vmatpush1.msra.mxu0 0.0
        %5168 = vmatprep.mubr.f32.mxu0 0.0
        %5169 = vmatmul.mubr.f32.gmra.mrb[0].mxu0 %v4769
        %v5170 = vpop.f32.mrb[0].mxu0
        %v5171 = vadd.f32 0.0, %v5170
        %v5172 = vpop.f32.mrb[0].mxu0
        %5173 = vdwg.mxu0
        %v5175 = vrot.slane %v5100, 5
        %v5176 = vrot.slane %v5100, 6
        %v5177 = vrot.slane %v5100, 7
        %v5182 = vadd.f32 %v2469, %v5175
        %v5183 = vadd.f32 %v2472, %v5176
        %v5184 = vadd.f32 %v2475, %v5177
        %v5185 = vadd.f32 %v2478, %v5100
        %v5186 = vxor.u32 %v5182, 2147483648
        %v5187 = vxor.u32 %v5183, 2147483648
        %v5188 = vxor.u32 %v5184, 2147483648
        %v5189 = vxor.u32 %v5185, 2147483648
        %v5190 = vmul.f32 %v5186, 1.442695
        %v5191 = vpow.pop %v5190
        %v5192 = vmul.f32 %v5187, 1.442695
        %v5193 = vpow.pop %v5192
        %v5194 = vmul.f32 %v5188, 1.442695
        %v5195 = vpow.pop %v5194
        %v5196 = vmul.f32 %v5189, 1.442695
        %v5197 = vpow.pop %v5196
        %v5198 = vadd.f32 %v5191, 1.0
        %v5199 = vadd.f32 %v5193, 1.0
        %v5200 = vadd.f32 %v5195, 1.0
        %v5201 = vadd.f32 %v5197, 1.0
        %v5202 = vrcp.pop %v5198
        %v5203 = vmul.f32 1.0, %v5202
        %v5204 = vrcp.pop %v5199
        %v5205 = vmul.f32 1.0, %v5204
        %v5206 = vrcp.pop %v5200
        %v5207 = vmul.f32 1.0, %v5206
        %v5208 = vrcp.pop %v5201
        %v5209 = vmul.f32 1.0, %v5208
        %v5211 = vrot.slane %v5102, 5
        %v5212 = vrot.slane %v5102, 6
        %v5213 = vrot.slane %v5102, 7
        %v5218 = vadd.f32 %v2470, %v5211
        %v5219 = vadd.f32 %v2473, %v5212
        %v5220 = vadd.f32 %v2476, %v5213
        %v5221 = vadd.f32 %v2479, %v5102
        %v5222 = vxor.u32 %v5218, 2147483648
        %v5223 = vxor.u32 %v5219, 2147483648
        %v5224 = vxor.u32 %v5220, 2147483648
        %v5225 = vxor.u32 %v5221, 2147483648
        %v5226 = vmul.f32 %v5222, 1.442695
        %v5227 = vpow.pop %v5226
        %v5228 = vmul.f32 %v5223, 1.442695
        %v5229 = vpow.pop %v5228
        %v5230 = vmul.f32 %v5224, 1.442695
        %v5231 = vpow.pop %v5230
        %v5232 = vmul.f32 %v5225, 1.442695
        %v5233 = vpow.pop %v5232
        %v5234 = vadd.f32 %v5227, 1.0
        %v5235 = vadd.f32 %v5229, 1.0
        %v5236 = vadd.f32 %v5231, 1.0
        %v5237 = vadd.f32 %v5233, 1.0
        %v5238 = vrcp.pop %v5234
        %v5239 = vmul.f32 1.0, %v5238
        %v5240 = vrcp.pop %v5235
        %v5241 = vmul.f32 1.0, %v5240
        %v5242 = vrcp.pop %v5236
        %v5243 = vmul.f32 1.0, %v5242
        %v5244 = vrcp.pop %v5237
        %v5245 = vmul.f32 1.0, %v5244
        %v5246 = vadd.f32 %v5171, %v2589
        %v5248 = vrot.slane %v5246, 5
        %v5249 = vrot.slane %v5246, 6
        %v5250 = vrot.slane %v5246, 7
        %v5255 = vmul.f32 %v5203, %v5248
        %v5256 = vmul.f32 %v5205, %v5249
        %v5257 = vmul.f32 %v5207, %v5250
        %v5258 = vmul.f32 %v5209, %v5246
        %v5259 = vadd.f32 %v2471, %v5255
        %v5260 = vadd.f32 %v2474, %v5256
        %v5261 = vadd.f32 %v2477, %v5257
        %v5262 = vadd.f32 %v2480, %v5258
        %v5263 = vtanh.pop %v5259
        %v5264 = vtanh.pop %v5260
        %v5265 = vtanh.pop %v5261
        %v5266 = vtanh.pop %v5262
        %v5267 = vsub.f32 1.0, %v5239
        %v5268 = vsub.f32 1.0, %v5241
        %v5269 = vsub.f32 1.0, %v5243
        %v5270 = vsub.f32 1.0, %v5245
        %v5271 = vmul.f32 %v5267, %v5263
        %v5272 = vmul.f32 %v5268, %v5264
        %v5273 = vmul.f32 %v5269, %v5265
        %v5274 = vmul.f32 %v5270, %v5266
        %v5275 = vrot.slane %v4743, 1
        %v5276 = vrot.slane %v4744, 1
        %v5277 = vrot.slane %v4745, 1
        %v5282 = vmul.f32 %v5239, %v5275
        %v5283 = vmul.f32 %v5241, %v5276
        %v5284 = vmul.f32 %v5243, %v5277
        %v5285 = vmul.f32 %v5245, %v4768
        %v5286 = vadd.f32 %v5271, %v5282
        %v5287 = vadd.f32 %v5272, %v5283
        %v5288 = vadd.f32 %v5273, %v5284
        %v5289 = vadd.f32 %v5274, %v5285
        %v5294 = vrot.slane %v5029, 4
        %v5295 = vrot.slane %v5030, 3
        %v5296 = vsel %vm3120, %v5295, %v5294
        %v5297 = vrot.slane %v5031, 2
        %v5298 = vsel %vm3123, %v5297, %v5296
        %v5299 = vrot.slane %v5032, 1
        %v5300 = vsel %vm3126, %v5299, %v5298
        %v5302 = vadd.f32 %v4758, %v5300
        %v5307 = vrot.slane %v5286, 3
        %v5308 = vrot.slane %v5287, 2
        %v5309 = vsel %vm3120, %v5308, %v5307
        %v5310 = vrot.slane %v5288, 1
        %v5311 = vsel %vm3123, %v5310, %v5309
        %v5312 = vsel %vm3126, %v5289, %v5311
        %v5314 = vadd.f32 %v4771, %v5312
        %5315 = vmatprep.subr.mxu0 %v2482
        %5316 = vmatpush1.msra.mxu0 %v2481
        %5317 = vmatprep.subr.mxu0 %v2485
        %5318 = vmatpush1.msra.mxu0 %v2484
        %5319 = vmatprep.subr.mxu0 %v2488
        %5320 = vmatpush1.msra.mxu0 %v2487
        %5321 = vmatprep.subr.mxu0 %v2491
        %5322 = vmatpush1.msra.mxu0 %v2490
        %5323 = vmatprep.subr.mxu0 %v2494
        %5324 = vmatpush1.msra.mxu0 %v2493
        %5325 = vmatprep.subr.mxu0 %v2497
        %5326 = vmatpush1.msra.mxu0 %v2496
        %5327 = vmatprep.subr.mxu0 %v2500
        %5328 = vmatpush1.msra.mxu0 %v2499
        %5329 = vmatprep.subr.mxu0 %v2503
        %5330 = vmatpush1.msra.mxu0 %v2502
        %5331 = vmatprep.subr.mxu0 %v2506
        %5332 = vmatpush1.msra.mxu0 %v2505
        %5333 = vmatprep.subr.mxu0 %v2509
        %5334 = vmatpush1.msra.mxu0 %v2508
        %5335 = vmatprep.subr.mxu0 %v2512
        %5336 = vmatpush1.msra.mxu0 %v2511
        %5337 = vmatprep.subr.mxu0 %v2515
        %5338 = vmatpush1.msra.mxu0 %v2514
        %5339 = vmatprep.subr.mxu0 %v2518
        %5340 = vmatpush1.msra.mxu0 %v2517
        %5341 = vmatprep.subr.mxu0 %v2521
        %5342 = vmatpush1.msra.mxu0 %v2520
        %5343 = vmatprep.subr.mxu0 %v2524
        %5344 = vmatpush1.msra.mxu0 %v2523
        %5345 = vmatprep.subr.mxu0 %v2527
        %5346 = vmatpush1.msra.mxu0 %v2526
        %5347 = vmatprep.subr.mxu0 0.0
        %5348 = vmatpush1.msra.mxu0 0.0
        %5349 = vmatprep.subr.mxu0 0.0
        %5350 = vmatpush1.msra.mxu0 0.0
        %5351 = vmatprep.subr.mxu0 0.0
        %5352 = vmatpush1.msra.mxu0 0.0
        %5353 = vmatprep.subr.mxu0 0.0
        %5354 = vmatpush1.msra.mxu0 0.0
        %5355 = vmatprep.subr.mxu0 0.0
        %5356 = vmatpush1.msra.mxu0 0.0
        %5357 = vmatprep.subr.mxu0 0.0
        %5358 = vmatpush1.msra.mxu0 0.0
        %5359 = vmatprep.subr.mxu0 0.0
        %5360 = vmatpush1.msra.mxu0 0.0
        %5361 = vmatprep.subr.mxu0 0.0
        %5362 = vmatpush1.msra.mxu0 0.0
        %5363 = vmatprep.subr.mxu0 0.0
        %5364 = vmatpush1.msra.mxu0 0.0
        %5365 = vmatprep.subr.mxu0 0.0
        %5366 = vmatpush1.msra.mxu0 0.0
        %5367 = vmatprep.subr.mxu0 0.0
        %5368 = vmatpush1.msra.mxu0 0.0
        %5369 = vmatprep.subr.mxu0 0.0
        %5370 = vmatpush1.msra.mxu0 0.0
        %5371 = vmatprep.subr.mxu0 0.0
        %5372 = vmatpush1.msra.mxu0 0.0
        %5373 = vmatprep.subr.mxu0 0.0
        %5374 = vmatpush1.msra.mxu0 0.0
        %5375 = vmatprep.subr.mxu0 0.0
        %5376 = vmatpush1.msra.mxu0 0.0
        %5377 = vmatprep.subr.mxu0 0.0
        %5378 = vmatpush1.msra.mxu0 0.0
        %5379 = vmatprep.mubr.f32.mxu0 0.0
        %5380 = vmatmul.mubr.f32.gmra.mrb[0].mxu0 %v5300
        %v5381 = vpop.f32.mrb[0].mxu0
        %v5382 = vadd.f32 0.0, %v5381
        %v5383 = vpop.f32.mrb[0].mxu0
        %v5384 = vadd.f32 0.0, %v5383
        %5385 = vdwg.mxu0
        %5386 = vmatprep.subr.mxu0 0.0
        %5387 = vmatpush1.msra.mxu0 %v2483
        %5388 = vmatprep.subr.mxu0 0.0
        %5389 = vmatpush1.msra.mxu0 %v2486
        %5390 = vmatprep.subr.mxu0 0.0
        %5391 = vmatpush1.msra.mxu0 %v2489
        %5392 = vmatprep.subr.mxu0 0.0
        %5393 = vmatpush1.msra.mxu0 %v2492
        %5394 = vmatprep.subr.mxu0 0.0
        %5395 = vmatpush1.msra.mxu0 %v2495
        %5396 = vmatprep.subr.mxu0 0.0
        %5397 = vmatpush1.msra.mxu0 %v2498
        %5398 = vmatprep.subr.mxu0 0.0
        %5399 = vmatpush1.msra.mxu0 %v2501
        %5400 = vmatprep.subr.mxu0 0.0
        %5401 = vmatpush1.msra.mxu0 %v2504
        %5402 = vmatprep.subr.mxu0 0.0
        %5403 = vmatpush1.msra.mxu0 %v2507
        %5404 = vmatprep.subr.mxu0 0.0
        %5405 = vmatpush1.msra.mxu0 %v2510
        %5406 = vmatprep.subr.mxu0 0.0
        %5407 = vmatpush1.msra.mxu0 %v2513
        %5408 = vmatprep.subr.mxu0 0.0
        %5409 = vmatpush1.msra.mxu0 %v2516
        %5410 = vmatprep.subr.mxu0 0.0
        %5411 = vmatpush1.msra.mxu0 %v2519
        %5412 = vmatprep.subr.mxu0 0.0
        %5413 = vmatpush1.msra.mxu0 %v2522
        %5414 = vmatprep.subr.mxu0 0.0
        %5415 = vmatpush1.msra.mxu0 %v2525
        %5416 = vmatprep.subr.mxu0 0.0
        %5417 = vmatpush1.msra.mxu0 %v2528
        %5418 = vmatprep.subr.mxu0 0.0
        %5419 = vmatpush1.msra.mxu0 0.0
        %5420 = vmatprep.subr.mxu0 0.0
        %5421 = vmatpush1.msra.mxu0 0.0
        %5422 = vmatprep.subr.mxu0 0.0
        %5423 = vmatpush1.msra.mxu0 0.0
        %5424 = vmatprep.subr.mxu0 0.0
        %5425 = vmatpush1.msra.mxu0 0.0
        %5426 = vmatprep.subr.mxu0 0.0
        %5427 = vmatpush1.msra.mxu0 0.0
        %5428 = vmatprep.subr.mxu0 0.0
        %5429 = vmatpush1.msra.mxu0 0.0
        %5430 = vmatprep.subr.mxu0 0.0
        %5431 = vmatpush1.msra.mxu0 0.0
        %5432 = vmatprep.subr.mxu0 0.0
        %5433 = vmatpush1.msra.mxu0 0.0
        %5434 = vmatprep.subr.mxu0 0.0
        %5435 = vmatpush1.msra.mxu0 0.0
        %5436 = vmatprep.subr.mxu0 0.0
        %5437 = vmatpush1.msra.mxu0 0.0
        %5438 = vmatprep.subr.mxu0 0.0
        %5439 = vmatpush1.msra.mxu0 0.0
        %5440 = vmatprep.subr.mxu0 0.0
        %5441 = vmatpush1.msra.mxu0 0.0
        %5442 = vmatprep.subr.mxu0 0.0
        %5443 = vmatpush1.msra.mxu0 0.0
        %5444 = vmatprep.subr.mxu0 0.0
        %5445 = vmatpush1.msra.mxu0 0.0
        %5446 = vmatprep.subr.mxu0 0.0
        %5447 = vmatpush1.msra.mxu0 0.0
        %5448 = vmatprep.subr.mxu0 0.0
        %5449 = vmatpush1.msra.mxu0 0.0
        %5450 = vmatprep.mubr.f32.mxu0 0.0
        %5451 = vmatmul.mubr.f32.gmra.mrb[0].mxu0 %v5300
        %v5452 = vpop.f32.mrb[0].mxu0
        %v5453 = vadd.f32 0.0, %v5452
        %v5454 = vpop.f32.mrb[0].mxu0
        %5455 = vdwg.mxu0
        %v5457 = vrot.slane %v5382, 3
        %v5458 = vrot.slane %v5382, 4
        %v5459 = vrot.slane %v5382, 5
        %v5460 = vrot.slane %v5382, 6
        %v5465 = vadd.f32 %v1630, %v5457
        %v5466 = vadd.f32 %v1633, %v5458
        %v5467 = vadd.f32 %v1636, %v5459
        %v5468 = vadd.f32 %v1639, %v5460
        %v5469 = vxor.u32 %v5465, 2147483648
        %v5470 = vxor.u32 %v5466, 2147483648
        %v5471 = vxor.u32 %v5467, 2147483648
        %v5472 = vxor.u32 %v5468, 2147483648
        %v5473 = vmul.f32 %v5469, 1.442695
        %v5474 = vpow.pop %v5473
        %v5475 = vmul.f32 %v5470, 1.442695
        %v5476 = vpow.pop %v5475
        %v5477 = vmul.f32 %v5471, 1.442695
        %v5478 = vpow.pop %v5477
        %v5479 = vmul.f32 %v5472, 1.442695
        %v5480 = vpow.pop %v5479
        %v5481 = vadd.f32 %v5474, 1.0
        %v5482 = vadd.f32 %v5476, 1.0
        %v5483 = vadd.f32 %v5478, 1.0
        %v5484 = vadd.f32 %v5480, 1.0
        %v5485 = vrcp.pop %v5481
        %v5486 = vmul.f32 1.0, %v5485
        %v5487 = vrcp.pop %v5482
        %v5488 = vmul.f32 1.0, %v5487
        %v5489 = vrcp.pop %v5483
        %v5490 = vmul.f32 1.0, %v5489
        %v5491 = vrcp.pop %v5484
        %v5492 = vmul.f32 1.0, %v5491
        %v5494 = vrot.slane %v5384, 3
        %v5495 = vrot.slane %v5384, 4
        %v5496 = vrot.slane %v5384, 5
        %v5497 = vrot.slane %v5384, 6
        %v5502 = vadd.f32 %v1631, %v5494
        %v5503 = vadd.f32 %v1634, %v5495
        %v5504 = vadd.f32 %v1637, %v5496
        %v5505 = vadd.f32 %v1640, %v5497
        %v5506 = vxor.u32 %v5502, 2147483648
        %v5507 = vxor.u32 %v5503, 2147483648
        %v5508 = vxor.u32 %v5504, 2147483648
        %v5509 = vxor.u32 %v5505, 2147483648
        %v5510 = vmul.f32 %v5506, 1.442695
        %v5511 = vpow.pop %v5510
        %v5512 = vmul.f32 %v5507, 1.442695
        %v5513 = vpow.pop %v5512
        %v5514 = vmul.f32 %v5508, 1.442695
        %v5515 = vpow.pop %v5514
        %v5516 = vmul.f32 %v5509, 1.442695
        %v5517 = vpow.pop %v5516
        %v5518 = vadd.f32 %v5511, 1.0
        %v5519 = vadd.f32 %v5513, 1.0
        %v5520 = vadd.f32 %v5515, 1.0
        %v5521 = vadd.f32 %v5517, 1.0
        %v5522 = vrcp.pop %v5518
        %v5523 = vmul.f32 1.0, %v5522
        %v5524 = vrcp.pop %v5519
        %v5525 = vmul.f32 1.0, %v5524
        %v5526 = vrcp.pop %v5520
        %v5527 = vmul.f32 1.0, %v5526
        %v5528 = vrcp.pop %v5521
        %v5529 = vmul.f32 1.0, %v5528
        %v5530 = vadd.f32 %v5453, %v2582
        %v5532 = vrot.slane %v5530, 3
        %v5533 = vrot.slane %v5530, 4
        %v5534 = vrot.slane %v5530, 5
        %v5535 = vrot.slane %v5530, 6
        %v5540 = vmul.f32 %v5486, %v5532
        %v5541 = vmul.f32 %v5488, %v5533
        %v5542 = vmul.f32 %v5490, %v5534
        %v5543 = vmul.f32 %v5492, %v5535
        %v5544 = vadd.f32 %v1632, %v5540
        %v5545 = vadd.f32 %v1635, %v5541
        %v5546 = vadd.f32 %v1638, %v5542
        %v5547 = vadd.f32 %v1641, %v5543
        %v5548 = vtanh.pop %v5544
        %v5549 = vtanh.pop %v5545
        %v5550 = vtanh.pop %v5546
        %v5551 = vtanh.pop %v5547
        %v5552 = vsub.f32 1.0, %v5523
        %v5553 = vsub.f32 1.0, %v5525
        %v5554 = vsub.f32 1.0, %v5527
        %v5555 = vsub.f32 1.0, %v5529
        %v5556 = vmul.f32 %v5552, %v5548
        %v5557 = vmul.f32 %v5553, %v5549
        %v5558 = vmul.f32 %v5554, %v5550
        %v5559 = vmul.f32 %v5555, %v5551
        %v5560 = vrot.slane %v5029, 7
        %v5561 = vrot.slane %v5030, 7
        %v5562 = vrot.slane %v5031, 7
        %v5563 = vrot.slane %v5032, 7
        %v5568 = vmul.f32 %v5523, %v5560
        %v5569 = vmul.f32 %v5525, %v5561
        %v5570 = vmul.f32 %v5527, %v5562
        %v5571 = vmul.f32 %v5529, %v5563
        %v5572 = vadd.f32 %v5556, %v5568
        %v5573 = vadd.f32 %v5557, %v5569
        %v5574 = vadd.f32 %v5558, %v5570
        %v5575 = vadd.f32 %v5559, %v5571
        %5576 = vmatprep.subr.mxu0 %v2530
        %5577 = vmatpush1.msra.mxu0 %v2529
        %5578 = vmatprep.subr.mxu0 %v2533
        %5579 = vmatpush1.msra.mxu0 %v2532
        %5580 = vmatprep.subr.mxu0 %v2536
        %5581 = vmatpush1.msra.mxu0 %v2535
        %5582 = vmatprep.subr.mxu0 %v2539
        %5583 = vmatpush1.msra.mxu0 %v2538
        %5584 = vmatprep.subr.mxu0 %v2542
        %5585 = vmatpush1.msra.mxu0 %v2541
        %5586 = vmatprep.subr.mxu0 %v2545
        %5587 = vmatpush1.msra.mxu0 %v2544
        %5588 = vmatprep.subr.mxu0 %v2548
        %5589 = vmatpush1.msra.mxu0 %v2547
        %5590 = vmatprep.subr.mxu0 %v2551
        %5591 = vmatpush1.msra.mxu0 %v2550
        %5592 = vmatprep.subr.mxu0 %v2554
        %5593 = vmatpush1.msra.mxu0 %v2553
        %5594 = vmatprep.subr.mxu0 %v2557
        %5595 = vmatpush1.msra.mxu0 %v2556
        %5596 = vmatprep.subr.mxu0 %v2560
        %5597 = vmatpush1.msra.mxu0 %v2559
        %5598 = vmatprep.subr.mxu0 %v2563
        %5599 = vmatpush1.msra.mxu0 %v2562
        %5600 = vmatprep.subr.mxu0 %v2566
        %5601 = vmatpush1.msra.mxu0 %v2565
        %5602 = vmatprep.subr.mxu0 %v2569
        %5603 = vmatpush1.msra.mxu0 %v2568
        %5604 = vmatprep.subr.mxu0 %v2572
        %5605 = vmatpush1.msra.mxu0 %v2571
        %5606 = vmatprep.subr.mxu0 %v2575
        %5607 = vmatpush1.msra.mxu0 %v2574
        %5608 = vmatprep.subr.mxu0 0.0
        %5609 = vmatpush1.msra.mxu0 0.0
        %5610 = vmatprep.subr.mxu0 0.0
        %5611 = vmatpush1.msra.mxu0 0.0
        %5612 = vmatprep.subr.mxu0 0.0
        %5613 = vmatpush1.msra.mxu0 0.0
        %5614 = vmatprep.subr.mxu0 0.0
        %5615 = vmatpush1.msra.mxu0 0.0
        %5616 = vmatprep.subr.mxu0 0.0
        %5617 = vmatpush1.msra.mxu0 0.0
        %5618 = vmatprep.subr.mxu0 0.0
        %5619 = vmatpush1.msra.mxu0 0.0
        %5620 = vmatprep.subr.mxu0 0.0
        %5621 = vmatpush1.msra.mxu0 0.0
        %5622 = vmatprep.subr.mxu0 0.0
        %5623 = vmatpush1.msra.mxu0 0.0
        %5624 = vmatprep.subr.mxu0 0.0
        %5625 = vmatpush1.msra.mxu0 0.0
        %5626 = vmatprep.subr.mxu0 0.0
        %5627 = vmatpush1.msra.mxu0 0.0
        %5628 = vmatprep.subr.mxu0 0.0
        %5629 = vmatpush1.msra.mxu0 0.0
        %5630 = vmatprep.subr.mxu0 0.0
        %5631 = vmatpush1.msra.mxu0 0.0
        %5632 = vmatprep.subr.mxu0 0.0
        %5633 = vmatpush1.msra.mxu0 0.0
        %5634 = vmatprep.subr.mxu0 0.0
        %5635 = vmatpush1.msra.mxu0 0.0
        %5636 = vmatprep.subr.mxu0 0.0
        %5637 = vmatpush1.msra.mxu0 0.0
        %5638 = vmatprep.subr.mxu0 0.0
        %5639 = vmatpush1.msra.mxu0 0.0
        %5640 = vmatprep.mubr.f32.mxu0 0.0
        %5641 = vmatmul.mubr.f32.gmra.mrb[0].mxu0 %v5312
        %v5642 = vpop.f32.mrb[0].mxu0
        %v5643 = vadd.f32 0.0, %v5642
        %v5644 = vpop.f32.mrb[0].mxu0
        %v5645 = vadd.f32 0.0, %v5644
        %5646 = vdwg.mxu0
        %5647 = vmatprep.subr.mxu0 0.0
        %5648 = vmatpush1.msra.mxu0 %v2531
        %5649 = vmatprep.subr.mxu0 0.0
        %5650 = vmatpush1.msra.mxu0 %v2534
        %5651 = vmatprep.subr.mxu0 0.0
        %5652 = vmatpush1.msra.mxu0 %v2537
        %5653 = vmatprep.subr.mxu0 0.0
        %5654 = vmatpush1.msra.mxu0 %v2540
        %5655 = vmatprep.subr.mxu0 0.0
        %5656 = vmatpush1.msra.mxu0 %v2543
        %5657 = vmatprep.subr.mxu0 0.0
        %5658 = vmatpush1.msra.mxu0 %v2546
        %5659 = vmatprep.subr.mxu0 0.0
        %5660 = vmatpush1.msra.mxu0 %v2549
        %5661 = vmatprep.subr.mxu0 0.0
        %5662 = vmatpush1.msra.mxu0 %v2552
        %5663 = vmatprep.subr.mxu0 0.0
        %5664 = vmatpush1.msra.mxu0 %v2555
        %5665 = vmatprep.subr.mxu0 0.0
        %5666 = vmatpush1.msra.mxu0 %v2558
        %5667 = vmatprep.subr.mxu0 0.0
        %5668 = vmatpush1.msra.mxu0 %v2561
        %5669 = vmatprep.subr.mxu0 0.0
        %5670 = vmatpush1.msra.mxu0 %v2564
        %5671 = vmatprep.subr.mxu0 0.0
        %5672 = vmatpush1.msra.mxu0 %v2567
        %5673 = vmatprep.subr.mxu0 0.0
        %5674 = vmatpush1.msra.mxu0 %v2570
        %5675 = vmatprep.subr.mxu0 0.0
        %5676 = vmatpush1.msra.mxu0 %v2573
        %5677 = vmatprep.subr.mxu0 0.0
        %5678 = vmatpush1.msra.mxu0 %v2576
        %5679 = vmatprep.subr.mxu0 0.0
        %5680 = vmatpush1.msra.mxu0 0.0
        %5681 = vmatprep.subr.mxu0 0.0
        %5682 = vmatpush1.msra.mxu0 0.0
        %5683 = vmatprep.subr.mxu0 0.0
        %5684 = vmatpush1.msra.mxu0 0.0
        %5685 = vmatprep.subr.mxu0 0.0
        %5686 = vmatpush1.msra.mxu0 0.0
        %5687 = vmatprep.subr.mxu0 0.0
        %5688 = vmatpush1.msra.mxu0 0.0
        %5689 = vmatprep.subr.mxu0 0.0
        %5690 = vmatpush1.msra.mxu0 0.0
        %5691 = vmatprep.subr.mxu0 0.0
        %5692 = vmatpush1.msra.mxu0 0.0
        %5693 = vmatprep.subr.mxu0 0.0
        %5694 = vmatpush1.msra.mxu0 0.0
        %5695 = vmatprep.subr.mxu0 0.0
        %5696 = vmatpush1.msra.mxu0 0.0
        %5697 = vmatprep.subr.mxu0 0.0
        %5698 = vmatpush1.msra.mxu0 0.0
        %5699 = vmatprep.subr.mxu0 0.0
        %5700 = vmatpush1.msra.mxu0 0.0
        %5701 = vmatprep.subr.mxu0 0.0
        %5702 = vmatpush1.msra.mxu0 0.0
        %5703 = vmatprep.subr.mxu0 0.0
        %5704 = vmatpush1.msra.mxu0 0.0
        %5705 = vmatprep.subr.mxu0 0.0
        %5706 = vmatpush1.msra.mxu0 0.0
        %5707 = vmatprep.subr.mxu0 0.0
        %5708 = vmatpush1.msra.mxu0 0.0
        %5709 = vmatprep.subr.mxu0 0.0
        %5710 = vmatpush1.msra.mxu0 0.0
        %5711 = vmatprep.mubr.f32.mxu0 0.0
        %5712 = vmatmul.mubr.f32.gmra.mrb[0].mxu0 %v5312
        %v5713 = vpop.f32.mrb[0].mxu0
        %v5714 = vadd.f32 0.0, %v5713
        %v5715 = vpop.f32.mrb[0].mxu0
        %5716 = vdwg.mxu0
        %v5718 = vrot.slane %v5643, 6
        %v5719 = vrot.slane %v5643, 7
        %v5720 = vrot.slane %v5643, 1
        %v5725 = vadd.f32 %v2469, %v5718
        %v5726 = vadd.f32 %v2472, %v5719
        %v5727 = vadd.f32 %v2475, %v5643
        %v5728 = vadd.f32 %v2478, %v5720
        %v5729 = vxor.u32 %v5725, 2147483648
        %v5730 = vxor.u32 %v5726, 2147483648
        %v5731 = vxor.u32 %v5727, 2147483648
        %v5732 = vxor.u32 %v5728, 2147483648
        %v5733 = vmul.f32 %v5729, 1.442695
        %v5734 = vpow.pop %v5733
        %v5735 = vmul.f32 %v5730, 1.442695
        %v5736 = vpow.pop %v5735
        %v5737 = vmul.f32 %v5731, 1.442695
        %v5738 = vpow.pop %v5737
        %v5739 = vmul.f32 %v5732, 1.442695
        %v5740 = vpow.pop %v5739
        %v5741 = vadd.f32 %v5734, 1.0
        %v5742 = vadd.f32 %v5736, 1.0
        %v5743 = vadd.f32 %v5738, 1.0
        %v5744 = vadd.f32 %v5740, 1.0
        %v5745 = vrcp.pop %v5741
        %v5746 = vmul.f32 1.0, %v5745
        %v5747 = vrcp.pop %v5742
        %v5748 = vmul.f32 1.0, %v5747
        %v5749 = vrcp.pop %v5743
        %v5750 = vmul.f32 1.0, %v5749
        %v5751 = vrcp.pop %v5744
        %v5752 = vmul.f32 1.0, %v5751
        %v5754 = vrot.slane %v5645, 6
        %v5755 = vrot.slane %v5645, 7
        %v5756 = vrot.slane %v5645, 1
        %v5761 = vadd.f32 %v2470, %v5754
        %v5762 = vadd.f32 %v2473, %v5755
        %v5763 = vadd.f32 %v2476, %v5645
        %v5764 = vadd.f32 %v2479, %v5756
        %v5765 = vxor.u32 %v5761, 2147483648
        %v5766 = vxor.u32 %v5762, 2147483648
        %v5767 = vxor.u32 %v5763, 2147483648
        %v5768 = vxor.u32 %v5764, 2147483648
        %v5769 = vmul.f32 %v5765, 1.442695
        %v5770 = vpow.pop %v5769
        %v5771 = vmul.f32 %v5766, 1.442695
        %v5772 = vpow.pop %v5771
        %v5773 = vmul.f32 %v5767, 1.442695
        %v5774 = vpow.pop %v5773
        %v5775 = vmul.f32 %v5768, 1.442695
        %v5776 = vpow.pop %v5775
        %v5777 = vadd.f32 %v5770, 1.0
        %v5778 = vadd.f32 %v5772, 1.0
        %v5779 = vadd.f32 %v5774, 1.0
        %v5780 = vadd.f32 %v5776, 1.0
        %v5781 = vrcp.pop %v5777
        %v5782 = vmul.f32 1.0, %v5781
        %v5783 = vrcp.pop %v5778
        %v5784 = vmul.f32 1.0, %v5783
        %v5785 = vrcp.pop %v5779
        %v5786 = vmul.f32 1.0, %v5785
        %v5787 = vrcp.pop %v5780
        %v5788 = vmul.f32 1.0, %v5787
        %v5789 = vadd.f32 %v5714, %v2589
        %v5791 = vrot.slane %v5789, 6
        %v5792 = vrot.slane %v5789, 7
        %v5793 = vrot.slane %v5789, 1
        %v5798 = vmul.f32 %v5746, %v5791
        %v5799 = vmul.f32 %v5748, %v5792
        %v5800 = vmul.f32 %v5750, %v5789
        %v5801 = vmul.f32 %v5752, %v5793
        %v5802 = vadd.f32 %v2471, %v5798
        %v5803 = vadd.f32 %v2474, %v5799
        %v5804 = vadd.f32 %v2477, %v5800
        %v5805 = vadd.f32 %v2480, %v5801
        %v5806 = vtanh.pop %v5802
        %v5807 = vtanh.pop %v5803
        %v5808 = vtanh.pop %v5804
        %v5809 = vtanh.pop %v5805
        %v5810 = vsub.f32 1.0, %v5782
        %v5811 = vsub.f32 1.0, %v5784
        %v5812 = vsub.f32 1.0, %v5786
        %v5813 = vsub.f32 1.0, %v5788
        %v5814 = vmul.f32 %v5810, %v5806
        %v5815 = vmul.f32 %v5811, %v5807
        %v5816 = vmul.f32 %v5812, %v5808
        %v5817 = vmul.f32 %v5813, %v5809
        %v5818 = vrot.slane %v5286, 1
        %v5819 = vrot.slane %v5287, 1
        %v5820 = vrot.slane %v5289, 1
        %v5825 = vmul.f32 %v5782, %v5818
        %v5826 = vmul.f32 %v5784, %v5819
        %v5827 = vmul.f32 %v5786, %v5310
        %v5828 = vmul.f32 %v5788, %v5820
        %v5829 = vadd.f32 %v5814, %v5825
        %v5830 = vadd.f32 %v5815, %v5826
        %v5831 = vadd.f32 %v5816, %v5827
        %v5832 = vadd.f32 %v5817, %v5828
        %v5837 = vrot.slane %v5572, 5
        %v5838 = vrot.slane %v5573, 4
        %v5839 = vsel %vm3120, %v5838, %v5837
        %v5840 = vrot.slane %v5574, 3
        %v5841 = vsel %vm3123, %v5840, %v5839
        %v5842 = vrot.slane %v5575, 2
        %v5843 = vsel %vm3126, %v5842, %v5841
        %v5845 = vadd.f32 %v5302, %v5843
        %v5850 = vrot.slane %v5829, 2
        %v5851 = vrot.slane %v5830, 1
        %v5852 = vsel %vm3120, %v5851, %v5850
        %v5853 = vsel %vm3123, %v5831, %v5852
        %v5854 = vrot.slane %v5832, 7
        %v5855 = vsel %vm3126, %v5854, %v5853
        %v5857 = vadd.f32 %v5314, %v5855
        %5858 = vmatprep.subr.mxu0 %v2482
        %5859 = vmatpush1.msra.mxu0 %v2481
        %5860 = vmatprep.subr.mxu0 %v2485
        %5861 = vmatpush1.msra.mxu0 %v2484
        %5862 = vmatprep.subr.mxu0 %v2488
        %5863 = vmatpush1.msra.mxu0 %v2487
        %5864 = vmatprep.subr.mxu0 %v2491
        %5865 = vmatpush1.msra.mxu0 %v2490
        %5866 = vmatprep.subr.mxu0 %v2494
        %5867 = vmatpush1.msra.mxu0 %v2493
        %5868 = vmatprep.subr.mxu0 %v2497
        %5869 = vmatpush1.msra.mxu0 %v2496
        %5870 = vmatprep.subr.mxu0 %v2500
        %5871 = vmatpush1.msra.mxu0 %v2499
        %5872 = vmatprep.subr.mxu0 %v2503
        %5873 = vmatpush1.msra.mxu0 %v2502
        %5874 = vmatprep.subr.mxu0 %v2506
        %5875 = vmatpush1.msra.mxu0 %v2505
        %5876 = vmatprep.subr.mxu0 %v2509
        %5877 = vmatpush1.msra.mxu0 %v2508
        %5878 = vmatprep.subr.mxu0 %v2512
        %5879 = vmatpush1.msra.mxu0 %v2511
        %5880 = vmatprep.subr.mxu0 %v2515
        %5881 = vmatpush1.msra.mxu0 %v2514
        %5882 = vmatprep.subr.mxu0 %v2518
        %5883 = vmatpush1.msra.mxu0 %v2517
        %5884 = vmatprep.subr.mxu0 %v2521
        %5885 = vmatpush1.msra.mxu0 %v2520
        %5886 = vmatprep.subr.mxu0 %v2524
        %5887 = vmatpush1.msra.mxu0 %v2523
        %5888 = vmatprep.subr.mxu0 %v2527
        %5889 = vmatpush1.msra.mxu0 %v2526
        %5890 = vmatprep.subr.mxu0 0.0
        %5891 = vmatpush1.msra.mxu0 0.0
        %5892 = vmatprep.subr.mxu0 0.0
        %5893 = vmatpush1.msra.mxu0 0.0
        %5894 = vmatprep.subr.mxu0 0.0
        %5895 = vmatpush1.msra.mxu0 0.0
        %5896 = vmatprep.subr.mxu0 0.0
        %5897 = vmatpush1.msra.mxu0 0.0
        %5898 = vmatprep.subr.mxu0 0.0
        %5899 = vmatpush1.msra.mxu0 0.0
        %5900 = vmatprep.subr.mxu0 0.0
        %5901 = vmatpush1.msra.mxu0 0.0
        %5902 = vmatprep.subr.mxu0 0.0
        %5903 = vmatpush1.msra.mxu0 0.0
        %5904 = vmatprep.subr.mxu0 0.0
        %5905 = vmatpush1.msra.mxu0 0.0
        %5906 = vmatprep.subr.mxu0 0.0
        %5907 = vmatpush1.msra.mxu0 0.0
        %5908 = vmatprep.subr.mxu0 0.0
        %5909 = vmatpush1.msra.mxu0 0.0
        %5910 = vmatprep.subr.mxu0 0.0
        %5911 = vmatpush1.msra.mxu0 0.0
        %5912 = vmatprep.subr.mxu0 0.0
        %5913 = vmatpush1.msra.mxu0 0.0
        %5914 = vmatprep.subr.mxu0 0.0
        %5915 = vmatpush1.msra.mxu0 0.0
        %5916 = vmatprep.subr.mxu0 0.0
        %5917 = vmatpush1.msra.mxu0 0.0
        %5918 = vmatprep.subr.mxu0 0.0
        %5919 = vmatpush1.msra.mxu0 0.0
        %5920 = vmatprep.subr.mxu0 0.0
        %5921 = vmatpush1.msra.mxu0 0.0
        %5922 = vmatprep.mubr.f32.mxu0 0.0
        %5923 = vmatmul.mubr.f32.gmra.mrb[0].mxu0 %v5843
        %v5924 = vpop.f32.mrb[0].mxu0
        %v5925 = vadd.f32 0.0, %v5924
        %v5926 = vpop.f32.mrb[0].mxu0
        %v5927 = vadd.f32 0.0, %v5926
        %5928 = vdwg.mxu0
        %5929 = vmatprep.subr.mxu0 0.0
        %5930 = vmatpush1.msra.mxu0 %v2483
        %5931 = vmatprep.subr.mxu0 0.0
        %5932 = vmatpush1.msra.mxu0 %v2486
        %5933 = vmatprep.subr.mxu0 0.0
        %5934 = vmatpush1.msra.mxu0 %v2489
        %5935 = vmatprep.subr.mxu0 0.0
        %5936 = vmatpush1.msra.mxu0 %v2492
        %5937 = vmatprep.subr.mxu0 0.0
        %5938 = vmatpush1.msra.mxu0 %v2495
        %5939 = vmatprep.subr.mxu0 0.0
        %5940 = vmatpush1.msra.mxu0 %v2498
        %5941 = vmatprep.subr.mxu0 0.0
        %5942 = vmatpush1.msra.mxu0 %v2501
        %5943 = vmatprep.subr.mxu0 0.0
        %5944 = vmatpush1.msra.mxu0 %v2504
        %5945 = vmatprep.subr.mxu0 0.0
        %5946 = vmatpush1.msra.mxu0 %v2507
        %5947 = vmatprep.subr.mxu0 0.0
        %5948 = vmatpush1.msra.mxu0 %v2510
        %5949 = vmatprep.subr.mxu0 0.0
        %5950 = vmatpush1.msra.mxu0 %v2513
        %5951 = vmatprep.subr.mxu0 0.0
        %5952 = vmatpush1.msra.mxu0 %v2516
        %5953 = vmatprep.subr.mxu0 0.0
        %5954 = vmatpush1.msra.mxu0 %v2519
        %5955 = vmatprep.subr.mxu0 0.0
        %5956 = vmatpush1.msra.mxu0 %v2522
        %5957 = vmatprep.subr.mxu0 0.0
        %5958 = vmatpush1.msra.mxu0 %v2525
        %5959 = vmatprep.subr.mxu0 0.0
        %5960 = vmatpush1.msra.mxu0 %v2528
        %5961 = vmatprep.subr.mxu0 0.0
        %5962 = vmatpush1.msra.mxu0 0.0
        %5963 = vmatprep.subr.mxu0 0.0
        %5964 = vmatpush1.msra.mxu0 0.0
        %5965 = vmatprep.subr.mxu0 0.0
        %5966 = vmatpush1.msra.mxu0 0.0
        %5967 = vmatprep.subr.mxu0 0.0
        %5968 = vmatpush1.msra.mxu0 0.0
        %5969 = vmatprep.subr.mxu0 0.0
        %5970 = vmatpush1.msra.mxu0 0.0
        %5971 = vmatprep.subr.mxu0 0.0
        %5972 = vmatpush1.msra.mxu0 0.0
        %5973 = vmatprep.subr.mxu0 0.0
        %5974 = vmatpush1.msra.mxu0 0.0
        %5975 = vmatprep.subr.mxu0 0.0
        %5976 = vmatpush1.msra.mxu0 0.0
        %5977 = vmatprep.subr.mxu0 0.0
        %5978 = vmatpush1.msra.mxu0 0.0
        %5979 = vmatprep.subr.mxu0 0.0
        %5980 = vmatpush1.msra.mxu0 0.0
        %5981 = vmatprep.subr.mxu0 0.0
        %5982 = vmatpush1.msra.mxu0 0.0
        %5983 = vmatprep.subr.mxu0 0.0
        %5984 = vmatpush1.msra.mxu0 0.0
        %5985 = vmatprep.subr.mxu0 0.0
        %5986 = vmatpush1.msra.mxu0 0.0
        %5987 = vmatprep.subr.mxu0 0.0
        %5988 = vmatpush1.msra.mxu0 0.0
        %5989 = vmatprep.subr.mxu0 0.0
        %5990 = vmatpush1.msra.mxu0 0.0
        %5991 = vmatprep.subr.mxu0 0.0
        %5992 = vmatpush1.msra.mxu0 0.0
        %5993 = vmatprep.mubr.f32.mxu0 0.0
        %5994 = vmatmul.mubr.f32.gmra.mrb[0].mxu0 %v5843
        %v5995 = vpop.f32.mrb[0].mxu0
        %v5996 = vadd.f32 0.0, %v5995
        %v5997 = vpop.f32.mrb[0].mxu0
        %5998 = vdwg.mxu0
        %v6000 = vrot.slane %v5925, 2
        %v6001 = vrot.slane %v5925, 3
        %v6002 = vrot.slane %v5925, 4
        %v6003 = vrot.slane %v5925, 5
        %v6008 = vadd.f32 %v1630, %v6000
        %v6009 = vadd.f32 %v1633, %v6001
        %v6010 = vadd.f32 %v1636, %v6002
        %v6011 = vadd.f32 %v1639, %v6003
        %v6012 = vxor.u32 %v6008, 2147483648
        %v6013 = vxor.u32 %v6009, 2147483648
        %v6014 = vxor.u32 %v6010, 2147483648
        %v6015 = vxor.u32 %v6011, 2147483648
        %v6016 = vmul.f32 %v6012, 1.442695
        %v6017 = vpow.pop %v6016
        %v6018 = vmul.f32 %v6013, 1.442695
        %v6019 = vpow.pop %v6018
        %v6020 = vmul.f32 %v6014, 1.442695
        %v6021 = vpow.pop %v6020
        %v6022 = vmul.f32 %v6015, 1.442695
        %v6023 = vpow.pop %v6022
        %v6024 = vadd.f32 %v6017, 1.0
        %v6025 = vadd.f32 %v6019, 1.0
        %v6026 = vadd.f32 %v6021, 1.0
        %v6027 = vadd.f32 %v6023, 1.0
        %v6028 = vrcp.pop %v6024
        %v6029 = vmul.f32 1.0, %v6028
        %v6030 = vrcp.pop %v6025
        %v6031 = vmul.f32 1.0, %v6030
        %v6032 = vrcp.pop %v6026
        %v6033 = vmul.f32 1.0, %v6032
        %v6034 = vrcp.pop %v6027
        %v6035 = vmul.f32 1.0, %v6034
        %v6037 = vrot.slane %v5927, 2
        %v6038 = vrot.slane %v5927, 3
        %v6039 = vrot.slane %v5927, 4
        %v6040 = vrot.slane %v5927, 5
        %v6045 = vadd.f32 %v1631, %v6037
        %v6046 = vadd.f32 %v1634, %v6038
        %v6047 = vadd.f32 %v1637, %v6039
        %v6048 = vadd.f32 %v1640, %v6040
        %v6049 = vxor.u32 %v6045, 2147483648
        %v6050 = vxor.u32 %v6046, 2147483648
        %v6051 = vxor.u32 %v6047, 2147483648
        %v6052 = vxor.u32 %v6048, 2147483648
        %v6053 = vmul.f32 %v6049, 1.442695
        %v6054 = vpow.pop %v6053
        %v6055 = vmul.f32 %v6050, 1.442695
        %v6056 = vpow.pop %v6055
        %v6057 = vmul.f32 %v6051, 1.442695
        %v6058 = vpow.pop %v6057
        %v6059 = vmul.f32 %v6052, 1.442695
        %v6060 = vpow.pop %v6059
        %v6061 = vadd.f32 %v6054, 1.0
        %v6062 = vadd.f32 %v6056, 1.0
        %v6063 = vadd.f32 %v6058, 1.0
        %v6064 = vadd.f32 %v6060, 1.0
        %v6065 = vrcp.pop %v6061
        %v6066 = vmul.f32 1.0, %v6065
        %v6067 = vrcp.pop %v6062
        %v6068 = vmul.f32 1.0, %v6067
        %v6069 = vrcp.pop %v6063
        %v6070 = vmul.f32 1.0, %v6069
        %v6071 = vrcp.pop %v6064
        %v6072 = vmul.f32 1.0, %v6071
        %v6073 = vadd.f32 %v5996, %v2582
        %v6075 = vrot.slane %v6073, 2
        %v6076 = vrot.slane %v6073, 3
        %v6077 = vrot.slane %v6073, 4
        %v6078 = vrot.slane %v6073, 5
        %v6083 = vmul.f32 %v6029, %v6075
        %v6084 = vmul.f32 %v6031, %v6076
        %v6085 = vmul.f32 %v6033, %v6077
        %v6086 = vmul.f32 %v6035, %v6078
        %v6087 = vadd.f32 %v1632, %v6083
        %v6088 = vadd.f32 %v1635, %v6084
        %v6089 = vadd.f32 %v1638, %v6085
        %v6090 = vadd.f32 %v1641, %v6086
        %v6091 = vtanh.pop %v6087
        %v6092 = vtanh.pop %v6088
        %v6093 = vtanh.pop %v6089
        %v6094 = vtanh.pop %v6090
        %v6095 = vsub.f32 1.0, %v6066
        %v6096 = vsub.f32 1.0, %v6068
        %v6097 = vsub.f32 1.0, %v6070
        %v6098 = vsub.f32 1.0, %v6072
        %v6099 = vmul.f32 %v6095, %v6091
        %v6100 = vmul.f32 %v6096, %v6092
        %v6101 = vmul.f32 %v6097, %v6093
        %v6102 = vmul.f32 %v6098, %v6094
        %v6103 = vrot.slane %v5572, 7
        %v6104 = vrot.slane %v5573, 7
        %v6105 = vrot.slane %v5574, 7
        %v6106 = vrot.slane %v5575, 7
        %v6111 = vmul.f32 %v6066, %v6103
        %v6112 = vmul.f32 %v6068, %v6104
        %v6113 = vmul.f32 %v6070, %v6105
        %v6114 = vmul.f32 %v6072, %v6106
        %v6115 = vadd.f32 %v6099, %v6111
        %v6116 = vadd.f32 %v6100, %v6112
        %v6117 = vadd.f32 %v6101, %v6113
        %v6118 = vadd.f32 %v6102, %v6114
        %6119 = vmatprep.subr.mxu0 %v2530
        %6120 = vmatpush1.msra.mxu0 %v2529
        %6121 = vmatprep.subr.mxu0 %v2533
        %6122 = vmatpush1.msra.mxu0 %v2532
        %6123 = vmatprep.subr.mxu0 %v2536
        %6124 = vmatpush1.msra.mxu0 %v2535
        %6125 = vmatprep.subr.mxu0 %v2539
        %6126 = vmatpush1.msra.mxu0 %v2538
        %6127 = vmatprep.subr.mxu0 %v2542
        %6128 = vmatpush1.msra.mxu0 %v2541
        %6129 = vmatprep.subr.mxu0 %v2545
        %6130 = vmatpush1.msra.mxu0 %v2544
        %6131 = vmatprep.subr.mxu0 %v2548
        %6132 = vmatpush1.msra.mxu0 %v2547
        %6133 = vmatprep.subr.mxu0 %v2551
        %6134 = vmatpush1.msra.mxu0 %v2550
        %6135 = vmatprep.subr.mxu0 %v2554
        %6136 = vmatpush1.msra.mxu0 %v2553
        %6137 = vmatprep.subr.mxu0 %v2557
        %6138 = vmatpush1.msra.mxu0 %v2556
        %6139 = vmatprep.subr.mxu0 %v2560
        %6140 = vmatpush1.msra.mxu0 %v2559
        %6141 = vmatprep.subr.mxu0 %v2563
        %6142 = vmatpush1.msra.mxu0 %v2562
        %6143 = vmatprep.subr.mxu0 %v2566
        %6144 = vmatpush1.msra.mxu0 %v2565
        %6145 = vmatprep.subr.mxu0 %v2569
        %6146 = vmatpush1.msra.mxu0 %v2568
        %6147 = vmatprep.subr.mxu0 %v2572
        %6148 = vmatpush1.msra.mxu0 %v2571
        %6149 = vmatprep.subr.mxu0 %v2575
        %6150 = vmatpush1.msra.mxu0 %v2574
        %6151 = vmatprep.subr.mxu0 0.0
        %6152 = vmatpush1.msra.mxu0 0.0
        %6153 = vmatprep.subr.mxu0 0.0
        %6154 = vmatpush1.msra.mxu0 0.0
        %6155 = vmatprep.subr.mxu0 0.0
        %6156 = vmatpush1.msra.mxu0 0.0
        %6157 = vmatprep.subr.mxu0 0.0
        %6158 = vmatpush1.msra.mxu0 0.0
        %6159 = vmatprep.subr.mxu0 0.0
        %6160 = vmatpush1.msra.mxu0 0.0
        %6161 = vmatprep.subr.mxu0 0.0
        %6162 = vmatpush1.msra.mxu0 0.0
        %6163 = vmatprep.subr.mxu0 0.0
        %6164 = vmatpush1.msra.mxu0 0.0
        %6165 = vmatprep.subr.mxu0 0.0
        %6166 = vmatpush1.msra.mxu0 0.0
        %6167 = vmatprep.subr.mxu0 0.0
        %6168 = vmatpush1.msra.mxu0 0.0
        %6169 = vmatprep.subr.mxu0 0.0
        %6170 = vmatpush1.msra.mxu0 0.0
        %6171 = vmatprep.subr.mxu0 0.0
        %6172 = vmatpush1.msra.mxu0 0.0
        %6173 = vmatprep.subr.mxu0 0.0
        %6174 = vmatpush1.msra.mxu0 0.0
        %6175 = vmatprep.subr.mxu0 0.0
        %6176 = vmatpush1.msra.mxu0 0.0
        %6177 = vmatprep.subr.mxu0 0.0
        %6178 = vmatpush1.msra.mxu0 0.0
        %6179 = vmatprep.subr.mxu0 0.0
        %6180 = vmatpush1.msra.mxu0 0.0
        %6181 = vmatprep.subr.mxu0 0.0
        %6182 = vmatpush1.msra.mxu0 0.0
        %6183 = vmatprep.mubr.f32.mxu0 0.0
        %6184 = vmatmul.mubr.f32.gmra.mrb[0].mxu0 %v5855
        %v6185 = vpop.f32.mrb[0].mxu0
        %v6186 = vadd.f32 0.0, %v6185
        %v6187 = vpop.f32.mrb[0].mxu0
        %v6188 = vadd.f32 0.0, %v6187
        %6189 = vdwg.mxu0
        %6190 = vmatprep.subr.mxu0 0.0
        %6191 = vmatpush1.msra.mxu0 %v2531
        %6192 = vmatprep.subr.mxu0 0.0
        %6193 = vmatpush1.msra.mxu0 %v2534
        %6194 = vmatprep.subr.mxu0 0.0
        %6195 = vmatpush1.msra.mxu0 %v2537
        %6196 = vmatprep.subr.mxu0 0.0
        %6197 = vmatpush1.msra.mxu0 %v2540
        %6198 = vmatprep.subr.mxu0 0.0
        %6199 = vmatpush1.msra.mxu0 %v2543
        %6200 = vmatprep.subr.mxu0 0.0
        %6201 = vmatpush1.msra.mxu0 %v2546
        %6202 = vmatprep.subr.mxu0 0.0
        %6203 = vmatpush1.msra.mxu0 %v2549
        %6204 = vmatprep.subr.mxu0 0.0
        %6205 = vmatpush1.msra.mxu0 %v2552
        %6206 = vmatprep.subr.mxu0 0.0
        %6207 = vmatpush1.msra.mxu0 %v2555
        %6208 = vmatprep.subr.mxu0 0.0
        %6209 = vmatpush1.msra.mxu0 %v2558
        %6210 = vmatprep.subr.mxu0 0.0
        %6211 = vmatpush1.msra.mxu0 %v2561
        %6212 = vmatprep.subr.mxu0 0.0
        %6213 = vmatpush1.msra.mxu0 %v2564
        %6214 = vmatprep.subr.mxu0 0.0
        %6215 = vmatpush1.msra.mxu0 %v2567
        %6216 = vmatprep.subr.mxu0 0.0
        %6217 = vmatpush1.msra.mxu0 %v2570
        %6218 = vmatprep.subr.mxu0 0.0
        %6219 = vmatpush1.msra.mxu0 %v2573
        %6220 = vmatprep.subr.mxu0 0.0
        %6221 = vmatpush1.msra.mxu0 %v2576
        %6222 = vmatprep.subr.mxu0 0.0
        %6223 = vmatpush1.msra.mxu0 0.0
        %6224 = vmatprep.subr.mxu0 0.0
        %6225 = vmatpush1.msra.mxu0 0.0
        %6226 = vmatprep.subr.mxu0 0.0
        %6227 = vmatpush1.msra.mxu0 0.0
        %6228 = vmatprep.subr.mxu0 0.0
        %6229 = vmatpush1.msra.mxu0 0.0
        %6230 = vmatprep.subr.mxu0 0.0
        %6231 = vmatpush1.msra.mxu0 0.0
        %6232 = vmatprep.subr.mxu0 0.0
        %6233 = vmatpush1.msra.mxu0 0.0
        %6234 = vmatprep.subr.mxu0 0.0
        %6235 = vmatpush1.msra.mxu0 0.0
        %6236 = vmatprep.subr.mxu0 0.0
        %6237 = vmatpush1.msra.mxu0 0.0
        %6238 = vmatprep.subr.mxu0 0.0
        %6239 = vmatpush1.msra.mxu0 0.0
        %6240 = vmatprep.subr.mxu0 0.0
        %6241 = vmatpush1.msra.mxu0 0.0
        %6242 = vmatprep.subr.mxu0 0.0
        %6243 = vmatpush1.msra.mxu0 0.0
        %6244 = vmatprep.subr.mxu0 0.0
        %6245 = vmatpush1.msra.mxu0 0.0
        %6246 = vmatprep.subr.mxu0 0.0
        %6247 = vmatpush1.msra.mxu0 0.0
        %6248 = vmatprep.subr.mxu0 0.0
        %6249 = vmatpush1.msra.mxu0 0.0
        %6250 = vmatprep.subr.mxu0 0.0
        %6251 = vmatpush1.msra.mxu0 0.0
        %6252 = vmatprep.subr.mxu0 0.0
        %6253 = vmatpush1.msra.mxu0 0.0
        %6254 = vmatprep.mubr.f32.mxu0 0.0
        %6255 = vmatmul.mubr.f32.gmra.mrb[0].mxu0 %v5855
        %v6256 = vpop.f32.mrb[0].mxu0
        %v6257 = vadd.f32 0.0, %v6256
        %v6258 = vpop.f32.mrb[0].mxu0
        %6259 = vdwg.mxu0
        %v6261 = vrot.slane %v6186, 7
        %v6262 = vrot.slane %v6186, 1
        %v6263 = vrot.slane %v6186, 2
        %v6268 = vadd.f32 %v2469, %v6261
        %v6269 = vadd.f32 %v2472, %v6186
        %v6270 = vadd.f32 %v2475, %v6262
        %v6271 = vadd.f32 %v2478, %v6263
        %v6272 = vxor.u32 %v6268, 2147483648
        %v6273 = vxor.u32 %v6269, 2147483648
        %v6274 = vxor.u32 %v6270, 2147483648
        %v6275 = vxor.u32 %v6271, 2147483648
        %v6276 = vmul.f32 %v6272, 1.442695
        %v6277 = vpow.pop %v6276
        %v6278 = vmul.f32 %v6273, 1.442695
        %v6279 = vpow.pop %v6278
        %v6280 = vmul.f32 %v6274, 1.442695
        %v6281 = vpow.pop %v6280
        %v6282 = vmul.f32 %v6275, 1.442695
        %v6283 = vpow.pop %v6282
        %v6284 = vadd.f32 %v6277, 1.0
        %v6285 = vadd.f32 %v6279, 1.0
        %v6286 = vadd.f32 %v6281, 1.0
        %v6287 = vadd.f32 %v6283, 1.0
        %v6288 = vrcp.pop %v6284
        %v6289 = vmul.f32 1.0, %v6288
        %v6290 = vrcp.pop %v6285
        %v6291 = vmul.f32 1.0, %v6290
        %v6292 = vrcp.pop %v6286
        %v6293 = vmul.f32 1.0, %v6292
        %v6294 = vrcp.pop %v6287
        %v6295 = vmul.f32 1.0, %v6294
        %v6297 = vrot.slane %v6188, 7
        %v6298 = vrot.slane %v6188, 1
        %v6299 = vrot.slane %v6188, 2
        %v6304 = vadd.f32 %v2470, %v6297
        %v6305 = vadd.f32 %v2473, %v6188
        %v6306 = vadd.f32 %v2476, %v6298
        %v6307 = vadd.f32 %v2479, %v6299
        %v6308 = vxor.u32 %v6304, 2147483648
        %v6309 = vxor.u32 %v6305, 2147483648
        %v6310 = vxor.u32 %v6306, 2147483648
        %v6311 = vxor.u32 %v6307, 2147483648
        %v6312 = vmul.f32 %v6308, 1.442695
        %v6313 = vpow.pop %v6312
        %v6314 = vmul.f32 %v6309, 1.442695
        %v6315 = vpow.pop %v6314
        %v6316 = vmul.f32 %v6310, 1.442695
        %v6317 = vpow.pop %v6316
        %v6318 = vmul.f32 %v6311, 1.442695
        %v6319 = vpow.pop %v6318
        %v6320 = vadd.f32 %v6313, 1.0
        %v6321 = vadd.f32 %v6315, 1.0
        %v6322 = vadd.f32 %v6317, 1.0
        %v6323 = vadd.f32 %v6319, 1.0
        %v6324 = vrcp.pop %v6320
        %v6325 = vmul.f32 1.0, %v6324
        %v6326 = vrcp.pop %v6321
        %v6327 = vmul.f32 1.0, %v6326
        %v6328 = vrcp.pop %v6322
        %v6329 = vmul.f32 1.0, %v6328
        %v6330 = vrcp.pop %v6323
        %v6331 = vmul.f32 1.0, %v6330
        %v6332 = vadd.f32 %v6257, %v2589
        %v6334 = vrot.slane %v6332, 7
        %v6335 = vrot.slane %v6332, 1
        %v6336 = vrot.slane %v6332, 2
        %v6341 = vmul.f32 %v6289, %v6334
        %v6342 = vmul.f32 %v6291, %v6332
        %v6343 = vmul.f32 %v6293, %v6335
        %v6344 = vmul.f32 %v6295, %v6336
        %v6345 = vadd.f32 %v2471, %v6341
        %v6346 = vadd.f32 %v2474, %v6342
        %v6347 = vadd.f32 %v2477, %v6343
        %v6348 = vadd.f32 %v2480, %v6344
        %v6349 = vtanh.pop %v6345
        %v6350 = vtanh.pop %v6346
        %v6351 = vtanh.pop %v6347
        %v6352 = vtanh.pop %v6348
        %v6353 = vsub.f32 1.0, %v6325
        %v6354 = vsub.f32 1.0, %v6327
        %v6355 = vsub.f32 1.0, %v6329
        %v6356 = vsub.f32 1.0, %v6331
        %v6357 = vmul.f32 %v6353, %v6349
        %v6358 = vmul.f32 %v6354, %v6350
        %v6359 = vmul.f32 %v6355, %v6351
        %v6360 = vmul.f32 %v6356, %v6352
        %v6361 = vrot.slane %v5829, 1
        %v6362 = vrot.slane %v5831, 1
        %v6363 = vrot.slane %v5832, 1
        %v6368 = vmul.f32 %v6325, %v6361
        %v6369 = vmul.f32 %v6327, %v5851
        %v6370 = vmul.f32 %v6329, %v6362
        %v6371 = vmul.f32 %v6331, %v6363
        %v6372 = vadd.f32 %v6357, %v6368
        %v6373 = vadd.f32 %v6358, %v6369
        %v6374 = vadd.f32 %v6359, %v6370
        %v6375 = vadd.f32 %v6360, %v6371
        %v6380 = vrot.slane %v6115, 6
        %v6381 = vrot.slane %v6116, 5
        %v6382 = vsel %vm3120, %v6381, %v6380
        %v6383 = vrot.slane %v6117, 4
        %v6384 = vsel %vm3123, %v6383, %v6382
        %v6385 = vrot.slane %v6118, 3
        %v6386 = vsel %vm3126, %v6385, %v6384
        %v6388 = vadd.f32 %v5845, %v6386
        %v6393 = vrot.slane %v6372, 1
        %v6394 = vsel %vm3120, %v6373, %v6393
        %v6395 = vrot.slane %v6374, 7
        %v6396 = vsel %vm3123, %v6395, %v6394
        %v6397 = vrot.slane %v6375, 6
        %v6398 = vsel %vm3126, %v6397, %v6396
        %v6400 = vadd.f32 %v5857, %v6398
        %6401 = vmatprep.subr.mxu0 %v2482
        %6402 = vmatpush1.msra.mxu0 %v2481
        %6403 = vmatprep.subr.mxu0 %v2485
        %6404 = vmatpush1.msra.mxu0 %v2484
        %6405 = vmatprep.subr.mxu0 %v2488
        %6406 = vmatpush1.msra.mxu0 %v2487
        %6407 = vmatprep.subr.mxu0 %v2491
        %6408 = vmatpush1.msra.mxu0 %v2490
        %6409 = vmatprep.subr.mxu0 %v2494
        %6410 = vmatpush1.msra.mxu0 %v2493
        %6411 = vmatprep.subr.mxu0 %v2497
        %6412 = vmatpush1.msra.mxu0 %v2496
        %6413 = vmatprep.subr.mxu0 %v2500
        %6414 = vmatpush1.msra.mxu0 %v2499
        %6415 = vmatprep.subr.mxu0 %v2503
        %6416 = vmatpush1.msra.mxu0 %v2502
        %6417 = vmatprep.subr.mxu0 %v2506
        %6418 = vmatpush1.msra.mxu0 %v2505
        %6419 = vmatprep.subr.mxu0 %v2509
        %6420 = vmatpush1.msra.mxu0 %v2508
        %6421 = vmatprep.subr.mxu0 %v2512
        %6422 = vmatpush1.msra.mxu0 %v2511
        %6423 = vmatprep.subr.mxu0 %v2515
        %6424 = vmatpush1.msra.mxu0 %v2514
        %6425 = vmatprep.subr.mxu0 %v2518
        %6426 = vmatpush1.msra.mxu0 %v2517
        %6427 = vmatprep.subr.mxu0 %v2521
        %6428 = vmatpush1.msra.mxu0 %v2520
        %6429 = vmatprep.subr.mxu0 %v2524
        %6430 = vmatpush1.msra.mxu0 %v2523
        %6431 = vmatprep.subr.mxu0 %v2527
        %6432 = vmatpush1.msra.mxu0 %v2526
        %6433 = vmatprep.subr.mxu0 0.0
        %6434 = vmatpush1.msra.mxu0 0.0
        %6435 = vmatprep.subr.mxu0 0.0
        %6436 = vmatpush1.msra.mxu0 0.0
        %6437 = vmatprep.subr.mxu0 0.0
        %6438 = vmatpush1.msra.mxu0 0.0
        %6439 = vmatprep.subr.mxu0 0.0
        %6440 = vmatpush1.msra.mxu0 0.0
        %6441 = vmatprep.subr.mxu0 0.0
        %6442 = vmatpush1.msra.mxu0 0.0
        %6443 = vmatprep.subr.mxu0 0.0
        %6444 = vmatpush1.msra.mxu0 0.0
        %6445 = vmatprep.subr.mxu0 0.0
        %6446 = vmatpush1.msra.mxu0 0.0
        %6447 = vmatprep.subr.mxu0 0.0
        %6448 = vmatpush1.msra.mxu0 0.0
        %6449 = vmatprep.subr.mxu0 0.0
        %6450 = vmatpush1.msra.mxu0 0.0
        %6451 = vmatprep.subr.mxu0 0.0
        %6452 = vmatpush1.msra.mxu0 0.0
        %6453 = vmatprep.subr.mxu0 0.0
        %6454 = vmatpush1.msra.mxu0 0.0
        %6455 = vmatprep.subr.mxu0 0.0
        %6456 = vmatpush1.msra.mxu0 0.0
        %6457 = vmatprep.subr.mxu0 0.0
        %6458 = vmatpush1.msra.mxu0 0.0
        %6459 = vmatprep.subr.mxu0 0.0
        %6460 = vmatpush1.msra.mxu0 0.0
        %6461 = vmatprep.subr.mxu0 0.0
        %6462 = vmatpush1.msra.mxu0 0.0
        %6463 = vmatprep.subr.mxu0 0.0
        %6464 = vmatpush1.msra.mxu0 0.0
        %6465 = vmatprep.mubr.f32.mxu0 0.0
        %6466 = vmatmul.mubr.f32.gmra.mrb[0].mxu0 %v6386
        %v6467 = vpop.f32.mrb[0].mxu0
        %v6468 = vadd.f32 0.0, %v6467
        %v6469 = vpop.f32.mrb[0].mxu0
        %v6470 = vadd.f32 0.0, %v6469
        %6471 = vdwg.mxu0
        %6472 = vmatprep.subr.mxu0 0.0
        %6473 = vmatpush1.msra.mxu0 %v2483
        %6474 = vmatprep.subr.mxu0 0.0
        %6475 = vmatpush1.msra.mxu0 %v2486
        %6476 = vmatprep.subr.mxu0 0.0
        %6477 = vmatpush1.msra.mxu0 %v2489
        %6478 = vmatprep.subr.mxu0 0.0
        %6479 = vmatpush1.msra.mxu0 %v2492
        %6480 = vmatprep.subr.mxu0 0.0
        %6481 = vmatpush1.msra.mxu0 %v2495
        %6482 = vmatprep.subr.mxu0 0.0
        %6483 = vmatpush1.msra.mxu0 %v2498
        %6484 = vmatprep.subr.mxu0 0.0
        %6485 = vmatpush1.msra.mxu0 %v2501
        %6486 = vmatprep.subr.mxu0 0.0
        %6487 = vmatpush1.msra.mxu0 %v2504
        %6488 = vmatprep.subr.mxu0 0.0
        %6489 = vmatpush1.msra.mxu0 %v2507
        %6490 = vmatprep.subr.mxu0 0.0
        %6491 = vmatpush1.msra.mxu0 %v2510
        %6492 = vmatprep.subr.mxu0 0.0
        %6493 = vmatpush1.msra.mxu0 %v2513
        %6494 = vmatprep.subr.mxu0 0.0
        %6495 = vmatpush1.msra.mxu0 %v2516
        %6496 = vmatprep.subr.mxu0 0.0
        %6497 = vmatpush1.msra.mxu0 %v2519
        %6498 = vmatprep.subr.mxu0 0.0
        %6499 = vmatpush1.msra.mxu0 %v2522
        %6500 = vmatprep.subr.mxu0 0.0
        %6501 = vmatpush1.msra.mxu0 %v2525
        %6502 = vmatprep.subr.mxu0 0.0
        %6503 = vmatpush1.msra.mxu0 %v2528
        %6504 = vmatprep.subr.mxu0 0.0
        %6505 = vmatpush1.msra.mxu0 0.0
        %6506 = vmatprep.subr.mxu0 0.0
        %6507 = vmatpush1.msra.mxu0 0.0
        %6508 = vmatprep.subr.mxu0 0.0
        %6509 = vmatpush1.msra.mxu0 0.0
        %6510 = vmatprep.subr.mxu0 0.0
        %6511 = vmatpush1.msra.mxu0 0.0
        %6512 = vmatprep.subr.mxu0 0.0
        %6513 = vmatpush1.msra.mxu0 0.0
        %6514 = vmatprep.subr.mxu0 0.0
        %6515 = vmatpush1.msra.mxu0 0.0
        %6516 = vmatprep.subr.mxu0 0.0
        %6517 = vmatpush1.msra.mxu0 0.0
        %6518 = vmatprep.subr.mxu0 0.0
        %6519 = vmatpush1.msra.mxu0 0.0
        %6520 = vmatprep.subr.mxu0 0.0
        %6521 = vmatpush1.msra.mxu0 0.0
        %6522 = vmatprep.subr.mxu0 0.0
        %6523 = vmatpush1.msra.mxu0 0.0
        %6524 = vmatprep.subr.mxu0 0.0
        %6525 = vmatpush1.msra.mxu0 0.0
        %6526 = vmatprep.subr.mxu0 0.0
        %6527 = vmatpush1.msra.mxu0 0.0
        %6528 = vmatprep.subr.mxu0 0.0
        %6529 = vmatpush1.msra.mxu0 0.0
        %6530 = vmatprep.subr.mxu0 0.0
        %6531 = vmatpush1.msra.mxu0 0.0
        %6532 = vmatprep.subr.mxu0 0.0
        %6533 = vmatpush1.msra.mxu0 0.0
        %6534 = vmatprep.subr.mxu0 0.0
        %6535 = vmatpush1.msra.mxu0 0.0
        %6536 = vmatprep.mubr.f32.mxu0 0.0
        %6537 = vmatmul.mubr.f32.gmra.mrb[0].mxu0 %v6386
        %v6538 = vpop.f32.mrb[0].mxu0
        %v6539 = vadd.f32 0.0, %v6538
        %v6540 = vpop.f32.mrb[0].mxu0
        %6541 = vdwg.mxu0
        %v6543 = vrot.slane %v6468, 1
        %v6544 = vrot.slane %v6468, 2
        %v6545 = vrot.slane %v6468, 3
        %v6546 = vrot.slane %v6468, 4
        %v6551 = vadd.f32 %v1630, %v6543
        %v6552 = vadd.f32 %v1633, %v6544
        %v6553 = vadd.f32 %v1636, %v6545
        %v6554 = vadd.f32 %v1639, %v6546
        %v6555 = vxor.u32 %v6551, 2147483648
        %v6556 = vxor.u32 %v6552, 2147483648
        %v6557 = vxor.u32 %v6553, 2147483648
        %v6558 = vxor.u32 %v6554, 2147483648
        %v6559 = vmul.f32 %v6555, 1.442695
        %v6560 = vpow.pop %v6559
        %v6561 = vmul.f32 %v6556, 1.442695
        %v6562 = vpow.pop %v6561
        %v6563 = vmul.f32 %v6557, 1.442695
        %v6564 = vpow.pop %v6563
        %v6565 = vmul.f32 %v6558, 1.442695
        %v6566 = vpow.pop %v6565
        %v6567 = vadd.f32 %v6560, 1.0
        %v6568 = vadd.f32 %v6562, 1.0
        %v6569 = vadd.f32 %v6564, 1.0
        %v6570 = vadd.f32 %v6566, 1.0
        %v6571 = vrcp.pop %v6567
        %v6572 = vmul.f32 1.0, %v6571
        %v6573 = vrcp.pop %v6568
        %v6574 = vmul.f32 1.0, %v6573
        %v6575 = vrcp.pop %v6569
        %v6576 = vmul.f32 1.0, %v6575
        %v6577 = vrcp.pop %v6570
        %v6578 = vmul.f32 1.0, %v6577
        %v6580 = vrot.slane %v6470, 1
        %v6581 = vrot.slane %v6470, 2
        %v6582 = vrot.slane %v6470, 3
        %v6583 = vrot.slane %v6470, 4
        %v6588 = vadd.f32 %v1631, %v6580
        %v6589 = vadd.f32 %v1634, %v6581
        %v6590 = vadd.f32 %v1637, %v6582
        %v6591 = vadd.f32 %v1640, %v6583
        %v6592 = vxor.u32 %v6588, 2147483648
        %v6593 = vxor.u32 %v6589, 2147483648
        %v6594 = vxor.u32 %v6590, 2147483648
        %v6595 = vxor.u32 %v6591, 2147483648
        %v6596 = vmul.f32 %v6592, 1.442695
        %v6597 = vpow.pop %v6596
        %v6598 = vmul.f32 %v6593, 1.442695
        %v6599 = vpow.pop %v6598
        %v6600 = vmul.f32 %v6594, 1.442695
        %v6601 = vpow.pop %v6600
        %v6602 = vmul.f32 %v6595, 1.442695
        %v6603 = vpow.pop %v6602
        %v6604 = vadd.f32 %v6597, 1.0
        %v6605 = vadd.f32 %v6599, 1.0
        %v6606 = vadd.f32 %v6601, 1.0
        %v6607 = vadd.f32 %v6603, 1.0
        %v6608 = vrcp.pop %v6604
        %v6609 = vmul.f32 1.0, %v6608
        %v6610 = vrcp.pop %v6605
        %v6611 = vmul.f32 1.0, %v6610
        %v6612 = vrcp.pop %v6606
        %v6613 = vmul.f32 1.0, %v6612
        %v6614 = vrcp.pop %v6607
        %v6615 = vmul.f32 1.0, %v6614
        %v6616 = vadd.f32 %v6539, %v2582
        %v6618 = vrot.slane %v6616, 1
        %v6619 = vrot.slane %v6616, 2
        %v6620 = vrot.slane %v6616, 3
        %v6621 = vrot.slane %v6616, 4
        %v6626 = vmul.f32 %v6572, %v6618
        %v6627 = vmul.f32 %v6574, %v6619
        %v6628 = vmul.f32 %v6576, %v6620
        %v6629 = vmul.f32 %v6578, %v6621
        %v6630 = vadd.f32 %v1632, %v6626
        %v6631 = vadd.f32 %v1635, %v6627
        %v6632 = vadd.f32 %v1638, %v6628
        %v6633 = vadd.f32 %v1641, %v6629
        %v6634 = vtanh.pop %v6630
        %v6635 = vtanh.pop %v6631
        %v6636 = vtanh.pop %v6632
        %v6637 = vtanh.pop %v6633
        %v6638 = vsub.f32 1.0, %v6609
        %v6639 = vsub.f32 1.0, %v6611
        %v6640 = vsub.f32 1.0, %v6613
        %v6641 = vsub.f32 1.0, %v6615
        %v6642 = vmul.f32 %v6638, %v6634
        %v6643 = vmul.f32 %v6639, %v6635
        %v6644 = vmul.f32 %v6640, %v6636
        %v6645 = vmul.f32 %v6641, %v6637
        %v6646 = vrot.slane %v6115, 7
        %v6647 = vrot.slane %v6116, 7
        %v6648 = vrot.slane %v6117, 7
        %v6649 = vrot.slane %v6118, 7
        %v6654 = vmul.f32 %v6609, %v6646
        %v6655 = vmul.f32 %v6611, %v6647
        %v6656 = vmul.f32 %v6613, %v6648
        %v6657 = vmul.f32 %v6615, %v6649
        %v6658 = vadd.f32 %v6642, %v6654
        %v6659 = vadd.f32 %v6643, %v6655
        %v6660 = vadd.f32 %v6644, %v6656
        %v6661 = vadd.f32 %v6645, %v6657
        %6662 = vmatprep.subr.mxu0 %v2530
        %6663 = vmatpush1.msra.mxu0 %v2529
        %6664 = vmatprep.subr.mxu0 %v2533
        %6665 = vmatpush1.msra.mxu0 %v2532
        %6666 = vmatprep.subr.mxu0 %v2536
        %6667 = vmatpush1.msra.mxu0 %v2535
        %6668 = vmatprep.subr.mxu0 %v2539
        %6669 = vmatpush1.msra.mxu0 %v2538
        %6670 = vmatprep.subr.mxu0 %v2542
        %6671 = vmatpush1.msra.mxu0 %v2541
        %6672 = vmatprep.subr.mxu0 %v2545
        %6673 = vmatpush1.msra.mxu0 %v2544
        %6674 = vmatprep.subr.mxu0 %v2548
        %6675 = vmatpush1.msra.mxu0 %v2547
        %6676 = vmatprep.subr.mxu0 %v2551
        %6677 = vmatpush1.msra.mxu0 %v2550
        %6678 = vmatprep.subr.mxu0 %v2554
        %6679 = vmatpush1.msra.mxu0 %v2553
        %6680 = vmatprep.subr.mxu0 %v2557
        %6681 = vmatpush1.msra.mxu0 %v2556
        %6682 = vmatprep.subr.mxu0 %v2560
        %6683 = vmatpush1.msra.mxu0 %v2559
        %6684 = vmatprep.subr.mxu0 %v2563
        %6685 = vmatpush1.msra.mxu0 %v2562
        %6686 = vmatprep.subr.mxu0 %v2566
        %6687 = vmatpush1.msra.mxu0 %v2565
        %6688 = vmatprep.subr.mxu0 %v2569
        %6689 = vmatpush1.msra.mxu0 %v2568
        %6690 = vmatprep.subr.mxu0 %v2572
        %6691 = vmatpush1.msra.mxu0 %v2571
        %6692 = vmatprep.subr.mxu0 %v2575
        %6693 = vmatpush1.msra.mxu0 %v2574
        %6694 = vmatprep.subr.mxu0 0.0
        %6695 = vmatpush1.msra.mxu0 0.0
        %6696 = vmatprep.subr.mxu0 0.0
        %6697 = vmatpush1.msra.mxu0 0.0
        %6698 = vmatprep.subr.mxu0 0.0
        %6699 = vmatpush1.msra.mxu0 0.0
        %6700 = vmatprep.subr.mxu0 0.0
        %6701 = vmatpush1.msra.mxu0 0.0
        %6702 = vmatprep.subr.mxu0 0.0
        %6703 = vmatpush1.msra.mxu0 0.0
        %6704 = vmatprep.subr.mxu0 0.0
        %6705 = vmatpush1.msra.mxu0 0.0
        %6706 = vmatprep.subr.mxu0 0.0
        %6707 = vmatpush1.msra.mxu0 0.0
        %6708 = vmatprep.subr.mxu0 0.0
        %6709 = vmatpush1.msra.mxu0 0.0
        %6710 = vmatprep.subr.mxu0 0.0
        %6711 = vmatpush1.msra.mxu0 0.0
        %6712 = vmatprep.subr.mxu0 0.0
        %6713 = vmatpush1.msra.mxu0 0.0
        %6714 = vmatprep.subr.mxu0 0.0
        %6715 = vmatpush1.msra.mxu0 0.0
        %6716 = vmatprep.subr.mxu0 0.0
        %6717 = vmatpush1.msra.mxu0 0.0
        %6718 = vmatprep.subr.mxu0 0.0
        %6719 = vmatpush1.msra.mxu0 0.0
        %6720 = vmatprep.subr.mxu0 0.0
        %6721 = vmatpush1.msra.mxu0 0.0
        %6722 = vmatprep.subr.mxu0 0.0
        %6723 = vmatpush1.msra.mxu0 0.0
        %6724 = vmatprep.subr.mxu0 0.0
        %6725 = vmatpush1.msra.mxu0 0.0
        %6726 = vmatprep.mubr.f32.mxu0 0.0
        %6727 = vmatmul.mubr.f32.gmra.mrb[0].mxu0 %v6398
        %v6728 = vpop.f32.mrb[0].mxu0
        %v6729 = vadd.f32 0.0, %v6728
        %v6730 = vpop.f32.mrb[0].mxu0
        %v6731 = vadd.f32 0.0, %v6730
        %6732 = vdwg.mxu0
        %6733 = vmatprep.subr.mxu0 0.0
        %6734 = vmatpush1.msra.mxu0 %v2531
        %6735 = vmatprep.subr.mxu0 0.0
        %6736 = vmatpush1.msra.mxu0 %v2534
        %6737 = vmatprep.subr.mxu0 0.0
        %6738 = vmatpush1.msra.mxu0 %v2537
        %6739 = vmatprep.subr.mxu0 0.0
        %6740 = vmatpush1.msra.mxu0 %v2540
        %6741 = vmatprep.subr.mxu0 0.0
        %6742 = vmatpush1.msra.mxu0 %v2543
        %6743 = vmatprep.subr.mxu0 0.0
        %6744 = vmatpush1.msra.mxu0 %v2546
        %6745 = vmatprep.subr.mxu0 0.0
        %6746 = vmatpush1.msra.mxu0 %v2549
        %6747 = vmatprep.subr.mxu0 0.0
        %6748 = vmatpush1.msra.mxu0 %v2552
        %6749 = vmatprep.subr.mxu0 0.0
        %6750 = vmatpush1.msra.mxu0 %v2555
        %6751 = vmatprep.subr.mxu0 0.0
        %6752 = vmatpush1.msra.mxu0 %v2558
        %6753 = vmatprep.subr.mxu0 0.0
        %6754 = vmatpush1.msra.mxu0 %v2561
        %6755 = vmatprep.subr.mxu0 0.0
        %6756 = vmatpush1.msra.mxu0 %v2564
        %6757 = vmatprep.subr.mxu0 0.0
        %6758 = vmatpush1.msra.mxu0 %v2567
        %6759 = vmatprep.subr.mxu0 0.0
        %6760 = vmatpush1.msra.mxu0 %v2570
        %6761 = vmatprep.subr.mxu0 0.0
        %6762 = vmatpush1.msra.mxu0 %v2573
        %6763 = vmatprep.subr.mxu0 0.0
        %6764 = vmatpush1.msra.mxu0 %v2576
        %6765 = vmatprep.subr.mxu0 0.0
        %6766 = vmatpush1.msra.mxu0 0.0
        %6767 = vmatprep.subr.mxu0 0.0
        %6768 = vmatpush1.msra.mxu0 0.0
        %6769 = vmatprep.subr.mxu0 0.0
        %6770 = vmatpush1.msra.mxu0 0.0
        %6771 = vmatprep.subr.mxu0 0.0
        %6772 = vmatpush1.msra.mxu0 0.0
        %6773 = vmatprep.subr.mxu0 0.0
        %6774 = vmatpush1.msra.mxu0 0.0
        %6775 = vmatprep.subr.mxu0 0.0
        %6776 = vmatpush1.msra.mxu0 0.0
        %6777 = vmatprep.subr.mxu0 0.0
        %6778 = vmatpush1.msra.mxu0 0.0
        %6779 = vmatprep.subr.mxu0 0.0
        %6780 = vmatpush1.msra.mxu0 0.0
        %6781 = vmatprep.subr.mxu0 0.0
        %6782 = vmatpush1.msra.mxu0 0.0
        %6783 = vmatprep.subr.mxu0 0.0
        %6784 = vmatpush1.msra.mxu0 0.0
        %6785 = vmatprep.subr.mxu0 0.0
        %6786 = vmatpush1.msra.mxu0 0.0
        %6787 = vmatprep.subr.mxu0 0.0
        %6788 = vmatpush1.msra.mxu0 0.0
        %6789 = vmatprep.subr.mxu0 0.0
        %6790 = vmatpush1.msra.mxu0 0.0
        %6791 = vmatprep.subr.mxu0 0.0
        %6792 = vmatpush1.msra.mxu0 0.0
        %6793 = vmatprep.subr.mxu0 0.0
        %6794 = vmatpush1.msra.mxu0 0.0
        %6795 = vmatprep.subr.mxu0 0.0
        %6796 = vmatpush1.msra.mxu0 0.0
        %6797 = vmatprep.mubr.f32.mxu0 0.0
        %6798 = vmatmul.mubr.f32.gmra.mrb[0].mxu0 %v6398
        %v6799 = vpop.f32.mrb[0].mxu0
        %v6800 = vadd.f32 0.0, %v6799
        %v6801 = vpop.f32.mrb[0].mxu0
        %6802 = vdwg.mxu0
        %v6804 = vrot.slane %v6729, 1
        %v6805 = vrot.slane %v6729, 2
        %v6806 = vrot.slane %v6729, 3
        %v6811 = vadd.f32 %v2469, %v6729
        %v6812 = vadd.f32 %v2472, %v6804
        %v6813 = vadd.f32 %v2475, %v6805
        %v6814 = vadd.f32 %v2478, %v6806
        %v6815 = vxor.u32 %v6811, 2147483648
        %v6816 = vxor.u32 %v6812, 2147483648
        %v6817 = vxor.u32 %v6813, 2147483648
        %v6818 = vxor.u32 %v6814, 2147483648
        %v6819 = vmul.f32 %v6815, 1.442695
        %v6820 = vpow.pop %v6819
        %v6821 = vmul.f32 %v6816, 1.442695
        %v6822 = vpow.pop %v6821
        %v6823 = vmul.f32 %v6817, 1.442695
        %v6824 = vpow.pop %v6823
        %v6825 = vmul.f32 %v6818, 1.442695
        %v6826 = vpow.pop %v6825
        %v6827 = vadd.f32 %v6820, 1.0
        %v6828 = vadd.f32 %v6822, 1.0
        %v6829 = vadd.f32 %v6824, 1.0
        %v6830 = vadd.f32 %v6826, 1.0
        %v6831 = vrcp.pop %v6827
        %v6832 = vmul.f32 1.0, %v6831
        %v6833 = vrcp.pop %v6828
        %v6834 = vmul.f32 1.0, %v6833
        %v6835 = vrcp.pop %v6829
        %v6836 = vmul.f32 1.0, %v6835
        %v6837 = vrcp.pop %v6830
        %v6838 = vmul.f32 1.0, %v6837
        %v6840 = vrot.slane %v6731, 1
        %v6841 = vrot.slane %v6731, 2
        %v6842 = vrot.slane %v6731, 3
        %v6847 = vadd.f32 %v2470, %v6731
        %v6848 = vadd.f32 %v2473, %v6840
        %v6849 = vadd.f32 %v2476, %v6841
        %v6850 = vadd.f32 %v2479, %v6842
        %v6851 = vxor.u32 %v6847, 2147483648
        %v6852 = vxor.u32 %v6848, 2147483648
        %v6853 = vxor.u32 %v6849, 2147483648
        %v6854 = vxor.u32 %v6850, 2147483648
        %v6855 = vmul.f32 %v6851, 1.442695
        %v6856 = vpow.pop %v6855
        %v6857 = vmul.f32 %v6852, 1.442695
        %v6858 = vpow.pop %v6857
        %v6859 = vmul.f32 %v6853, 1.442695
        %v6860 = vpow.pop %v6859
        %v6861 = vmul.f32 %v6854, 1.442695
        %v6862 = vpow.pop %v6861
        %v6863 = vadd.f32 %v6856, 1.0
        %v6864 = vadd.f32 %v6858, 1.0
        %v6865 = vadd.f32 %v6860, 1.0
        %v6866 = vadd.f32 %v6862, 1.0
        %v6867 = vrcp.pop %v6863
        %v6868 = vmul.f32 1.0, %v6867
        %v6869 = vrcp.pop %v6864
        %v6870 = vmul.f32 1.0, %v6869
        %v6871 = vrcp.pop %v6865
        %v6872 = vmul.f32 1.0, %v6871
        %v6873 = vrcp.pop %v6866
        %v6874 = vmul.f32 1.0, %v6873
        %v6875 = vadd.f32 %v6800, %v2589
        %v6877 = vrot.slane %v6875, 1
        %v6878 = vrot.slane %v6875, 2
        %v6879 = vrot.slane %v6875, 3
        %v6884 = vmul.f32 %v6832, %v6875
        %v6885 = vmul.f32 %v6834, %v6877
        %v6886 = vmul.f32 %v6836, %v6878
        %v6887 = vmul.f32 %v6838, %v6879
        %v6888 = vadd.f32 %v2471, %v6884
        %v6889 = vadd.f32 %v2474, %v6885
        %v6890 = vadd.f32 %v2477, %v6886
        %v6891 = vadd.f32 %v2480, %v6887
        %v6892 = vtanh.pop %v6888
        %v6893 = vtanh.pop %v6889
        %v6894 = vtanh.pop %v6890
        %v6895 = vtanh.pop %v6891
        %v6896 = vsub.f32 1.0, %v6868
        %v6897 = vsub.f32 1.0, %v6870
        %v6898 = vsub.f32 1.0, %v6872
        %v6899 = vsub.f32 1.0, %v6874
        %v6900 = vmul.f32 %v6896, %v6892
        %v6901 = vmul.f32 %v6897, %v6893
        %v6902 = vmul.f32 %v6898, %v6894
        %v6903 = vmul.f32 %v6899, %v6895
        %v6904 = vrot.slane %v6373, 1
        %v6905 = vrot.slane %v6374, 1
        %v6906 = vrot.slane %v6375, 1
        %v6911 = vmul.f32 %v6868, %v6393
        %v6912 = vmul.f32 %v6870, %v6904
        %v6913 = vmul.f32 %v6872, %v6905
        %v6914 = vmul.f32 %v6874, %v6906
        %v6915 = vadd.f32 %v6900, %v6911
        %v6916 = vadd.f32 %v6901, %v6912
        %v6917 = vadd.f32 %v6902, %v6913
        %v6918 = vadd.f32 %v6903, %v6914
        %v6923 = vrot.slane %v6658, 7
        %v6924 = vrot.slane %v6659, 6
        %v6925 = vsel %vm3120, %v6924, %v6923
        %v6926 = vrot.slane %v6660, 5
        %v6927 = vsel %vm3123, %v6926, %v6925
        %v6928 = vrot.slane %v6661, 4
        %v6929 = vsel %vm3126, %v6928, %v6927
        %v6931 = vadd.f32 %v6388, %v6929
        %v6936 = vrot.slane %v6916, 7
        %v6937 = vsel %vm3120, %v6936, %v6915
        %v6938 = vrot.slane %v6917, 6
        %v6939 = vsel %vm3123, %v6938, %v6937
        %v6940 = vrot.slane %v6918, 5
        %v6941 = vsel %vm3126, %v6940, %v6939
        %v6943 = vadd.f32 %v6400, %v6941
        %v6944 = vrot.slane %v6659, 7
        %v6945 = vrot.slane %v6660, 6
        %v6946 = vsel %vm3120, %v6945, %v6944
        %v6947 = vrot.slane %v6661, 5
        %v6948 = vsel %vm3123, %v6947, %v6946
        %6951 = vst [vmem:[#allocation2 - $0x7] sm:$0x80] %v6658
        %6952 = vst [vmem:[#allocation2 + $0x1] sm:$0x7] %v6948
        %6953 = vst [vmem:[#allocation3] sm:$0xf] %v6941
        %6954 = vst [vmem:[#allocation4] sm:$0xf] %v6931
        %6955 = vst [vmem:[#allocation5] sm:$0xf] %v6943
        %p6956 = scmp.eq.s32.totalorder %s29, 1
        // Predicated region
        $region185: #{siamese_forward.1} parent=155 // pred_check
          %p6957 = pneg %p6956
        $region186: #{siamese_forward.1} parent=155 // pred_check_branch
          %6959 = sbr.rel (%p6957) target = $region188
        $region187: #{siamese_forward.1} parent=155 // pred_region
          %v6960 = vmul.f32 %v6931, 0.0625
          %v6961 = vmul.f32 %v6943, 0.0625
          %v6962 = vld [vmem:[%s12] sm:$0xff]
          %v6963 = vld [vmem:[%s12 + $0x8] sm:$0xff]
          %v6964 = vld [vmem:[%s12 + $0x10] sm:$0xff]
          %v6965 = vld [vmem:[%s12 + $0x18] sm:$0xff]
          %v6966 = vld [vmem:[%s12 + $0x20] sm:$0xff]
          %v6967 = vld [vmem:[%s12 + $0x28] sm:$0xff]
          %v6968 = vld [vmem:[%s12 + $0x30] sm:$0xff]
          %v6969 = vld [vmem:[%s12 + $0x38] sm:$0xff]
          %v6970 = vld [vmem:[%s12 + $0x40] sm:$0xff]
          %v6971 = vld [vmem:[%s12 + $0x48] sm:$0xff]
          %v6972 = vld [vmem:[%s12 + $0x50] sm:$0xff]
          %v6973 = vld [vmem:[%s12 + $0x58] sm:$0xff]
          %v6974 = vld [vmem:[%s12 + $0x60] sm:$0xff]
          %v6975 = vld [vmem:[%s12 + $0x68] sm:$0xff]
          %v6976 = vld [vmem:[%s12 + $0x70] sm:$0xff]
          %v6977 = vld [vmem:[%s12 + $0x78] sm:$0xff]
          %v6978 = vld [vmem:[%s12 + $0x80] sm:$0xff]
          %v6979 = vld [vmem:[%s12 + $0x88] sm:$0xff]
          %v6980 = vld [vmem:[%s12 + $0x90] sm:$0xff]
          %v6981 = vld [vmem:[%s12 + $0x98] sm:$0xff]
          %v6982 = vld [vmem:[%s12 + $0xa0] sm:$0xff]
          %v6983 = vld [vmem:[%s12 + $0xa8] sm:$0xff]
          %v6984 = vld [vmem:[%s12 + $0xb0] sm:$0xff]
          %v6985 = vld [vmem:[%s12 + $0xb8] sm:$0xff]
          %v6986 = vld [vmem:[%s12 + $0xc0] sm:$0xff]
          %v6987 = vld [vmem:[%s12 + $0xc8] sm:$0xff]
          %v6988 = vld [vmem:[%s12 + $0xd0] sm:$0xff]
          %v6989 = vld [vmem:[%s12 + $0xd8] sm:$0xff]
          %v6990 = vld [vmem:[%s12 + $0xe0] sm:$0xff]
          %v6991 = vld [vmem:[%s12 + $0xe8] sm:$0xff]
          %v6992 = vld [vmem:[%s12 + $0xf0] sm:$0xff]
          %v6993 = vld [vmem:[%s12 + $0xf8] sm:$0xff]
          %v6994 = vld [vmem:[%s13] sm:$0xff]
          %v6995 = vld [vmem:[%s13 + $0x8] sm:$0xff]
          %v6996 = vld [vmem:[%s13 + $0x10] sm:$0xff]
          %v6997 = vld [vmem:[%s13 + $0x18] sm:$0xff]
          %v6998 = vld [vmem:[%s13 + $0x20] sm:$0xff]
          %v6999 = vld [vmem:[%s13 + $0x28] sm:$0xff]
          %v7000 = vld [vmem:[%s13 + $0x30] sm:$0xff]
          %v7001 = vld [vmem:[%s13 + $0x38] sm:$0xff]
          %v7002 = vld [vmem:[%s13 + $0x40] sm:$0xff]
          %v7003 = vld [vmem:[%s13 + $0x48] sm:$0xff]
          %v7004 = vld [vmem:[%s13 + $0x50] sm:$0xff]
          %v7005 = vld [vmem:[%s13 + $0x58] sm:$0xff]
          %v7006 = vld [vmem:[%s13 + $0x60] sm:$0xff]
          %v7007 = vld [vmem:[%s13 + $0x68] sm:$0xff]
          %v7008 = vld [vmem:[%s13 + $0x70] sm:$0xff]
          %v7009 = vld [vmem:[%s13 + $0x78] sm:$0xff]
          %v7010 = vld [vmem:[%s13 + $0x80] sm:$0xff]
          %v7011 = vld [vmem:[%s13 + $0x88] sm:$0xff]
          %v7012 = vld [vmem:[%s13 + $0x90] sm:$0xff]
          %v7013 = vld [vmem:[%s13 + $0x98] sm:$0xff]
          %v7014 = vld [vmem:[%s13 + $0xa0] sm:$0xff]
          %v7015 = vld [vmem:[%s13 + $0xa8] sm:$0xff]
          %v7016 = vld [vmem:[%s13 + $0xb0] sm:$0xff]
          %v7017 = vld [vmem:[%s13 + $0xb8] sm:$0xff]
          %v7018 = vld [vmem:[%s13 + $0xc0] sm:$0xff]
          %v7019 = vld [vmem:[%s13 + $0xc8] sm:$0xff]
          %v7020 = vld [vmem:[%s13 + $0xd0] sm:$0xff]
          %v7021 = vld [vmem:[%s13 + $0xd8] sm:$0xff]
          %v7022 = vld [vmem:[%s13 + $0xe0] sm:$0xff]
          %v7023 = vld [vmem:[%s13 + $0xe8] sm:$0xff]
          %v7024 = vld [vmem:[%s13 + $0xf0] sm:$0xff]
          %v7025 = vld [vmem:[%s13 + $0xf8] sm:$0xff]
          %v7028 = vrot.slane %v6960, 2
          %v7029 = vrot.slane %v6961, 2
          %7032 = vmatprep.subr.mxu0 0.0
          %7033 = vmatpush1.msra.mxu0 %v6994
          %7034 = vmatprep.subr.mxu0 0.0
          %7035 = vmatpush1.msra.mxu0 %v6995
          %7036 = vmatprep.subr.mxu0 0.0
          %7037 = vmatpush1.msra.mxu0 %v6996
          %7038 = vmatprep.subr.mxu0 0.0
          %7039 = vmatpush1.msra.mxu0 %v6997
          %7040 = vmatprep.subr.mxu0 0.0
          %7041 = vmatpush1.msra.mxu0 %v6998
          %7042 = vmatprep.subr.mxu0 0.0
          %7043 = vmatpush1.msra.mxu0 %v6999
          %7044 = vmatprep.subr.mxu0 0.0
          %7045 = vmatpush1.msra.mxu0 %v7000
          %7046 = vmatprep.subr.mxu0 0.0
          %7047 = vmatpush1.msra.mxu0 %v7001
          %7048 = vmatprep.subr.mxu0 0.0
          %7049 = vmatpush1.msra.mxu0 %v7002
          %7050 = vmatprep.subr.mxu0 0.0
          %7051 = vmatpush1.msra.mxu0 %v7003
          %7052 = vmatprep.subr.mxu0 0.0
          %7053 = vmatpush1.msra.mxu0 %v7004
          %7054 = vmatprep.subr.mxu0 0.0
          %7055 = vmatpush1.msra.mxu0 %v7005
          %7056 = vmatprep.subr.mxu0 0.0
          %7057 = vmatpush1.msra.mxu0 %v7006
          %7058 = vmatprep.subr.mxu0 0.0
          %7059 = vmatpush1.msra.mxu0 %v7007
          %7060 = vmatprep.subr.mxu0 0.0
          %7061 = vmatpush1.msra.mxu0 %v7008
          %7062 = vmatprep.subr.mxu0 0.0
          %7063 = vmatpush1.msra.mxu0 %v7009
          %7064 = vmatprep.subr.mxu0 0.0
          %7065 = vmatpush1.msra.mxu0 %v7010
          %7066 = vmatprep.subr.mxu0 0.0
          %7067 = vmatpush1.msra.mxu0 %v7011
          %7068 = vmatprep.subr.mxu0 0.0
          %7069 = vmatpush1.msra.mxu0 %v7012
          %7070 = vmatprep.subr.mxu0 0.0
          %7071 = vmatpush1.msra.mxu0 %v7013
          %7072 = vmatprep.subr.mxu0 0.0
          %7073 = vmatpush1.msra.mxu0 %v7014
          %7074 = vmatprep.subr.mxu0 0.0
          %7075 = vmatpush1.msra.mxu0 %v7015
          %7076 = vmatprep.subr.mxu0 0.0
          %7077 = vmatpush1.msra.mxu0 %v7016
          %7078 = vmatprep.subr.mxu0 0.0
          %7079 = vmatpush1.msra.mxu0 %v7017
          %7080 = vmatprep.subr.mxu0 0.0
          %7081 = vmatpush1.msra.mxu0 %v7018
          %7082 = vmatprep.subr.mxu0 0.0
          %7083 = vmatpush1.msra.mxu0 %v7019
          %7084 = vmatprep.subr.mxu0 0.0
          %7085 = vmatpush1.msra.mxu0 %v7020
          %7086 = vmatprep.subr.mxu0 0.0
          %7087 = vmatpush1.msra.mxu0 %v7021
          %7088 = vmatprep.subr.mxu0 0.0
          %7089 = vmatpush1.msra.mxu0 %v7022
          %7090 = vmatprep.subr.mxu0 0.0
          %7091 = vmatpush1.msra.mxu0 %v7023
          %7092 = vmatprep.subr.mxu0 0.0
          %7093 = vmatpush1.msra.mxu0 %v7024
          %7094 = vmatprep.subr.mxu0 0.0
          %7095 = vmatpush1.msra.mxu0 %v7025
          %7096 = vmatprep.mubr.f32.mxu0 %v7029
          %7097 = vmatmul.mubr.f32.gmra.mrb[0].mxu0 %v7028
          %v7098 = vpop.f32.mrb[0].mxu0
          %v7099 = vadd.f32 0.0, %v7098
          %v7100 = vpop.f32.mrb[0].mxu0
          %7101 = vdwg.mxu0
          %7102 = vmatprep.subr.mxu0 0.0
          %7103 = vmatpush1.msra.mxu0 %v6962
          %7104 = vmatprep.subr.mxu0 0.0
          %7105 = vmatpush1.msra.mxu0 %v6963
          %7106 = vmatprep.subr.mxu0 0.0
          %7107 = vmatpush1.msra.mxu0 %v6964
          %7108 = vmatprep.subr.mxu0 0.0
          %7109 = vmatpush1.msra.mxu0 %v6965
          %7110 = vmatprep.subr.mxu0 0.0
          %7111 = vmatpush1.msra.mxu0 %v6966
          %7112 = vmatprep.subr.mxu0 0.0
          %7113 = vmatpush1.msra.mxu0 %v6967
          %7114 = vmatprep.subr.mxu0 0.0
          %7115 = vmatpush1.msra.mxu0 %v6968
          %7116 = vmatprep.subr.mxu0 0.0
          %7117 = vmatpush1.msra.mxu0 %v6969
          %7118 = vmatprep.subr.mxu0 0.0
          %7119 = vmatpush1.msra.mxu0 %v6970
          %7120 = vmatprep.subr.mxu0 0.0
          %7121 = vmatpush1.msra.mxu0 %v6971
          %7122 = vmatprep.subr.mxu0 0.0
          %7123 = vmatpush1.msra.mxu0 %v6972
          %7124 = vmatprep.subr.mxu0 0.0
          %7125 = vmatpush1.msra.mxu0 %v6973
          %7126 = vmatprep.subr.mxu0 0.0
          %7127 = vmatpush1.msra.mxu0 %v6974
          %7128 = vmatprep.subr.mxu0 0.0
          %7129 = vmatpush1.msra.mxu0 %v6975
          %7130 = vmatprep.subr.mxu0 0.0
          %7131 = vmatpush1.msra.mxu0 %v6976
          %7132 = vmatprep.subr.mxu0 0.0
          %7133 = vmatpush1.msra.mxu0 %v6977
          %7134 = vmatprep.subr.mxu0 0.0
          %7135 = vmatpush1.msra.mxu0 %v6978
          %7136 = vmatprep.subr.mxu0 0.0
          %7137 = vmatpush1.msra.mxu0 %v6979
          %7138 = vmatprep.subr.mxu0 0.0
          %7139 = vmatpush1.msra.mxu0 %v6980
          %7140 = vmatprep.subr.mxu0 0.0
          %7141 = vmatpush1.msra.mxu0 %v6981
          %7142 = vmatprep.subr.mxu0 0.0
          %7143 = vmatpush1.msra.mxu0 %v6982
          %7144 = vmatprep.subr.mxu0 0.0
          %7145 = vmatpush1.msra.mxu0 %v6983
          %7146 = vmatprep.subr.mxu0 0.0
          %7147 = vmatpush1.msra.mxu0 %v6984
          %7148 = vmatprep.subr.mxu0 0.0
          %7149 = vmatpush1.msra.mxu0 %v6985
          %7150 = vmatprep.subr.mxu0 0.0
          %7151 = vmatpush1.msra.mxu0 %v6986
          %7152 = vmatprep.subr.mxu0 0.0
          %7153 = vmatpush1.msra.mxu0 %v6987
          %7154 = vmatprep.subr.mxu0 0.0
          %7155 = vmatpush1.msra.mxu0 %v6988
          %7156 = vmatprep.subr.mxu0 0.0
          %7157 = vmatpush1.msra.mxu0 %v6989
          %7158 = vmatprep.subr.mxu0 0.0
          %7159 = vmatpush1.msra.mxu0 %v6990
          %7160 = vmatprep.subr.mxu0 0.0
          %7161 = vmatpush1.msra.mxu0 %v6991
          %7162 = vmatprep.subr.mxu0 0.0
          %7163 = vmatpush1.msra.mxu0 %v6992
          %7164 = vmatprep.subr.mxu0 0.0
          %7165 = vmatpush1.msra.mxu0 %v6993
          %7166 = vmatprep.mubr.f32.mxu0 %v6961
          %7167 = vmatmul.mubr.f32.gmra.mrb[0].mxu0 %v6960
          %v7168 = vpop.f32.mrb[0].mxu0
          %v7169 = vadd.f32 %v7099, %v7168
          %v7170 = vpop.f32.mrb[0].mxu0
          %7171 = vdwg.mxu0
          %v7172 = vld [vmem:[%s14] sm:$0x1]
          %v7174 = vlaneseq
          %v7175 = vshrl.u32 %v7174, 7
          %v7176 = vsub.s32 0, %v7175
          %v7177 = vrot.slane %v7172, %v7176
          %v7179 = vadd.f32 %v7169, %v7177
          %7180 = vst [vmem:[#allocation15] sm:$0x3] %v7179
        $region188: #{siamese_forward.1} parent=155 // pred_fallthru
          _
        // Predicated region
        $region189: #{siamese_forward.1} parent=155 // pred_check
          %p7181 = pneg %p381
        $region190: #{siamese_forward.1} parent=155 // pred_check_branch
          %7183 = sbr.rel (%p7181) target = $region192
        $region191: #{siamese_forward.1} parent=155 // pred_region
          %s7185 = ssub.s32 32, 32
          %7186 = vsyncadd [#allocation12], %s7185
          %s7188 = sshll.u32 [#allocation15], 4
          %s7189 = int_to_ptr.vmem [resolvable:$true] %s7188
          %7191 = dma.vmem_to_hbm [thread:$0]  %s7189, 32, %s15, [#allocation12]
        $region192: #{siamese_forward.1} parent=155 // pred_fallthru
          _
        // Predicated region
        $region193: #{siamese_forward.1} parent=155 // pred_check
          %p7192 = pneg %p381
        $region194: #{siamese_forward.1} parent=155 // pred_check_branch
          %7194 = sbr.rel (%p7192) target = $region196
        $region195: #{siamese_forward.1} parent=155 // pred_region
          %7195 = dma.done [#allocation12], 32
        $region196: #{siamese_forward.1} parent=155 // pred_fallthru
          _
      $region156: #{siamese_forward.1} parent=5 // pred_fallthru
        _
      %p7196 = scmp.le.s32.totalorder 2, %s24
      // Predicated region
      $region197: #{siamese_forward.1} parent=5 // pred_check
        %p7197 = pneg %p7196
      $region198: #{siamese_forward.1} parent=5 // pred_check_branch
        %7199 = sbr.rel (%p7197) target = $region200
      $region199: #{siamese_forward.1} parent=5 // pred_region
        %s7200 = ssub.s32 %s24, 2
      $region200: #{siamese_forward.1} parent=5 // pred_fallthru
        _
    $region6: #{siamese_forward.1} parent=1 // loop_footer
      %s28 = sadd.s32 1, %s24
    $region7: #{siamese_forward.1} parent=1 // loop_footer_branch
      %23 = sbr.rel target = $region3
    $region8: #{siamese_forward.1} parent=1 // loop_exit
      _
    %7201 = vsyncpa [#allocation11], 1
    %s7202 = scalar_lea.sflag [#allocation11], 1
    %7203 = vsyncpa %s7202, 1
    %7204 = vsyncpa [#allocation14], 1
    %7205 = vsyncpa [#allocation12], 1
    %s7206 = scalar_lea.sflag [#allocation12], 1
    %7207 = vsyncpa %s7206, 1

</llo_original>
